<compile_context>
chip_gen: v7x
topology: tpu7x:2x2x1
jax: 0.10.0
libtpu: 0.0.40
codegen_flags: <defaults>
</compile_context>

<pallas_src>
import functools

import numpy as np
import jax
import jax.numpy as jnp
from jax.experimental import pallas as pl
from jax.experimental.pallas import tpu as pltpu


# ---------------------------------------------------------------------------
# Fused Block8 kernel
# ---------------------------------------------------------------------------
def _block8_kernel(x_ref, sh_ref,
                   w0_ref, g0_ref, b0_ref,
                   w1a_ref, g1a_ref, b1a_ref,
                   w1b_ref, g1b_ref, b1b_ref,
                   w1c_ref, g1c_ref, b1c_ref,
                   w2a_ref, w2b_ref, b2s_ref,
                   o_ref, *, scale, noReLU):
    f32 = jnp.float32
    bf16 = jnp.bfloat16

    x = x_ref[0]                                    # (HW, 1792) bf16

    def cbr(a_bf16, w, g, b):                       # conv-as-matmul + BN + ReLU
        acc = jnp.dot(a_bf16, w, preferred_element_type=f32)
        return jnp.maximum(acc * g + b, 0.0)

    def shift(a_bf16, k):                           # row shift via 0/1 matrix (MXU)
        return jnp.dot(sh_ref[k], a_bf16, preferred_element_type=f32).astype(bf16)

    # --- branch0 and branch1[0]: 1x1 convs over the shared input -----------
    x0 = cbr(x, w0_ref[...], g0_ref[...], b0_ref[...])       # (HW, 192) f32
    y = cbr(x, w1a_ref[...], g1a_ref[...], b1a_ref[...])     # (HW, 192) f32

    # --- branch1[1]: (1,3) conv, padding (0,1) -> three shifted-tap matmuls
    yb = y.astype(bf16)
    acc = jnp.dot(shift(yb, 0), w1b_ref[0], preferred_element_type=f32)   # w-1 tap
    acc = acc + jnp.dot(yb, w1b_ref[1], preferred_element_type=f32)       # center
    acc = acc + jnp.dot(shift(yb, 1), w1b_ref[2], preferred_element_type=f32)  # w+1
    y = jnp.maximum(acc * g1b_ref[...] + b1b_ref[...], 0.0)

    # --- branch1[2]: (3,1) conv, padding (1,0) ------------------------------
    yb = y.astype(bf16)
    acc = jnp.dot(shift(yb, 2), w1c_ref[0], preferred_element_type=f32)   # h-1 tap
    acc = acc + jnp.dot(yb, w1c_ref[1], preferred_element_type=f32)       # center
    acc = acc + jnp.dot(shift(yb, 3), w1c_ref[2], preferred_element_type=f32)  # h+1
    y = jnp.maximum(acc * g1c_ref[...] + b1c_ref[...], 0.0)

    # --- final 1x1 conv (split weight == implicit concat), residual, ReLU --
    acc = jnp.dot(x0.astype(bf16), w2a_ref[...], preferred_element_type=f32)
    acc = acc + jnp.dot(y.astype(bf16), w2b_ref[...], preferred_element_type=f32)
    out = acc * scale + b2s_ref[...] + x.astype(f32)
    if not noReLU:
        out = jnp.maximum(out, 0.0)
    o_ref[0] = out.astype(o_ref.dtype)


# ---------------------------------------------------------------------------
# Host-side helpers
# ---------------------------------------------------------------------------
def make_shift_mats(h, w):
    """0/1 matrices S such that (S @ y)[i] = y[neighbor(i)] with zero padding.

    Order: [w-1, w+1, h-1, h+1] for a row-major (h, w) flattening.
    """
    hw = h * w
    idx = np.arange(hw)
    hh, ww = idx // w, idx % w

    def m(valid, src):
        a = np.zeros((hw, hw), np.float32)
        a[idx[valid], src[valid]] = 1.0
        return a

    return np.stack([m(ww > 0, idx - 1),
                     m(ww < w - 1, idx + 1),
                     m(hh > 0, idx - w),
                     m(hh < h - 1, idx + w)])


def block8_pallas(x_nchw, p, scale=1.0, noReLU=False):
    n, c, h, w = x_nchw.shape
    hw = h * w
    bf16 = jnp.bfloat16
    f32 = jnp.float32

    x = jnp.transpose(x_nchw, (0, 2, 3, 1)).reshape(n, hw, c)
    xb = x.astype(bf16)

    w0 = p['w0'].reshape(c, 192).astype(bf16)
    w1a = p['w1a'].reshape(c, 192).astype(bf16)
    w1b = p['w1b'][0].astype(bf16)                 # (3, 192, 192) indexed by kw
    w1c = p['w1c'][:, 0].astype(bf16)              # (3, 192, 192) indexed by kh
    w2 = p['w2'].reshape(384, c)
    w2a = w2[:192].astype(bf16)                    # pairs with branch0
    w2b = w2[192:].astype(bf16)                    # pairs with branch1
    b2s = (p['b2'] * scale).reshape(1, c).astype(f32)

    def v2(a):                                     # BN affine as (1, C) f32 rows
        return a.reshape(1, -1).astype(f32)

    shifts = jnp.asarray(make_shift_mats(h, w)).astype(bf16)   # (4, hw, hw)

    kern = functools.partial(_block8_kernel, scale=float(scale),
                             noReLU=bool(noReLU))

    full2 = lambda b: (0, 0)
    full3 = lambda b: (0, 0, 0)
    out = pl.pallas_call(
        kern,
        out_shape=jax.ShapeDtypeStruct((n, hw, c), x_nchw.dtype),
        grid=(n,),
        in_specs=[
            pl.BlockSpec((1, hw, c), lambda b: (b, 0, 0)),     # x (per batch elem)
            pl.BlockSpec((4, hw, hw), full3),                  # shift matrices
            pl.BlockSpec((c, 192), full2), pl.BlockSpec((1, 192), full2), pl.BlockSpec((1, 192), full2),
            pl.BlockSpec((c, 192), full2), pl.BlockSpec((1, 192), full2), pl.BlockSpec((1, 192), full2),
            pl.BlockSpec((3, 192, 192), full3), pl.BlockSpec((1, 192), full2), pl.BlockSpec((1, 192), full2),
            pl.BlockSpec((3, 192, 192), full3), pl.BlockSpec((1, 192), full2), pl.BlockSpec((1, 192), full2),
            pl.BlockSpec((192, c), full2), pl.BlockSpec((192, c), full2),
            pl.BlockSpec((1, c), full2),
        ],
        out_specs=pl.BlockSpec((1, hw, c), lambda b: (b, 0, 0)),
        compiler_params=pltpu.CompilerParams(
            dimension_semantics=("parallel",),
            vmem_limit_bytes=32 * 1024 * 1024),
    )(xb, shifts,
      w0, v2(p['s0']), v2(p['sh0']),
      w1a, v2(p['s1a']), v2(p['sh1a']),
      w1b, v2(p['s1b']), v2(p['sh1b']),
      w1c, v2(p['s1c']), v2(p['sh1c']),
      w2a, w2b, b2s)

    return jnp.transpose(out.reshape(n, h, w, c), (0, 3, 1, 2))   # NHWC -> NCHW


# ---------------------------------------------------------------------------
# Pure-JAX f32 reference (lax.conv) for verification
# ---------------------------------------------------------------------------
def block8_ref(x_nchw, p, scale=1.0, noReLU=False):
    x = jnp.transpose(x_nchw, (0, 2, 3, 1))

    def cbr(z, wt, s, sh, pad):
        y = jax.lax.conv_general_dilated(
            z, wt, (1, 1), pad, dimension_numbers=('NHWC', 'HWIO', 'NHWC'),
            precision=jax.lax.Precision.HIGHEST)
        return jnp.maximum(y * s + sh, 0.0)

    x0 = cbr(x, p['w0'], p['s0'], p['sh0'], 'VALID')
    y = cbr(x, p['w1a'], p['s1a'], p['sh1a'], 'VALID')
    y = cbr(y, p['w1b'], p['s1b'], p['sh1b'], [(0, 0), (1, 1)])
    y = cbr(y, p['w1c'], p['s1c'], p['sh1c'], [(1, 1), (0, 0)])
    cat = jnp.concatenate([x0, y], axis=-1)
    out = jax.lax.conv_general_dilated(
        cat, p['w2'], (1, 1), 'VALID', dimension_numbers=('NHWC', 'HWIO', 'NHWC'),
        precision=jax.lax.Precision.HIGHEST) + p['b2']
    out = out * scale + x
    if not noReLU:
        out = jnp.maximum(out, 0.0)
    return jnp.transpose(out, (0, 3, 1, 2))


# ---------------------------------------------------------------------------
# Deterministic parameters (ConvModule = conv(no bias) + BN + ReLU)
# ---------------------------------------------------------------------------
def make_conv_bn(key, kh, kw, cin, cout):
    k_w, k_g, k_b, k_m, k_v = jax.random.split(key, 5)
    w = jax.random.normal(k_w, (kh, kw, cin, cout), jnp.float32) / jnp.sqrt(kh * kw * cin)
    gamma = 1.0 + 0.1 * jax.random.normal(k_g, (cout,), jnp.float32)
    beta = 0.1 * jax.random.normal(k_b, (cout,), jnp.float32)
    mean = 0.1 * jax.random.normal(k_m, (cout,), jnp.float32)
    var = jax.random.uniform(k_v, (cout,), jnp.float32, minval=0.5, maxval=1.5)
    eps = 1e-5
    bn_scale = gamma / jnp.sqrt(var + eps)
    bn_shift = beta - mean * bn_scale
    # TODO(synk): BN is folded with eval-mode (running-stats) semantics; train-mode
    # batch statistics are not reproduced.
    return w, bn_scale, bn_shift


if __name__ == "__main__":
    key = jax.random.PRNGKey(0)
    keys = jax.random.split(key, 8)

    # Channel counts are fixed by the module (1792 / 192 / 384); keep spatial small.
    N, C, H, W = 2, 1792, 8, 8
    x = jax.random.normal(keys[0], (N, C, H, W), jnp.float32)

    p = {}
    p['w0'], p['s0'], p['sh0'] = make_conv_bn(keys[1], 1, 1, 1792, 192)
    p['w1a'], p['s1a'], p['sh1a'] = make_conv_bn(keys[2], 1, 1, 1792, 192)
    p['w1b'], p['s1b'], p['sh1b'] = make_conv_bn(keys[3], 1, 3, 192, 192)
    p['w1c'], p['s1c'], p['sh1c'] = make_conv_bn(keys[4], 3, 1, 192, 192)
    p['w2'] = jax.random.normal(keys[5], (1, 1, 384, 1792), jnp.float32) / jnp.sqrt(384.0)
    p['b2'] = 0.1 * jax.random.normal(keys[6], (1792,), jnp.float32)

    scale, noReLU = 0.2, False

    fwd = jax.jit(lambda xx, pp: block8_pallas(xx, pp, scale, noReLU))
    out = jax.block_until_ready(fwd(x, p))
    ref = jax.block_until_ready(block8_ref(x, p, scale, noReLU))

    # bf16 operands with f32 accumulation: loosen tolerance vs the f32 reference.
    np.testing.assert_allclose(np.asarray(out), np.asarray(ref), rtol=3e-2, atol=3e-2)

    print("KERNEL_OK")
</pallas_src>

<mosaic_0001>
module attributes {stable_mosaic.version = 11 : i64} {
  func.func @_block8_kernel(%arg0: i32, %arg1: memref<1x64x1792xbf16, #tpu.memory_space<vmem>>, %arg2: memref<4x64x64xbf16, #tpu.memory_space<vmem>>, %arg3: memref<1792x192xbf16, #tpu.memory_space<vmem>>, %arg4: memref<1x192xf32, #tpu.memory_space<vmem>>, %arg5: memref<1x192xf32, #tpu.memory_space<vmem>>, %arg6: memref<1792x192xbf16, #tpu.memory_space<vmem>>, %arg7: memref<1x192xf32, #tpu.memory_space<vmem>>, %arg8: memref<1x192xf32, #tpu.memory_space<vmem>>, %arg9: memref<3x192x192xbf16, #tpu.memory_space<vmem>>, %arg10: memref<1x192xf32, #tpu.memory_space<vmem>>, %arg11: memref<1x192xf32, #tpu.memory_space<vmem>>, %arg12: memref<3x192x192xbf16, #tpu.memory_space<vmem>>, %arg13: memref<1x192xf32, #tpu.memory_space<vmem>>, %arg14: memref<1x192xf32, #tpu.memory_space<vmem>>, %arg15: memref<192x1792xbf16, #tpu.memory_space<vmem>>, %arg16: memref<192x1792xbf16, #tpu.memory_space<vmem>>, %arg17: memref<1x1792xf32, #tpu.memory_space<vmem>>, %arg18: memref<1x64x1792xf32, #tpu.memory_space<vmem>>) attributes {dimension_semantics = [#tpu.dimension_semantics<parallel>], iteration_bounds = array<i64: 2>, scalar_prefetch = 0 : i64, scratch_operands = 0 : i64, tpu.core_type = #tpu.core_type<tc>, window_params = [{transform_indices = @transform_0, window_bounds = array<i64: 1, 64, 1792>}, {pipeline_mode = #tpu.pipeline_mode<synchronous>, transform_indices = @transform_1, window_bounds = array<i64: 4, 64, 64>}, {pipeline_mode = #tpu.pipeline_mode<synchronous>, transform_indices = @transform_2, window_bounds = array<i64: 1792, 192>}, {pipeline_mode = #tpu.pipeline_mode<synchronous>, transform_indices = @transform_3, window_bounds = array<i64: 1, 192>}, {pipeline_mode = #tpu.pipeline_mode<synchronous>, transform_indices = @transform_4, window_bounds = array<i64: 1, 192>}, {pipeline_mode = #tpu.pipeline_mode<synchronous>, transform_indices = @transform_5, window_bounds = array<i64: 1792, 192>}, {pipeline_mode = #tpu.pipeline_mode<synchronous>, transform_indices = @transform_6, window_bounds = array<i64: 1, 192>}, {pipeline_mode = #tpu.pipeline_mode<synchronous>, transform_indices = @transform_7, window_bounds = array<i64: 1, 192>}, {pipeline_mode = #tpu.pipeline_mode<synchronous>, transform_indices = @transform_8, window_bounds = array<i64: 3, 192, 192>}, {pipeline_mode = #tpu.pipeline_mode<synchronous>, transform_indices = @transform_9, window_bounds = array<i64: 1, 192>}, {pipeline_mode = #tpu.pipeline_mode<synchronous>, transform_indices = @transform_10, window_bounds = array<i64: 1, 192>}, {pipeline_mode = #tpu.pipeline_mode<synchronous>, transform_indices = @transform_11, window_bounds = array<i64: 3, 192, 192>}, {pipeline_mode = #tpu.pipeline_mode<synchronous>, transform_indices = @transform_12, window_bounds = array<i64: 1, 192>}, {pipeline_mode = #tpu.pipeline_mode<synchronous>, transform_indices = @transform_13, window_bounds = array<i64: 1, 192>}, {pipeline_mode = #tpu.pipeline_mode<synchronous>, transform_indices = @transform_14, window_bounds = array<i64: 192, 1792>}, {pipeline_mode = #tpu.pipeline_mode<synchronous>, transform_indices = @transform_15, window_bounds = array<i64: 192, 1792>}, {pipeline_mode = #tpu.pipeline_mode<synchronous>, transform_indices = @transform_16, window_bounds = array<i64: 1, 1792>}, {transform_indices = @transform_17, window_bounds = array<i64: 1, 64, 1792>}]} {
    %c0 = arith.constant 0 : index
    %c0_0 = arith.constant 0 : index
    %c0_1 = arith.constant 0 : index
    %0 = vector.load %arg1[%c0, %c0_0, %c0_1] : memref<1x64x1792xbf16, #tpu.memory_space<vmem>>, vector<1x64x1792xbf16>
    %1 = vector.shape_cast %0 : vector<1x64x1792xbf16> to vector<64x1792xbf16>
    %c0_2 = arith.constant 0 : index
    %c0_3 = arith.constant 0 : index
    %2 = vector.load %arg3[%c0_2, %c0_3] : memref<1792x192xbf16, #tpu.memory_space<vmem>>, vector<1792x192xbf16>
    %c0_4 = arith.constant 0 : index
    %c0_5 = arith.constant 0 : index
    %3 = vector.load %arg4[%c0_4, %c0_5] : memref<1x192xf32, #tpu.memory_space<vmem>>, vector<1x192xf32>
    %c0_6 = arith.constant 0 : index
    %c0_7 = arith.constant 0 : index
    %4 = vector.load %arg5[%c0_6, %c0_7] : memref<1x192xf32, #tpu.memory_space<vmem>>, vector<1x192xf32>
    %cst = arith.constant dense<0.000000e+00> : vector<64x192xf32>
    %5 = tpu.matmul %1, %2, %cst {dimension_numbers = #tpu.dot_dimension_numbers<[1], [0], [0], [1], [0, 0, 1, 1], [], []>} : vector<64x1792xbf16>, vector<1792x192xbf16>, vector<64x192xf32> -> vector<64x192xf32>
    %6 = vector.broadcast %3 : vector<1x192xf32> to vector<64x192xf32>
    %7 = arith.mulf %5, %6 : vector<64x192xf32>
    %8 = vector.broadcast %4 : vector<1x192xf32> to vector<64x192xf32>
    %9 = arith.addf %7, %8 : vector<64x192xf32>
    %cst_8 = arith.constant 0.000000e+00 : f32
    %10 = vector.broadcast %cst_8 : f32 to vector<64x192xf32>
    %11 = arith.maximumf %9, %10 : vector<64x192xf32>
    %c0_9 = arith.constant 0 : index
    %c0_10 = arith.constant 0 : index
    %12 = vector.load %arg6[%c0_9, %c0_10] : memref<1792x192xbf16, #tpu.memory_space<vmem>>, vector<1792x192xbf16>
    %c0_11 = arith.constant 0 : index
    %c0_12 = arith.constant 0 : index
    %13 = vector.load %arg7[%c0_11, %c0_12] : memref<1x192xf32, #tpu.memory_space<vmem>>, vector<1x192xf32>
    %c0_13 = arith.constant 0 : index
    %c0_14 = arith.constant 0 : index
    %14 = vector.load %arg8[%c0_13, %c0_14] : memref<1x192xf32, #tpu.memory_space<vmem>>, vector<1x192xf32>
    %cst_15 = arith.constant dense<0.000000e+00> : vector<64x192xf32>
    %15 = tpu.matmul %1, %12, %cst_15 {dimension_numbers = #tpu.dot_dimension_numbers<[1], [0], [0], [1], [0, 0, 1, 1], [], []>} : vector<64x1792xbf16>, vector<1792x192xbf16>, vector<64x192xf32> -> vector<64x192xf32>
    %16 = vector.broadcast %13 : vector<1x192xf32> to vector<64x192xf32>
    %17 = arith.mulf %15, %16 : vector<64x192xf32>
    %18 = vector.broadcast %14 : vector<1x192xf32> to vector<64x192xf32>
    %19 = arith.addf %17, %18 : vector<64x192xf32>
    %cst_16 = arith.constant 0.000000e+00 : f32
    %20 = vector.broadcast %cst_16 : f32 to vector<64x192xf32>
    %21 = arith.maximumf %19, %20 : vector<64x192xf32>
    %22 = arith.truncf %21 : vector<64x192xf32> to vector<64x192xbf16>
    %c0_17 = arith.constant 0 : index
    %c0_18 = arith.constant 0 : index
    %c0_19 = arith.constant 0 : index
    %23 = vector.load %arg2[%c0_17, %c0_18, %c0_19] : memref<4x64x64xbf16, #tpu.memory_space<vmem>>, vector<1x64x64xbf16>
    %24 = vector.shape_cast %23 : vector<1x64x64xbf16> to vector<64x64xbf16>
    %cst_20 = arith.constant dense<0.000000e+00> : vector<64x192xf32>
    %25 = tpu.matmul %24, %22, %cst_20 {dimension_numbers = #tpu.dot_dimension_numbers<[1], [0], [0], [1], [0, 0, 1, 1], [], []>} : vector<64x64xbf16>, vector<64x192xbf16>, vector<64x192xf32> -> vector<64x192xf32>
    %26 = arith.truncf %25 : vector<64x192xf32> to vector<64x192xbf16>
    %c0_21 = arith.constant 0 : index
    %c0_22 = arith.constant 0 : index
    %c0_23 = arith.constant 0 : index
    %27 = vector.load %arg9[%c0_21, %c0_22, %c0_23] : memref<3x192x192xbf16, #tpu.memory_space<vmem>>, vector<1x192x192xbf16>
    %28 = vector.shape_cast %27 : vector<1x192x192xbf16> to vector<192x192xbf16>
    %cst_24 = arith.constant dense<0.000000e+00> : vector<64x192xf32>
    %29 = tpu.matmul %26, %28, %cst_24 {dimension_numbers = #tpu.dot_dimension_numbers<[1], [0], [0], [1], [0, 0, 1, 1], [], []>} : vector<64x192xbf16>, vector<192x192xbf16>, vector<64x192xf32> -> vector<64x192xf32>
    %c1 = arith.constant 1 : index
    %c0_25 = arith.constant 0 : index
    %c0_26 = arith.constant 0 : index
    %30 = vector.load %arg9[%c1, %c0_25, %c0_26] : memref<3x192x192xbf16, #tpu.memory_space<vmem>>, vector<1x192x192xbf16>
    %31 = vector.shape_cast %30 : vector<1x192x192xbf16> to vector<192x192xbf16>
    %cst_27 = arith.constant dense<0.000000e+00> : vector<64x192xf32>
    %32 = tpu.matmul %22, %31, %cst_27 {dimension_numbers = #tpu.dot_dimension_numbers<[1], [0], [0], [1], [0, 0, 1, 1], [], []>} : vector<64x192xbf16>, vector<192x192xbf16>, vector<64x192xf32> -> vector<64x192xf32>
    %33 = arith.addf %29, %32 : vector<64x192xf32>
    %c1_28 = arith.constant 1 : index
    %c0_29 = arith.constant 0 : index
    %c0_30 = arith.constant 0 : index
    %34 = vector.load %arg2[%c1_28, %c0_29, %c0_30] : memref<4x64x64xbf16, #tpu.memory_space<vmem>>, vector<1x64x64xbf16>
    %35 = vector.shape_cast %34 : vector<1x64x64xbf16> to vector<64x64xbf16>
    %cst_31 = arith.constant dense<0.000000e+00> : vector<64x192xf32>
    %36 = tpu.matmul %35, %22, %cst_31 {dimension_numbers = #tpu.dot_dimension_numbers<[1], [0], [0], [1], [0, 0, 1, 1], [], []>} : vector<64x64xbf16>, vector<64x192xbf16>, vector<64x192xf32> -> vector<64x192xf32>
    %37 = arith.truncf %36 : vector<64x192xf32> to vector<64x192xbf16>
    %c2 = arith.constant 2 : index
    %c0_32 = arith.constant 0 : index
    %c0_33 = arith.constant 0 : index
    %38 = vector.load %arg9[%c2, %c0_32, %c0_33] : memref<3x192x192xbf16, #tpu.memory_space<vmem>>, vector<1x192x192xbf16>
    %39 = vector.shape_cast %38 : vector<1x192x192xbf16> to vector<192x192xbf16>
    %cst_34 = arith.constant dense<0.000000e+00> : vector<64x192xf32>
    %40 = tpu.matmul %37, %39, %cst_34 {dimension_numbers = #tpu.dot_dimension_numbers<[1], [0], [0], [1], [0, 0, 1, 1], [], []>} : vector<64x192xbf16>, vector<192x192xbf16>, vector<64x192xf32> -> vector<64x192xf32>
    %41 = arith.addf %33, %40 : vector<64x192xf32>
    %c0_35 = arith.constant 0 : index
    %c0_36 = arith.constant 0 : index
    %42 = vector.load %arg10[%c0_35, %c0_36] : memref<1x192xf32, #tpu.memory_space<vmem>>, vector<1x192xf32>
    %43 = vector.broadcast %42 : vector<1x192xf32> to vector<64x192xf32>
    %44 = arith.mulf %41, %43 : vector<64x192xf32>
    %c0_37 = arith.constant 0 : index
    %c0_38 = arith.constant 0 : index
    %45 = vector.load %arg11[%c0_37, %c0_38] : memref<1x192xf32, #tpu.memory_space<vmem>>, vector<1x192xf32>
    %46 = vector.broadcast %45 : vector<1x192xf32> to vector<64x192xf32>
    %47 = arith.addf %44, %46 : vector<64x192xf32>
    %cst_39 = arith.constant 0.000000e+00 : f32
    %48 = vector.broadcast %cst_39 : f32 to vector<64x192xf32>
    %49 = arith.maximumf %47, %48 : vector<64x192xf32>
    %50 = arith.truncf %49 : vector<64x192xf32> to vector<64x192xbf16>
    %c2_40 = arith.constant 2 : index
    %c0_41 = arith.constant 0 : index
    %c0_42 = arith.constant 0 : index
    %51 = vector.load %arg2[%c2_40, %c0_41, %c0_42] : memref<4x64x64xbf16, #tpu.memory_space<vmem>>, vector<1x64x64xbf16>
    %52 = vector.shape_cast %51 : vector<1x64x64xbf16> to vector<64x64xbf16>
    %cst_43 = arith.constant dense<0.000000e+00> : vector<64x192xf32>
    %53 = tpu.matmul %52, %50, %cst_43 {dimension_numbers = #tpu.dot_dimension_numbers<[1], [0], [0], [1], [0, 0, 1, 1], [], []>} : vector<64x64xbf16>, vector<64x192xbf16>, vector<64x192xf32> -> vector<64x192xf32>
    %54 = arith.truncf %53 : vector<64x192xf32> to vector<64x192xbf16>
    %c0_44 = arith.constant 0 : index
    %c0_45 = arith.constant 0 : index
    %c0_46 = arith.constant 0 : index
    %55 = vector.load %arg12[%c0_44, %c0_45, %c0_46] : memref<3x192x192xbf16, #tpu.memory_space<vmem>>, vector<1x192x192xbf16>
    %56 = vector.shape_cast %55 : vector<1x192x192xbf16> to vector<192x192xbf16>
    %cst_47 = arith.constant dense<0.000000e+00> : vector<64x192xf32>
    %57 = tpu.matmul %54, %56, %cst_47 {dimension_numbers = #tpu.dot_dimension_numbers<[1], [0], [0], [1], [0, 0, 1, 1], [], []>} : vector<64x192xbf16>, vector<192x192xbf16>, vector<64x192xf32> -> vector<64x192xf32>
    %c1_48 = arith.constant 1 : index
    %c0_49 = arith.constant 0 : index
    %c0_50 = arith.constant 0 : index
    %58 = vector.load %arg12[%c1_48, %c0_49, %c0_50] : memref<3x192x192xbf16, #tpu.memory_space<vmem>>, vector<1x192x192xbf16>
    %59 = vector.shape_cast %58 : vector<1x192x192xbf16> to vector<192x192xbf16>
    %cst_51 = arith.constant dense<0.000000e+00> : vector<64x192xf32>
    %60 = tpu.matmul %50, %59, %cst_51 {dimension_numbers = #tpu.dot_dimension_numbers<[1], [0], [0], [1], [0, 0, 1, 1], [], []>} : vector<64x192xbf16>, vector<192x192xbf16>, vector<64x192xf32> -> vector<64x192xf32>
    %61 = arith.addf %57, %60 : vector<64x192xf32>
    %c3 = arith.constant 3 : index
    %c0_52 = arith.constant 0 : index
    %c0_53 = arith.constant 0 : index
    %62 = vector.load %arg2[%c3, %c0_52, %c0_53] : memref<4x64x64xbf16, #tpu.memory_space<vmem>>, vector<1x64x64xbf16>
    %63 = vector.shape_cast %62 : vector<1x64x64xbf16> to vector<64x64xbf16>
    %cst_54 = arith.constant dense<0.000000e+00> : vector<64x192xf32>
    %64 = tpu.matmul %63, %50, %cst_54 {dimension_numbers = #tpu.dot_dimension_numbers<[1], [0], [0], [1], [0, 0, 1, 1], [], []>} : vector<64x64xbf16>, vector<64x192xbf16>, vector<64x192xf32> -> vector<64x192xf32>
    %65 = arith.truncf %64 : vector<64x192xf32> to vector<64x192xbf16>
    %c2_55 = arith.constant 2 : index
    %c0_56 = arith.constant 0 : index
    %c0_57 = arith.constant 0 : index
    %66 = vector.load %arg12[%c2_55, %c0_56, %c0_57] : memref<3x192x192xbf16, #tpu.memory_space<vmem>>, vector<1x192x192xbf16>
    %67 = vector.shape_cast %66 : vector<1x192x192xbf16> to vector<192x192xbf16>
    %cst_58 = arith.constant dense<0.000000e+00> : vector<64x192xf32>
    %68 = tpu.matmul %65, %67, %cst_58 {dimension_numbers = #tpu.dot_dimension_numbers<[1], [0], [0], [1], [0, 0, 1, 1], [], []>} : vector<64x192xbf16>, vector<192x192xbf16>, vector<64x192xf32> -> vector<64x192xf32>
    %69 = arith.addf %61, %68 : vector<64x192xf32>
    %c0_59 = arith.constant 0 : index
    %c0_60 = arith.constant 0 : index
    %70 = vector.load %arg13[%c0_59, %c0_60] : memref<1x192xf32, #tpu.memory_space<vmem>>, vector<1x192xf32>
    %71 = vector.broadcast %70 : vector<1x192xf32> to vector<64x192xf32>
    %72 = arith.mulf %69, %71 : vector<64x192xf32>
    %c0_61 = arith.constant 0 : index
    %c0_62 = arith.constant 0 : index
    %73 = vector.load %arg14[%c0_61, %c0_62] : memref<1x192xf32, #tpu.memory_space<vmem>>, vector<1x192xf32>
    %74 = vector.broadcast %73 : vector<1x192xf32> to vector<64x192xf32>
    %75 = arith.addf %72, %74 : vector<64x192xf32>
    %cst_63 = arith.constant 0.000000e+00 : f32
    %76 = vector.broadcast %cst_63 : f32 to vector<64x192xf32>
    %77 = arith.maximumf %75, %76 : vector<64x192xf32>
    %78 = arith.truncf %11 : vector<64x192xf32> to vector<64x192xbf16>
    %c0_64 = arith.constant 0 : index
    %c0_65 = arith.constant 0 : index
    %79 = vector.load %arg15[%c0_64, %c0_65] : memref<192x1792xbf16, #tpu.memory_space<vmem>>, vector<192x1792xbf16>
    %cst_66 = arith.constant dense<0.000000e+00> : vector<64x1792xf32>
    %80 = tpu.matmul %78, %79, %cst_66 {dimension_numbers = #tpu.dot_dimension_numbers<[1], [0], [0], [1], [0, 0, 1, 1], [], []>} : vector<64x192xbf16>, vector<192x1792xbf16>, vector<64x1792xf32> -> vector<64x1792xf32>
    %81 = arith.truncf %77 : vector<64x192xf32> to vector<64x192xbf16>
    %c0_67 = arith.constant 0 : index
    %c0_68 = arith.constant 0 : index
    %82 = vector.load %arg16[%c0_67, %c0_68] : memref<192x1792xbf16, #tpu.memory_space<vmem>>, vector<192x1792xbf16>
    %cst_69 = arith.constant dense<0.000000e+00> : vector<64x1792xf32>
    %83 = tpu.matmul %81, %82, %cst_69 {dimension_numbers = #tpu.dot_dimension_numbers<[1], [0], [0], [1], [0, 0, 1, 1], [], []>} : vector<64x192xbf16>, vector<192x1792xbf16>, vector<64x1792xf32> -> vector<64x1792xf32>
    %84 = arith.addf %80, %83 : vector<64x1792xf32>
    %cst_70 = arith.constant 2.000000e-01 : f32
    %85 = vector.broadcast %cst_70 : f32 to vector<64x1792xf32>
    %86 = arith.mulf %84, %85 : vector<64x1792xf32>
    %c0_71 = arith.constant 0 : index
    %c0_72 = arith.constant 0 : index
    %87 = vector.load %arg17[%c0_71, %c0_72] : memref<1x1792xf32, #tpu.memory_space<vmem>>, vector<1x1792xf32>
    %88 = vector.broadcast %87 : vector<1x1792xf32> to vector<64x1792xf32>
    %89 = arith.addf %86, %88 : vector<64x1792xf32>
    %90 = arith.extf %1 : vector<64x1792xbf16> to vector<64x1792xf32>
    %91 = arith.addf %89, %90 : vector<64x1792xf32>
    %cst_73 = arith.constant 0.000000e+00 : f32
    %92 = vector.broadcast %cst_73 : f32 to vector<64x1792xf32>
    %93 = arith.maximumf %91, %92 : vector<64x1792xf32>
    %c0_74 = arith.constant 0 : index
    %c0_75 = arith.constant 0 : index
    %c0_76 = arith.constant 0 : index
    %94 = vector.load %arg18[%c0_74, %c0_75, %c0_76] : memref<1x64x1792xf32, #tpu.memory_space<vmem>>, vector<1x64x1792xf32>
    %95 = vector.shape_cast %94 : vector<1x64x1792xf32> to vector<64x1792xf32>
    %96 = vector.shape_cast %93 : vector<64x1792xf32> to vector<1x64x1792xf32>
    tpu.vector_store %arg18[%c0_74, %c0_75, %c0_76], %96 {strides = array<i32>} : memref<1x64x1792xf32, #tpu.memory_space<vmem>>, vector<1x64x1792xf32>,
    return
  }
  func.func @transform_0(%arg0: i32) -> (i32, i32, i32) {
    %c0_i32 = arith.constant 0 : i32
    %c0_i32_0 = arith.constant 0 : i32
    %c0_i32_1 = arith.constant 0 : i32
    return %arg0, %c0_i32, %c0_i32_0 : i32, i32, i32
  }
  func.func @transform_1(%arg0: i32) -> (i32, i32, i32) {
    %c0_i32 = arith.constant 0 : i32
    %c0_i32_0 = arith.constant 0 : i32
    %c0_i32_1 = arith.constant 0 : i32
    %c0_i32_2 = arith.constant 0 : i32
    return %c0_i32, %c0_i32_0, %c0_i32_1 : i32, i32, i32
  }
  func.func @transform_2(%arg0: i32) -> (i32, i32) {
    %c0_i32 = arith.constant 0 : i32
    %c0_i32_0 = arith.constant 0 : i32
    %c0_i32_1 = arith.constant 0 : i32
    return %c0_i32, %c0_i32_0 : i32, i32
  }
  func.func @transform_3(%arg0: i32) -> (i32, i32) {
    %c0_i32 = arith.constant 0 : i32
    %c0_i32_0 = arith.constant 0 : i32
    %c0_i32_1 = arith.constant 0 : i32
    return %c0_i32, %c0_i32_0 : i32, i32
  }
  func.func @transform_4(%arg0: i32) -> (i32, i32) {
    %c0_i32 = arith.constant 0 : i32
    %c0_i32_0 = arith.constant 0 : i32
    %c0_i32_1 = arith.constant 0 : i32
    return %c0_i32, %c0_i32_0 : i32, i32
  }
  func.func @transform_5(%arg0: i32) -> (i32, i32) {
    %c0_i32 = arith.constant 0 : i32
    %c0_i32_0 = arith.constant 0 : i32
    %c0_i32_1 = arith.constant 0 : i32
    return %c0_i32, %c0_i32_0 : i32, i32
  }
  func.func @transform_6(%arg0: i32) -> (i32, i32) {
    %c0_i32 = arith.constant 0 : i32
    %c0_i32_0 = arith.constant 0 : i32
    %c0_i32_1 = arith.constant 0 : i32
    return %c0_i32, %c0_i32_0 : i32, i32
  }
  func.func @transform_7(%arg0: i32) -> (i32, i32) {
    %c0_i32 = arith.constant 0 : i32
    %c0_i32_0 = arith.constant 0 : i32
    %c0_i32_1 = arith.constant 0 : i32
    return %c0_i32, %c0_i32_0 : i32, i32
  }
  func.func @transform_8(%arg0: i32) -> (i32, i32, i32) {
    %c0_i32 = arith.constant 0 : i32
    %c0_i32_0 = arith.constant 0 : i32
    %c0_i32_1 = arith.constant 0 : i32
    %c0_i32_2 = arith.constant 0 : i32
    return %c0_i32, %c0_i32_0, %c0_i32_1 : i32, i32, i32
  }
  func.func @transform_9(%arg0: i32) -> (i32, i32) {
    %c0_i32 = arith.constant 0 : i32
    %c0_i32_0 = arith.constant 0 : i32
    %c0_i32_1 = arith.constant 0 : i32
    return %c0_i32, %c0_i32_0 : i32, i32
  }
  func.func @transform_10(%arg0: i32) -> (i32, i32) {
    %c0_i32 = arith.constant 0 : i32
    %c0_i32_0 = arith.constant 0 : i32
    %c0_i32_1 = arith.constant 0 : i32
    return %c0_i32, %c0_i32_0 : i32, i32
  }
  func.func @transform_11(%arg0: i32) -> (i32, i32, i32) {
    %c0_i32 = arith.constant 0 : i32
    %c0_i32_0 = arith.constant 0 : i32
    %c0_i32_1 = arith.constant 0 : i32
    %c0_i32_2 = arith.constant 0 : i32
    return %c0_i32, %c0_i32_0, %c0_i32_1 : i32, i32, i32
  }
  func.func @transform_12(%arg0: i32) -> (i32, i32) {
    %c0_i32 = arith.constant 0 : i32
    %c0_i32_0 = arith.constant 0 : i32
    %c0_i32_1 = arith.constant 0 : i32
    return %c0_i32, %c0_i32_0 : i32, i32
  }
  func.func @transform_13(%arg0: i32) -> (i32, i32) {
    %c0_i32 = arith.constant 0 : i32
    %c0_i32_0 = arith.constant 0 : i32
    %c0_i32_1 = arith.constant 0 : i32
    return %c0_i32, %c0_i32_0 : i32, i32
  }
  func.func @transform_14(%arg0: i32) -> (i32, i32) {
    %c0_i32 = arith.constant 0 : i32
    %c0_i32_0 = arith.constant 0 : i32
    %c0_i32_1 = arith.constant 0 : i32
    return %c0_i32, %c0_i32_0 : i32, i32
  }
  func.func @transform_15(%arg0: i32) -> (i32, i32) {
    %c0_i32 = arith.constant 0 : i32
    %c0_i32_0 = arith.constant 0 : i32
    %c0_i32_1 = arith.constant 0 : i32
    return %c0_i32, %c0_i32_0 : i32, i32
  }
  func.func @transform_16(%arg0: i32) -> (i32, i32) {
    %c0_i32 = arith.constant 0 : i32
    %c0_i32_0 = arith.constant 0 : i32
    %c0_i32_1 = arith.constant 0 : i32
    return %c0_i32, %c0_i32_0 : i32, i32
  }
  func.func @transform_17(%arg0: i32) -> (i32, i32, i32) {
    %c0_i32 = arith.constant 0 : i32
    %c0_i32_0 = arith.constant 0 : i32
    %c0_i32_1 = arith.constant 0 : i32
    return %arg0, %c0_i32, %c0_i32_0 : i32, i32, i32
  }
}

</mosaic_0001>

<llo_original>
// kernel: _lambda_.1
$region0: #{_lambda_.1}
  #allocation0 [shape = 'u32[]', space=smem, size = 0x4, offset = 0x4, fixed_abs, tag = 'smem constant byte address 0x4 - core index']
  #allocation1 [shape = 'u32[144,128]{1,0:T(1,128)}', space=vmem, size = 0x12000, scoped, tag = 'internal scratch']
  %s0 = inlined_call_operand.vmem [shape: bf16[2,64,1792], index: 0, kind: input, shape index: {}]
  %s1 = inlined_call_operand.vmem [shape: bf16[4,64,64], index: 1, kind: input, shape index: {}]
  %s2 = inlined_call_operand.vmem [shape: bf16[1792,192], index: 2, kind: input, shape index: {}]
  %s3 = inlined_call_operand.vmem [shape: f32[1,192], index: 3, kind: input, shape index: {}]
  %s4 = inlined_call_operand.vmem [shape: f32[1,192], index: 4, kind: input, shape index: {}]
  %s5 = inlined_call_operand.vmem [shape: bf16[1792,192], index: 5, kind: input, shape index: {}]
  %s6 = inlined_call_operand.vmem [shape: f32[1,192], index: 6, kind: input, shape index: {}]
  %s7 = inlined_call_operand.vmem [shape: f32[1,192], index: 7, kind: input, shape index: {}]
  %s8 = inlined_call_operand.vmem [shape: bf16[3,192,192], index: 8, kind: input, shape index: {}]
  %s9 = inlined_call_operand.vmem [shape: f32[1,192], index: 9, kind: input, shape index: {}]
  %s10 = inlined_call_operand.vmem [shape: f32[1,192], index: 10, kind: input, shape index: {}]
  %s11 = inlined_call_operand.vmem [shape: bf16[3,192,192], index: 11, kind: input, shape index: {}]
  %s12 = inlined_call_operand.vmem [shape: f32[1,192], index: 12, kind: input, shape index: {}]
  %s13 = inlined_call_operand.vmem [shape: f32[1,192], index: 13, kind: input, shape index: {}]
  %s14 = inlined_call_operand.vmem [shape: bf16[192,1792], index: 14, kind: input, shape index: {}]
  %s15 = inlined_call_operand.vmem [shape: bf16[192,1792], index: 15, kind: input, shape index: {}]
  %s16 = inlined_call_operand.vmem [shape: f32[1,1792], index: 16, kind: input, shape index: {}]
  %s17 = inlined_call_operand.hbm [shape: f32[2,64,1792], index: 17, kind: output, shape index: {}]
  %s18 = sld [smem:[#allocation0]]
  $region101: #{_lambda_.1} parent=0
    _
  %s20 = ssub.s32 1, %s18
  %s21 = scalar_select 0, %s20, %s18
  $region1: #{_lambda_.1} parent=0
    #allocation2 [shape = 'u8[917504]{0}', space=vmem, size = 0xe0000, scoped, tag = 'output window, operand 0']
    #allocation3 [shape = 's32[2]{0}', space=sflag, size = 0x8, scoped, tag = 'scoped memory for _lambda_.1']
    %22 = vsyncpa [#allocation3], 0
    %s23 = scalar_lea.sflag [#allocation3], 1
    %24 = vsyncpa %s23, 0
    loop: start=0, step=1, limit=4
    $region2: #{_lambda_.1} parent=1 // loop_pre_header
      _
    $region3: #{_lambda_.1} parent=1 // loop_header
      %s26 = sphi 0, %s30
      %p27 = scmp.ge.s32.totalorder %s26, 4
      %s36 = sphi 0, %s38
      %s39 = sphi 0, %s36
      %s40 = sphi 0, %s39
      %s56 = sphi 0, %s40
      %s60 = sphi 0, %s60
      %s62 = sphi 0, %s60
      %s63 = sphi 0, %s62
      %s77 = sphi 0, %s63
      %s81 = sphi 0, %s81
      %s83 = sphi 0, %s81
      %s84 = sphi 0, %s83
      %s98 = sphi 0, %s84
      %s102 = sphi 0, %s102
      %s104 = sphi 0, %s102
      %s105 = sphi 0, %s104
      %s119 = sphi 0, %s105
      %s123 = sphi 0, %s123
      %s125 = sphi 0, %s123
      %s126 = sphi 0, %s125
      %s140 = sphi 0, %s126
      %s144 = sphi 0, %s144
      %s146 = sphi 0, %s144
      %s147 = sphi 0, %s146
      %s161 = sphi 0, %s147
      %s165 = sphi 0, %s165
      %s167 = sphi 0, %s165
      %s168 = sphi 0, %s167
      %s182 = sphi 0, %s168
      %s186 = sphi 0, %s186
      %s188 = sphi 0, %s186
      %s189 = sphi 0, %s188
      %s203 = sphi 0, %s189
      %s207 = sphi 0, %s207
      %s209 = sphi 0, %s207
      %s210 = sphi 0, %s209
      %s224 = sphi 0, %s210
      %s228 = sphi 0, %s228
      %s230 = sphi 0, %s228
      %s231 = sphi 0, %s230
      %s245 = sphi 0, %s231
      %s249 = sphi 0, %s249
      %s251 = sphi 0, %s249
      %s252 = sphi 0, %s251
      %s266 = sphi 0, %s252
      %s270 = sphi 0, %s270
      %s272 = sphi 0, %s270
      %s273 = sphi 0, %s272
      %s287 = sphi 0, %s273
      %s291 = sphi 0, %s291
      %s293 = sphi 0, %s291
      %s294 = sphi 0, %s293
      %s308 = sphi 0, %s294
      %s312 = sphi 0, %s312
      %s314 = sphi 0, %s312
      %s315 = sphi 0, %s314
      %s329 = sphi 0, %s315
      %s333 = sphi 0, %s333
      %s335 = sphi 0, %s333
      %s336 = sphi 0, %s335
      %s350 = sphi 0, %s336
      %s354 = sphi 0, %s354
      %s356 = sphi 0, %s354
      %s357 = sphi 0, %s356
      %s371 = sphi 0, %s357
      %s375 = sphi 0, %s375
      %s377 = sphi 0, %s375
      %s378 = sphi 0, %s377
      %s392 = sphi 0, %s378
      %s398 = sphi 0, %s400
      %s401 = sphi 0, %s398
      %s402 = sphi 0, %s401
      %s418 = sphi 0, %s402
    $region4: #{_lambda_.1} parent=1 // loop_header_branch
      %29 = sbr.rel (%p27) target = $region8
    $region5: #{_lambda_.1} parent=1 // loop_body
      %s31 = ssub.s32 %s26, 1
      %s32 = ssub.s32 %s26, 2
      %s33 = sadd.s32 %s26, 1
      %s34 = ssub.s32 %s26, %s33
      %p35 = scmp.eq.s32.totalorder %s34, 0
      %s37 = sadd.s32 %s36, 1
      %s38 = scalar_select %p35, %s36, %s37
      %p41 = pneg %p35
      %p42 = scmp.eq.s32.totalorder %s26, 1
      %p43 = por %p41, %p42
      %p44 = scmp.ne.s32.totalorder %s36, %s39
      %p45 = scmp.eq.s32.totalorder %s26, 0
      %p46 = por %p44, %p45
      %p47 = scmp.ne.s32.totalorder %s36, %s39
      %p48 = scmp.eq.s32.totalorder %s31, 1
      %p49 = por %p47, %p48
      %p50 = scmp.ne.s32.totalorder %s39, %s40
      %p51 = scmp.eq.s32.totalorder %s31, 0
      %p52 = por %p50, %p51
      %p53 = scmp.ne.s32.totalorder %s39, %s40
      %p54 = scmp.eq.s32.totalorder %s32, 1
      %p55 = por %p53, %p54
      %p57 = scmp.ne.s32.totalorder %s40, %s56
      %p58 = scmp.eq.s32.totalorder %s32, 0
      %p59 = por %p57, %p58
      %s61 = sadd.s32 %s60, 1
      %p64 = scmp.eq.s32.totalorder %s26, 1
      %p65 = scmp.ne.s32.totalorder %s60, %s62
      %p66 = scmp.eq.s32.totalorder %s26, 0
      %p67 = por %p65, %p66
      %p68 = scmp.ne.s32.totalorder %s60, %s62
      %p69 = scmp.eq.s32.totalorder %s31, 1
      %p70 = por %p68, %p69
      %p71 = scmp.ne.s32.totalorder %s62, %s63
      %p72 = scmp.eq.s32.totalorder %s31, 0
      %p73 = por %p71, %p72
      %p74 = scmp.ne.s32.totalorder %s62, %s63
      %p75 = scmp.eq.s32.totalorder %s32, 1
      %p76 = por %p74, %p75
      %p78 = scmp.ne.s32.totalorder %s63, %s77
      %p79 = scmp.eq.s32.totalorder %s32, 0
      %p80 = por %p78, %p79
      %s82 = sadd.s32 %s81, 1
      %p85 = scmp.eq.s32.totalorder %s26, 1
      %p86 = scmp.ne.s32.totalorder %s81, %s83
      %p87 = scmp.eq.s32.totalorder %s26, 0
      %p88 = por %p86, %p87
      %p89 = scmp.ne.s32.totalorder %s81, %s83
      %p90 = scmp.eq.s32.totalorder %s31, 1
      %p91 = por %p89, %p90
      %p92 = scmp.ne.s32.totalorder %s83, %s84
      %p93 = scmp.eq.s32.totalorder %s31, 0
      %p94 = por %p92, %p93
      %p95 = scmp.ne.s32.totalorder %s83, %s84
      %p96 = scmp.eq.s32.totalorder %s32, 1
      %p97 = por %p95, %p96
      %p99 = scmp.ne.s32.totalorder %s84, %s98
      %p100 = scmp.eq.s32.totalorder %s32, 0
      %p101 = por %p99, %p100
      %s103 = sadd.s32 %s102, 1
      %p106 = scmp.eq.s32.totalorder %s26, 1
      %p107 = scmp.ne.s32.totalorder %s102, %s104
      %p108 = scmp.eq.s32.totalorder %s26, 0
      %p109 = por %p107, %p108
      %p110 = scmp.ne.s32.totalorder %s102, %s104
      %p111 = scmp.eq.s32.totalorder %s31, 1
      %p112 = por %p110, %p111
      %p113 = scmp.ne.s32.totalorder %s104, %s105
      %p114 = scmp.eq.s32.totalorder %s31, 0
      %p115 = por %p113, %p114
      %p116 = scmp.ne.s32.totalorder %s104, %s105
      %p117 = scmp.eq.s32.totalorder %s32, 1
      %p118 = por %p116, %p117
      %p120 = scmp.ne.s32.totalorder %s105, %s119
      %p121 = scmp.eq.s32.totalorder %s32, 0
      %p122 = por %p120, %p121
      %s124 = sadd.s32 %s123, 1
      %p127 = scmp.eq.s32.totalorder %s26, 1
      %p128 = scmp.ne.s32.totalorder %s123, %s125
      %p129 = scmp.eq.s32.totalorder %s26, 0
      %p130 = por %p128, %p129
      %p131 = scmp.ne.s32.totalorder %s123, %s125
      %p132 = scmp.eq.s32.totalorder %s31, 1
      %p133 = por %p131, %p132
      %p134 = scmp.ne.s32.totalorder %s125, %s126
      %p135 = scmp.eq.s32.totalorder %s31, 0
      %p136 = por %p134, %p135
      %p137 = scmp.ne.s32.totalorder %s125, %s126
      %p138 = scmp.eq.s32.totalorder %s32, 1
      %p139 = por %p137, %p138
      %p141 = scmp.ne.s32.totalorder %s126, %s140
      %p142 = scmp.eq.s32.totalorder %s32, 0
      %p143 = por %p141, %p142
      %s145 = sadd.s32 %s144, 1
      %p148 = scmp.eq.s32.totalorder %s26, 1
      %p149 = scmp.ne.s32.totalorder %s144, %s146
      %p150 = scmp.eq.s32.totalorder %s26, 0
      %p151 = por %p149, %p150
      %p152 = scmp.ne.s32.totalorder %s144, %s146
      %p153 = scmp.eq.s32.totalorder %s31, 1
      %p154 = por %p152, %p153
      %p155 = scmp.ne.s32.totalorder %s146, %s147
      %p156 = scmp.eq.s32.totalorder %s31, 0
      %p157 = por %p155, %p156
      %p158 = scmp.ne.s32.totalorder %s146, %s147
      %p159 = scmp.eq.s32.totalorder %s32, 1
      %p160 = por %p158, %p159
      %p162 = scmp.ne.s32.totalorder %s147, %s161
      %p163 = scmp.eq.s32.totalorder %s32, 0
      %p164 = por %p162, %p163
      %s166 = sadd.s32 %s165, 1
      %p169 = scmp.eq.s32.totalorder %s26, 1
      %p170 = scmp.ne.s32.totalorder %s165, %s167
      %p171 = scmp.eq.s32.totalorder %s26, 0
      %p172 = por %p170, %p171
      %p173 = scmp.ne.s32.totalorder %s165, %s167
      %p174 = scmp.eq.s32.totalorder %s31, 1
      %p175 = por %p173, %p174
      %p176 = scmp.ne.s32.totalorder %s167, %s168
      %p177 = scmp.eq.s32.totalorder %s31, 0
      %p178 = por %p176, %p177
      %p179 = scmp.ne.s32.totalorder %s167, %s168
      %p180 = scmp.eq.s32.totalorder %s32, 1
      %p181 = por %p179, %p180
      %p183 = scmp.ne.s32.totalorder %s168, %s182
      %p184 = scmp.eq.s32.totalorder %s32, 0
      %p185 = por %p183, %p184
      %s187 = sadd.s32 %s186, 1
      %p190 = scmp.eq.s32.totalorder %s26, 1
      %p191 = scmp.ne.s32.totalorder %s186, %s188
      %p192 = scmp.eq.s32.totalorder %s26, 0
      %p193 = por %p191, %p192
      %p194 = scmp.ne.s32.totalorder %s186, %s188
      %p195 = scmp.eq.s32.totalorder %s31, 1
      %p196 = por %p194, %p195
      %p197 = scmp.ne.s32.totalorder %s188, %s189
      %p198 = scmp.eq.s32.totalorder %s31, 0
      %p199 = por %p197, %p198
      %p200 = scmp.ne.s32.totalorder %s188, %s189
      %p201 = scmp.eq.s32.totalorder %s32, 1
      %p202 = por %p200, %p201
      %p204 = scmp.ne.s32.totalorder %s189, %s203
      %p205 = scmp.eq.s32.totalorder %s32, 0
      %p206 = por %p204, %p205
      %s208 = sadd.s32 %s207, 1
      %p211 = scmp.eq.s32.totalorder %s26, 1
      %p212 = scmp.ne.s32.totalorder %s207, %s209
      %p213 = scmp.eq.s32.totalorder %s26, 0
      %p214 = por %p212, %p213
      %p215 = scmp.ne.s32.totalorder %s207, %s209
      %p216 = scmp.eq.s32.totalorder %s31, 1
      %p217 = por %p215, %p216
      %p218 = scmp.ne.s32.totalorder %s209, %s210
      %p219 = scmp.eq.s32.totalorder %s31, 0
      %p220 = por %p218, %p219
      %p221 = scmp.ne.s32.totalorder %s209, %s210
      %p222 = scmp.eq.s32.totalorder %s32, 1
      %p223 = por %p221, %p222
      %p225 = scmp.ne.s32.totalorder %s210, %s224
      %p226 = scmp.eq.s32.totalorder %s32, 0
      %p227 = por %p225, %p226
      %s229 = sadd.s32 %s228, 1
      %p232 = scmp.eq.s32.totalorder %s26, 1
      %p233 = scmp.ne.s32.totalorder %s228, %s230
      %p234 = scmp.eq.s32.totalorder %s26, 0
      %p235 = por %p233, %p234
      %p236 = scmp.ne.s32.totalorder %s228, %s230
      %p237 = scmp.eq.s32.totalorder %s31, 1
      %p238 = por %p236, %p237
      %p239 = scmp.ne.s32.totalorder %s230, %s231
      %p240 = scmp.eq.s32.totalorder %s31, 0
      %p241 = por %p239, %p240
      %p242 = scmp.ne.s32.totalorder %s230, %s231
      %p243 = scmp.eq.s32.totalorder %s32, 1
      %p244 = por %p242, %p243
      %p246 = scmp.ne.s32.totalorder %s231, %s245
      %p247 = scmp.eq.s32.totalorder %s32, 0
      %p248 = por %p246, %p247
      %s250 = sadd.s32 %s249, 1
      %p253 = scmp.eq.s32.totalorder %s26, 1
      %p254 = scmp.ne.s32.totalorder %s249, %s251
      %p255 = scmp.eq.s32.totalorder %s26, 0
      %p256 = por %p254, %p255
      %p257 = scmp.ne.s32.totalorder %s249, %s251
      %p258 = scmp.eq.s32.totalorder %s31, 1
      %p259 = por %p257, %p258
      %p260 = scmp.ne.s32.totalorder %s251, %s252
      %p261 = scmp.eq.s32.totalorder %s31, 0
      %p262 = por %p260, %p261
      %p263 = scmp.ne.s32.totalorder %s251, %s252
      %p264 = scmp.eq.s32.totalorder %s32, 1
      %p265 = por %p263, %p264
      %p267 = scmp.ne.s32.totalorder %s252, %s266
      %p268 = scmp.eq.s32.totalorder %s32, 0
      %p269 = por %p267, %p268
      %s271 = sadd.s32 %s270, 1
      %p274 = scmp.eq.s32.totalorder %s26, 1
      %p275 = scmp.ne.s32.totalorder %s270, %s272
      %p276 = scmp.eq.s32.totalorder %s26, 0
      %p277 = por %p275, %p276
      %p278 = scmp.ne.s32.totalorder %s270, %s272
      %p279 = scmp.eq.s32.totalorder %s31, 1
      %p280 = por %p278, %p279
      %p281 = scmp.ne.s32.totalorder %s272, %s273
      %p282 = scmp.eq.s32.totalorder %s31, 0
      %p283 = por %p281, %p282
      %p284 = scmp.ne.s32.totalorder %s272, %s273
      %p285 = scmp.eq.s32.totalorder %s32, 1
      %p286 = por %p284, %p285
      %p288 = scmp.ne.s32.totalorder %s273, %s287
      %p289 = scmp.eq.s32.totalorder %s32, 0
      %p290 = por %p288, %p289
      %s292 = sadd.s32 %s291, 1
      %p295 = scmp.eq.s32.totalorder %s26, 1
      %p296 = scmp.ne.s32.totalorder %s291, %s293
      %p297 = scmp.eq.s32.totalorder %s26, 0
      %p298 = por %p296, %p297
      %p299 = scmp.ne.s32.totalorder %s291, %s293
      %p300 = scmp.eq.s32.totalorder %s31, 1
      %p301 = por %p299, %p300
      %p302 = scmp.ne.s32.totalorder %s293, %s294
      %p303 = scmp.eq.s32.totalorder %s31, 0
      %p304 = por %p302, %p303
      %p305 = scmp.ne.s32.totalorder %s293, %s294
      %p306 = scmp.eq.s32.totalorder %s32, 1
      %p307 = por %p305, %p306
      %p309 = scmp.ne.s32.totalorder %s294, %s308
      %p310 = scmp.eq.s32.totalorder %s32, 0
      %p311 = por %p309, %p310
      %s313 = sadd.s32 %s312, 1
      %p316 = scmp.eq.s32.totalorder %s26, 1
      %p317 = scmp.ne.s32.totalorder %s312, %s314
      %p318 = scmp.eq.s32.totalorder %s26, 0
      %p319 = por %p317, %p318
      %p320 = scmp.ne.s32.totalorder %s312, %s314
      %p321 = scmp.eq.s32.totalorder %s31, 1
      %p322 = por %p320, %p321
      %p323 = scmp.ne.s32.totalorder %s314, %s315
      %p324 = scmp.eq.s32.totalorder %s31, 0
      %p325 = por %p323, %p324
      %p326 = scmp.ne.s32.totalorder %s314, %s315
      %p327 = scmp.eq.s32.totalorder %s32, 1
      %p328 = por %p326, %p327
      %p330 = scmp.ne.s32.totalorder %s315, %s329
      %p331 = scmp.eq.s32.totalorder %s32, 0
      %p332 = por %p330, %p331
      %s334 = sadd.s32 %s333, 1
      %p337 = scmp.eq.s32.totalorder %s26, 1
      %p338 = scmp.ne.s32.totalorder %s333, %s335
      %p339 = scmp.eq.s32.totalorder %s26, 0
      %p340 = por %p338, %p339
      %p341 = scmp.ne.s32.totalorder %s333, %s335
      %p342 = scmp.eq.s32.totalorder %s31, 1
      %p343 = por %p341, %p342
      %p344 = scmp.ne.s32.totalorder %s335, %s336
      %p345 = scmp.eq.s32.totalorder %s31, 0
      %p346 = por %p344, %p345
      %p347 = scmp.ne.s32.totalorder %s335, %s336
      %p348 = scmp.eq.s32.totalorder %s32, 1
      %p349 = por %p347, %p348
      %p351 = scmp.ne.s32.totalorder %s336, %s350
      %p352 = scmp.eq.s32.totalorder %s32, 0
      %p353 = por %p351, %p352
      %s355 = sadd.s32 %s354, 1
      %p358 = scmp.eq.s32.totalorder %s26, 1
      %p359 = scmp.ne.s32.totalorder %s354, %s356
      %p360 = scmp.eq.s32.totalorder %s26, 0
      %p361 = por %p359, %p360
      %p362 = scmp.ne.s32.totalorder %s354, %s356
      %p363 = scmp.eq.s32.totalorder %s31, 1
      %p364 = por %p362, %p363
      %p365 = scmp.ne.s32.totalorder %s356, %s357
      %p366 = scmp.eq.s32.totalorder %s31, 0
      %p367 = por %p365, %p366
      %p368 = scmp.ne.s32.totalorder %s356, %s357
      %p369 = scmp.eq.s32.totalorder %s32, 1
      %p370 = por %p368, %p369
      %p372 = scmp.ne.s32.totalorder %s357, %s371
      %p373 = scmp.eq.s32.totalorder %s32, 0
      %p374 = por %p372, %p373
      %s376 = sadd.s32 %s375, 1
      %p379 = scmp.eq.s32.totalorder %s26, 1
      %p380 = scmp.ne.s32.totalorder %s375, %s377
      %p381 = scmp.eq.s32.totalorder %s26, 0
      %p382 = por %p380, %p381
      %p383 = scmp.ne.s32.totalorder %s375, %s377
      %p384 = scmp.eq.s32.totalorder %s31, 1
      %p385 = por %p383, %p384
      %p386 = scmp.ne.s32.totalorder %s377, %s378
      %p387 = scmp.eq.s32.totalorder %s31, 0
      %p388 = por %p386, %p387
      %p389 = scmp.ne.s32.totalorder %s377, %s378
      %p390 = scmp.eq.s32.totalorder %s32, 1
      %p391 = por %p389, %p390
      %p393 = scmp.ne.s32.totalorder %s378, %s392
      %p394 = scmp.eq.s32.totalorder %s32, 0
      %p395 = por %p393, %p394
      %s396 = ssub.s32 %s26, %s33
      %p397 = scmp.eq.s32.totalorder %s396, 0
      %s399 = sadd.s32 %s398, 1
      %s400 = scalar_select %p397, %s398, %s399
      %p403 = pneg %p397
      %p404 = scmp.eq.s32.totalorder %s26, 1
      %p405 = por %p403, %p404
      %p406 = scmp.ne.s32.totalorder %s398, %s401
      %p407 = scmp.eq.s32.totalorder %s26, 0
      %p408 = por %p406, %p407
      %p409 = scmp.ne.s32.totalorder %s398, %s401
      %p410 = scmp.eq.s32.totalorder %s31, 1
      %p411 = por %p409, %p410
      %p412 = scmp.ne.s32.totalorder %s401, %s402
      %p413 = scmp.eq.s32.totalorder %s31, 0
      %p414 = por %p412, %p413
      %p415 = scmp.ne.s32.totalorder %s401, %s402
      %p416 = scmp.eq.s32.totalorder %s32, 1
      %p417 = por %p415, %p416
      %p419 = scmp.ne.s32.totalorder %s402, %s418
      %p420 = scmp.eq.s32.totalorder %s32, 0
      %p421 = por %p419, %p420
      %p422 = scmp.le.s32.totalorder 1, %s26
      %p423 = scmp.lt.s32.totalorder %s26, 3
      %p424 = pnand %p422, %p423
      %p425 = pneg %p424
      // Predicated region
      $region9: #{_lambda_.1} parent=5 // pred_check
        _
      $region10: #{_lambda_.1} parent=5 // pred_check_branch
        %427 = sbr.rel (%p424) target = $region12
      $region11: #{_lambda_.1} parent=5 // pred_region
        %s428 = ssub.s32 %s26, 1
        // Predicated region
        $region13: #{_lambda_.1} parent=11 // pred_check
          %p429 = pneg %p73
        $region14: #{_lambda_.1} parent=11 // pred_check_branch
          %431 = sbr.rel (%p429) target = $region16
        $region15: #{_lambda_.1} parent=11 // pred_region
          _
        $region16: #{_lambda_.1} parent=11 // pred_fallthru
          _
        // Predicated region
        $region17: #{_lambda_.1} parent=11 // pred_check
          %p432 = pneg %p94
        $region18: #{_lambda_.1} parent=11 // pred_check_branch
          %434 = sbr.rel (%p432) target = $region20
        $region19: #{_lambda_.1} parent=11 // pred_region
          _
        $region20: #{_lambda_.1} parent=11 // pred_fallthru
          _
        // Predicated region
        $region21: #{_lambda_.1} parent=11 // pred_check
          %p435 = pneg %p115
        $region22: #{_lambda_.1} parent=11 // pred_check_branch
          %437 = sbr.rel (%p435) target = $region24
        $region23: #{_lambda_.1} parent=11 // pred_region
          _
        $region24: #{_lambda_.1} parent=11 // pred_fallthru
          _
        // Predicated region
        $region25: #{_lambda_.1} parent=11 // pred_check
          %p438 = pneg %p136
        $region26: #{_lambda_.1} parent=11 // pred_check_branch
          %440 = sbr.rel (%p438) target = $region28
        $region27: #{_lambda_.1} parent=11 // pred_region
          _
        $region28: #{_lambda_.1} parent=11 // pred_fallthru
          _
        // Predicated region
        $region29: #{_lambda_.1} parent=11 // pred_check
          %p441 = pneg %p157
        $region30: #{_lambda_.1} parent=11 // pred_check_branch
          %443 = sbr.rel (%p441) target = $region32
        $region31: #{_lambda_.1} parent=11 // pred_region
          _
        $region32: #{_lambda_.1} parent=11 // pred_fallthru
          _
        // Predicated region
        $region33: #{_lambda_.1} parent=11 // pred_check
          %p444 = pneg %p178
        $region34: #{_lambda_.1} parent=11 // pred_check_branch
          %446 = sbr.rel (%p444) target = $region36
        $region35: #{_lambda_.1} parent=11 // pred_region
          _
        $region36: #{_lambda_.1} parent=11 // pred_fallthru
          _
        // Predicated region
        $region37: #{_lambda_.1} parent=11 // pred_check
          %p447 = pneg %p199
        $region38: #{_lambda_.1} parent=11 // pred_check_branch
          %449 = sbr.rel (%p447) target = $region40
        $region39: #{_lambda_.1} parent=11 // pred_region
          _
        $region40: #{_lambda_.1} parent=11 // pred_fallthru
          _
        // Predicated region
        $region41: #{_lambda_.1} parent=11 // pred_check
          %p450 = pneg %p220
        $region42: #{_lambda_.1} parent=11 // pred_check_branch
          %452 = sbr.rel (%p450) target = $region44
        $region43: #{_lambda_.1} parent=11 // pred_region
          _
        $region44: #{_lambda_.1} parent=11 // pred_fallthru
          _
        // Predicated region
        $region45: #{_lambda_.1} parent=11 // pred_check
          %p453 = pneg %p241
        $region46: #{_lambda_.1} parent=11 // pred_check_branch
          %455 = sbr.rel (%p453) target = $region48
        $region47: #{_lambda_.1} parent=11 // pred_region
          _
        $region48: #{_lambda_.1} parent=11 // pred_fallthru
          _
        // Predicated region
        $region49: #{_lambda_.1} parent=11 // pred_check
          %p456 = pneg %p262
        $region50: #{_lambda_.1} parent=11 // pred_check_branch
          %458 = sbr.rel (%p456) target = $region52
        $region51: #{_lambda_.1} parent=11 // pred_region
          _
        $region52: #{_lambda_.1} parent=11 // pred_fallthru
          _
        // Predicated region
        $region53: #{_lambda_.1} parent=11 // pred_check
          %p459 = pneg %p283
        $region54: #{_lambda_.1} parent=11 // pred_check_branch
          %461 = sbr.rel (%p459) target = $region56
        $region55: #{_lambda_.1} parent=11 // pred_region
          _
        $region56: #{_lambda_.1} parent=11 // pred_fallthru
          _
        // Predicated region
        $region57: #{_lambda_.1} parent=11 // pred_check
          %p462 = pneg %p304
        $region58: #{_lambda_.1} parent=11 // pred_check_branch
          %464 = sbr.rel (%p462) target = $region60
        $region59: #{_lambda_.1} parent=11 // pred_region
          _
        $region60: #{_lambda_.1} parent=11 // pred_fallthru
          _
        // Predicated region
        $region61: #{_lambda_.1} parent=11 // pred_check
          %p465 = pneg %p325
        $region62: #{_lambda_.1} parent=11 // pred_check_branch
          %467 = sbr.rel (%p465) target = $region64
        $region63: #{_lambda_.1} parent=11 // pred_region
          _
        $region64: #{_lambda_.1} parent=11 // pred_fallthru
          _
        // Predicated region
        $region65: #{_lambda_.1} parent=11 // pred_check
          %p468 = pneg %p346
        $region66: #{_lambda_.1} parent=11 // pred_check_branch
          %470 = sbr.rel (%p468) target = $region68
        $region67: #{_lambda_.1} parent=11 // pred_region
          _
        $region68: #{_lambda_.1} parent=11 // pred_fallthru
          _
        // Predicated region
        $region69: #{_lambda_.1} parent=11 // pred_check
          %p471 = pneg %p367
        $region70: #{_lambda_.1} parent=11 // pred_check_branch
          %473 = sbr.rel (%p471) target = $region72
        $region71: #{_lambda_.1} parent=11 // pred_region
          _
        $region72: #{_lambda_.1} parent=11 // pred_fallthru
          _
        // Predicated region
        $region73: #{_lambda_.1} parent=11 // pred_check
          %p474 = pneg %p388
        $region74: #{_lambda_.1} parent=11 // pred_check_branch
          %476 = sbr.rel (%p474) target = $region76
        $region75: #{_lambda_.1} parent=11 // pred_region
          _
        $region76: #{_lambda_.1} parent=11 // pred_fallthru
          _
      $region12: #{_lambda_.1} parent=5 // pred_fallthru
        _
      %p477 = scmp.lt.s32.totalorder %s26, 2
      // Predicated region
      $region77: #{_lambda_.1} parent=5 // pred_check
        %p478 = pneg %p477
      $region78: #{_lambda_.1} parent=5 // pred_check_branch
        %480 = sbr.rel (%p478) target = $region80
      $region79: #{_lambda_.1} parent=5 // pred_region
        // Predicated region
        $region81: #{_lambda_.1} parent=79 // pred_check
          %p481 = pneg %p46
        $region82: #{_lambda_.1} parent=79 // pred_check_branch
          %483 = sbr.rel (%p481) target = $region84
        $region83: #{_lambda_.1} parent=79 // pred_region
          %p484 = scmp.lt.s32.totalorder %s26, 1
          %s485 = scalar_select %p484, %s26, 1
          %s486 = smul.addr %s485, 112
          %s487 = smul.addr %s486, 4
          %s488 = scalar_lea.vmem %s0, %s487
        $region84: #{_lambda_.1} parent=79 // pred_fallthru
          _
      $region80: #{_lambda_.1} parent=5 // pred_fallthru
        _
      %p489 = scmp.le.s32.totalorder 1, %s26
      %p490 = scmp.lt.s32.totalorder %s26, 3
      %p491 = pnand %p489, %p490
      %p492 = pneg %p491
      // Predicated region
      $region85: #{_lambda_.1} parent=5 // pred_check
        _
      $region86: #{_lambda_.1} parent=5 // pred_check_branch
        %494 = sbr.rel (%p491) target = $region88
      $region87: #{_lambda_.1} parent=5 // pred_region
        %s495 = ssub.s32 %s26, 1
        %p496 = scmp.lt.s32.totalorder %s31, 1
        %s497 = scalar_select %p496, %s31, 1
        %s498 = smul.addr %s497, 112
        %s499 = smul.addr %s498, 4
        %s500 = scalar_lea.vmem %s0, %s499
        %p501 = pneg %p52
        %p502 = pneg %p49
        %p503 = pneg %p73
        %p504 = pneg %p70
        %p505 = pneg %p94
        %p506 = pneg %p91
        %p507 = pneg %p115
        %p508 = pneg %p112
        %p509 = pneg %p136
        %p510 = pneg %p133
        %p511 = pneg %p157
        %p512 = pneg %p154
        %p513 = pneg %p178
        %p514 = pneg %p175
        %p515 = pneg %p199
        %p516 = pneg %p196
        %p517 = pneg %p220
        %p518 = pneg %p217
        %p519 = pneg %p241
        %p520 = pneg %p238
        %p521 = pneg %p262
        %p522 = pneg %p259
        %p523 = pneg %p283
        %p524 = pneg %p280
        %p525 = pneg %p304
        %p526 = pneg %p301
        %p527 = pneg %p325
        %p528 = pneg %p322
        %p529 = pneg %p346
        %p530 = pneg %p343
        %p531 = pneg %p367
        %p532 = pneg %p364
        %p533 = pneg %p388
        %p534 = pneg %p385
        %p535 = pneg %p414
        %p536 = pneg %p411
        %s537 = sand.u32 %s401, 1
        %s538 = scalar_lea.sflag [#allocation3], %s537
        %s539 = sand.u32 %s401, 1
        %s540 = smul.addr %s539, 896
        %s541 = scalar_lea.vmem [#allocation2], %s540
        %p542 = scmp.lt.s32.totalorder %s31, 1
        %s543 = scalar_select %p542, %s31, 1
        %s544 = smul.addr %s543, 112
        %s545 = smul.addr %s544, 4
        %s546 = scalar_lea.vmem %s0, %s545
        %v548 = vld [vmem:[%s546] sm:$0xff]
        %v549 = vld [vmem:[%s546 + $0x8] sm:$0xff]
        %v550 = vld [vmem:[%s546 + $0x10] sm:$0xff]
        %v551 = vld [vmem:[%s546 + $0x18] sm:$0xff]
        %v552 = vld [vmem:[%s546 + $0x20] sm:$0xff]
        %v553 = vld [vmem:[%s546 + $0x28] sm:$0xff]
        %v554 = vld [vmem:[%s546 + $0x30] sm:$0xff]
        %v555 = vld [vmem:[%s546 + $0x38] sm:$0xff]
        %v556 = vld [vmem:[%s546 + $0x40] sm:$0xff]
        %v557 = vld [vmem:[%s546 + $0x48] sm:$0xff]
        %v558 = vld [vmem:[%s546 + $0x50] sm:$0xff]
        %v559 = vld [vmem:[%s546 + $0x58] sm:$0xff]
        %v560 = vld [vmem:[%s546 + $0x60] sm:$0xff]
        %v561 = vld [vmem:[%s546 + $0x68] sm:$0xff]
        %v562 = vld [vmem:[%s546 + $0x70] sm:$0xff]
        %v563 = vld [vmem:[%s546 + $0x78] sm:$0xff]
        %v564 = vld [vmem:[%s546 + $0x80] sm:$0xff]
        %v565 = vld [vmem:[%s546 + $0x88] sm:$0xff]
        %v566 = vld [vmem:[%s546 + $0x90] sm:$0xff]
        %v567 = vld [vmem:[%s546 + $0x98] sm:$0xff]
        %v568 = vld [vmem:[%s546 + $0xa0] sm:$0xff]
        %v569 = vld [vmem:[%s546 + $0xa8] sm:$0xff]
        %v570 = vld [vmem:[%s546 + $0xb0] sm:$0xff]
        %v571 = vld [vmem:[%s546 + $0xb8] sm:$0xff]
        %v572 = vld [vmem:[%s546 + $0xc0] sm:$0xff]
        %v573 = vld [vmem:[%s546 + $0xc8] sm:$0xff]
        %v574 = vld [vmem:[%s546 + $0xd0] sm:$0xff]
        %v575 = vld [vmem:[%s546 + $0xd8] sm:$0xff]
        %v576 = vld [vmem:[%s546 + $0xe0] sm:$0xff]
        %v577 = vld [vmem:[%s546 + $0xe8] sm:$0xff]
        %v578 = vld [vmem:[%s546 + $0xf0] sm:$0xff]
        %v579 = vld [vmem:[%s546 + $0xf8] sm:$0xff]
        %v580 = vld [vmem:[%s546 + $0x100] sm:$0xff]
        %v581 = vld [vmem:[%s546 + $0x108] sm:$0xff]
        %v582 = vld [vmem:[%s546 + $0x110] sm:$0xff]
        %v583 = vld [vmem:[%s546 + $0x118] sm:$0xff]
        %v584 = vld [vmem:[%s546 + $0x120] sm:$0xff]
        %v585 = vld [vmem:[%s546 + $0x128] sm:$0xff]
        %v586 = vld [vmem:[%s546 + $0x130] sm:$0xff]
        %v587 = vld [vmem:[%s546 + $0x138] sm:$0xff]
        %v588 = vld [vmem:[%s546 + $0x140] sm:$0xff]
        %v589 = vld [vmem:[%s546 + $0x148] sm:$0xff]
        %v590 = vld [vmem:[%s546 + $0x150] sm:$0xff]
        %v591 = vld [vmem:[%s546 + $0x158] sm:$0xff]
        %v592 = vld [vmem:[%s546 + $0x160] sm:$0xff]
        %v593 = vld [vmem:[%s546 + $0x168] sm:$0xff]
        %v594 = vld [vmem:[%s546 + $0x170] sm:$0xff]
        %v595 = vld [vmem:[%s546 + $0x178] sm:$0xff]
        %v596 = vld [vmem:[%s546 + $0x180] sm:$0xff]
        %v597 = vld [vmem:[%s546 + $0x188] sm:$0xff]
        %v598 = vld [vmem:[%s546 + $0x190] sm:$0xff]
        %v599 = vld [vmem:[%s546 + $0x198] sm:$0xff]
        %v600 = vld [vmem:[%s546 + $0x1a0] sm:$0xff]
        %v601 = vld [vmem:[%s546 + $0x1a8] sm:$0xff]
        %v602 = vld [vmem:[%s546 + $0x1b0] sm:$0xff]
        %v603 = vld [vmem:[%s546 + $0x1b8] sm:$0xff]
        %v604 = vld [vmem:[%s2] sm:$0xff]
        %v605 = vld [vmem:[%s2 + $0x8] sm:$0xff]
        %v606 = vld [vmem:[%s2 + $0x10] sm:$0xff]
        %v607 = vld [vmem:[%s2 + $0x18] sm:$0xff]
        %v608 = vld [vmem:[%s2 + $0x20] sm:$0xff]
        %v609 = vld [vmem:[%s2 + $0x28] sm:$0xff]
        %v610 = vld [vmem:[%s2 + $0x30] sm:$0xff]
        %v611 = vld [vmem:[%s2 + $0x38] sm:$0xff]
        %v612 = vld [vmem:[%s2 + $0x40] sm:$0xff]
        %v613 = vld [vmem:[%s2 + $0x48] sm:$0xff]
        %v614 = vld [vmem:[%s2 + $0x50] sm:$0xff]
        %v615 = vld [vmem:[%s2 + $0x58] sm:$0xff]
        %v616 = vld [vmem:[%s2 + $0x60] sm:$0xff]
        %v617 = vld [vmem:[%s2 + $0x68] sm:$0xff]
        %v618 = vld [vmem:[%s2 + $0x70] sm:$0xff]
        %v619 = vld [vmem:[%s2 + $0x78] sm:$0xff]
        %v620 = vld [vmem:[%s2 + $0x80] sm:$0xff]
        %v621 = vld [vmem:[%s2 + $0x88] sm:$0xff]
        %v622 = vld [vmem:[%s2 + $0x90] sm:$0xff]
        %v623 = vld [vmem:[%s2 + $0x98] sm:$0xff]
        %v624 = vld [vmem:[%s2 + $0xa0] sm:$0xff]
        %v625 = vld [vmem:[%s2 + $0xa8] sm:$0xff]
        %v626 = vld [vmem:[%s2 + $0xb0] sm:$0xff]
        %v627 = vld [vmem:[%s2 + $0xb8] sm:$0xff]
        %v628 = vld [vmem:[%s2 + $0xc0] sm:$0xff]
        %v629 = vld [vmem:[%s2 + $0xc8] sm:$0xff]
        %v630 = vld [vmem:[%s2 + $0xd0] sm:$0xff]
        %v631 = vld [vmem:[%s2 + $0xd8] sm:$0xff]
        %v632 = vld [vmem:[%s2 + $0xe0] sm:$0xff]
        %v633 = vld [vmem:[%s2 + $0xe8] sm:$0xff]
        %v634 = vld [vmem:[%s2 + $0xf0] sm:$0xff]
        %v635 = vld [vmem:[%s2 + $0xf8] sm:$0xff]
        %v636 = vld [vmem:[%s2 + $0x100] sm:$0xff]
        %v637 = vld [vmem:[%s2 + $0x108] sm:$0xff]
        %v638 = vld [vmem:[%s2 + $0x110] sm:$0xff]
        %v639 = vld [vmem:[%s2 + $0x118] sm:$0xff]
        %v640 = vld [vmem:[%s2 + $0x120] sm:$0xff]
        %v641 = vld [vmem:[%s2 + $0x128] sm:$0xff]
        %v642 = vld [vmem:[%s2 + $0x130] sm:$0xff]
        %v643 = vld [vmem:[%s2 + $0x138] sm:$0xff]
        %v644 = vld [vmem:[%s2 + $0x140] sm:$0xff]
        %v645 = vld [vmem:[%s2 + $0x148] sm:$0xff]
        %v646 = vld [vmem:[%s2 + $0x150] sm:$0xff]
        %v647 = vld [vmem:[%s2 + $0x158] sm:$0xff]
        %v648 = vld [vmem:[%s2 + $0x160] sm:$0xff]
        %v649 = vld [vmem:[%s2 + $0x168] sm:$0xff]
        %v650 = vld [vmem:[%s2 + $0x170] sm:$0xff]
        %v651 = vld [vmem:[%s2 + $0x178] sm:$0xff]
        %v652 = vld [vmem:[%s2 + $0x180] sm:$0xff]
        %v653 = vld [vmem:[%s2 + $0x188] sm:$0xff]
        %v654 = vld [vmem:[%s2 + $0x190] sm:$0xff]
        %v655 = vld [vmem:[%s2 + $0x198] sm:$0xff]
        %v656 = vld [vmem:[%s2 + $0x1a0] sm:$0xff]
        %v657 = vld [vmem:[%s2 + $0x1a8] sm:$0xff]
        %v658 = vld [vmem:[%s2 + $0x1b0] sm:$0xff]
        %v659 = vld [vmem:[%s2 + $0x1b8] sm:$0xff]
        %v660 = vld [vmem:[%s2 + $0x1c0] sm:$0xff]
        %v661 = vld [vmem:[%s2 + $0x1c8] sm:$0xff]
        %v662 = vld [vmem:[%s2 + $0x1d0] sm:$0xff]
        %v663 = vld [vmem:[%s2 + $0x1d8] sm:$0xff]
        %v664 = vld [vmem:[%s2 + $0x1e0] sm:$0xff]
        %v665 = vld [vmem:[%s2 + $0x1e8] sm:$0xff]
        %v666 = vld [vmem:[%s2 + $0x1f0] sm:$0xff]
        %v667 = vld [vmem:[%s2 + $0x1f8] sm:$0xff]
        %v668 = vld [vmem:[%s2 + $0x200] sm:$0xff]
        %v669 = vld [vmem:[%s2 + $0x208] sm:$0xff]
        %v670 = vld [vmem:[%s2 + $0x210] sm:$0xff]
        %v671 = vld [vmem:[%s2 + $0x218] sm:$0xff]
        %v672 = vld [vmem:[%s2 + $0x220] sm:$0xff]
        %v673 = vld [vmem:[%s2 + $0x228] sm:$0xff]
        %v674 = vld [vmem:[%s2 + $0x230] sm:$0xff]
        %v675 = vld [vmem:[%s2 + $0x238] sm:$0xff]
        %v676 = vld [vmem:[%s2 + $0x240] sm:$0xff]
        %v677 = vld [vmem:[%s2 + $0x248] sm:$0xff]
        %v678 = vld [vmem:[%s2 + $0x250] sm:$0xff]
        %v679 = vld [vmem:[%s2 + $0x258] sm:$0xff]
        %v680 = vld [vmem:[%s2 + $0x260] sm:$0xff]
        %v681 = vld [vmem:[%s2 + $0x268] sm:$0xff]
        %v682 = vld [vmem:[%s2 + $0x270] sm:$0xff]
        %v683 = vld [vmem:[%s2 + $0x278] sm:$0xff]
        %v684 = vld [vmem:[%s2 + $0x280] sm:$0xff]
        %v685 = vld [vmem:[%s2 + $0x288] sm:$0xff]
        %v686 = vld [vmem:[%s2 + $0x290] sm:$0xff]
        %v687 = vld [vmem:[%s2 + $0x298] sm:$0xff]
        %v688 = vld [vmem:[%s2 + $0x2a0] sm:$0xff]
        %v689 = vld [vmem:[%s2 + $0x2a8] sm:$0xff]
        %v690 = vld [vmem:[%s2 + $0x2b0] sm:$0xff]
        %v691 = vld [vmem:[%s2 + $0x2b8] sm:$0xff]
        %v692 = vld [vmem:[%s2 + $0x2c0] sm:$0xff]
        %v693 = vld [vmem:[%s2 + $0x2c8] sm:$0xff]
        %v694 = vld [vmem:[%s2 + $0x2d0] sm:$0xff]
        %v695 = vld [vmem:[%s2 + $0x2d8] sm:$0xff]
        %v696 = vld [vmem:[%s2 + $0x2e0] sm:$0xff]
        %v697 = vld [vmem:[%s2 + $0x2e8] sm:$0xff]
        %v698 = vld [vmem:[%s2 + $0x2f0] sm:$0xff]
        %v699 = vld [vmem:[%s2 + $0x2f8] sm:$0xff]
        %v700 = vld [vmem:[%s2 + $0x300] sm:$0xff]
        %v701 = vld [vmem:[%s2 + $0x308] sm:$0xff]
        %v702 = vld [vmem:[%s2 + $0x310] sm:$0xff]
        %v703 = vld [vmem:[%s2 + $0x318] sm:$0xff]
        %v704 = vld [vmem:[%s2 + $0x320] sm:$0xff]
        %v705 = vld [vmem:[%s2 + $0x328] sm:$0xff]
        %v706 = vld [vmem:[%s2 + $0x330] sm:$0xff]
        %v707 = vld [vmem:[%s2 + $0x338] sm:$0xff]
        %v708 = vld [vmem:[%s2 + $0x340] sm:$0xff]
        %v709 = vld [vmem:[%s2 + $0x348] sm:$0xff]
        %v710 = vld [vmem:[%s2 + $0x350] sm:$0xff]
        %v711 = vld [vmem:[%s2 + $0x358] sm:$0xff]
        %v712 = vld [vmem:[%s2 + $0x360] sm:$0xff]
        %v713 = vld [vmem:[%s2 + $0x368] sm:$0xff]
        %v714 = vld [vmem:[%s2 + $0x370] sm:$0xff]
        %v715 = vld [vmem:[%s2 + $0x378] sm:$0xff]
        %v716 = vld [vmem:[%s2 + $0x380] sm:$0xff]
        %v717 = vld [vmem:[%s2 + $0x388] sm:$0xff]
        %v718 = vld [vmem:[%s2 + $0x390] sm:$0xff]
        %v719 = vld [vmem:[%s2 + $0x398] sm:$0xff]
        %v720 = vld [vmem:[%s2 + $0x3a0] sm:$0xff]
        %v721 = vld [vmem:[%s2 + $0x3a8] sm:$0xff]
        %v722 = vld [vmem:[%s2 + $0x3b0] sm:$0xff]
        %v723 = vld [vmem:[%s2 + $0x3b8] sm:$0xff]
        %v724 = vld [vmem:[%s2 + $0x3c0] sm:$0xff]
        %v725 = vld [vmem:[%s2 + $0x3c8] sm:$0xff]
        %v726 = vld [vmem:[%s2 + $0x3d0] sm:$0xff]
        %v727 = vld [vmem:[%s2 + $0x3d8] sm:$0xff]
        %v728 = vld [vmem:[%s2 + $0x3e0] sm:$0xff]
        %v729 = vld [vmem:[%s2 + $0x3e8] sm:$0xff]
        %v730 = vld [vmem:[%s2 + $0x3f0] sm:$0xff]
        %v731 = vld [vmem:[%s2 + $0x3f8] sm:$0xff]
        %v732 = vld [vmem:[%s2 + $0x400] sm:$0xff]
        %v733 = vld [vmem:[%s2 + $0x408] sm:$0xff]
        %v734 = vld [vmem:[%s2 + $0x410] sm:$0xff]
        %v735 = vld [vmem:[%s2 + $0x418] sm:$0xff]
        %v736 = vld [vmem:[%s2 + $0x420] sm:$0xff]
        %v737 = vld [vmem:[%s2 + $0x428] sm:$0xff]
        %v738 = vld [vmem:[%s2 + $0x430] sm:$0xff]
        %v739 = vld [vmem:[%s2 + $0x438] sm:$0xff]
        %v740 = vld [vmem:[%s2 + $0x440] sm:$0xff]
        %v741 = vld [vmem:[%s2 + $0x448] sm:$0xff]
        %v742 = vld [vmem:[%s2 + $0x450] sm:$0xff]
        %v743 = vld [vmem:[%s2 + $0x458] sm:$0xff]
        %v744 = vld [vmem:[%s2 + $0x460] sm:$0xff]
        %v745 = vld [vmem:[%s2 + $0x468] sm:$0xff]
        %v746 = vld [vmem:[%s2 + $0x470] sm:$0xff]
        %v747 = vld [vmem:[%s2 + $0x478] sm:$0xff]
        %v748 = vld [vmem:[%s2 + $0x480] sm:$0xff]
        %v749 = vld [vmem:[%s2 + $0x488] sm:$0xff]
        %v750 = vld [vmem:[%s2 + $0x490] sm:$0xff]
        %v751 = vld [vmem:[%s2 + $0x498] sm:$0xff]
        %v752 = vld [vmem:[%s2 + $0x4a0] sm:$0xff]
        %v753 = vld [vmem:[%s2 + $0x4a8] sm:$0xff]
        %v754 = vld [vmem:[%s2 + $0x4b0] sm:$0xff]
        %v755 = vld [vmem:[%s2 + $0x4b8] sm:$0xff]
        %v756 = vld [vmem:[%s2 + $0x4c0] sm:$0xff]
        %v757 = vld [vmem:[%s2 + $0x4c8] sm:$0xff]
        %v758 = vld [vmem:[%s2 + $0x4d0] sm:$0xff]
        %v759 = vld [vmem:[%s2 + $0x4d8] sm:$0xff]
        %v760 = vld [vmem:[%s2 + $0x4e0] sm:$0xff]
        %v761 = vld [vmem:[%s2 + $0x4e8] sm:$0xff]
        %v762 = vld [vmem:[%s2 + $0x4f0] sm:$0xff]
        %v763 = vld [vmem:[%s2 + $0x4f8] sm:$0xff]
        %v764 = vld [vmem:[%s2 + $0x500] sm:$0xff]
        %v765 = vld [vmem:[%s2 + $0x508] sm:$0xff]
        %v766 = vld [vmem:[%s2 + $0x510] sm:$0xff]
        %v767 = vld [vmem:[%s2 + $0x518] sm:$0xff]
        %v768 = vld [vmem:[%s2 + $0x520] sm:$0xff]
        %v769 = vld [vmem:[%s2 + $0x528] sm:$0xff]
        %v770 = vld [vmem:[%s2 + $0x530] sm:$0xff]
        %v771 = vld [vmem:[%s2 + $0x538] sm:$0xff]
        %v772 = vld [vmem:[%s2 + $0x540] sm:$0xff]
        %v773 = vld [vmem:[%s2 + $0x548] sm:$0xff]
        %v774 = vld [vmem:[%s2 + $0x550] sm:$0xff]
        %v775 = vld [vmem:[%s2 + $0x558] sm:$0xff]
        %v776 = vld [vmem:[%s2 + $0x560] sm:$0xff]
        %v777 = vld [vmem:[%s2 + $0x568] sm:$0xff]
        %v778 = vld [vmem:[%s2 + $0x570] sm:$0xff]
        %v779 = vld [vmem:[%s2 + $0x578] sm:$0xff]
        %v780 = vld [vmem:[%s2 + $0x580] sm:$0xff]
        %v781 = vld [vmem:[%s2 + $0x588] sm:$0xff]
        %v782 = vld [vmem:[%s2 + $0x590] sm:$0xff]
        %v783 = vld [vmem:[%s2 + $0x598] sm:$0xff]
        %v784 = vld [vmem:[%s2 + $0x5a0] sm:$0xff]
        %v785 = vld [vmem:[%s2 + $0x5a8] sm:$0xff]
        %v786 = vld [vmem:[%s2 + $0x5b0] sm:$0xff]
        %v787 = vld [vmem:[%s2 + $0x5b8] sm:$0xff]
        %v788 = vld [vmem:[%s2 + $0x5c0] sm:$0xff]
        %v789 = vld [vmem:[%s2 + $0x5c8] sm:$0xff]
        %v790 = vld [vmem:[%s2 + $0x5d0] sm:$0xff]
        %v791 = vld [vmem:[%s2 + $0x5d8] sm:$0xff]
        %v792 = vld [vmem:[%s2 + $0x5e0] sm:$0xff]
        %v793 = vld [vmem:[%s2 + $0x5e8] sm:$0xff]
        %v794 = vld [vmem:[%s2 + $0x5f0] sm:$0xff]
        %v795 = vld [vmem:[%s2 + $0x5f8] sm:$0xff]
        %v796 = vld [vmem:[%s2 + $0x600] sm:$0xff]
        %v797 = vld [vmem:[%s2 + $0x608] sm:$0xff]
        %v798 = vld [vmem:[%s2 + $0x610] sm:$0xff]
        %v799 = vld [vmem:[%s2 + $0x618] sm:$0xff]
        %v800 = vld [vmem:[%s2 + $0x620] sm:$0xff]
        %v801 = vld [vmem:[%s2 + $0x628] sm:$0xff]
        %v802 = vld [vmem:[%s2 + $0x630] sm:$0xff]
        %v803 = vld [vmem:[%s2 + $0x638] sm:$0xff]
        %v804 = vld [vmem:[%s2 + $0x640] sm:$0xff]
        %v805 = vld [vmem:[%s2 + $0x648] sm:$0xff]
        %v806 = vld [vmem:[%s2 + $0x650] sm:$0xff]
        %v807 = vld [vmem:[%s2 + $0x658] sm:$0xff]
        %v808 = vld [vmem:[%s2 + $0x660] sm:$0xff]
        %v809 = vld [vmem:[%s2 + $0x668] sm:$0xff]
        %v810 = vld [vmem:[%s2 + $0x670] sm:$0xff]
        %v811 = vld [vmem:[%s2 + $0x678] sm:$0xff]
        %v812 = vld [vmem:[%s2 + $0x680] sm:$0xff]
        %v813 = vld [vmem:[%s2 + $0x688] sm:$0xff]
        %v814 = vld [vmem:[%s2 + $0x690] sm:$0xff]
        %v815 = vld [vmem:[%s2 + $0x698] sm:$0xff]
        %v816 = vld [vmem:[%s2 + $0x6a0] sm:$0xff]
        %v817 = vld [vmem:[%s2 + $0x6a8] sm:$0xff]
        %v818 = vld [vmem:[%s2 + $0x6b0] sm:$0xff]
        %v819 = vld [vmem:[%s2 + $0x6b8] sm:$0xff]
        %v820 = vld [vmem:[%s2 + $0x6c0] sm:$0xff]
        %v821 = vld [vmem:[%s2 + $0x6c8] sm:$0xff]
        %v822 = vld [vmem:[%s2 + $0x6d0] sm:$0xff]
        %v823 = vld [vmem:[%s2 + $0x6d8] sm:$0xff]
        %v824 = vld [vmem:[%s2 + $0x6e0] sm:$0xff]
        %v825 = vld [vmem:[%s2 + $0x6e8] sm:$0xff]
        %v826 = vld [vmem:[%s2 + $0x6f0] sm:$0xff]
        %v827 = vld [vmem:[%s2 + $0x6f8] sm:$0xff]
        %v828 = vld [vmem:[%s3] sm:$0x3]
        %v829 = vld [vmem:[%s4] sm:$0x3]
        %v886 = vunpack.c.l.b16 %v548
        %v887 = vunpack.c.h.b16 %v548
        %v888 = vunpack.c.l.b16 %v549
        %v889 = vunpack.c.h.b16 %v549
        %v890 = vunpack.c.l.b16 %v550
        %v891 = vunpack.c.h.b16 %v550
        %v892 = vunpack.c.l.b16 %v551
        %v893 = vunpack.c.h.b16 %v551
        %v894 = vunpack.c.l.b16 %v552
        %v895 = vunpack.c.h.b16 %v552
        %v896 = vunpack.c.l.b16 %v553
        %v897 = vunpack.c.h.b16 %v553
        %v898 = vunpack.c.l.b16 %v554
        %v899 = vunpack.c.h.b16 %v554
        %v900 = vunpack.c.l.b16 %v555
        %v901 = vunpack.c.h.b16 %v555
        %v902 = vunpack.c.l.b16 %v556
        %v903 = vunpack.c.h.b16 %v556
        %v904 = vunpack.c.l.b16 %v557
        %v905 = vunpack.c.h.b16 %v557
        %v906 = vunpack.c.l.b16 %v558
        %v907 = vunpack.c.h.b16 %v558
        %v908 = vunpack.c.l.b16 %v559
        %v909 = vunpack.c.h.b16 %v559
        %v910 = vunpack.c.l.b16 %v560
        %v911 = vunpack.c.h.b16 %v560
        %v912 = vunpack.c.l.b16 %v561
        %v913 = vunpack.c.h.b16 %v561
        %v914 = vunpack.c.l.b16 %v562
        %v915 = vunpack.c.h.b16 %v562
        %v916 = vunpack.c.l.b16 %v563
        %v917 = vunpack.c.h.b16 %v563
        %v918 = vunpack.c.l.b16 %v564
        %v919 = vunpack.c.h.b16 %v564
        %v920 = vunpack.c.l.b16 %v565
        %v921 = vunpack.c.h.b16 %v565
        %v922 = vunpack.c.l.b16 %v566
        %v923 = vunpack.c.h.b16 %v566
        %v924 = vunpack.c.l.b16 %v567
        %v925 = vunpack.c.h.b16 %v567
        %v926 = vunpack.c.l.b16 %v568
        %v927 = vunpack.c.h.b16 %v568
        %v928 = vunpack.c.l.b16 %v569
        %v929 = vunpack.c.h.b16 %v569
        %v930 = vunpack.c.l.b16 %v570
        %v931 = vunpack.c.h.b16 %v570
        %v932 = vunpack.c.l.b16 %v571
        %v933 = vunpack.c.h.b16 %v571
        %v934 = vunpack.c.l.b16 %v572
        %v935 = vunpack.c.h.b16 %v572
        %v936 = vunpack.c.l.b16 %v573
        %v937 = vunpack.c.h.b16 %v573
        %v938 = vunpack.c.l.b16 %v574
        %v939 = vunpack.c.h.b16 %v574
        %v940 = vunpack.c.l.b16 %v575
        %v941 = vunpack.c.h.b16 %v575
        %v942 = vunpack.c.l.b16 %v576
        %v943 = vunpack.c.h.b16 %v576
        %v944 = vunpack.c.l.b16 %v577
        %v945 = vunpack.c.h.b16 %v577
        %v946 = vunpack.c.l.b16 %v578
        %v947 = vunpack.c.h.b16 %v578
        %v948 = vunpack.c.l.b16 %v579
        %v949 = vunpack.c.h.b16 %v579
        %v950 = vunpack.c.l.b16 %v580
        %v951 = vunpack.c.h.b16 %v580
        %v952 = vunpack.c.l.b16 %v581
        %v953 = vunpack.c.h.b16 %v581
        %v954 = vunpack.c.l.b16 %v582
        %v955 = vunpack.c.h.b16 %v582
        %v956 = vunpack.c.l.b16 %v583
        %v957 = vunpack.c.h.b16 %v583
        %v958 = vunpack.c.l.b16 %v584
        %v959 = vunpack.c.h.b16 %v584
        %v960 = vunpack.c.l.b16 %v585
        %v961 = vunpack.c.h.b16 %v585
        %v962 = vunpack.c.l.b16 %v586
        %v963 = vunpack.c.h.b16 %v586
        %v964 = vunpack.c.l.b16 %v587
        %v965 = vunpack.c.h.b16 %v587
        %v966 = vunpack.c.l.b16 %v588
        %v967 = vunpack.c.h.b16 %v588
        %v968 = vunpack.c.l.b16 %v589
        %v969 = vunpack.c.h.b16 %v589
        %v970 = vunpack.c.l.b16 %v590
        %v971 = vunpack.c.h.b16 %v590
        %v972 = vunpack.c.l.b16 %v591
        %v973 = vunpack.c.h.b16 %v591
        %v974 = vunpack.c.l.b16 %v592
        %v975 = vunpack.c.h.b16 %v592
        %v976 = vunpack.c.l.b16 %v593
        %v977 = vunpack.c.h.b16 %v593
        %v978 = vunpack.c.l.b16 %v594
        %v979 = vunpack.c.h.b16 %v594
        %v980 = vunpack.c.l.b16 %v595
        %v981 = vunpack.c.h.b16 %v595
        %v982 = vunpack.c.l.b16 %v596
        %v983 = vunpack.c.h.b16 %v596
        %v984 = vunpack.c.l.b16 %v597
        %v985 = vunpack.c.h.b16 %v597
        %v986 = vunpack.c.l.b16 %v598
        %v987 = vunpack.c.h.b16 %v598
        %v988 = vunpack.c.l.b16 %v599
        %v989 = vunpack.c.h.b16 %v599
        %v990 = vunpack.c.l.b16 %v600
        %v991 = vunpack.c.h.b16 %v600
        %v992 = vunpack.c.l.b16 %v601
        %v993 = vunpack.c.h.b16 %v601
        %v994 = vunpack.c.l.b16 %v602
        %v995 = vunpack.c.h.b16 %v602
        %v996 = vunpack.c.l.b16 %v603
        %v997 = vunpack.c.h.b16 %v603
        %v998 = vpack.c.b16 %v900, %v886
        %v999 = vpack.c.b16 %v901, %v887
        %v1000 = vpack.c.b16 %v902, %v888
        %v1001 = vpack.c.b16 %v903, %v889
        %v1002 = vpack.c.b16 %v904, %v890
        %v1003 = vpack.c.b16 %v905, %v891
        %v1004 = vpack.c.b16 %v906, %v892
        %v1005 = vpack.c.b16 %v907, %v893
        %v1006 = vpack.c.b16 %v908, %v894
        %v1007 = vpack.c.b16 %v909, %v895
        %v1008 = vpack.c.b16 %v910, %v896
        %v1009 = vpack.c.b16 %v911, %v897
        %v1010 = vpack.c.b16 %v912, %v898
        %v1011 = vpack.c.b16 %v913, %v899
        %v1012 = vpack.c.b16 %v928, %v914
        %v1013 = vpack.c.b16 %v929, %v915
        %v1014 = vpack.c.b16 %v930, %v916
        %v1015 = vpack.c.b16 %v931, %v917
        %v1016 = vpack.c.b16 %v932, %v918
        %v1017 = vpack.c.b16 %v933, %v919
        %v1018 = vpack.c.b16 %v934, %v920
        %v1019 = vpack.c.b16 %v935, %v921
        %v1020 = vpack.c.b16 %v936, %v922
        %v1021 = vpack.c.b16 %v937, %v923
        %v1022 = vpack.c.b16 %v938, %v924
        %v1023 = vpack.c.b16 %v939, %v925
        %v1024 = vpack.c.b16 %v940, %v926
        %v1025 = vpack.c.b16 %v941, %v927
        %v1026 = vpack.c.b16 %v956, %v942
        %v1027 = vpack.c.b16 %v957, %v943
        %v1028 = vpack.c.b16 %v958, %v944
        %v1029 = vpack.c.b16 %v959, %v945
        %v1030 = vpack.c.b16 %v960, %v946
        %v1031 = vpack.c.b16 %v961, %v947
        %v1032 = vpack.c.b16 %v962, %v948
        %v1033 = vpack.c.b16 %v963, %v949
        %v1034 = vpack.c.b16 %v964, %v950
        %v1035 = vpack.c.b16 %v965, %v951
        %v1036 = vpack.c.b16 %v966, %v952
        %v1037 = vpack.c.b16 %v967, %v953
        %v1038 = vpack.c.b16 %v968, %v954
        %v1039 = vpack.c.b16 %v969, %v955
        %v1040 = vpack.c.b16 %v984, %v970
        %v1041 = vpack.c.b16 %v985, %v971
        %v1042 = vpack.c.b16 %v986, %v972
        %v1043 = vpack.c.b16 %v987, %v973
        %v1044 = vpack.c.b16 %v988, %v974
        %v1045 = vpack.c.b16 %v989, %v975
        %v1046 = vpack.c.b16 %v990, %v976
        %v1047 = vpack.c.b16 %v991, %v977
        %v1048 = vpack.c.b16 %v992, %v978
        %v1049 = vpack.c.b16 %v993, %v979
        %v1050 = vpack.c.b16 %v994, %v980
        %v1051 = vpack.c.b16 %v995, %v981
        %v1052 = vpack.c.b16 %v996, %v982
        %v1053 = vpack.c.b16 %v997, %v983
        %v1334 = vunpack.c.l.b16 %v604
        %v1335 = vunpack.c.h.b16 %v604
        %v1336 = vunpack.c.l.b16 %v605
        %v1337 = vunpack.c.h.b16 %v605
        %v1338 = vunpack.c.l.b16 %v606
        %v1339 = vunpack.c.h.b16 %v606
        %v1340 = vunpack.c.l.b16 %v607
        %v1341 = vunpack.c.h.b16 %v607
        %v1342 = vunpack.c.l.b16 %v608
        %v1343 = vunpack.c.h.b16 %v608
        %v1344 = vunpack.c.l.b16 %v609
        %v1345 = vunpack.c.h.b16 %v609
        %v1346 = vunpack.c.l.b16 %v610
        %v1347 = vunpack.c.h.b16 %v610
        %v1348 = vunpack.c.l.b16 %v611
        %v1349 = vunpack.c.h.b16 %v611
        %v1350 = vunpack.c.l.b16 %v612
        %v1351 = vunpack.c.h.b16 %v612
        %v1352 = vunpack.c.l.b16 %v613
        %v1353 = vunpack.c.h.b16 %v613
        %v1354 = vunpack.c.l.b16 %v614
        %v1355 = vunpack.c.h.b16 %v614
        %v1356 = vunpack.c.l.b16 %v615
        %v1357 = vunpack.c.h.b16 %v615
        %v1358 = vunpack.c.l.b16 %v616
        %v1359 = vunpack.c.h.b16 %v616
        %v1360 = vunpack.c.l.b16 %v617
        %v1361 = vunpack.c.h.b16 %v617
        %v1362 = vunpack.c.l.b16 %v618
        %v1363 = vunpack.c.h.b16 %v618
        %v1364 = vunpack.c.l.b16 %v619
        %v1365 = vunpack.c.h.b16 %v619
        %v1366 = vunpack.c.l.b16 %v620
        %v1367 = vunpack.c.h.b16 %v620
        %v1368 = vunpack.c.l.b16 %v621
        %v1369 = vunpack.c.h.b16 %v621
        %v1370 = vunpack.c.l.b16 %v622
        %v1371 = vunpack.c.h.b16 %v622
        %v1372 = vunpack.c.l.b16 %v623
        %v1373 = vunpack.c.h.b16 %v623
        %v1374 = vunpack.c.l.b16 %v624
        %v1375 = vunpack.c.h.b16 %v624
        %v1376 = vunpack.c.l.b16 %v625
        %v1377 = vunpack.c.h.b16 %v625
        %v1378 = vunpack.c.l.b16 %v626
        %v1379 = vunpack.c.h.b16 %v626
        %v1380 = vunpack.c.l.b16 %v627
        %v1381 = vunpack.c.h.b16 %v627
        %v1382 = vunpack.c.l.b16 %v628
        %v1383 = vunpack.c.h.b16 %v628
        %v1384 = vunpack.c.l.b16 %v629
        %v1385 = vunpack.c.h.b16 %v629
        %v1386 = vunpack.c.l.b16 %v630
        %v1387 = vunpack.c.h.b16 %v630
        %v1388 = vunpack.c.l.b16 %v631
        %v1389 = vunpack.c.h.b16 %v631
        %v1390 = vunpack.c.l.b16 %v632
        %v1391 = vunpack.c.h.b16 %v632
        %v1392 = vunpack.c.l.b16 %v633
        %v1393 = vunpack.c.h.b16 %v633
        %v1394 = vunpack.c.l.b16 %v634
        %v1395 = vunpack.c.h.b16 %v634
        %v1396 = vunpack.c.l.b16 %v635
        %v1397 = vunpack.c.h.b16 %v635
        %v1398 = vunpack.c.l.b16 %v636
        %v1399 = vunpack.c.h.b16 %v636
        %v1400 = vunpack.c.l.b16 %v637
        %v1401 = vunpack.c.h.b16 %v637
        %v1402 = vunpack.c.l.b16 %v638
        %v1403 = vunpack.c.h.b16 %v638
        %v1404 = vunpack.c.l.b16 %v639
        %v1405 = vunpack.c.h.b16 %v639
        %v1406 = vunpack.c.l.b16 %v640
        %v1407 = vunpack.c.h.b16 %v640
        %v1408 = vunpack.c.l.b16 %v641
        %v1409 = vunpack.c.h.b16 %v641
        %v1410 = vunpack.c.l.b16 %v642
        %v1411 = vunpack.c.h.b16 %v642
        %v1412 = vunpack.c.l.b16 %v643
        %v1413 = vunpack.c.h.b16 %v643
        %v1414 = vunpack.c.l.b16 %v644
        %v1415 = vunpack.c.h.b16 %v644
        %v1416 = vunpack.c.l.b16 %v645
        %v1417 = vunpack.c.h.b16 %v645
        %v1418 = vunpack.c.l.b16 %v646
        %v1419 = vunpack.c.h.b16 %v646
        %v1420 = vunpack.c.l.b16 %v647
        %v1421 = vunpack.c.h.b16 %v647
        %v1422 = vunpack.c.l.b16 %v648
        %v1423 = vunpack.c.h.b16 %v648
        %v1424 = vunpack.c.l.b16 %v649
        %v1425 = vunpack.c.h.b16 %v649
        %v1426 = vunpack.c.l.b16 %v650
        %v1427 = vunpack.c.h.b16 %v650
        %v1428 = vunpack.c.l.b16 %v651
        %v1429 = vunpack.c.h.b16 %v651
        %v1430 = vunpack.c.l.b16 %v652
        %v1431 = vunpack.c.h.b16 %v652
        %v1432 = vunpack.c.l.b16 %v653
        %v1433 = vunpack.c.h.b16 %v653
        %v1434 = vunpack.c.l.b16 %v654
        %v1435 = vunpack.c.h.b16 %v654
        %v1436 = vunpack.c.l.b16 %v655
        %v1437 = vunpack.c.h.b16 %v655
        %v1438 = vunpack.c.l.b16 %v656
        %v1439 = vunpack.c.h.b16 %v656
        %v1440 = vunpack.c.l.b16 %v657
        %v1441 = vunpack.c.h.b16 %v657
        %v1442 = vunpack.c.l.b16 %v658
        %v1443 = vunpack.c.h.b16 %v658
        %v1444 = vunpack.c.l.b16 %v659
        %v1445 = vunpack.c.h.b16 %v659
        %v1446 = vunpack.c.l.b16 %v660
        %v1447 = vunpack.c.h.b16 %v660
        %v1448 = vunpack.c.l.b16 %v661
        %v1449 = vunpack.c.h.b16 %v661
        %v1450 = vunpack.c.l.b16 %v662
        %v1451 = vunpack.c.h.b16 %v662
        %v1452 = vunpack.c.l.b16 %v663
        %v1453 = vunpack.c.h.b16 %v663
        %v1454 = vunpack.c.l.b16 %v664
        %v1455 = vunpack.c.h.b16 %v664
        %v1456 = vunpack.c.l.b16 %v665
        %v1457 = vunpack.c.h.b16 %v665
        %v1458 = vunpack.c.l.b16 %v666
        %v1459 = vunpack.c.h.b16 %v666
        %v1460 = vunpack.c.l.b16 %v667
        %v1461 = vunpack.c.h.b16 %v667
        %v1462 = vunpack.c.l.b16 %v668
        %v1463 = vunpack.c.h.b16 %v668
        %v1464 = vunpack.c.l.b16 %v669
        %v1465 = vunpack.c.h.b16 %v669
        %v1466 = vunpack.c.l.b16 %v670
        %v1467 = vunpack.c.h.b16 %v670
        %v1468 = vunpack.c.l.b16 %v671
        %v1469 = vunpack.c.h.b16 %v671
        %v1470 = vunpack.c.l.b16 %v672
        %v1471 = vunpack.c.h.b16 %v672
        %v1472 = vunpack.c.l.b16 %v673
        %v1473 = vunpack.c.h.b16 %v673
        %v1474 = vunpack.c.l.b16 %v674
        %v1475 = vunpack.c.h.b16 %v674
        %v1476 = vunpack.c.l.b16 %v675
        %v1477 = vunpack.c.h.b16 %v675
        %v1478 = vunpack.c.l.b16 %v676
        %v1479 = vunpack.c.h.b16 %v676
        %v1480 = vunpack.c.l.b16 %v677
        %v1481 = vunpack.c.h.b16 %v677
        %v1482 = vunpack.c.l.b16 %v678
        %v1483 = vunpack.c.h.b16 %v678
        %v1484 = vunpack.c.l.b16 %v679
        %v1485 = vunpack.c.h.b16 %v679
        %v1486 = vunpack.c.l.b16 %v680
        %v1487 = vunpack.c.h.b16 %v680
        %v1488 = vunpack.c.l.b16 %v681
        %v1489 = vunpack.c.h.b16 %v681
        %v1490 = vunpack.c.l.b16 %v682
        %v1491 = vunpack.c.h.b16 %v682
        %v1492 = vunpack.c.l.b16 %v683
        %v1493 = vunpack.c.h.b16 %v683
        %v1494 = vunpack.c.l.b16 %v684
        %v1495 = vunpack.c.h.b16 %v684
        %v1496 = vunpack.c.l.b16 %v685
        %v1497 = vunpack.c.h.b16 %v685
        %v1498 = vunpack.c.l.b16 %v686
        %v1499 = vunpack.c.h.b16 %v686
        %v1500 = vunpack.c.l.b16 %v687
        %v1501 = vunpack.c.h.b16 %v687
        %v1502 = vunpack.c.l.b16 %v688
        %v1503 = vunpack.c.h.b16 %v688
        %v1504 = vunpack.c.l.b16 %v689
        %v1505 = vunpack.c.h.b16 %v689
        %v1506 = vunpack.c.l.b16 %v690
        %v1507 = vunpack.c.h.b16 %v690
        %v1508 = vunpack.c.l.b16 %v691
        %v1509 = vunpack.c.h.b16 %v691
        %v1510 = vunpack.c.l.b16 %v692
        %v1511 = vunpack.c.h.b16 %v692
        %v1512 = vunpack.c.l.b16 %v693
        %v1513 = vunpack.c.h.b16 %v693
        %v1514 = vunpack.c.l.b16 %v694
        %v1515 = vunpack.c.h.b16 %v694
        %v1516 = vunpack.c.l.b16 %v695
        %v1517 = vunpack.c.h.b16 %v695
        %v1518 = vunpack.c.l.b16 %v696
        %v1519 = vunpack.c.h.b16 %v696
        %v1520 = vunpack.c.l.b16 %v697
        %v1521 = vunpack.c.h.b16 %v697
        %v1522 = vunpack.c.l.b16 %v698
        %v1523 = vunpack.c.h.b16 %v698
        %v1524 = vunpack.c.l.b16 %v699
        %v1525 = vunpack.c.h.b16 %v699
        %v1526 = vunpack.c.l.b16 %v700
        %v1527 = vunpack.c.h.b16 %v700
        %v1528 = vunpack.c.l.b16 %v701
        %v1529 = vunpack.c.h.b16 %v701
        %v1530 = vunpack.c.l.b16 %v702
        %v1531 = vunpack.c.h.b16 %v702
        %v1532 = vunpack.c.l.b16 %v703
        %v1533 = vunpack.c.h.b16 %v703
        %v1534 = vunpack.c.l.b16 %v704
        %v1535 = vunpack.c.h.b16 %v704
        %v1536 = vunpack.c.l.b16 %v705
        %v1537 = vunpack.c.h.b16 %v705
        %v1538 = vunpack.c.l.b16 %v706
        %v1539 = vunpack.c.h.b16 %v706
        %v1540 = vunpack.c.l.b16 %v707
        %v1541 = vunpack.c.h.b16 %v707
        %v1542 = vunpack.c.l.b16 %v708
        %v1543 = vunpack.c.h.b16 %v708
        %v1544 = vunpack.c.l.b16 %v709
        %v1545 = vunpack.c.h.b16 %v709
        %v1546 = vunpack.c.l.b16 %v710
        %v1547 = vunpack.c.h.b16 %v710
        %v1548 = vunpack.c.l.b16 %v711
        %v1549 = vunpack.c.h.b16 %v711
        %v1550 = vunpack.c.l.b16 %v712
        %v1551 = vunpack.c.h.b16 %v712
        %v1552 = vunpack.c.l.b16 %v713
        %v1553 = vunpack.c.h.b16 %v713
        %v1554 = vunpack.c.l.b16 %v714
        %v1555 = vunpack.c.h.b16 %v714
        %v1556 = vunpack.c.l.b16 %v715
        %v1557 = vunpack.c.h.b16 %v715
        %v1558 = vunpack.c.l.b16 %v716
        %v1559 = vunpack.c.h.b16 %v716
        %v1560 = vunpack.c.l.b16 %v717
        %v1561 = vunpack.c.h.b16 %v717
        %v1562 = vunpack.c.l.b16 %v718
        %v1563 = vunpack.c.h.b16 %v718
        %v1564 = vunpack.c.l.b16 %v719
        %v1565 = vunpack.c.h.b16 %v719
        %v1566 = vunpack.c.l.b16 %v720
        %v1567 = vunpack.c.h.b16 %v720
        %v1568 = vunpack.c.l.b16 %v721
        %v1569 = vunpack.c.h.b16 %v721
        %v1570 = vunpack.c.l.b16 %v722
        %v1571 = vunpack.c.h.b16 %v722
        %v1572 = vunpack.c.l.b16 %v723
        %v1573 = vunpack.c.h.b16 %v723
        %v1574 = vunpack.c.l.b16 %v724
        %v1575 = vunpack.c.h.b16 %v724
        %v1576 = vunpack.c.l.b16 %v725
        %v1577 = vunpack.c.h.b16 %v725
        %v1578 = vunpack.c.l.b16 %v726
        %v1579 = vunpack.c.h.b16 %v726
        %v1580 = vunpack.c.l.b16 %v727
        %v1581 = vunpack.c.h.b16 %v727
        %v1582 = vunpack.c.l.b16 %v728
        %v1583 = vunpack.c.h.b16 %v728
        %v1584 = vunpack.c.l.b16 %v729
        %v1585 = vunpack.c.h.b16 %v729
        %v1586 = vunpack.c.l.b16 %v730
        %v1587 = vunpack.c.h.b16 %v730
        %v1588 = vunpack.c.l.b16 %v731
        %v1589 = vunpack.c.h.b16 %v731
        %v1590 = vunpack.c.l.b16 %v732
        %v1591 = vunpack.c.h.b16 %v732
        %v1592 = vunpack.c.l.b16 %v733
        %v1593 = vunpack.c.h.b16 %v733
        %v1594 = vunpack.c.l.b16 %v734
        %v1595 = vunpack.c.h.b16 %v734
        %v1596 = vunpack.c.l.b16 %v735
        %v1597 = vunpack.c.h.b16 %v735
        %v1598 = vunpack.c.l.b16 %v736
        %v1599 = vunpack.c.h.b16 %v736
        %v1600 = vunpack.c.l.b16 %v737
        %v1601 = vunpack.c.h.b16 %v737
        %v1602 = vunpack.c.l.b16 %v738
        %v1603 = vunpack.c.h.b16 %v738
        %v1604 = vunpack.c.l.b16 %v739
        %v1605 = vunpack.c.h.b16 %v739
        %v1606 = vunpack.c.l.b16 %v740
        %v1607 = vunpack.c.h.b16 %v740
        %v1608 = vunpack.c.l.b16 %v741
        %v1609 = vunpack.c.h.b16 %v741
        %v1610 = vunpack.c.l.b16 %v742
        %v1611 = vunpack.c.h.b16 %v742
        %v1612 = vunpack.c.l.b16 %v743
        %v1613 = vunpack.c.h.b16 %v743
        %v1614 = vunpack.c.l.b16 %v744
        %v1615 = vunpack.c.h.b16 %v744
        %v1616 = vunpack.c.l.b16 %v745
        %v1617 = vunpack.c.h.b16 %v745
        %v1618 = vunpack.c.l.b16 %v746
        %v1619 = vunpack.c.h.b16 %v746
        %v1620 = vunpack.c.l.b16 %v747
        %v1621 = vunpack.c.h.b16 %v747
        %v1622 = vunpack.c.l.b16 %v748
        %v1623 = vunpack.c.h.b16 %v748
        %v1624 = vunpack.c.l.b16 %v749
        %v1625 = vunpack.c.h.b16 %v749
        %v1626 = vunpack.c.l.b16 %v750
        %v1627 = vunpack.c.h.b16 %v750
        %v1628 = vunpack.c.l.b16 %v751
        %v1629 = vunpack.c.h.b16 %v751
        %v1630 = vunpack.c.l.b16 %v752
        %v1631 = vunpack.c.h.b16 %v752
        %v1632 = vunpack.c.l.b16 %v753
        %v1633 = vunpack.c.h.b16 %v753
        %v1634 = vunpack.c.l.b16 %v754
        %v1635 = vunpack.c.h.b16 %v754
        %v1636 = vunpack.c.l.b16 %v755
        %v1637 = vunpack.c.h.b16 %v755
        %v1638 = vunpack.c.l.b16 %v756
        %v1639 = vunpack.c.h.b16 %v756
        %v1640 = vunpack.c.l.b16 %v757
        %v1641 = vunpack.c.h.b16 %v757
        %v1642 = vunpack.c.l.b16 %v758
        %v1643 = vunpack.c.h.b16 %v758
        %v1644 = vunpack.c.l.b16 %v759
        %v1645 = vunpack.c.h.b16 %v759
        %v1646 = vunpack.c.l.b16 %v760
        %v1647 = vunpack.c.h.b16 %v760
        %v1648 = vunpack.c.l.b16 %v761
        %v1649 = vunpack.c.h.b16 %v761
        %v1650 = vunpack.c.l.b16 %v762
        %v1651 = vunpack.c.h.b16 %v762
        %v1652 = vunpack.c.l.b16 %v763
        %v1653 = vunpack.c.h.b16 %v763
        %v1654 = vunpack.c.l.b16 %v764
        %v1655 = vunpack.c.h.b16 %v764
        %v1656 = vunpack.c.l.b16 %v765
        %v1657 = vunpack.c.h.b16 %v765
        %v1658 = vunpack.c.l.b16 %v766
        %v1659 = vunpack.c.h.b16 %v766
        %v1660 = vunpack.c.l.b16 %v767
        %v1661 = vunpack.c.h.b16 %v767
        %v1662 = vunpack.c.l.b16 %v768
        %v1663 = vunpack.c.h.b16 %v768
        %v1664 = vunpack.c.l.b16 %v769
        %v1665 = vunpack.c.h.b16 %v769
        %v1666 = vunpack.c.l.b16 %v770
        %v1667 = vunpack.c.h.b16 %v770
        %v1668 = vunpack.c.l.b16 %v771
        %v1669 = vunpack.c.h.b16 %v771
        %v1670 = vunpack.c.l.b16 %v772
        %v1671 = vunpack.c.h.b16 %v772
        %v1672 = vunpack.c.l.b16 %v773
        %v1673 = vunpack.c.h.b16 %v773
        %v1674 = vunpack.c.l.b16 %v774
        %v1675 = vunpack.c.h.b16 %v774
        %v1676 = vunpack.c.l.b16 %v775
        %v1677 = vunpack.c.h.b16 %v775
        %v1678 = vunpack.c.l.b16 %v776
        %v1679 = vunpack.c.h.b16 %v776
        %v1680 = vunpack.c.l.b16 %v777
        %v1681 = vunpack.c.h.b16 %v777
        %v1682 = vunpack.c.l.b16 %v778
        %v1683 = vunpack.c.h.b16 %v778
        %v1684 = vunpack.c.l.b16 %v779
        %v1685 = vunpack.c.h.b16 %v779
        %v1686 = vunpack.c.l.b16 %v780
        %v1687 = vunpack.c.h.b16 %v780
        %v1688 = vunpack.c.l.b16 %v781
        %v1689 = vunpack.c.h.b16 %v781
        %v1690 = vunpack.c.l.b16 %v782
        %v1691 = vunpack.c.h.b16 %v782
        %v1692 = vunpack.c.l.b16 %v783
        %v1693 = vunpack.c.h.b16 %v783
        %v1694 = vunpack.c.l.b16 %v784
        %v1695 = vunpack.c.h.b16 %v784
        %v1696 = vunpack.c.l.b16 %v785
        %v1697 = vunpack.c.h.b16 %v785
        %v1698 = vunpack.c.l.b16 %v786
        %v1699 = vunpack.c.h.b16 %v786
        %v1700 = vunpack.c.l.b16 %v787
        %v1701 = vunpack.c.h.b16 %v787
        %v1702 = vunpack.c.l.b16 %v788
        %v1703 = vunpack.c.h.b16 %v788
        %v1704 = vunpack.c.l.b16 %v789
        %v1705 = vunpack.c.h.b16 %v789
        %v1706 = vunpack.c.l.b16 %v790
        %v1707 = vunpack.c.h.b16 %v790
        %v1708 = vunpack.c.l.b16 %v791
        %v1709 = vunpack.c.h.b16 %v791
        %v1710 = vunpack.c.l.b16 %v792
        %v1711 = vunpack.c.h.b16 %v792
        %v1712 = vunpack.c.l.b16 %v793
        %v1713 = vunpack.c.h.b16 %v793
        %v1714 = vunpack.c.l.b16 %v794
        %v1715 = vunpack.c.h.b16 %v794
        %v1716 = vunpack.c.l.b16 %v795
        %v1717 = vunpack.c.h.b16 %v795
        %v1718 = vunpack.c.l.b16 %v796
        %v1719 = vunpack.c.h.b16 %v796
        %v1720 = vunpack.c.l.b16 %v797
        %v1721 = vunpack.c.h.b16 %v797
        %v1722 = vunpack.c.l.b16 %v798
        %v1723 = vunpack.c.h.b16 %v798
        %v1724 = vunpack.c.l.b16 %v799
        %v1725 = vunpack.c.h.b16 %v799
        %v1726 = vunpack.c.l.b16 %v800
        %v1727 = vunpack.c.h.b16 %v800
        %v1728 = vunpack.c.l.b16 %v801
        %v1729 = vunpack.c.h.b16 %v801
        %v1730 = vunpack.c.l.b16 %v802
        %v1731 = vunpack.c.h.b16 %v802
        %v1732 = vunpack.c.l.b16 %v803
        %v1733 = vunpack.c.h.b16 %v803
        %v1734 = vunpack.c.l.b16 %v804
        %v1735 = vunpack.c.h.b16 %v804
        %v1736 = vunpack.c.l.b16 %v805
        %v1737 = vunpack.c.h.b16 %v805
        %v1738 = vunpack.c.l.b16 %v806
        %v1739 = vunpack.c.h.b16 %v806
        %v1740 = vunpack.c.l.b16 %v807
        %v1741 = vunpack.c.h.b16 %v807
        %v1742 = vunpack.c.l.b16 %v808
        %v1743 = vunpack.c.h.b16 %v808
        %v1744 = vunpack.c.l.b16 %v809
        %v1745 = vunpack.c.h.b16 %v809
        %v1746 = vunpack.c.l.b16 %v810
        %v1747 = vunpack.c.h.b16 %v810
        %v1748 = vunpack.c.l.b16 %v811
        %v1749 = vunpack.c.h.b16 %v811
        %v1750 = vunpack.c.l.b16 %v812
        %v1751 = vunpack.c.h.b16 %v812
        %v1752 = vunpack.c.l.b16 %v813
        %v1753 = vunpack.c.h.b16 %v813
        %v1754 = vunpack.c.l.b16 %v814
        %v1755 = vunpack.c.h.b16 %v814
        %v1756 = vunpack.c.l.b16 %v815
        %v1757 = vunpack.c.h.b16 %v815
        %v1758 = vunpack.c.l.b16 %v816
        %v1759 = vunpack.c.h.b16 %v816
        %v1760 = vunpack.c.l.b16 %v817
        %v1761 = vunpack.c.h.b16 %v817
        %v1762 = vunpack.c.l.b16 %v818
        %v1763 = vunpack.c.h.b16 %v818
        %v1764 = vunpack.c.l.b16 %v819
        %v1765 = vunpack.c.h.b16 %v819
        %v1766 = vunpack.c.l.b16 %v820
        %v1767 = vunpack.c.h.b16 %v820
        %v1768 = vunpack.c.l.b16 %v821
        %v1769 = vunpack.c.h.b16 %v821
        %v1770 = vunpack.c.l.b16 %v822
        %v1771 = vunpack.c.h.b16 %v822
        %v1772 = vunpack.c.l.b16 %v823
        %v1773 = vunpack.c.h.b16 %v823
        %v1774 = vunpack.c.l.b16 %v824
        %v1775 = vunpack.c.h.b16 %v824
        %v1776 = vunpack.c.l.b16 %v825
        %v1777 = vunpack.c.h.b16 %v825
        %v1778 = vunpack.c.l.b16 %v826
        %v1779 = vunpack.c.h.b16 %v826
        %v1780 = vunpack.c.l.b16 %v827
        %v1781 = vunpack.c.h.b16 %v827
        %v1782 = vpack.c.b16 %v1336, %v1334
        %v1783 = vpack.c.b16 %v1337, %v1335
        %v1784 = vpack.c.b16 %v1340, %v1338
        %v1785 = vpack.c.b16 %v1341, %v1339
        %v1786 = vpack.c.b16 %v1344, %v1342
        %v1787 = vpack.c.b16 %v1345, %v1343
        %v1788 = vpack.c.b16 %v1348, %v1346
        %v1789 = vpack.c.b16 %v1349, %v1347
        %v1790 = vpack.c.b16 %v1352, %v1350
        %v1791 = vpack.c.b16 %v1353, %v1351
        %v1792 = vpack.c.b16 %v1356, %v1354
        %v1793 = vpack.c.b16 %v1357, %v1355
        %v1794 = vpack.c.b16 %v1360, %v1358
        %v1795 = vpack.c.b16 %v1361, %v1359
        %v1796 = vpack.c.b16 %v1364, %v1362
        %v1797 = vpack.c.b16 %v1365, %v1363
        %v1798 = vpack.c.b16 %v1368, %v1366
        %v1799 = vpack.c.b16 %v1369, %v1367
        %v1800 = vpack.c.b16 %v1372, %v1370
        %v1801 = vpack.c.b16 %v1373, %v1371
        %v1802 = vpack.c.b16 %v1376, %v1374
        %v1803 = vpack.c.b16 %v1377, %v1375
        %v1804 = vpack.c.b16 %v1380, %v1378
        %v1805 = vpack.c.b16 %v1381, %v1379
        %v1806 = vpack.c.b16 %v1384, %v1382
        %v1807 = vpack.c.b16 %v1385, %v1383
        %v1808 = vpack.c.b16 %v1388, %v1386
        %v1809 = vpack.c.b16 %v1389, %v1387
        %v1810 = vpack.c.b16 %v1392, %v1390
        %v1811 = vpack.c.b16 %v1393, %v1391
        %v1812 = vpack.c.b16 %v1396, %v1394
        %v1813 = vpack.c.b16 %v1397, %v1395
        %v1814 = vpack.c.b16 %v1400, %v1398
        %v1815 = vpack.c.b16 %v1401, %v1399
        %v1816 = vpack.c.b16 %v1404, %v1402
        %v1817 = vpack.c.b16 %v1405, %v1403
        %v1818 = vpack.c.b16 %v1408, %v1406
        %v1819 = vpack.c.b16 %v1409, %v1407
        %v1820 = vpack.c.b16 %v1412, %v1410
        %v1821 = vpack.c.b16 %v1413, %v1411
        %v1822 = vpack.c.b16 %v1416, %v1414
        %v1823 = vpack.c.b16 %v1417, %v1415
        %v1824 = vpack.c.b16 %v1420, %v1418
        %v1825 = vpack.c.b16 %v1421, %v1419
        %v1826 = vpack.c.b16 %v1424, %v1422
        %v1827 = vpack.c.b16 %v1425, %v1423
        %v1828 = vpack.c.b16 %v1428, %v1426
        %v1829 = vpack.c.b16 %v1429, %v1427
        %v1830 = vpack.c.b16 %v1432, %v1430
        %v1831 = vpack.c.b16 %v1433, %v1431
        %v1832 = vpack.c.b16 %v1436, %v1434
        %v1833 = vpack.c.b16 %v1437, %v1435
        %v1834 = vpack.c.b16 %v1440, %v1438
        %v1835 = vpack.c.b16 %v1441, %v1439
        %v1836 = vpack.c.b16 %v1444, %v1442
        %v1837 = vpack.c.b16 %v1445, %v1443
        %v1838 = vpack.c.b16 %v1448, %v1446
        %v1839 = vpack.c.b16 %v1449, %v1447
        %v1840 = vpack.c.b16 %v1452, %v1450
        %v1841 = vpack.c.b16 %v1453, %v1451
        %v1842 = vpack.c.b16 %v1456, %v1454
        %v1843 = vpack.c.b16 %v1457, %v1455
        %v1844 = vpack.c.b16 %v1460, %v1458
        %v1845 = vpack.c.b16 %v1461, %v1459
        %v1846 = vpack.c.b16 %v1464, %v1462
        %v1847 = vpack.c.b16 %v1465, %v1463
        %v1848 = vpack.c.b16 %v1468, %v1466
        %v1849 = vpack.c.b16 %v1469, %v1467
        %v1850 = vpack.c.b16 %v1472, %v1470
        %v1851 = vpack.c.b16 %v1473, %v1471
        %v1852 = vpack.c.b16 %v1476, %v1474
        %v1853 = vpack.c.b16 %v1477, %v1475
        %v1854 = vpack.c.b16 %v1480, %v1478
        %v1855 = vpack.c.b16 %v1481, %v1479
        %v1856 = vpack.c.b16 %v1484, %v1482
        %v1857 = vpack.c.b16 %v1485, %v1483
        %v1858 = vpack.c.b16 %v1488, %v1486
        %v1859 = vpack.c.b16 %v1489, %v1487
        %v1860 = vpack.c.b16 %v1492, %v1490
        %v1861 = vpack.c.b16 %v1493, %v1491
        %v1862 = vpack.c.b16 %v1496, %v1494
        %v1863 = vpack.c.b16 %v1497, %v1495
        %v1864 = vpack.c.b16 %v1500, %v1498
        %v1865 = vpack.c.b16 %v1501, %v1499
        %v1866 = vpack.c.b16 %v1504, %v1502
        %v1867 = vpack.c.b16 %v1505, %v1503
        %v1868 = vpack.c.b16 %v1508, %v1506
        %v1869 = vpack.c.b16 %v1509, %v1507
        %v1870 = vpack.c.b16 %v1512, %v1510
        %v1871 = vpack.c.b16 %v1513, %v1511
        %v1872 = vpack.c.b16 %v1516, %v1514
        %v1873 = vpack.c.b16 %v1517, %v1515
        %v1874 = vpack.c.b16 %v1520, %v1518
        %v1875 = vpack.c.b16 %v1521, %v1519
        %v1876 = vpack.c.b16 %v1524, %v1522
        %v1877 = vpack.c.b16 %v1525, %v1523
        %v1878 = vpack.c.b16 %v1528, %v1526
        %v1879 = vpack.c.b16 %v1529, %v1527
        %v1880 = vpack.c.b16 %v1532, %v1530
        %v1881 = vpack.c.b16 %v1533, %v1531
        %v1882 = vpack.c.b16 %v1536, %v1534
        %v1883 = vpack.c.b16 %v1537, %v1535
        %v1884 = vpack.c.b16 %v1540, %v1538
        %v1885 = vpack.c.b16 %v1541, %v1539
        %v1886 = vpack.c.b16 %v1544, %v1542
        %v1887 = vpack.c.b16 %v1545, %v1543
        %v1888 = vpack.c.b16 %v1548, %v1546
        %v1889 = vpack.c.b16 %v1549, %v1547
        %v1890 = vpack.c.b16 %v1552, %v1550
        %v1891 = vpack.c.b16 %v1553, %v1551
        %v1892 = vpack.c.b16 %v1556, %v1554
        %v1893 = vpack.c.b16 %v1557, %v1555
        %v1894 = vpack.c.b16 %v1560, %v1558
        %v1895 = vpack.c.b16 %v1561, %v1559
        %v1896 = vpack.c.b16 %v1564, %v1562
        %v1897 = vpack.c.b16 %v1565, %v1563
        %v1898 = vpack.c.b16 %v1568, %v1566
        %v1899 = vpack.c.b16 %v1569, %v1567
        %v1900 = vpack.c.b16 %v1572, %v1570
        %v1901 = vpack.c.b16 %v1573, %v1571
        %v1902 = vpack.c.b16 %v1576, %v1574
        %v1903 = vpack.c.b16 %v1577, %v1575
        %v1904 = vpack.c.b16 %v1580, %v1578
        %v1905 = vpack.c.b16 %v1581, %v1579
        %v1906 = vpack.c.b16 %v1584, %v1582
        %v1907 = vpack.c.b16 %v1585, %v1583
        %v1908 = vpack.c.b16 %v1588, %v1586
        %v1909 = vpack.c.b16 %v1589, %v1587
        %v1910 = vpack.c.b16 %v1592, %v1590
        %v1911 = vpack.c.b16 %v1593, %v1591
        %v1912 = vpack.c.b16 %v1596, %v1594
        %v1913 = vpack.c.b16 %v1597, %v1595
        %v1914 = vpack.c.b16 %v1600, %v1598
        %v1915 = vpack.c.b16 %v1601, %v1599
        %v1916 = vpack.c.b16 %v1604, %v1602
        %v1917 = vpack.c.b16 %v1605, %v1603
        %v1918 = vpack.c.b16 %v1608, %v1606
        %v1919 = vpack.c.b16 %v1609, %v1607
        %v1920 = vpack.c.b16 %v1612, %v1610
        %v1921 = vpack.c.b16 %v1613, %v1611
        %v1922 = vpack.c.b16 %v1616, %v1614
        %v1923 = vpack.c.b16 %v1617, %v1615
        %v1924 = vpack.c.b16 %v1620, %v1618
        %v1925 = vpack.c.b16 %v1621, %v1619
        %v1926 = vpack.c.b16 %v1624, %v1622
        %v1927 = vpack.c.b16 %v1625, %v1623
        %v1928 = vpack.c.b16 %v1628, %v1626
        %v1929 = vpack.c.b16 %v1629, %v1627
        %v1930 = vpack.c.b16 %v1632, %v1630
        %v1931 = vpack.c.b16 %v1633, %v1631
        %v1932 = vpack.c.b16 %v1636, %v1634
        %v1933 = vpack.c.b16 %v1637, %v1635
        %v1934 = vpack.c.b16 %v1640, %v1638
        %v1935 = vpack.c.b16 %v1641, %v1639
        %v1936 = vpack.c.b16 %v1644, %v1642
        %v1937 = vpack.c.b16 %v1645, %v1643
        %v1938 = vpack.c.b16 %v1648, %v1646
        %v1939 = vpack.c.b16 %v1649, %v1647
        %v1940 = vpack.c.b16 %v1652, %v1650
        %v1941 = vpack.c.b16 %v1653, %v1651
        %v1942 = vpack.c.b16 %v1656, %v1654
        %v1943 = vpack.c.b16 %v1657, %v1655
        %v1944 = vpack.c.b16 %v1660, %v1658
        %v1945 = vpack.c.b16 %v1661, %v1659
        %v1946 = vpack.c.b16 %v1664, %v1662
        %v1947 = vpack.c.b16 %v1665, %v1663
        %v1948 = vpack.c.b16 %v1668, %v1666
        %v1949 = vpack.c.b16 %v1669, %v1667
        %v1950 = vpack.c.b16 %v1672, %v1670
        %v1951 = vpack.c.b16 %v1673, %v1671
        %v1952 = vpack.c.b16 %v1676, %v1674
        %v1953 = vpack.c.b16 %v1677, %v1675
        %v1954 = vpack.c.b16 %v1680, %v1678
        %v1955 = vpack.c.b16 %v1681, %v1679
        %v1956 = vpack.c.b16 %v1684, %v1682
        %v1957 = vpack.c.b16 %v1685, %v1683
        %v1958 = vpack.c.b16 %v1688, %v1686
        %v1959 = vpack.c.b16 %v1689, %v1687
        %v1960 = vpack.c.b16 %v1692, %v1690
        %v1961 = vpack.c.b16 %v1693, %v1691
        %v1962 = vpack.c.b16 %v1696, %v1694
        %v1963 = vpack.c.b16 %v1697, %v1695
        %v1964 = vpack.c.b16 %v1700, %v1698
        %v1965 = vpack.c.b16 %v1701, %v1699
        %v1966 = vpack.c.b16 %v1704, %v1702
        %v1967 = vpack.c.b16 %v1705, %v1703
        %v1968 = vpack.c.b16 %v1708, %v1706
        %v1969 = vpack.c.b16 %v1709, %v1707
        %v1970 = vpack.c.b16 %v1712, %v1710
        %v1971 = vpack.c.b16 %v1713, %v1711
        %v1972 = vpack.c.b16 %v1716, %v1714
        %v1973 = vpack.c.b16 %v1717, %v1715
        %v1974 = vpack.c.b16 %v1720, %v1718
        %v1975 = vpack.c.b16 %v1721, %v1719
        %v1976 = vpack.c.b16 %v1724, %v1722
        %v1977 = vpack.c.b16 %v1725, %v1723
        %v1978 = vpack.c.b16 %v1728, %v1726
        %v1979 = vpack.c.b16 %v1729, %v1727
        %v1980 = vpack.c.b16 %v1732, %v1730
        %v1981 = vpack.c.b16 %v1733, %v1731
        %v1982 = vpack.c.b16 %v1736, %v1734
        %v1983 = vpack.c.b16 %v1737, %v1735
        %v1984 = vpack.c.b16 %v1740, %v1738
        %v1985 = vpack.c.b16 %v1741, %v1739
        %v1986 = vpack.c.b16 %v1744, %v1742
        %v1987 = vpack.c.b16 %v1745, %v1743
        %v1988 = vpack.c.b16 %v1748, %v1746
        %v1989 = vpack.c.b16 %v1749, %v1747
        %v1990 = vpack.c.b16 %v1752, %v1750
        %v1991 = vpack.c.b16 %v1753, %v1751
        %v1992 = vpack.c.b16 %v1756, %v1754
        %v1993 = vpack.c.b16 %v1757, %v1755
        %v1994 = vpack.c.b16 %v1760, %v1758
        %v1995 = vpack.c.b16 %v1761, %v1759
        %v1996 = vpack.c.b16 %v1764, %v1762
        %v1997 = vpack.c.b16 %v1765, %v1763
        %v1998 = vpack.c.b16 %v1768, %v1766
        %v1999 = vpack.c.b16 %v1769, %v1767
        %v2000 = vpack.c.b16 %v1772, %v1770
        %v2001 = vpack.c.b16 %v1773, %v1771
        %v2002 = vpack.c.b16 %v1776, %v1774
        %v2003 = vpack.c.b16 %v1777, %v1775
        %v2004 = vpack.c.b16 %v1780, %v1778
        %v2005 = vpack.c.b16 %v1781, %v1779
        %2230 = vmatprep.subr.bf16.mxu0 %v1783
        %2231 = vmatpush1.bf16.msra.mxu0 %v1782
        %2232 = vmatprep.subr.bf16.mxu0 %v1785
        %2233 = vmatpush1.bf16.msra.mxu0 %v1784
        %2234 = vmatprep.subr.bf16.mxu0 %v1787
        %2235 = vmatpush1.bf16.msra.mxu0 %v1786
        %2236 = vmatprep.subr.bf16.mxu0 %v1789
        %2237 = vmatpush1.bf16.msra.mxu0 %v1788
        %2238 = vmatprep.subr.bf16.mxu0 %v1791
        %2239 = vmatpush1.bf16.msra.mxu0 %v1790
        %2240 = vmatprep.subr.bf16.mxu0 %v1793
        %2241 = vmatpush1.bf16.msra.mxu0 %v1792
        %2242 = vmatprep.subr.bf16.mxu0 %v1795
        %2243 = vmatpush1.bf16.msra.mxu0 %v1794
        %2244 = vmatprep.subr.bf16.mxu0 %v1797
        %2245 = vmatpush1.bf16.msra.mxu0 %v1796
        %2246 = vmatprep.subr.bf16.mxu0 %v1799
        %2247 = vmatpush1.bf16.msra.mxu0 %v1798
        %2248 = vmatprep.subr.bf16.mxu0 %v1801
        %2249 = vmatpush1.bf16.msra.mxu0 %v1800
        %2250 = vmatprep.subr.bf16.mxu0 %v1803
        %2251 = vmatpush1.bf16.msra.mxu0 %v1802
        %2252 = vmatprep.subr.bf16.mxu0 %v1805
        %2253 = vmatpush1.bf16.msra.mxu0 %v1804
        %2254 = vmatprep.subr.bf16.mxu0 %v1807
        %2255 = vmatpush1.bf16.msra.mxu0 %v1806
        %2256 = vmatprep.subr.bf16.mxu0 %v1809
        %2257 = vmatpush1.bf16.msra.mxu0 %v1808
        %2258 = vmatprep.subr.bf16.mxu0 %v1811
        %2259 = vmatpush1.bf16.msra.mxu0 %v1810
        %2260 = vmatprep.subr.bf16.mxu0 %v1813
        %2261 = vmatpush1.bf16.msra.mxu0 %v1812
        %2262 = vmatprep.mubr.bf16.mxu0 %v999
        %2263 = vmatmul.mubr.bf16.gmra.mrb[0].mxu0 %v998
        %v2264 = vpop.f32.mrb[0].mxu0
        %v2265 = vadd.f32 0.0, %v2264
        %v2266 = vpop.f32.mrb[0].mxu0
        %v2267 = vadd.f32 0.0, %v2266
        %v2268 = vpop.f32.mrb[0].mxu0
        %v2269 = vadd.f32 0.0, %v2268
        %v2270 = vpop.f32.mrb[0].mxu0
        %v2271 = vadd.f32 0.0, %v2270
        %2272 = vmatprep.mubr.bf16.mxu0 %v1013
        %2273 = vmatmul.mubr.bf16.gmra.mrb[0].mxu0 %v1012
        %v2274 = vpop.f32.mrb[0].mxu0
        %v2275 = vadd.f32 0.0, %v2274
        %v2276 = vpop.f32.mrb[0].mxu0
        %v2277 = vadd.f32 0.0, %v2276
        %v2278 = vpop.f32.mrb[0].mxu0
        %v2279 = vadd.f32 0.0, %v2278
        %v2280 = vpop.f32.mrb[0].mxu0
        %v2281 = vadd.f32 0.0, %v2280
        %2282 = vmatprep.mubr.bf16.mxu0 %v1027
        %2283 = vmatmul.mubr.bf16.gmra.mrb[0].mxu0 %v1026
        %v2284 = vpop.f32.mrb[0].mxu0
        %v2285 = vadd.f32 0.0, %v2284
        %v2286 = vpop.f32.mrb[0].mxu0
        %v2287 = vadd.f32 0.0, %v2286
        %v2288 = vpop.f32.mrb[0].mxu0
        %v2289 = vadd.f32 0.0, %v2288
        %v2290 = vpop.f32.mrb[0].mxu0
        %v2291 = vadd.f32 0.0, %v2290
        %2292 = vmatprep.mubr.bf16.mxu0 %v1041
        %2293 = vmatmul.mubr.bf16.gmra.mrb[0].mxu0 %v1040
        %v2294 = vpop.f32.mrb[0].mxu0
        %v2295 = vadd.f32 0.0, %v2294
        %v2296 = vpop.f32.mrb[0].mxu0
        %v2297 = vadd.f32 0.0, %v2296
        %v2298 = vpop.f32.mrb[0].mxu0
        %v2299 = vadd.f32 0.0, %v2298
        %v2300 = vpop.f32.mrb[0].mxu0
        %v2301 = vadd.f32 0.0, %v2300
        %2302 = vdwg.mxu0
        %2303 = vmatprep.subr.bf16.mxu0 %v1815
        %2304 = vmatpush1.bf16.msra.mxu0 %v1814
        %2305 = vmatprep.subr.bf16.mxu0 %v1817
        %2306 = vmatpush1.bf16.msra.mxu0 %v1816
        %2307 = vmatprep.subr.bf16.mxu0 %v1819
        %2308 = vmatpush1.bf16.msra.mxu0 %v1818
        %2309 = vmatprep.subr.bf16.mxu0 %v1821
        %2310 = vmatpush1.bf16.msra.mxu0 %v1820
        %2311 = vmatprep.subr.bf16.mxu0 %v1823
        %2312 = vmatpush1.bf16.msra.mxu0 %v1822
        %2313 = vmatprep.subr.bf16.mxu0 %v1825
        %2314 = vmatpush1.bf16.msra.mxu0 %v1824
        %2315 = vmatprep.subr.bf16.mxu0 %v1827
        %2316 = vmatpush1.bf16.msra.mxu0 %v1826
        %2317 = vmatprep.subr.bf16.mxu0 %v1829
        %2318 = vmatpush1.bf16.msra.mxu0 %v1828
        %2319 = vmatprep.subr.bf16.mxu0 %v1831
        %2320 = vmatpush1.bf16.msra.mxu0 %v1830
        %2321 = vmatprep.subr.bf16.mxu0 %v1833
        %2322 = vmatpush1.bf16.msra.mxu0 %v1832
        %2323 = vmatprep.subr.bf16.mxu0 %v1835
        %2324 = vmatpush1.bf16.msra.mxu0 %v1834
        %2325 = vmatprep.subr.bf16.mxu0 %v1837
        %2326 = vmatpush1.bf16.msra.mxu0 %v1836
        %2327 = vmatprep.subr.bf16.mxu0 %v1839
        %2328 = vmatpush1.bf16.msra.mxu0 %v1838
        %2329 = vmatprep.subr.bf16.mxu0 %v1841
        %2330 = vmatpush1.bf16.msra.mxu0 %v1840
        %2331 = vmatprep.subr.bf16.mxu0 %v1843
        %2332 = vmatpush1.bf16.msra.mxu0 %v1842
        %2333 = vmatprep.subr.bf16.mxu0 %v1845
        %2334 = vmatpush1.bf16.msra.mxu0 %v1844
        %2335 = vmatprep.mubr.bf16.mxu0 %v1001
        %2336 = vmatmul.mubr.bf16.gmra.mrb[0].mxu0 %v1000
        %v2337 = vpop.f32.mrb[0].mxu0
        %v2338 = vadd.f32 %v2265, %v2337
        %v2339 = vpop.f32.mrb[0].mxu0
        %v2340 = vadd.f32 %v2267, %v2339
        %v2341 = vpop.f32.mrb[0].mxu0
        %v2342 = vadd.f32 %v2269, %v2341
        %v2343 = vpop.f32.mrb[0].mxu0
        %v2344 = vadd.f32 %v2271, %v2343
        %2345 = vmatprep.mubr.bf16.mxu0 %v1015
        %2346 = vmatmul.mubr.bf16.gmra.mrb[0].mxu0 %v1014
        %v2347 = vpop.f32.mrb[0].mxu0
        %v2348 = vadd.f32 %v2275, %v2347
        %v2349 = vpop.f32.mrb[0].mxu0
        %v2350 = vadd.f32 %v2277, %v2349
        %v2351 = vpop.f32.mrb[0].mxu0
        %v2352 = vadd.f32 %v2279, %v2351
        %v2353 = vpop.f32.mrb[0].mxu0
        %v2354 = vadd.f32 %v2281, %v2353
        %2355 = vmatprep.mubr.bf16.mxu0 %v1029
        %2356 = vmatmul.mubr.bf16.gmra.mrb[0].mxu0 %v1028
        %v2357 = vpop.f32.mrb[0].mxu0
        %v2358 = vadd.f32 %v2285, %v2357
        %v2359 = vpop.f32.mrb[0].mxu0
        %v2360 = vadd.f32 %v2287, %v2359
        %v2361 = vpop.f32.mrb[0].mxu0
        %v2362 = vadd.f32 %v2289, %v2361
        %v2363 = vpop.f32.mrb[0].mxu0
        %v2364 = vadd.f32 %v2291, %v2363
        %2365 = vmatprep.mubr.bf16.mxu0 %v1043
        %2366 = vmatmul.mubr.bf16.gmra.mrb[0].mxu0 %v1042
        %v2367 = vpop.f32.mrb[0].mxu0
        %v2368 = vadd.f32 %v2295, %v2367
        %v2369 = vpop.f32.mrb[0].mxu0
        %v2370 = vadd.f32 %v2297, %v2369
        %v2371 = vpop.f32.mrb[0].mxu0
        %v2372 = vadd.f32 %v2299, %v2371
        %v2373 = vpop.f32.mrb[0].mxu0
        %v2374 = vadd.f32 %v2301, %v2373
        %2375 = vdwg.mxu0
        %2376 = vmatprep.subr.bf16.mxu0 %v1847
        %2377 = vmatpush1.bf16.msra.mxu0 %v1846
        %2378 = vmatprep.subr.bf16.mxu0 %v1849
        %2379 = vmatpush1.bf16.msra.mxu0 %v1848
        %2380 = vmatprep.subr.bf16.mxu0 %v1851
        %2381 = vmatpush1.bf16.msra.mxu0 %v1850
        %2382 = vmatprep.subr.bf16.mxu0 %v1853
        %2383 = vmatpush1.bf16.msra.mxu0 %v1852
        %2384 = vmatprep.subr.bf16.mxu0 %v1855
        %2385 = vmatpush1.bf16.msra.mxu0 %v1854
        %2386 = vmatprep.subr.bf16.mxu0 %v1857
        %2387 = vmatpush1.bf16.msra.mxu0 %v1856
        %2388 = vmatprep.subr.bf16.mxu0 %v1859
        %2389 = vmatpush1.bf16.msra.mxu0 %v1858
        %2390 = vmatprep.subr.bf16.mxu0 %v1861
        %2391 = vmatpush1.bf16.msra.mxu0 %v1860
        %2392 = vmatprep.subr.bf16.mxu0 %v1863
        %2393 = vmatpush1.bf16.msra.mxu0 %v1862
        %2394 = vmatprep.subr.bf16.mxu0 %v1865
        %2395 = vmatpush1.bf16.msra.mxu0 %v1864
        %2396 = vmatprep.subr.bf16.mxu0 %v1867
        %2397 = vmatpush1.bf16.msra.mxu0 %v1866
        %2398 = vmatprep.subr.bf16.mxu0 %v1869
        %2399 = vmatpush1.bf16.msra.mxu0 %v1868
        %2400 = vmatprep.subr.bf16.mxu0 %v1871
        %2401 = vmatpush1.bf16.msra.mxu0 %v1870
        %2402 = vmatprep.subr.bf16.mxu0 %v1873
        %2403 = vmatpush1.bf16.msra.mxu0 %v1872
        %2404 = vmatprep.subr.bf16.mxu0 %v1875
        %2405 = vmatpush1.bf16.msra.mxu0 %v1874
        %2406 = vmatprep.subr.bf16.mxu0 %v1877
        %2407 = vmatpush1.bf16.msra.mxu0 %v1876
        %2408 = vmatprep.mubr.bf16.mxu0 %v1003
        %2409 = vmatmul.mubr.bf16.gmra.mrb[0].mxu0 %v1002
        %v2410 = vpop.f32.mrb[0].mxu0
        %v2411 = vadd.f32 %v2338, %v2410
        %v2412 = vpop.f32.mrb[0].mxu0
        %v2413 = vadd.f32 %v2340, %v2412
        %v2414 = vpop.f32.mrb[0].mxu0
        %v2415 = vadd.f32 %v2342, %v2414
        %v2416 = vpop.f32.mrb[0].mxu0
        %v2417 = vadd.f32 %v2344, %v2416
        %2418 = vmatprep.mubr.bf16.mxu0 %v1017
        %2419 = vmatmul.mubr.bf16.gmra.mrb[0].mxu0 %v1016
        %v2420 = vpop.f32.mrb[0].mxu0
        %v2421 = vadd.f32 %v2348, %v2420
        %v2422 = vpop.f32.mrb[0].mxu0
        %v2423 = vadd.f32 %v2350, %v2422
        %v2424 = vpop.f32.mrb[0].mxu0
        %v2425 = vadd.f32 %v2352, %v2424
        %v2426 = vpop.f32.mrb[0].mxu0
        %v2427 = vadd.f32 %v2354, %v2426
        %2428 = vmatprep.mubr.bf16.mxu0 %v1031
        %2429 = vmatmul.mubr.bf16.gmra.mrb[0].mxu0 %v1030
        %v2430 = vpop.f32.mrb[0].mxu0
        %v2431 = vadd.f32 %v2358, %v2430
        %v2432 = vpop.f32.mrb[0].mxu0
        %v2433 = vadd.f32 %v2360, %v2432
        %v2434 = vpop.f32.mrb[0].mxu0
        %v2435 = vadd.f32 %v2362, %v2434
        %v2436 = vpop.f32.mrb[0].mxu0
        %v2437 = vadd.f32 %v2364, %v2436
        %2438 = vmatprep.mubr.bf16.mxu0 %v1045
        %2439 = vmatmul.mubr.bf16.gmra.mrb[0].mxu0 %v1044
        %v2440 = vpop.f32.mrb[0].mxu0
        %v2441 = vadd.f32 %v2368, %v2440
        %v2442 = vpop.f32.mrb[0].mxu0
        %v2443 = vadd.f32 %v2370, %v2442
        %v2444 = vpop.f32.mrb[0].mxu0
        %v2445 = vadd.f32 %v2372, %v2444
        %v2446 = vpop.f32.mrb[0].mxu0
        %v2447 = vadd.f32 %v2374, %v2446
        %2448 = vdwg.mxu0
        %2449 = vmatprep.subr.bf16.mxu0 %v1879
        %2450 = vmatpush1.bf16.msra.mxu0 %v1878
        %2451 = vmatprep.subr.bf16.mxu0 %v1881
        %2452 = vmatpush1.bf16.msra.mxu0 %v1880
        %2453 = vmatprep.subr.bf16.mxu0 %v1883
        %2454 = vmatpush1.bf16.msra.mxu0 %v1882
        %2455 = vmatprep.subr.bf16.mxu0 %v1885
        %2456 = vmatpush1.bf16.msra.mxu0 %v1884
        %2457 = vmatprep.subr.bf16.mxu0 %v1887
        %2458 = vmatpush1.bf16.msra.mxu0 %v1886
        %2459 = vmatprep.subr.bf16.mxu0 %v1889
        %2460 = vmatpush1.bf16.msra.mxu0 %v1888
        %2461 = vmatprep.subr.bf16.mxu0 %v1891
        %2462 = vmatpush1.bf16.msra.mxu0 %v1890
        %2463 = vmatprep.subr.bf16.mxu0 %v1893
        %2464 = vmatpush1.bf16.msra.mxu0 %v1892
        %2465 = vmatprep.subr.bf16.mxu0 %v1895
        %2466 = vmatpush1.bf16.msra.mxu0 %v1894
        %2467 = vmatprep.subr.bf16.mxu0 %v1897
        %2468 = vmatpush1.bf16.msra.mxu0 %v1896
        %2469 = vmatprep.subr.bf16.mxu0 %v1899
        %2470 = vmatpush1.bf16.msra.mxu0 %v1898
        %2471 = vmatprep.subr.bf16.mxu0 %v1901
        %2472 = vmatpush1.bf16.msra.mxu0 %v1900
        %2473 = vmatprep.subr.bf16.mxu0 %v1903
        %2474 = vmatpush1.bf16.msra.mxu0 %v1902
        %2475 = vmatprep.subr.bf16.mxu0 %v1905
        %2476 = vmatpush1.bf16.msra.mxu0 %v1904
        %2477 = vmatprep.subr.bf16.mxu0 %v1907
        %2478 = vmatpush1.bf16.msra.mxu0 %v1906
        %2479 = vmatprep.subr.bf16.mxu0 %v1909
        %2480 = vmatpush1.bf16.msra.mxu0 %v1908
        %2481 = vmatprep.mubr.bf16.mxu0 %v1005
        %2482 = vmatmul.mubr.bf16.gmra.mrb[0].mxu0 %v1004
        %v2483 = vpop.f32.mrb[0].mxu0
        %v2484 = vadd.f32 %v2411, %v2483
        %v2485 = vpop.f32.mrb[0].mxu0
        %v2486 = vadd.f32 %v2413, %v2485
        %v2487 = vpop.f32.mrb[0].mxu0
        %v2488 = vadd.f32 %v2415, %v2487
        %v2489 = vpop.f32.mrb[0].mxu0
        %v2490 = vadd.f32 %v2417, %v2489
        %2491 = vmatprep.mubr.bf16.mxu0 %v1019
        %2492 = vmatmul.mubr.bf16.gmra.mrb[0].mxu0 %v1018
        %v2493 = vpop.f32.mrb[0].mxu0
        %v2494 = vadd.f32 %v2421, %v2493
        %v2495 = vpop.f32.mrb[0].mxu0
        %v2496 = vadd.f32 %v2423, %v2495
        %v2497 = vpop.f32.mrb[0].mxu0
        %v2498 = vadd.f32 %v2425, %v2497
        %v2499 = vpop.f32.mrb[0].mxu0
        %v2500 = vadd.f32 %v2427, %v2499
        %2501 = vmatprep.mubr.bf16.mxu0 %v1033
        %2502 = vmatmul.mubr.bf16.gmra.mrb[0].mxu0 %v1032
        %v2503 = vpop.f32.mrb[0].mxu0
        %v2504 = vadd.f32 %v2431, %v2503
        %v2505 = vpop.f32.mrb[0].mxu0
        %v2506 = vadd.f32 %v2433, %v2505
        %v2507 = vpop.f32.mrb[0].mxu0
        %v2508 = vadd.f32 %v2435, %v2507
        %v2509 = vpop.f32.mrb[0].mxu0
        %v2510 = vadd.f32 %v2437, %v2509
        %2511 = vmatprep.mubr.bf16.mxu0 %v1047
        %2512 = vmatmul.mubr.bf16.gmra.mrb[0].mxu0 %v1046
        %v2513 = vpop.f32.mrb[0].mxu0
        %v2514 = vadd.f32 %v2441, %v2513
        %v2515 = vpop.f32.mrb[0].mxu0
        %v2516 = vadd.f32 %v2443, %v2515
        %v2517 = vpop.f32.mrb[0].mxu0
        %v2518 = vadd.f32 %v2445, %v2517
        %v2519 = vpop.f32.mrb[0].mxu0
        %v2520 = vadd.f32 %v2447, %v2519
        %2521 = vdwg.mxu0
        %2522 = vmatprep.subr.bf16.mxu0 %v1911
        %2523 = vmatpush1.bf16.msra.mxu0 %v1910
        %2524 = vmatprep.subr.bf16.mxu0 %v1913
        %2525 = vmatpush1.bf16.msra.mxu0 %v1912
        %2526 = vmatprep.subr.bf16.mxu0 %v1915
        %2527 = vmatpush1.bf16.msra.mxu0 %v1914
        %2528 = vmatprep.subr.bf16.mxu0 %v1917
        %2529 = vmatpush1.bf16.msra.mxu0 %v1916
        %2530 = vmatprep.subr.bf16.mxu0 %v1919
        %2531 = vmatpush1.bf16.msra.mxu0 %v1918
        %2532 = vmatprep.subr.bf16.mxu0 %v1921
        %2533 = vmatpush1.bf16.msra.mxu0 %v1920
        %2534 = vmatprep.subr.bf16.mxu0 %v1923
        %2535 = vmatpush1.bf16.msra.mxu0 %v1922
        %2536 = vmatprep.subr.bf16.mxu0 %v1925
        %2537 = vmatpush1.bf16.msra.mxu0 %v1924
        %2538 = vmatprep.subr.bf16.mxu0 %v1927
        %2539 = vmatpush1.bf16.msra.mxu0 %v1926
        %2540 = vmatprep.subr.bf16.mxu0 %v1929
        %2541 = vmatpush1.bf16.msra.mxu0 %v1928
        %2542 = vmatprep.subr.bf16.mxu0 %v1931
        %2543 = vmatpush1.bf16.msra.mxu0 %v1930
        %2544 = vmatprep.subr.bf16.mxu0 %v1933
        %2545 = vmatpush1.bf16.msra.mxu0 %v1932
        %2546 = vmatprep.subr.bf16.mxu0 %v1935
        %2547 = vmatpush1.bf16.msra.mxu0 %v1934
        %2548 = vmatprep.subr.bf16.mxu0 %v1937
        %2549 = vmatpush1.bf16.msra.mxu0 %v1936
        %2550 = vmatprep.subr.bf16.mxu0 %v1939
        %2551 = vmatpush1.bf16.msra.mxu0 %v1938
        %2552 = vmatprep.subr.bf16.mxu0 %v1941
        %2553 = vmatpush1.bf16.msra.mxu0 %v1940
        %2554 = vmatprep.mubr.bf16.mxu0 %v1007
        %2555 = vmatmul.mubr.bf16.gmra.mrb[0].mxu0 %v1006
        %v2556 = vpop.f32.mrb[0].mxu0
        %v2557 = vadd.f32 %v2484, %v2556
        %v2558 = vpop.f32.mrb[0].mxu0
        %v2559 = vadd.f32 %v2486, %v2558
        %v2560 = vpop.f32.mrb[0].mxu0
        %v2561 = vadd.f32 %v2488, %v2560
        %v2562 = vpop.f32.mrb[0].mxu0
        %v2563 = vadd.f32 %v2490, %v2562
        %2564 = vmatprep.mubr.bf16.mxu0 %v1021
        %2565 = vmatmul.mubr.bf16.gmra.mrb[0].mxu0 %v1020
        %v2566 = vpop.f32.mrb[0].mxu0
        %v2567 = vadd.f32 %v2494, %v2566
        %v2568 = vpop.f32.mrb[0].mxu0
        %v2569 = vadd.f32 %v2496, %v2568
        %v2570 = vpop.f32.mrb[0].mxu0
        %v2571 = vadd.f32 %v2498, %v2570
        %v2572 = vpop.f32.mrb[0].mxu0
        %v2573 = vadd.f32 %v2500, %v2572
        %2574 = vmatprep.mubr.bf16.mxu0 %v1035
        %2575 = vmatmul.mubr.bf16.gmra.mrb[0].mxu0 %v1034
        %v2576 = vpop.f32.mrb[0].mxu0
        %v2577 = vadd.f32 %v2504, %v2576
        %v2578 = vpop.f32.mrb[0].mxu0
        %v2579 = vadd.f32 %v2506, %v2578
        %v2580 = vpop.f32.mrb[0].mxu0
        %v2581 = vadd.f32 %v2508, %v2580
        %v2582 = vpop.f32.mrb[0].mxu0
        %v2583 = vadd.f32 %v2510, %v2582
        %2584 = vmatprep.mubr.bf16.mxu0 %v1049
        %2585 = vmatmul.mubr.bf16.gmra.mrb[0].mxu0 %v1048
        %v2586 = vpop.f32.mrb[0].mxu0
        %v2587 = vadd.f32 %v2514, %v2586
        %v2588 = vpop.f32.mrb[0].mxu0
        %v2589 = vadd.f32 %v2516, %v2588
        %v2590 = vpop.f32.mrb[0].mxu0
        %v2591 = vadd.f32 %v2518, %v2590
        %v2592 = vpop.f32.mrb[0].mxu0
        %v2593 = vadd.f32 %v2520, %v2592
        %2594 = vdwg.mxu0
        %2595 = vmatprep.subr.bf16.mxu0 %v1943
        %2596 = vmatpush1.bf16.msra.mxu0 %v1942
        %2597 = vmatprep.subr.bf16.mxu0 %v1945
        %2598 = vmatpush1.bf16.msra.mxu0 %v1944
        %2599 = vmatprep.subr.bf16.mxu0 %v1947
        %2600 = vmatpush1.bf16.msra.mxu0 %v1946
        %2601 = vmatprep.subr.bf16.mxu0 %v1949
        %2602 = vmatpush1.bf16.msra.mxu0 %v1948
        %2603 = vmatprep.subr.bf16.mxu0 %v1951
        %2604 = vmatpush1.bf16.msra.mxu0 %v1950
        %2605 = vmatprep.subr.bf16.mxu0 %v1953
        %2606 = vmatpush1.bf16.msra.mxu0 %v1952
        %2607 = vmatprep.subr.bf16.mxu0 %v1955
        %2608 = vmatpush1.bf16.msra.mxu0 %v1954
        %2609 = vmatprep.subr.bf16.mxu0 %v1957
        %2610 = vmatpush1.bf16.msra.mxu0 %v1956
        %2611 = vmatprep.subr.bf16.mxu0 %v1959
        %2612 = vmatpush1.bf16.msra.mxu0 %v1958
        %2613 = vmatprep.subr.bf16.mxu0 %v1961
        %2614 = vmatpush1.bf16.msra.mxu0 %v1960
        %2615 = vmatprep.subr.bf16.mxu0 %v1963
        %2616 = vmatpush1.bf16.msra.mxu0 %v1962
        %2617 = vmatprep.subr.bf16.mxu0 %v1965
        %2618 = vmatpush1.bf16.msra.mxu0 %v1964
        %2619 = vmatprep.subr.bf16.mxu0 %v1967
        %2620 = vmatpush1.bf16.msra.mxu0 %v1966
        %2621 = vmatprep.subr.bf16.mxu0 %v1969
        %2622 = vmatpush1.bf16.msra.mxu0 %v1968
        %2623 = vmatprep.subr.bf16.mxu0 %v1971
        %2624 = vmatpush1.bf16.msra.mxu0 %v1970
        %2625 = vmatprep.subr.bf16.mxu0 %v1973
        %2626 = vmatpush1.bf16.msra.mxu0 %v1972
        %2627 = vmatprep.mubr.bf16.mxu0 %v1009
        %2628 = vmatmul.mubr.bf16.gmra.mrb[0].mxu0 %v1008
        %v2629 = vpop.f32.mrb[0].mxu0
        %v2630 = vadd.f32 %v2557, %v2629
        %v2631 = vpop.f32.mrb[0].mxu0
        %v2632 = vadd.f32 %v2559, %v2631
        %v2633 = vpop.f32.mrb[0].mxu0
        %v2634 = vadd.f32 %v2561, %v2633
        %v2635 = vpop.f32.mrb[0].mxu0
        %v2636 = vadd.f32 %v2563, %v2635
        %2637 = vmatprep.mubr.bf16.mxu0 %v1023
        %2638 = vmatmul.mubr.bf16.gmra.mrb[0].mxu0 %v1022
        %v2639 = vpop.f32.mrb[0].mxu0
        %v2640 = vadd.f32 %v2567, %v2639
        %v2641 = vpop.f32.mrb[0].mxu0
        %v2642 = vadd.f32 %v2569, %v2641
        %v2643 = vpop.f32.mrb[0].mxu0
        %v2644 = vadd.f32 %v2571, %v2643
        %v2645 = vpop.f32.mrb[0].mxu0
        %v2646 = vadd.f32 %v2573, %v2645
        %2647 = vmatprep.mubr.bf16.mxu0 %v1037
        %2648 = vmatmul.mubr.bf16.gmra.mrb[0].mxu0 %v1036
        %v2649 = vpop.f32.mrb[0].mxu0
        %v2650 = vadd.f32 %v2577, %v2649
        %v2651 = vpop.f32.mrb[0].mxu0
        %v2652 = vadd.f32 %v2579, %v2651
        %v2653 = vpop.f32.mrb[0].mxu0
        %v2654 = vadd.f32 %v2581, %v2653
        %v2655 = vpop.f32.mrb[0].mxu0
        %v2656 = vadd.f32 %v2583, %v2655
        %2657 = vmatprep.mubr.bf16.mxu0 %v1051
        %2658 = vmatmul.mubr.bf16.gmra.mrb[0].mxu0 %v1050
        %v2659 = vpop.f32.mrb[0].mxu0
        %v2660 = vadd.f32 %v2587, %v2659
        %v2661 = vpop.f32.mrb[0].mxu0
        %v2662 = vadd.f32 %v2589, %v2661
        %v2663 = vpop.f32.mrb[0].mxu0
        %v2664 = vadd.f32 %v2591, %v2663
        %v2665 = vpop.f32.mrb[0].mxu0
        %v2666 = vadd.f32 %v2593, %v2665
        %2667 = vdwg.mxu0
        %2668 = vmatprep.subr.bf16.mxu0 %v1975
        %2669 = vmatpush1.bf16.msra.mxu0 %v1974
        %2670 = vmatprep.subr.bf16.mxu0 %v1977
        %2671 = vmatpush1.bf16.msra.mxu0 %v1976
        %2672 = vmatprep.subr.bf16.mxu0 %v1979
        %2673 = vmatpush1.bf16.msra.mxu0 %v1978
        %2674 = vmatprep.subr.bf16.mxu0 %v1981
        %2675 = vmatpush1.bf16.msra.mxu0 %v1980
        %2676 = vmatprep.subr.bf16.mxu0 %v1983
        %2677 = vmatpush1.bf16.msra.mxu0 %v1982
        %2678 = vmatprep.subr.bf16.mxu0 %v1985
        %2679 = vmatpush1.bf16.msra.mxu0 %v1984
        %2680 = vmatprep.subr.bf16.mxu0 %v1987
        %2681 = vmatpush1.bf16.msra.mxu0 %v1986
        %2682 = vmatprep.subr.bf16.mxu0 %v1989
        %2683 = vmatpush1.bf16.msra.mxu0 %v1988
        %2684 = vmatprep.subr.bf16.mxu0 %v1991
        %2685 = vmatpush1.bf16.msra.mxu0 %v1990
        %2686 = vmatprep.subr.bf16.mxu0 %v1993
        %2687 = vmatpush1.bf16.msra.mxu0 %v1992
        %2688 = vmatprep.subr.bf16.mxu0 %v1995
        %2689 = vmatpush1.bf16.msra.mxu0 %v1994
        %2690 = vmatprep.subr.bf16.mxu0 %v1997
        %2691 = vmatpush1.bf16.msra.mxu0 %v1996
        %2692 = vmatprep.subr.bf16.mxu0 %v1999
        %2693 = vmatpush1.bf16.msra.mxu0 %v1998
        %2694 = vmatprep.subr.bf16.mxu0 %v2001
        %2695 = vmatpush1.bf16.msra.mxu0 %v2000
        %2696 = vmatprep.subr.bf16.mxu0 %v2003
        %2697 = vmatpush1.bf16.msra.mxu0 %v2002
        %2698 = vmatprep.subr.bf16.mxu0 %v2005
        %2699 = vmatpush1.bf16.msra.mxu0 %v2004
        %2700 = vmatprep.mubr.bf16.mxu0 %v1011
        %2701 = vmatmul.mubr.bf16.gmra.mrb[0].mxu0 %v1010
        %v2702 = vpop.f32.mrb[0].mxu0
        %v2703 = vadd.f32 %v2630, %v2702
        %v2704 = vpop.f32.mrb[0].mxu0
        %v2705 = vadd.f32 %v2632, %v2704
        %v2706 = vpop.f32.mrb[0].mxu0
        %v2707 = vadd.f32 %v2634, %v2706
        %v2708 = vpop.f32.mrb[0].mxu0
        %v2709 = vadd.f32 %v2636, %v2708
        %2710 = vmatprep.mubr.bf16.mxu0 %v1025
        %2711 = vmatmul.mubr.bf16.gmra.mrb[0].mxu0 %v1024
        %v2712 = vpop.f32.mrb[0].mxu0
        %v2713 = vadd.f32 %v2640, %v2712
        %v2714 = vpop.f32.mrb[0].mxu0
        %v2715 = vadd.f32 %v2642, %v2714
        %v2716 = vpop.f32.mrb[0].mxu0
        %v2717 = vadd.f32 %v2644, %v2716
        %v2718 = vpop.f32.mrb[0].mxu0
        %v2719 = vadd.f32 %v2646, %v2718
        %2720 = vmatprep.mubr.bf16.mxu0 %v1039
        %2721 = vmatmul.mubr.bf16.gmra.mrb[0].mxu0 %v1038
        %v2722 = vpop.f32.mrb[0].mxu0
        %v2723 = vadd.f32 %v2650, %v2722
        %v2724 = vpop.f32.mrb[0].mxu0
        %v2725 = vadd.f32 %v2652, %v2724
        %v2726 = vpop.f32.mrb[0].mxu0
        %v2727 = vadd.f32 %v2654, %v2726
        %v2728 = vpop.f32.mrb[0].mxu0
        %v2729 = vadd.f32 %v2656, %v2728
        %2730 = vmatprep.mubr.bf16.mxu0 %v1053
        %2731 = vmatmul.mubr.bf16.gmra.mrb[0].mxu0 %v1052
        %v2732 = vpop.f32.mrb[0].mxu0
        %v2733 = vadd.f32 %v2660, %v2732
        %v2734 = vpop.f32.mrb[0].mxu0
        %v2735 = vadd.f32 %v2662, %v2734
        %v2736 = vpop.f32.mrb[0].mxu0
        %v2737 = vadd.f32 %v2664, %v2736
        %v2738 = vpop.f32.mrb[0].mxu0
        %v2739 = vadd.f32 %v2666, %v2738
        %2740 = vdwg.mxu0
        %v2742 = vlaneseq
        %v2743 = vshrl.u32 %v2742, 7
        %v2744 = vsub.s32 0, %v2743
        %v2745 = vrot.slane %v828, %v2744
        %v2746 = vlaneseq
        %v2747 = vshrl.u32 %v2746, 7
        %v2748 = vsub.s32 1, %v2747
        %v2749 = vrot.slane %v828, %v2748
        %v2752 = vmul.f32 %v2703, %v2745
        %v2753 = vmul.f32 %v2705, %v2749
        %v2754 = vmul.f32 %v2707, %v2745
        %v2755 = vmul.f32 %v2709, %v2749
        %v2756 = vmul.f32 %v2713, %v2745
        %v2757 = vmul.f32 %v2715, %v2749
        %v2758 = vmul.f32 %v2717, %v2745
        %v2759 = vmul.f32 %v2719, %v2749
        %v2760 = vmul.f32 %v2723, %v2745
        %v2761 = vmul.f32 %v2725, %v2749
        %v2762 = vmul.f32 %v2727, %v2745
        %v2763 = vmul.f32 %v2729, %v2749
        %v2764 = vmul.f32 %v2733, %v2745
        %v2765 = vmul.f32 %v2735, %v2749
        %v2766 = vmul.f32 %v2737, %v2745
        %v2767 = vmul.f32 %v2739, %v2749
        %v2769 = vlaneseq
        %v2770 = vshrl.u32 %v2769, 7
        %v2771 = vsub.s32 0, %v2770
        %v2772 = vrot.slane %v829, %v2771
        %v2773 = vlaneseq
        %v2774 = vshrl.u32 %v2773, 7
        %v2775 = vsub.s32 1, %v2774
        %v2776 = vrot.slane %v829, %v2775
        %v2779 = vadd.f32 %v2752, %v2772
        %v2780 = vadd.f32 %v2753, %v2776
        %v2781 = vadd.f32 %v2754, %v2772
        %v2782 = vadd.f32 %v2755, %v2776
        %v2783 = vadd.f32 %v2756, %v2772
        %v2784 = vadd.f32 %v2757, %v2776
        %v2785 = vadd.f32 %v2758, %v2772
        %v2786 = vadd.f32 %v2759, %v2776
        %v2787 = vadd.f32 %v2760, %v2772
        %v2788 = vadd.f32 %v2761, %v2776
        %v2789 = vadd.f32 %v2762, %v2772
        %v2790 = vadd.f32 %v2763, %v2776
        %v2791 = vadd.f32 %v2764, %v2772
        %v2792 = vadd.f32 %v2765, %v2776
        %v2793 = vadd.f32 %v2766, %v2772
        %v2794 = vadd.f32 %v2767, %v2776
        %v2795 = vmax.f32 %v2779, 0.0
        %v2796 = vmax.f32 %v2780, 0.0
        %v2797 = vmax.f32 %v2781, 0.0
        %v2798 = vmax.f32 %v2782, 0.0
        %v2799 = vmax.f32 %v2783, 0.0
        %v2800 = vmax.f32 %v2784, 0.0
        %v2801 = vmax.f32 %v2785, 0.0
        %v2802 = vmax.f32 %v2786, 0.0
        %v2803 = vmax.f32 %v2787, 0.0
        %v2804 = vmax.f32 %v2788, 0.0
        %v2805 = vmax.f32 %v2789, 0.0
        %v2806 = vmax.f32 %v2790, 0.0
        %v2807 = vmax.f32 %v2791, 0.0
        %v2808 = vmax.f32 %v2792, 0.0
        %v2809 = vmax.f32 %v2793, 0.0
        %v2810 = vmax.f32 %v2794, 0.0
        %v2811 = vld [vmem:[%s5] sm:$0xff]
        %v2812 = vld [vmem:[%s5 + $0x8] sm:$0xff]
        %v2813 = vld [vmem:[%s5 + $0x10] sm:$0xff]
        %v2814 = vld [vmem:[%s5 + $0x18] sm:$0xff]
        %v2815 = vld [vmem:[%s5 + $0x20] sm:$0xff]
        %v2816 = vld [vmem:[%s5 + $0x28] sm:$0xff]
        %v2817 = vld [vmem:[%s5 + $0x30] sm:$0xff]
        %v2818 = vld [vmem:[%s5 + $0x38] sm:$0xff]
        %v2819 = vld [vmem:[%s5 + $0x40] sm:$0xff]
        %v2820 = vld [vmem:[%s5 + $0x48] sm:$0xff]
        %v2821 = vld [vmem:[%s5 + $0x50] sm:$0xff]
        %v2822 = vld [vmem:[%s5 + $0x58] sm:$0xff]
        %v2823 = vld [vmem:[%s5 + $0x60] sm:$0xff]
        %v2824 = vld [vmem:[%s5 + $0x68] sm:$0xff]
        %v2825 = vld [vmem:[%s5 + $0x70] sm:$0xff]
        %v2826 = vld [vmem:[%s5 + $0x78] sm:$0xff]
        %v2827 = vld [vmem:[%s5 + $0x80] sm:$0xff]
        %v2828 = vld [vmem:[%s5 + $0x88] sm:$0xff]
        %v2829 = vld [vmem:[%s5 + $0x90] sm:$0xff]
        %v2830 = vld [vmem:[%s5 + $0x98] sm:$0xff]
        %v2831 = vld [vmem:[%s5 + $0xa0] sm:$0xff]
        %v2832 = vld [vmem:[%s5 + $0xa8] sm:$0xff]
        %v2833 = vld [vmem:[%s5 + $0xb0] sm:$0xff]
        %v2834 = vld [vmem:[%s5 + $0xb8] sm:$0xff]
        %v2835 = vld [vmem:[%s5 + $0xc0] sm:$0xff]
        %v2836 = vld [vmem:[%s5 + $0xc8] sm:$0xff]
        %v2837 = vld [vmem:[%s5 + $0xd0] sm:$0xff]
        %v2838 = vld [vmem:[%s5 + $0xd8] sm:$0xff]
        %v2839 = vld [vmem:[%s5 + $0xe0] sm:$0xff]
        %v2840 = vld [vmem:[%s5 + $0xe8] sm:$0xff]
        %v2841 = vld [vmem:[%s5 + $0xf0] sm:$0xff]
        %v2842 = vld [vmem:[%s5 + $0xf8] sm:$0xff]
        %v2843 = vld [vmem:[%s5 + $0x100] sm:$0xff]
        %v2844 = vld [vmem:[%s5 + $0x108] sm:$0xff]
        %v2845 = vld [vmem:[%s5 + $0x110] sm:$0xff]
        %v2846 = vld [vmem:[%s5 + $0x118] sm:$0xff]
        %v2847 = vld [vmem:[%s5 + $0x120] sm:$0xff]
        %v2848 = vld [vmem:[%s5 + $0x128] sm:$0xff]
        %v2849 = vld [vmem:[%s5 + $0x130] sm:$0xff]
        %v2850 = vld [vmem:[%s5 + $0x138] sm:$0xff]
        %v2851 = vld [vmem:[%s5 + $0x140] sm:$0xff]
        %v2852 = vld [vmem:[%s5 + $0x148] sm:$0xff]
        %v2853 = vld [vmem:[%s5 + $0x150] sm:$0xff]
        %v2854 = vld [vmem:[%s5 + $0x158] sm:$0xff]
        %v2855 = vld [vmem:[%s5 + $0x160] sm:$0xff]
        %v2856 = vld [vmem:[%s5 + $0x168] sm:$0xff]
        %v2857 = vld [vmem:[%s5 + $0x170] sm:$0xff]
        %v2858 = vld [vmem:[%s5 + $0x178] sm:$0xff]
        %v2859 = vld [vmem:[%s5 + $0x180] sm:$0xff]
        %v2860 = vld [vmem:[%s5 + $0x188] sm:$0xff]
        %v2861 = vld [vmem:[%s5 + $0x190] sm:$0xff]
        %v2862 = vld [vmem:[%s5 + $0x198] sm:$0xff]
        %v2863 = vld [vmem:[%s5 + $0x1a0] sm:$0xff]
        %v2864 = vld [vmem:[%s5 + $0x1a8] sm:$0xff]
        %v2865 = vld [vmem:[%s5 + $0x1b0] sm:$0xff]
        %v2866 = vld [vmem:[%s5 + $0x1b8] sm:$0xff]
        %v2867 = vld [vmem:[%s5 + $0x1c0] sm:$0xff]
        %v2868 = vld [vmem:[%s5 + $0x1c8] sm:$0xff]
        %v2869 = vld [vmem:[%s5 + $0x1d0] sm:$0xff]
        %v2870 = vld [vmem:[%s5 + $0x1d8] sm:$0xff]
        %v2871 = vld [vmem:[%s5 + $0x1e0] sm:$0xff]
        %v2872 = vld [vmem:[%s5 + $0x1e8] sm:$0xff]
        %v2873 = vld [vmem:[%s5 + $0x1f0] sm:$0xff]
        %v2874 = vld [vmem:[%s5 + $0x1f8] sm:$0xff]
        %v2875 = vld [vmem:[%s5 + $0x200] sm:$0xff]
        %v2876 = vld [vmem:[%s5 + $0x208] sm:$0xff]
        %v2877 = vld [vmem:[%s5 + $0x210] sm:$0xff]
        %v2878 = vld [vmem:[%s5 + $0x218] sm:$0xff]
        %v2879 = vld [vmem:[%s5 + $0x220] sm:$0xff]
        %v2880 = vld [vmem:[%s5 + $0x228] sm:$0xff]
        %v2881 = vld [vmem:[%s5 + $0x230] sm:$0xff]
        %v2882 = vld [vmem:[%s5 + $0x238] sm:$0xff]
        %v2883 = vld [vmem:[%s5 + $0x240] sm:$0xff]
        %v2884 = vld [vmem:[%s5 + $0x248] sm:$0xff]
        %v2885 = vld [vmem:[%s5 + $0x250] sm:$0xff]
        %v2886 = vld [vmem:[%s5 + $0x258] sm:$0xff]
        %v2887 = vld [vmem:[%s5 + $0x260] sm:$0xff]
        %v2888 = vld [vmem:[%s5 + $0x268] sm:$0xff]
        %v2889 = vld [vmem:[%s5 + $0x270] sm:$0xff]
        %v2890 = vld [vmem:[%s5 + $0x278] sm:$0xff]
        %v2891 = vld [vmem:[%s5 + $0x280] sm:$0xff]
        %v2892 = vld [vmem:[%s5 + $0x288] sm:$0xff]
        %v2893 = vld [vmem:[%s5 + $0x290] sm:$0xff]
        %v2894 = vld [vmem:[%s5 + $0x298] sm:$0xff]
        %v2895 = vld [vmem:[%s5 + $0x2a0] sm:$0xff]
        %v2896 = vld [vmem:[%s5 + $0x2a8] sm:$0xff]
        %v2897 = vld [vmem:[%s5 + $0x2b0] sm:$0xff]
        %v2898 = vld [vmem:[%s5 + $0x2b8] sm:$0xff]
        %v2899 = vld [vmem:[%s5 + $0x2c0] sm:$0xff]
        %v2900 = vld [vmem:[%s5 + $0x2c8] sm:$0xff]
        %v2901 = vld [vmem:[%s5 + $0x2d0] sm:$0xff]
        %v2902 = vld [vmem:[%s5 + $0x2d8] sm:$0xff]
        %v2903 = vld [vmem:[%s5 + $0x2e0] sm:$0xff]
        %v2904 = vld [vmem:[%s5 + $0x2e8] sm:$0xff]
        %v2905 = vld [vmem:[%s5 + $0x2f0] sm:$0xff]
        %v2906 = vld [vmem:[%s5 + $0x2f8] sm:$0xff]
        %v2907 = vld [vmem:[%s5 + $0x300] sm:$0xff]
        %v2908 = vld [vmem:[%s5 + $0x308] sm:$0xff]
        %v2909 = vld [vmem:[%s5 + $0x310] sm:$0xff]
        %v2910 = vld [vmem:[%s5 + $0x318] sm:$0xff]
        %v2911 = vld [vmem:[%s5 + $0x320] sm:$0xff]
        %v2912 = vld [vmem:[%s5 + $0x328] sm:$0xff]
        %v2913 = vld [vmem:[%s5 + $0x330] sm:$0xff]
        %v2914 = vld [vmem:[%s5 + $0x338] sm:$0xff]
        %v2915 = vld [vmem:[%s5 + $0x340] sm:$0xff]
        %v2916 = vld [vmem:[%s5 + $0x348] sm:$0xff]
        %v2917 = vld [vmem:[%s5 + $0x350] sm:$0xff]
        %v2918 = vld [vmem:[%s5 + $0x358] sm:$0xff]
        %v2919 = vld [vmem:[%s5 + $0x360] sm:$0xff]
        %v2920 = vld [vmem:[%s5 + $0x368] sm:$0xff]
        %v2921 = vld [vmem:[%s5 + $0x370] sm:$0xff]
        %v2922 = vld [vmem:[%s5 + $0x378] sm:$0xff]
        %v2923 = vld [vmem:[%s5 + $0x380] sm:$0xff]
        %v2924 = vld [vmem:[%s5 + $0x388] sm:$0xff]
        %v2925 = vld [vmem:[%s5 + $0x390] sm:$0xff]
        %v2926 = vld [vmem:[%s5 + $0x398] sm:$0xff]
        %v2927 = vld [vmem:[%s5 + $0x3a0] sm:$0xff]
        %v2928 = vld [vmem:[%s5 + $0x3a8] sm:$0xff]
        %v2929 = vld [vmem:[%s5 + $0x3b0] sm:$0xff]
        %v2930 = vld [vmem:[%s5 + $0x3b8] sm:$0xff]
        %v2931 = vld [vmem:[%s5 + $0x3c0] sm:$0xff]
        %v2932 = vld [vmem:[%s5 + $0x3c8] sm:$0xff]
        %v2933 = vld [vmem:[%s5 + $0x3d0] sm:$0xff]
        %v2934 = vld [vmem:[%s5 + $0x3d8] sm:$0xff]
        %v2935 = vld [vmem:[%s5 + $0x3e0] sm:$0xff]
        %v2936 = vld [vmem:[%s5 + $0x3e8] sm:$0xff]
        %v2937 = vld [vmem:[%s5 + $0x3f0] sm:$0xff]
        %v2938 = vld [vmem:[%s5 + $0x3f8] sm:$0xff]
        %v2939 = vld [vmem:[%s5 + $0x400] sm:$0xff]
        %v2940 = vld [vmem:[%s5 + $0x408] sm:$0xff]
        %v2941 = vld [vmem:[%s5 + $0x410] sm:$0xff]
        %v2942 = vld [vmem:[%s5 + $0x418] sm:$0xff]
        %v2943 = vld [vmem:[%s5 + $0x420] sm:$0xff]
        %v2944 = vld [vmem:[%s5 + $0x428] sm:$0xff]
        %v2945 = vld [vmem:[%s5 + $0x430] sm:$0xff]
        %v2946 = vld [vmem:[%s5 + $0x438] sm:$0xff]
        %v2947 = vld [vmem:[%s5 + $0x440] sm:$0xff]
        %v2948 = vld [vmem:[%s5 + $0x448] sm:$0xff]
        %v2949 = vld [vmem:[%s5 + $0x450] sm:$0xff]
        %v2950 = vld [vmem:[%s5 + $0x458] sm:$0xff]
        %v2951 = vld [vmem:[%s5 + $0x460] sm:$0xff]
        %v2952 = vld [vmem:[%s5 + $0x468] sm:$0xff]
        %v2953 = vld [vmem:[%s5 + $0x470] sm:$0xff]
        %v2954 = vld [vmem:[%s5 + $0x478] sm:$0xff]
        %v2955 = vld [vmem:[%s5 + $0x480] sm:$0xff]
        %v2956 = vld [vmem:[%s5 + $0x488] sm:$0xff]
        %v2957 = vld [vmem:[%s5 + $0x490] sm:$0xff]
        %v2958 = vld [vmem:[%s5 + $0x498] sm:$0xff]
        %v2959 = vld [vmem:[%s5 + $0x4a0] sm:$0xff]
        %v2960 = vld [vmem:[%s5 + $0x4a8] sm:$0xff]
        %v2961 = vld [vmem:[%s5 + $0x4b0] sm:$0xff]
        %v2962 = vld [vmem:[%s5 + $0x4b8] sm:$0xff]
        %v2963 = vld [vmem:[%s5 + $0x4c0] sm:$0xff]
        %v2964 = vld [vmem:[%s5 + $0x4c8] sm:$0xff]
        %v2965 = vld [vmem:[%s5 + $0x4d0] sm:$0xff]
        %v2966 = vld [vmem:[%s5 + $0x4d8] sm:$0xff]
        %v2967 = vld [vmem:[%s5 + $0x4e0] sm:$0xff]
        %v2968 = vld [vmem:[%s5 + $0x4e8] sm:$0xff]
        %v2969 = vld [vmem:[%s5 + $0x4f0] sm:$0xff]
        %v2970 = vld [vmem:[%s5 + $0x4f8] sm:$0xff]
        %v2971 = vld [vmem:[%s5 + $0x500] sm:$0xff]
        %v2972 = vld [vmem:[%s5 + $0x508] sm:$0xff]
        %v2973 = vld [vmem:[%s5 + $0x510] sm:$0xff]
        %v2974 = vld [vmem:[%s5 + $0x518] sm:$0xff]
        %v2975 = vld [vmem:[%s5 + $0x520] sm:$0xff]
        %v2976 = vld [vmem:[%s5 + $0x528] sm:$0xff]
        %v2977 = vld [vmem:[%s5 + $0x530] sm:$0xff]
        %v2978 = vld [vmem:[%s5 + $0x538] sm:$0xff]
        %v2979 = vld [vmem:[%s5 + $0x540] sm:$0xff]
        %v2980 = vld [vmem:[%s5 + $0x548] sm:$0xff]
        %v2981 = vld [vmem:[%s5 + $0x550] sm:$0xff]
        %v2982 = vld [vmem:[%s5 + $0x558] sm:$0xff]
        %v2983 = vld [vmem:[%s5 + $0x560] sm:$0xff]
        %v2984 = vld [vmem:[%s5 + $0x568] sm:$0xff]
        %v2985 = vld [vmem:[%s5 + $0x570] sm:$0xff]
        %v2986 = vld [vmem:[%s5 + $0x578] sm:$0xff]
        %v2987 = vld [vmem:[%s5 + $0x580] sm:$0xff]
        %v2988 = vld [vmem:[%s5 + $0x588] sm:$0xff]
        %v2989 = vld [vmem:[%s5 + $0x590] sm:$0xff]
        %v2990 = vld [vmem:[%s5 + $0x598] sm:$0xff]
        %v2991 = vld [vmem:[%s5 + $0x5a0] sm:$0xff]
        %v2992 = vld [vmem:[%s5 + $0x5a8] sm:$0xff]
        %v2993 = vld [vmem:[%s5 + $0x5b0] sm:$0xff]
        %v2994 = vld [vmem:[%s5 + $0x5b8] sm:$0xff]
        %v2995 = vld [vmem:[%s5 + $0x5c0] sm:$0xff]
        %v2996 = vld [vmem:[%s5 + $0x5c8] sm:$0xff]
        %v2997 = vld [vmem:[%s5 + $0x5d0] sm:$0xff]
        %v2998 = vld [vmem:[%s5 + $0x5d8] sm:$0xff]
        %v2999 = vld [vmem:[%s5 + $0x5e0] sm:$0xff]
        %v3000 = vld [vmem:[%s5 + $0x5e8] sm:$0xff]
        %v3001 = vld [vmem:[%s5 + $0x5f0] sm:$0xff]
        %v3002 = vld [vmem:[%s5 + $0x5f8] sm:$0xff]
        %v3003 = vld [vmem:[%s5 + $0x600] sm:$0xff]
        %v3004 = vld [vmem:[%s5 + $0x608] sm:$0xff]
        %v3005 = vld [vmem:[%s5 + $0x610] sm:$0xff]
        %v3006 = vld [vmem:[%s5 + $0x618] sm:$0xff]
        %v3007 = vld [vmem:[%s5 + $0x620] sm:$0xff]
        %v3008 = vld [vmem:[%s5 + $0x628] sm:$0xff]
        %v3009 = vld [vmem:[%s5 + $0x630] sm:$0xff]
        %v3010 = vld [vmem:[%s5 + $0x638] sm:$0xff]
        %v3011 = vld [vmem:[%s5 + $0x640] sm:$0xff]
        %v3012 = vld [vmem:[%s5 + $0x648] sm:$0xff]
        %v3013 = vld [vmem:[%s5 + $0x650] sm:$0xff]
        %v3014 = vld [vmem:[%s5 + $0x658] sm:$0xff]
        %v3015 = vld [vmem:[%s5 + $0x660] sm:$0xff]
        %v3016 = vld [vmem:[%s5 + $0x668] sm:$0xff]
        %v3017 = vld [vmem:[%s5 + $0x670] sm:$0xff]
        %v3018 = vld [vmem:[%s5 + $0x678] sm:$0xff]
        %v3019 = vld [vmem:[%s5 + $0x680] sm:$0xff]
        %v3020 = vld [vmem:[%s5 + $0x688] sm:$0xff]
        %v3021 = vld [vmem:[%s5 + $0x690] sm:$0xff]
        %v3022 = vld [vmem:[%s5 + $0x698] sm:$0xff]
        %v3023 = vld [vmem:[%s5 + $0x6a0] sm:$0xff]
        %v3024 = vld [vmem:[%s5 + $0x6a8] sm:$0xff]
        %v3025 = vld [vmem:[%s5 + $0x6b0] sm:$0xff]
        %v3026 = vld [vmem:[%s5 + $0x6b8] sm:$0xff]
        %v3027 = vld [vmem:[%s5 + $0x6c0] sm:$0xff]
        %v3028 = vld [vmem:[%s5 + $0x6c8] sm:$0xff]
        %v3029 = vld [vmem:[%s5 + $0x6d0] sm:$0xff]
        %v3030 = vld [vmem:[%s5 + $0x6d8] sm:$0xff]
        %v3031 = vld [vmem:[%s5 + $0x6e0] sm:$0xff]
        %v3032 = vld [vmem:[%s5 + $0x6e8] sm:$0xff]
        %v3033 = vld [vmem:[%s5 + $0x6f0] sm:$0xff]
        %v3034 = vld [vmem:[%s5 + $0x6f8] sm:$0xff]
        %v3035 = vld [vmem:[%s6] sm:$0x3]
        %v3036 = vld [vmem:[%s7] sm:$0x3]
        %v3261 = vunpack.c.l.b16 %v2811
        %v3262 = vunpack.c.h.b16 %v2811
        %v3263 = vunpack.c.l.b16 %v2812
        %v3264 = vunpack.c.h.b16 %v2812
        %v3265 = vunpack.c.l.b16 %v2813
        %v3266 = vunpack.c.h.b16 %v2813
        %v3267 = vunpack.c.l.b16 %v2814
        %v3268 = vunpack.c.h.b16 %v2814
        %v3269 = vunpack.c.l.b16 %v2815
        %v3270 = vunpack.c.h.b16 %v2815
        %v3271 = vunpack.c.l.b16 %v2816
        %v3272 = vunpack.c.h.b16 %v2816
        %v3273 = vunpack.c.l.b16 %v2817
        %v3274 = vunpack.c.h.b16 %v2817
        %v3275 = vunpack.c.l.b16 %v2818
        %v3276 = vunpack.c.h.b16 %v2818
        %v3277 = vunpack.c.l.b16 %v2819
        %v3278 = vunpack.c.h.b16 %v2819
        %v3279 = vunpack.c.l.b16 %v2820
        %v3280 = vunpack.c.h.b16 %v2820
        %v3281 = vunpack.c.l.b16 %v2821
        %v3282 = vunpack.c.h.b16 %v2821
        %v3283 = vunpack.c.l.b16 %v2822
        %v3284 = vunpack.c.h.b16 %v2822
        %v3285 = vunpack.c.l.b16 %v2823
        %v3286 = vunpack.c.h.b16 %v2823
        %v3287 = vunpack.c.l.b16 %v2824
        %v3288 = vunpack.c.h.b16 %v2824
        %v3289 = vunpack.c.l.b16 %v2825
        %v3290 = vunpack.c.h.b16 %v2825
        %v3291 = vunpack.c.l.b16 %v2826
        %v3292 = vunpack.c.h.b16 %v2826
        %v3293 = vunpack.c.l.b16 %v2827
        %v3294 = vunpack.c.h.b16 %v2827
        %v3295 = vunpack.c.l.b16 %v2828
        %v3296 = vunpack.c.h.b16 %v2828
        %v3297 = vunpack.c.l.b16 %v2829
        %v3298 = vunpack.c.h.b16 %v2829
        %v3299 = vunpack.c.l.b16 %v2830
        %v3300 = vunpack.c.h.b16 %v2830
        %v3301 = vunpack.c.l.b16 %v2831
        %v3302 = vunpack.c.h.b16 %v2831
        %v3303 = vunpack.c.l.b16 %v2832
        %v3304 = vunpack.c.h.b16 %v2832
        %v3305 = vunpack.c.l.b16 %v2833
        %v3306 = vunpack.c.h.b16 %v2833
        %v3307 = vunpack.c.l.b16 %v2834
        %v3308 = vunpack.c.h.b16 %v2834
        %v3309 = vunpack.c.l.b16 %v2835
        %v3310 = vunpack.c.h.b16 %v2835
        %v3311 = vunpack.c.l.b16 %v2836
        %v3312 = vunpack.c.h.b16 %v2836
        %v3313 = vunpack.c.l.b16 %v2837
        %v3314 = vunpack.c.h.b16 %v2837
        %v3315 = vunpack.c.l.b16 %v2838
        %v3316 = vunpack.c.h.b16 %v2838
        %v3317 = vunpack.c.l.b16 %v2839
        %v3318 = vunpack.c.h.b16 %v2839
        %v3319 = vunpack.c.l.b16 %v2840
        %v3320 = vunpack.c.h.b16 %v2840
        %v3321 = vunpack.c.l.b16 %v2841
        %v3322 = vunpack.c.h.b16 %v2841
        %v3323 = vunpack.c.l.b16 %v2842
        %v3324 = vunpack.c.h.b16 %v2842
        %v3325 = vunpack.c.l.b16 %v2843
        %v3326 = vunpack.c.h.b16 %v2843
        %v3327 = vunpack.c.l.b16 %v2844
        %v3328 = vunpack.c.h.b16 %v2844
        %v3329 = vunpack.c.l.b16 %v2845
        %v3330 = vunpack.c.h.b16 %v2845
        %v3331 = vunpack.c.l.b16 %v2846
        %v3332 = vunpack.c.h.b16 %v2846
        %v3333 = vunpack.c.l.b16 %v2847
        %v3334 = vunpack.c.h.b16 %v2847
        %v3335 = vunpack.c.l.b16 %v2848
        %v3336 = vunpack.c.h.b16 %v2848
        %v3337 = vunpack.c.l.b16 %v2849
        %v3338 = vunpack.c.h.b16 %v2849
        %v3339 = vunpack.c.l.b16 %v2850
        %v3340 = vunpack.c.h.b16 %v2850
        %v3341 = vunpack.c.l.b16 %v2851
        %v3342 = vunpack.c.h.b16 %v2851
        %v3343 = vunpack.c.l.b16 %v2852
        %v3344 = vunpack.c.h.b16 %v2852
        %v3345 = vunpack.c.l.b16 %v2853
        %v3346 = vunpack.c.h.b16 %v2853
        %v3347 = vunpack.c.l.b16 %v2854
        %v3348 = vunpack.c.h.b16 %v2854
        %v3349 = vunpack.c.l.b16 %v2855
        %v3350 = vunpack.c.h.b16 %v2855
        %v3351 = vunpack.c.l.b16 %v2856
        %v3352 = vunpack.c.h.b16 %v2856
        %v3353 = vunpack.c.l.b16 %v2857
        %v3354 = vunpack.c.h.b16 %v2857
        %v3355 = vunpack.c.l.b16 %v2858
        %v3356 = vunpack.c.h.b16 %v2858
        %v3357 = vunpack.c.l.b16 %v2859
        %v3358 = vunpack.c.h.b16 %v2859
        %v3359 = vunpack.c.l.b16 %v2860
        %v3360 = vunpack.c.h.b16 %v2860
        %v3361 = vunpack.c.l.b16 %v2861
        %v3362 = vunpack.c.h.b16 %v2861
        %v3363 = vunpack.c.l.b16 %v2862
        %v3364 = vunpack.c.h.b16 %v2862
        %v3365 = vunpack.c.l.b16 %v2863
        %v3366 = vunpack.c.h.b16 %v2863
        %v3367 = vunpack.c.l.b16 %v2864
        %v3368 = vunpack.c.h.b16 %v2864
        %v3369 = vunpack.c.l.b16 %v2865
        %v3370 = vunpack.c.h.b16 %v2865
        %v3371 = vunpack.c.l.b16 %v2866
        %v3372 = vunpack.c.h.b16 %v2866
        %v3373 = vunpack.c.l.b16 %v2867
        %v3374 = vunpack.c.h.b16 %v2867
        %v3375 = vunpack.c.l.b16 %v2868
        %v3376 = vunpack.c.h.b16 %v2868
        %v3377 = vunpack.c.l.b16 %v2869
        %v3378 = vunpack.c.h.b16 %v2869
        %v3379 = vunpack.c.l.b16 %v2870
        %v3380 = vunpack.c.h.b16 %v2870
        %v3381 = vunpack.c.l.b16 %v2871
        %v3382 = vunpack.c.h.b16 %v2871
        %v3383 = vunpack.c.l.b16 %v2872
        %v3384 = vunpack.c.h.b16 %v2872
        %v3385 = vunpack.c.l.b16 %v2873
        %v3386 = vunpack.c.h.b16 %v2873
        %v3387 = vunpack.c.l.b16 %v2874
        %v3388 = vunpack.c.h.b16 %v2874
        %v3389 = vunpack.c.l.b16 %v2875
        %v3390 = vunpack.c.h.b16 %v2875
        %v3391 = vunpack.c.l.b16 %v2876
        %v3392 = vunpack.c.h.b16 %v2876
        %v3393 = vunpack.c.l.b16 %v2877
        %v3394 = vunpack.c.h.b16 %v2877
        %v3395 = vunpack.c.l.b16 %v2878
        %v3396 = vunpack.c.h.b16 %v2878
        %v3397 = vunpack.c.l.b16 %v2879
        %v3398 = vunpack.c.h.b16 %v2879
        %v3399 = vunpack.c.l.b16 %v2880
        %v3400 = vunpack.c.h.b16 %v2880
        %v3401 = vunpack.c.l.b16 %v2881
        %v3402 = vunpack.c.h.b16 %v2881
        %v3403 = vunpack.c.l.b16 %v2882
        %v3404 = vunpack.c.h.b16 %v2882
        %v3405 = vunpack.c.l.b16 %v2883
        %v3406 = vunpack.c.h.b16 %v2883
        %v3407 = vunpack.c.l.b16 %v2884
        %v3408 = vunpack.c.h.b16 %v2884
        %v3409 = vunpack.c.l.b16 %v2885
        %v3410 = vunpack.c.h.b16 %v2885
        %v3411 = vunpack.c.l.b16 %v2886
        %v3412 = vunpack.c.h.b16 %v2886
        %v3413 = vunpack.c.l.b16 %v2887
        %v3414 = vunpack.c.h.b16 %v2887
        %v3415 = vunpack.c.l.b16 %v2888
        %v3416 = vunpack.c.h.b16 %v2888
        %v3417 = vunpack.c.l.b16 %v2889
        %v3418 = vunpack.c.h.b16 %v2889
        %v3419 = vunpack.c.l.b16 %v2890
        %v3420 = vunpack.c.h.b16 %v2890
        %v3421 = vunpack.c.l.b16 %v2891
        %v3422 = vunpack.c.h.b16 %v2891
        %v3423 = vunpack.c.l.b16 %v2892
        %v3424 = vunpack.c.h.b16 %v2892
        %v3425 = vunpack.c.l.b16 %v2893
        %v3426 = vunpack.c.h.b16 %v2893
        %v3427 = vunpack.c.l.b16 %v2894
        %v3428 = vunpack.c.h.b16 %v2894
        %v3429 = vunpack.c.l.b16 %v2895
        %v3430 = vunpack.c.h.b16 %v2895
        %v3431 = vunpack.c.l.b16 %v2896
        %v3432 = vunpack.c.h.b16 %v2896
        %v3433 = vunpack.c.l.b16 %v2897
        %v3434 = vunpack.c.h.b16 %v2897
        %v3435 = vunpack.c.l.b16 %v2898
        %v3436 = vunpack.c.h.b16 %v2898
        %v3437 = vunpack.c.l.b16 %v2899
        %v3438 = vunpack.c.h.b16 %v2899
        %v3439 = vunpack.c.l.b16 %v2900
        %v3440 = vunpack.c.h.b16 %v2900
        %v3441 = vunpack.c.l.b16 %v2901
        %v3442 = vunpack.c.h.b16 %v2901
        %v3443 = vunpack.c.l.b16 %v2902
        %v3444 = vunpack.c.h.b16 %v2902
        %v3445 = vunpack.c.l.b16 %v2903
        %v3446 = vunpack.c.h.b16 %v2903
        %v3447 = vunpack.c.l.b16 %v2904
        %v3448 = vunpack.c.h.b16 %v2904
        %v3449 = vunpack.c.l.b16 %v2905
        %v3450 = vunpack.c.h.b16 %v2905
        %v3451 = vunpack.c.l.b16 %v2906
        %v3452 = vunpack.c.h.b16 %v2906
        %v3453 = vunpack.c.l.b16 %v2907
        %v3454 = vunpack.c.h.b16 %v2907
        %v3455 = vunpack.c.l.b16 %v2908
        %v3456 = vunpack.c.h.b16 %v2908
        %v3457 = vunpack.c.l.b16 %v2909
        %v3458 = vunpack.c.h.b16 %v2909
        %v3459 = vunpack.c.l.b16 %v2910
        %v3460 = vunpack.c.h.b16 %v2910
        %v3461 = vunpack.c.l.b16 %v2911
        %v3462 = vunpack.c.h.b16 %v2911
        %v3463 = vunpack.c.l.b16 %v2912
        %v3464 = vunpack.c.h.b16 %v2912
        %v3465 = vunpack.c.l.b16 %v2913
        %v3466 = vunpack.c.h.b16 %v2913
        %v3467 = vunpack.c.l.b16 %v2914
        %v3468 = vunpack.c.h.b16 %v2914
        %v3469 = vunpack.c.l.b16 %v2915
        %v3470 = vunpack.c.h.b16 %v2915
        %v3471 = vunpack.c.l.b16 %v2916
        %v3472 = vunpack.c.h.b16 %v2916
        %v3473 = vunpack.c.l.b16 %v2917
        %v3474 = vunpack.c.h.b16 %v2917
        %v3475 = vunpack.c.l.b16 %v2918
        %v3476 = vunpack.c.h.b16 %v2918
        %v3477 = vunpack.c.l.b16 %v2919
        %v3478 = vunpack.c.h.b16 %v2919
        %v3479 = vunpack.c.l.b16 %v2920
        %v3480 = vunpack.c.h.b16 %v2920
        %v3481 = vunpack.c.l.b16 %v2921
        %v3482 = vunpack.c.h.b16 %v2921
        %v3483 = vunpack.c.l.b16 %v2922
        %v3484 = vunpack.c.h.b16 %v2922
        %v3485 = vunpack.c.l.b16 %v2923
        %v3486 = vunpack.c.h.b16 %v2923
        %v3487 = vunpack.c.l.b16 %v2924
        %v3488 = vunpack.c.h.b16 %v2924
        %v3489 = vunpack.c.l.b16 %v2925
        %v3490 = vunpack.c.h.b16 %v2925
        %v3491 = vunpack.c.l.b16 %v2926
        %v3492 = vunpack.c.h.b16 %v2926
        %v3493 = vunpack.c.l.b16 %v2927
        %v3494 = vunpack.c.h.b16 %v2927
        %v3495 = vunpack.c.l.b16 %v2928
        %v3496 = vunpack.c.h.b16 %v2928
        %v3497 = vunpack.c.l.b16 %v2929
        %v3498 = vunpack.c.h.b16 %v2929
        %v3499 = vunpack.c.l.b16 %v2930
        %v3500 = vunpack.c.h.b16 %v2930
        %v3501 = vunpack.c.l.b16 %v2931
        %v3502 = vunpack.c.h.b16 %v2931
        %v3503 = vunpack.c.l.b16 %v2932
        %v3504 = vunpack.c.h.b16 %v2932
        %v3505 = vunpack.c.l.b16 %v2933
        %v3506 = vunpack.c.h.b16 %v2933
        %v3507 = vunpack.c.l.b16 %v2934
        %v3508 = vunpack.c.h.b16 %v2934
        %v3509 = vunpack.c.l.b16 %v2935
        %v3510 = vunpack.c.h.b16 %v2935
        %v3511 = vunpack.c.l.b16 %v2936
        %v3512 = vunpack.c.h.b16 %v2936
        %v3513 = vunpack.c.l.b16 %v2937
        %v3514 = vunpack.c.h.b16 %v2937
        %v3515 = vunpack.c.l.b16 %v2938
        %v3516 = vunpack.c.h.b16 %v2938
        %v3517 = vunpack.c.l.b16 %v2939
        %v3518 = vunpack.c.h.b16 %v2939
        %v3519 = vunpack.c.l.b16 %v2940
        %v3520 = vunpack.c.h.b16 %v2940
        %v3521 = vunpack.c.l.b16 %v2941
        %v3522 = vunpack.c.h.b16 %v2941
        %v3523 = vunpack.c.l.b16 %v2942
        %v3524 = vunpack.c.h.b16 %v2942
        %v3525 = vunpack.c.l.b16 %v2943
        %v3526 = vunpack.c.h.b16 %v2943
        %v3527 = vunpack.c.l.b16 %v2944
        %v3528 = vunpack.c.h.b16 %v2944
        %v3529 = vunpack.c.l.b16 %v2945
        %v3530 = vunpack.c.h.b16 %v2945
        %v3531 = vunpack.c.l.b16 %v2946
        %v3532 = vunpack.c.h.b16 %v2946
        %v3533 = vunpack.c.l.b16 %v2947
        %v3534 = vunpack.c.h.b16 %v2947
        %v3535 = vunpack.c.l.b16 %v2948
        %v3536 = vunpack.c.h.b16 %v2948
        %v3537 = vunpack.c.l.b16 %v2949
        %v3538 = vunpack.c.h.b16 %v2949
        %v3539 = vunpack.c.l.b16 %v2950
        %v3540 = vunpack.c.h.b16 %v2950
        %v3541 = vunpack.c.l.b16 %v2951
        %v3542 = vunpack.c.h.b16 %v2951
        %v3543 = vunpack.c.l.b16 %v2952
        %v3544 = vunpack.c.h.b16 %v2952
        %v3545 = vunpack.c.l.b16 %v2953
        %v3546 = vunpack.c.h.b16 %v2953
        %v3547 = vunpack.c.l.b16 %v2954
        %v3548 = vunpack.c.h.b16 %v2954
        %v3549 = vunpack.c.l.b16 %v2955
        %v3550 = vunpack.c.h.b16 %v2955
        %v3551 = vunpack.c.l.b16 %v2956
        %v3552 = vunpack.c.h.b16 %v2956
        %v3553 = vunpack.c.l.b16 %v2957
        %v3554 = vunpack.c.h.b16 %v2957
        %v3555 = vunpack.c.l.b16 %v2958
        %v3556 = vunpack.c.h.b16 %v2958
        %v3557 = vunpack.c.l.b16 %v2959
        %v3558 = vunpack.c.h.b16 %v2959
        %v3559 = vunpack.c.l.b16 %v2960
        %v3560 = vunpack.c.h.b16 %v2960
        %v3561 = vunpack.c.l.b16 %v2961
        %v3562 = vunpack.c.h.b16 %v2961
        %v3563 = vunpack.c.l.b16 %v2962
        %v3564 = vunpack.c.h.b16 %v2962
        %v3565 = vunpack.c.l.b16 %v2963
        %v3566 = vunpack.c.h.b16 %v2963
        %v3567 = vunpack.c.l.b16 %v2964
        %v3568 = vunpack.c.h.b16 %v2964
        %v3569 = vunpack.c.l.b16 %v2965
        %v3570 = vunpack.c.h.b16 %v2965
        %v3571 = vunpack.c.l.b16 %v2966
        %v3572 = vunpack.c.h.b16 %v2966
        %v3573 = vunpack.c.l.b16 %v2967
        %v3574 = vunpack.c.h.b16 %v2967
        %v3575 = vunpack.c.l.b16 %v2968
        %v3576 = vunpack.c.h.b16 %v2968
        %v3577 = vunpack.c.l.b16 %v2969
        %v3578 = vunpack.c.h.b16 %v2969
        %v3579 = vunpack.c.l.b16 %v2970
        %v3580 = vunpack.c.h.b16 %v2970
        %v3581 = vunpack.c.l.b16 %v2971
        %v3582 = vunpack.c.h.b16 %v2971
        %v3583 = vunpack.c.l.b16 %v2972
        %v3584 = vunpack.c.h.b16 %v2972
        %v3585 = vunpack.c.l.b16 %v2973
        %v3586 = vunpack.c.h.b16 %v2973
        %v3587 = vunpack.c.l.b16 %v2974
        %v3588 = vunpack.c.h.b16 %v2974
        %v3589 = vunpack.c.l.b16 %v2975
        %v3590 = vunpack.c.h.b16 %v2975
        %v3591 = vunpack.c.l.b16 %v2976
        %v3592 = vunpack.c.h.b16 %v2976
        %v3593 = vunpack.c.l.b16 %v2977
        %v3594 = vunpack.c.h.b16 %v2977
        %v3595 = vunpack.c.l.b16 %v2978
        %v3596 = vunpack.c.h.b16 %v2978
        %v3597 = vunpack.c.l.b16 %v2979
        %v3598 = vunpack.c.h.b16 %v2979
        %v3599 = vunpack.c.l.b16 %v2980
        %v3600 = vunpack.c.h.b16 %v2980
        %v3601 = vunpack.c.l.b16 %v2981
        %v3602 = vunpack.c.h.b16 %v2981
        %v3603 = vunpack.c.l.b16 %v2982
        %v3604 = vunpack.c.h.b16 %v2982
        %v3605 = vunpack.c.l.b16 %v2983
        %v3606 = vunpack.c.h.b16 %v2983
        %v3607 = vunpack.c.l.b16 %v2984
        %v3608 = vunpack.c.h.b16 %v2984
        %v3609 = vunpack.c.l.b16 %v2985
        %v3610 = vunpack.c.h.b16 %v2985
        %v3611 = vunpack.c.l.b16 %v2986
        %v3612 = vunpack.c.h.b16 %v2986
        %v3613 = vunpack.c.l.b16 %v2987
        %v3614 = vunpack.c.h.b16 %v2987
        %v3615 = vunpack.c.l.b16 %v2988
        %v3616 = vunpack.c.h.b16 %v2988
        %v3617 = vunpack.c.l.b16 %v2989
        %v3618 = vunpack.c.h.b16 %v2989
        %v3619 = vunpack.c.l.b16 %v2990
        %v3620 = vunpack.c.h.b16 %v2990
        %v3621 = vunpack.c.l.b16 %v2991
        %v3622 = vunpack.c.h.b16 %v2991
        %v3623 = vunpack.c.l.b16 %v2992
        %v3624 = vunpack.c.h.b16 %v2992
        %v3625 = vunpack.c.l.b16 %v2993
        %v3626 = vunpack.c.h.b16 %v2993
        %v3627 = vunpack.c.l.b16 %v2994
        %v3628 = vunpack.c.h.b16 %v2994
        %v3629 = vunpack.c.l.b16 %v2995
        %v3630 = vunpack.c.h.b16 %v2995
        %v3631 = vunpack.c.l.b16 %v2996
        %v3632 = vunpack.c.h.b16 %v2996
        %v3633 = vunpack.c.l.b16 %v2997
        %v3634 = vunpack.c.h.b16 %v2997
        %v3635 = vunpack.c.l.b16 %v2998
        %v3636 = vunpack.c.h.b16 %v2998
        %v3637 = vunpack.c.l.b16 %v2999
        %v3638 = vunpack.c.h.b16 %v2999
        %v3639 = vunpack.c.l.b16 %v3000
        %v3640 = vunpack.c.h.b16 %v3000
        %v3641 = vunpack.c.l.b16 %v3001
        %v3642 = vunpack.c.h.b16 %v3001
        %v3643 = vunpack.c.l.b16 %v3002
        %v3644 = vunpack.c.h.b16 %v3002
        %v3645 = vunpack.c.l.b16 %v3003
        %v3646 = vunpack.c.h.b16 %v3003
        %v3647 = vunpack.c.l.b16 %v3004
        %v3648 = vunpack.c.h.b16 %v3004
        %v3649 = vunpack.c.l.b16 %v3005
        %v3650 = vunpack.c.h.b16 %v3005
        %v3651 = vunpack.c.l.b16 %v3006
        %v3652 = vunpack.c.h.b16 %v3006
        %v3653 = vunpack.c.l.b16 %v3007
        %v3654 = vunpack.c.h.b16 %v3007
        %v3655 = vunpack.c.l.b16 %v3008
        %v3656 = vunpack.c.h.b16 %v3008
        %v3657 = vunpack.c.l.b16 %v3009
        %v3658 = vunpack.c.h.b16 %v3009
        %v3659 = vunpack.c.l.b16 %v3010
        %v3660 = vunpack.c.h.b16 %v3010
        %v3661 = vunpack.c.l.b16 %v3011
        %v3662 = vunpack.c.h.b16 %v3011
        %v3663 = vunpack.c.l.b16 %v3012
        %v3664 = vunpack.c.h.b16 %v3012
        %v3665 = vunpack.c.l.b16 %v3013
        %v3666 = vunpack.c.h.b16 %v3013
        %v3667 = vunpack.c.l.b16 %v3014
        %v3668 = vunpack.c.h.b16 %v3014
        %v3669 = vunpack.c.l.b16 %v3015
        %v3670 = vunpack.c.h.b16 %v3015
        %v3671 = vunpack.c.l.b16 %v3016
        %v3672 = vunpack.c.h.b16 %v3016
        %v3673 = vunpack.c.l.b16 %v3017
        %v3674 = vunpack.c.h.b16 %v3017
        %v3675 = vunpack.c.l.b16 %v3018
        %v3676 = vunpack.c.h.b16 %v3018
        %v3677 = vunpack.c.l.b16 %v3019
        %v3678 = vunpack.c.h.b16 %v3019
        %v3679 = vunpack.c.l.b16 %v3020
        %v3680 = vunpack.c.h.b16 %v3020
        %v3681 = vunpack.c.l.b16 %v3021
        %v3682 = vunpack.c.h.b16 %v3021
        %v3683 = vunpack.c.l.b16 %v3022
        %v3684 = vunpack.c.h.b16 %v3022
        %v3685 = vunpack.c.l.b16 %v3023
        %v3686 = vunpack.c.h.b16 %v3023
        %v3687 = vunpack.c.l.b16 %v3024
        %v3688 = vunpack.c.h.b16 %v3024
        %v3689 = vunpack.c.l.b16 %v3025
        %v3690 = vunpack.c.h.b16 %v3025
        %v3691 = vunpack.c.l.b16 %v3026
        %v3692 = vunpack.c.h.b16 %v3026
        %v3693 = vunpack.c.l.b16 %v3027
        %v3694 = vunpack.c.h.b16 %v3027
        %v3695 = vunpack.c.l.b16 %v3028
        %v3696 = vunpack.c.h.b16 %v3028
        %v3697 = vunpack.c.l.b16 %v3029
        %v3698 = vunpack.c.h.b16 %v3029
        %v3699 = vunpack.c.l.b16 %v3030
        %v3700 = vunpack.c.h.b16 %v3030
        %v3701 = vunpack.c.l.b16 %v3031
        %v3702 = vunpack.c.h.b16 %v3031
        %v3703 = vunpack.c.l.b16 %v3032
        %v3704 = vunpack.c.h.b16 %v3032
        %v3705 = vunpack.c.l.b16 %v3033
        %v3706 = vunpack.c.h.b16 %v3033
        %v3707 = vunpack.c.l.b16 %v3034
        %v3708 = vunpack.c.h.b16 %v3034
        %v3709 = vpack.c.b16 %v3263, %v3261
        %v3710 = vpack.c.b16 %v3264, %v3262
        %v3711 = vpack.c.b16 %v3267, %v3265
        %v3712 = vpack.c.b16 %v3268, %v3266
        %v3713 = vpack.c.b16 %v3271, %v3269
        %v3714 = vpack.c.b16 %v3272, %v3270
        %v3715 = vpack.c.b16 %v3275, %v3273
        %v3716 = vpack.c.b16 %v3276, %v3274
        %v3717 = vpack.c.b16 %v3279, %v3277
        %v3718 = vpack.c.b16 %v3280, %v3278
        %v3719 = vpack.c.b16 %v3283, %v3281
        %v3720 = vpack.c.b16 %v3284, %v3282
        %v3721 = vpack.c.b16 %v3287, %v3285
        %v3722 = vpack.c.b16 %v3288, %v3286
        %v3723 = vpack.c.b16 %v3291, %v3289
        %v3724 = vpack.c.b16 %v3292, %v3290
        %v3725 = vpack.c.b16 %v3295, %v3293
        %v3726 = vpack.c.b16 %v3296, %v3294
        %v3727 = vpack.c.b16 %v3299, %v3297
        %v3728 = vpack.c.b16 %v3300, %v3298
        %v3729 = vpack.c.b16 %v3303, %v3301
        %v3730 = vpack.c.b16 %v3304, %v3302
        %v3731 = vpack.c.b16 %v3307, %v3305
        %v3732 = vpack.c.b16 %v3308, %v3306
        %v3733 = vpack.c.b16 %v3311, %v3309
        %v3734 = vpack.c.b16 %v3312, %v3310
        %v3735 = vpack.c.b16 %v3315, %v3313
        %v3736 = vpack.c.b16 %v3316, %v3314
        %v3737 = vpack.c.b16 %v3319, %v3317
        %v3738 = vpack.c.b16 %v3320, %v3318
        %v3739 = vpack.c.b16 %v3323, %v3321
        %v3740 = vpack.c.b16 %v3324, %v3322
        %v3741 = vpack.c.b16 %v3327, %v3325
        %v3742 = vpack.c.b16 %v3328, %v3326
        %v3743 = vpack.c.b16 %v3331, %v3329
        %v3744 = vpack.c.b16 %v3332, %v3330
        %v3745 = vpack.c.b16 %v3335, %v3333
        %v3746 = vpack.c.b16 %v3336, %v3334
        %v3747 = vpack.c.b16 %v3339, %v3337
        %v3748 = vpack.c.b16 %v3340, %v3338
        %v3749 = vpack.c.b16 %v3343, %v3341
        %v3750 = vpack.c.b16 %v3344, %v3342
        %v3751 = vpack.c.b16 %v3347, %v3345
        %v3752 = vpack.c.b16 %v3348, %v3346
        %v3753 = vpack.c.b16 %v3351, %v3349
        %v3754 = vpack.c.b16 %v3352, %v3350
        %v3755 = vpack.c.b16 %v3355, %v3353
        %v3756 = vpack.c.b16 %v3356, %v3354
        %v3757 = vpack.c.b16 %v3359, %v3357
        %v3758 = vpack.c.b16 %v3360, %v3358
        %v3759 = vpack.c.b16 %v3363, %v3361
        %v3760 = vpack.c.b16 %v3364, %v3362
        %v3761 = vpack.c.b16 %v3367, %v3365
        %v3762 = vpack.c.b16 %v3368, %v3366
        %v3763 = vpack.c.b16 %v3371, %v3369
        %v3764 = vpack.c.b16 %v3372, %v3370
        %v3765 = vpack.c.b16 %v3375, %v3373
        %v3766 = vpack.c.b16 %v3376, %v3374
        %v3767 = vpack.c.b16 %v3379, %v3377
        %v3768 = vpack.c.b16 %v3380, %v3378
        %v3769 = vpack.c.b16 %v3383, %v3381
        %v3770 = vpack.c.b16 %v3384, %v3382
        %v3771 = vpack.c.b16 %v3387, %v3385
        %v3772 = vpack.c.b16 %v3388, %v3386
        %v3773 = vpack.c.b16 %v3391, %v3389
        %v3774 = vpack.c.b16 %v3392, %v3390
        %v3775 = vpack.c.b16 %v3395, %v3393
        %v3776 = vpack.c.b16 %v3396, %v3394
        %v3777 = vpack.c.b16 %v3399, %v3397
        %v3778 = vpack.c.b16 %v3400, %v3398
        %v3779 = vpack.c.b16 %v3403, %v3401
        %v3780 = vpack.c.b16 %v3404, %v3402
        %v3781 = vpack.c.b16 %v3407, %v3405
        %v3782 = vpack.c.b16 %v3408, %v3406
        %v3783 = vpack.c.b16 %v3411, %v3409
        %v3784 = vpack.c.b16 %v3412, %v3410
        %v3785 = vpack.c.b16 %v3415, %v3413
        %v3786 = vpack.c.b16 %v3416, %v3414
        %v3787 = vpack.c.b16 %v3419, %v3417
        %v3788 = vpack.c.b16 %v3420, %v3418
        %v3789 = vpack.c.b16 %v3423, %v3421
        %v3790 = vpack.c.b16 %v3424, %v3422
        %v3791 = vpack.c.b16 %v3427, %v3425
        %v3792 = vpack.c.b16 %v3428, %v3426
        %v3793 = vpack.c.b16 %v3431, %v3429
        %v3794 = vpack.c.b16 %v3432, %v3430
        %v3795 = vpack.c.b16 %v3435, %v3433
        %v3796 = vpack.c.b16 %v3436, %v3434
        %v3797 = vpack.c.b16 %v3439, %v3437
        %v3798 = vpack.c.b16 %v3440, %v3438
        %v3799 = vpack.c.b16 %v3443, %v3441
        %v3800 = vpack.c.b16 %v3444, %v3442
        %v3801 = vpack.c.b16 %v3447, %v3445
        %v3802 = vpack.c.b16 %v3448, %v3446
        %v3803 = vpack.c.b16 %v3451, %v3449
        %v3804 = vpack.c.b16 %v3452, %v3450
        %v3805 = vpack.c.b16 %v3455, %v3453
        %v3806 = vpack.c.b16 %v3456, %v3454
        %v3807 = vpack.c.b16 %v3459, %v3457
        %v3808 = vpack.c.b16 %v3460, %v3458
        %v3809 = vpack.c.b16 %v3463, %v3461
        %v3810 = vpack.c.b16 %v3464, %v3462
        %v3811 = vpack.c.b16 %v3467, %v3465
        %v3812 = vpack.c.b16 %v3468, %v3466
        %v3813 = vpack.c.b16 %v3471, %v3469
        %v3814 = vpack.c.b16 %v3472, %v3470
        %v3815 = vpack.c.b16 %v3475, %v3473
        %v3816 = vpack.c.b16 %v3476, %v3474
        %v3817 = vpack.c.b16 %v3479, %v3477
        %v3818 = vpack.c.b16 %v3480, %v3478
        %v3819 = vpack.c.b16 %v3483, %v3481
        %v3820 = vpack.c.b16 %v3484, %v3482
        %v3821 = vpack.c.b16 %v3487, %v3485
        %v3822 = vpack.c.b16 %v3488, %v3486
        %v3823 = vpack.c.b16 %v3491, %v3489
        %v3824 = vpack.c.b16 %v3492, %v3490
        %v3825 = vpack.c.b16 %v3495, %v3493
        %v3826 = vpack.c.b16 %v3496, %v3494
        %v3827 = vpack.c.b16 %v3499, %v3497
        %v3828 = vpack.c.b16 %v3500, %v3498
        %v3829 = vpack.c.b16 %v3503, %v3501
        %v3830 = vpack.c.b16 %v3504, %v3502
        %v3831 = vpack.c.b16 %v3507, %v3505
        %v3832 = vpack.c.b16 %v3508, %v3506
        %v3833 = vpack.c.b16 %v3511, %v3509
        %v3834 = vpack.c.b16 %v3512, %v3510
        %v3835 = vpack.c.b16 %v3515, %v3513
        %v3836 = vpack.c.b16 %v3516, %v3514
        %v3837 = vpack.c.b16 %v3519, %v3517
        %v3838 = vpack.c.b16 %v3520, %v3518
        %v3839 = vpack.c.b16 %v3523, %v3521
        %v3840 = vpack.c.b16 %v3524, %v3522
        %v3841 = vpack.c.b16 %v3527, %v3525
        %v3842 = vpack.c.b16 %v3528, %v3526
        %v3843 = vpack.c.b16 %v3531, %v3529
        %v3844 = vpack.c.b16 %v3532, %v3530
        %v3845 = vpack.c.b16 %v3535, %v3533
        %v3846 = vpack.c.b16 %v3536, %v3534
        %v3847 = vpack.c.b16 %v3539, %v3537
        %v3848 = vpack.c.b16 %v3540, %v3538
        %v3849 = vpack.c.b16 %v3543, %v3541
        %v3850 = vpack.c.b16 %v3544, %v3542
        %v3851 = vpack.c.b16 %v3547, %v3545
        %v3852 = vpack.c.b16 %v3548, %v3546
        %v3853 = vpack.c.b16 %v3551, %v3549
        %v3854 = vpack.c.b16 %v3552, %v3550
        %v3855 = vpack.c.b16 %v3555, %v3553
        %v3856 = vpack.c.b16 %v3556, %v3554
        %v3857 = vpack.c.b16 %v3559, %v3557
        %v3858 = vpack.c.b16 %v3560, %v3558
        %v3859 = vpack.c.b16 %v3563, %v3561
        %v3860 = vpack.c.b16 %v3564, %v3562
        %v3861 = vpack.c.b16 %v3567, %v3565
        %v3862 = vpack.c.b16 %v3568, %v3566
        %v3863 = vpack.c.b16 %v3571, %v3569
        %v3864 = vpack.c.b16 %v3572, %v3570
        %v3865 = vpack.c.b16 %v3575, %v3573
        %v3866 = vpack.c.b16 %v3576, %v3574
        %v3867 = vpack.c.b16 %v3579, %v3577
        %v3868 = vpack.c.b16 %v3580, %v3578
        %v3869 = vpack.c.b16 %v3583, %v3581
        %v3870 = vpack.c.b16 %v3584, %v3582
        %v3871 = vpack.c.b16 %v3587, %v3585
        %v3872 = vpack.c.b16 %v3588, %v3586
        %v3873 = vpack.c.b16 %v3591, %v3589
        %v3874 = vpack.c.b16 %v3592, %v3590
        %v3875 = vpack.c.b16 %v3595, %v3593
        %v3876 = vpack.c.b16 %v3596, %v3594
        %v3877 = vpack.c.b16 %v3599, %v3597
        %v3878 = vpack.c.b16 %v3600, %v3598
        %v3879 = vpack.c.b16 %v3603, %v3601
        %v3880 = vpack.c.b16 %v3604, %v3602
        %v3881 = vpack.c.b16 %v3607, %v3605
        %v3882 = vpack.c.b16 %v3608, %v3606
        %v3883 = vpack.c.b16 %v3611, %v3609
        %v3884 = vpack.c.b16 %v3612, %v3610
        %v3885 = vpack.c.b16 %v3615, %v3613
        %v3886 = vpack.c.b16 %v3616, %v3614
        %v3887 = vpack.c.b16 %v3619, %v3617
        %v3888 = vpack.c.b16 %v3620, %v3618
        %v3889 = vpack.c.b16 %v3623, %v3621
        %v3890 = vpack.c.b16 %v3624, %v3622
        %v3891 = vpack.c.b16 %v3627, %v3625
        %v3892 = vpack.c.b16 %v3628, %v3626
        %v3893 = vpack.c.b16 %v3631, %v3629
        %v3894 = vpack.c.b16 %v3632, %v3630
        %v3895 = vpack.c.b16 %v3635, %v3633
        %v3896 = vpack.c.b16 %v3636, %v3634
        %v3897 = vpack.c.b16 %v3639, %v3637
        %v3898 = vpack.c.b16 %v3640, %v3638
        %v3899 = vpack.c.b16 %v3643, %v3641
        %v3900 = vpack.c.b16 %v3644, %v3642
        %v3901 = vpack.c.b16 %v3647, %v3645
        %v3902 = vpack.c.b16 %v3648, %v3646
        %v3903 = vpack.c.b16 %v3651, %v3649
        %v3904 = vpack.c.b16 %v3652, %v3650
        %v3905 = vpack.c.b16 %v3655, %v3653
        %v3906 = vpack.c.b16 %v3656, %v3654
        %v3907 = vpack.c.b16 %v3659, %v3657
        %v3908 = vpack.c.b16 %v3660, %v3658
        %v3909 = vpack.c.b16 %v3663, %v3661
        %v3910 = vpack.c.b16 %v3664, %v3662
        %v3911 = vpack.c.b16 %v3667, %v3665
        %v3912 = vpack.c.b16 %v3668, %v3666
        %v3913 = vpack.c.b16 %v3671, %v3669
        %v3914 = vpack.c.b16 %v3672, %v3670
        %v3915 = vpack.c.b16 %v3675, %v3673
        %v3916 = vpack.c.b16 %v3676, %v3674
        %v3917 = vpack.c.b16 %v3679, %v3677
        %v3918 = vpack.c.b16 %v3680, %v3678
        %v3919 = vpack.c.b16 %v3683, %v3681
        %v3920 = vpack.c.b16 %v3684, %v3682
        %v3921 = vpack.c.b16 %v3687, %v3685
        %v3922 = vpack.c.b16 %v3688, %v3686
        %v3923 = vpack.c.b16 %v3691, %v3689
        %v3924 = vpack.c.b16 %v3692, %v3690
        %v3925 = vpack.c.b16 %v3695, %v3693
        %v3926 = vpack.c.b16 %v3696, %v3694
        %v3927 = vpack.c.b16 %v3699, %v3697
        %v3928 = vpack.c.b16 %v3700, %v3698
        %v3929 = vpack.c.b16 %v3703, %v3701
        %v3930 = vpack.c.b16 %v3704, %v3702
        %v3931 = vpack.c.b16 %v3707, %v3705
        %v3932 = vpack.c.b16 %v3708, %v3706
        %4157 = vmatprep.subr.bf16.mxu0 %v3710
        %4158 = vmatpush1.bf16.msra.mxu0 %v3709
        %4159 = vmatprep.subr.bf16.mxu0 %v3712
        %4160 = vmatpush1.bf16.msra.mxu0 %v3711
        %4161 = vmatprep.subr.bf16.mxu0 %v3714
        %4162 = vmatpush1.bf16.msra.mxu0 %v3713
        %4163 = vmatprep.subr.bf16.mxu0 %v3716
        %4164 = vmatpush1.bf16.msra.mxu0 %v3715
        %4165 = vmatprep.subr.bf16.mxu0 %v3718
        %4166 = vmatpush1.bf16.msra.mxu0 %v3717
        %4167 = vmatprep.subr.bf16.mxu0 %v3720
        %4168 = vmatpush1.bf16.msra.mxu0 %v3719
        %4169 = vmatprep.subr.bf16.mxu0 %v3722
        %4170 = vmatpush1.bf16.msra.mxu0 %v3721
        %4171 = vmatprep.subr.bf16.mxu0 %v3724
        %4172 = vmatpush1.bf16.msra.mxu0 %v3723
        %4173 = vmatprep.subr.bf16.mxu0 %v3726
        %4174 = vmatpush1.bf16.msra.mxu0 %v3725
        %4175 = vmatprep.subr.bf16.mxu0 %v3728
        %4176 = vmatpush1.bf16.msra.mxu0 %v3727
        %4177 = vmatprep.subr.bf16.mxu0 %v3730
        %4178 = vmatpush1.bf16.msra.mxu0 %v3729
        %4179 = vmatprep.subr.bf16.mxu0 %v3732
        %4180 = vmatpush1.bf16.msra.mxu0 %v3731
        %4181 = vmatprep.subr.bf16.mxu0 %v3734
        %4182 = vmatpush1.bf16.msra.mxu0 %v3733
        %4183 = vmatprep.subr.bf16.mxu0 %v3736
        %4184 = vmatpush1.bf16.msra.mxu0 %v3735
        %4185 = vmatprep.subr.bf16.mxu0 %v3738
        %4186 = vmatpush1.bf16.msra.mxu0 %v3737
        %4187 = vmatprep.subr.bf16.mxu0 %v3740
        %4188 = vmatpush1.bf16.msra.mxu0 %v3739
        %4189 = vmatprep.mubr.bf16.mxu0 %v999
        %4190 = vmatmul.mubr.bf16.gmra.mrb[0].mxu0 %v998
        %v4191 = vpop.f32.mrb[0].mxu0
        %v4192 = vadd.f32 0.0, %v4191
        %v4193 = vpop.f32.mrb[0].mxu0
        %v4194 = vadd.f32 0.0, %v4193
        %v4195 = vpop.f32.mrb[0].mxu0
        %v4196 = vadd.f32 0.0, %v4195
        %v4197 = vpop.f32.mrb[0].mxu0
        %v4198 = vadd.f32 0.0, %v4197
        %4199 = vmatprep.mubr.bf16.mxu0 %v1013
        %4200 = vmatmul.mubr.bf16.gmra.mrb[0].mxu0 %v1012
        %v4201 = vpop.f32.mrb[0].mxu0
        %v4202 = vadd.f32 0.0, %v4201
        %v4203 = vpop.f32.mrb[0].mxu0
        %v4204 = vadd.f32 0.0, %v4203
        %v4205 = vpop.f32.mrb[0].mxu0
        %v4206 = vadd.f32 0.0, %v4205
        %v4207 = vpop.f32.mrb[0].mxu0
        %v4208 = vadd.f32 0.0, %v4207
        %4209 = vmatprep.mubr.bf16.mxu0 %v1027
        %4210 = vmatmul.mubr.bf16.gmra.mrb[0].mxu0 %v1026
        %v4211 = vpop.f32.mrb[0].mxu0
        %v4212 = vadd.f32 0.0, %v4211
        %v4213 = vpop.f32.mrb[0].mxu0
        %v4214 = vadd.f32 0.0, %v4213
        %v4215 = vpop.f32.mrb[0].mxu0
        %v4216 = vadd.f32 0.0, %v4215
        %v4217 = vpop.f32.mrb[0].mxu0
        %v4218 = vadd.f32 0.0, %v4217
        %4219 = vmatprep.mubr.bf16.mxu0 %v1041
        %4220 = vmatmul.mubr.bf16.gmra.mrb[0].mxu0 %v1040
        %v4221 = vpop.f32.mrb[0].mxu0
        %v4222 = vadd.f32 0.0, %v4221
        %v4223 = vpop.f32.mrb[0].mxu0
        %v4224 = vadd.f32 0.0, %v4223
        %v4225 = vpop.f32.mrb[0].mxu0
        %v4226 = vadd.f32 0.0, %v4225
        %v4227 = vpop.f32.mrb[0].mxu0
        %v4228 = vadd.f32 0.0, %v4227
        %4229 = vdwg.mxu0
        %4230 = vmatprep.subr.bf16.mxu0 %v3742
        %4231 = vmatpush1.bf16.msra.mxu0 %v3741
        %4232 = vmatprep.subr.bf16.mxu0 %v3744
        %4233 = vmatpush1.bf16.msra.mxu0 %v3743
        %4234 = vmatprep.subr.bf16.mxu0 %v3746
        %4235 = vmatpush1.bf16.msra.mxu0 %v3745
        %4236 = vmatprep.subr.bf16.mxu0 %v3748
        %4237 = vmatpush1.bf16.msra.mxu0 %v3747
        %4238 = vmatprep.subr.bf16.mxu0 %v3750
        %4239 = vmatpush1.bf16.msra.mxu0 %v3749
        %4240 = vmatprep.subr.bf16.mxu0 %v3752
        %4241 = vmatpush1.bf16.msra.mxu0 %v3751
        %4242 = vmatprep.subr.bf16.mxu0 %v3754
        %4243 = vmatpush1.bf16.msra.mxu0 %v3753
        %4244 = vmatprep.subr.bf16.mxu0 %v3756
        %4245 = vmatpush1.bf16.msra.mxu0 %v3755
        %4246 = vmatprep.subr.bf16.mxu0 %v3758
        %4247 = vmatpush1.bf16.msra.mxu0 %v3757
        %4248 = vmatprep.subr.bf16.mxu0 %v3760
        %4249 = vmatpush1.bf16.msra.mxu0 %v3759
        %4250 = vmatprep.subr.bf16.mxu0 %v3762
        %4251 = vmatpush1.bf16.msra.mxu0 %v3761
        %4252 = vmatprep.subr.bf16.mxu0 %v3764
        %4253 = vmatpush1.bf16.msra.mxu0 %v3763
        %4254 = vmatprep.subr.bf16.mxu0 %v3766
        %4255 = vmatpush1.bf16.msra.mxu0 %v3765
        %4256 = vmatprep.subr.bf16.mxu0 %v3768
        %4257 = vmatpush1.bf16.msra.mxu0 %v3767
        %4258 = vmatprep.subr.bf16.mxu0 %v3770
        %4259 = vmatpush1.bf16.msra.mxu0 %v3769
        %4260 = vmatprep.subr.bf16.mxu0 %v3772
        %4261 = vmatpush1.bf16.msra.mxu0 %v3771
        %4262 = vmatprep.mubr.bf16.mxu0 %v1001
        %4263 = vmatmul.mubr.bf16.gmra.mrb[0].mxu0 %v1000
        %v4264 = vpop.f32.mrb[0].mxu0
        %v4265 = vadd.f32 %v4192, %v4264
        %v4266 = vpop.f32.mrb[0].mxu0
        %v4267 = vadd.f32 %v4194, %v4266
        %v4268 = vpop.f32.mrb[0].mxu0
        %v4269 = vadd.f32 %v4196, %v4268
        %v4270 = vpop.f32.mrb[0].mxu0
        %v4271 = vadd.f32 %v4198, %v4270
        %4272 = vmatprep.mubr.bf16.mxu0 %v1015
        %4273 = vmatmul.mubr.bf16.gmra.mrb[0].mxu0 %v1014
        %v4274 = vpop.f32.mrb[0].mxu0
        %v4275 = vadd.f32 %v4202, %v4274
        %v4276 = vpop.f32.mrb[0].mxu0
        %v4277 = vadd.f32 %v4204, %v4276
        %v4278 = vpop.f32.mrb[0].mxu0
        %v4279 = vadd.f32 %v4206, %v4278
        %v4280 = vpop.f32.mrb[0].mxu0
        %v4281 = vadd.f32 %v4208, %v4280
        %4282 = vmatprep.mubr.bf16.mxu0 %v1029
        %4283 = vmatmul.mubr.bf16.gmra.mrb[0].mxu0 %v1028
        %v4284 = vpop.f32.mrb[0].mxu0
        %v4285 = vadd.f32 %v4212, %v4284
        %v4286 = vpop.f32.mrb[0].mxu0
        %v4287 = vadd.f32 %v4214, %v4286
        %v4288 = vpop.f32.mrb[0].mxu0
        %v4289 = vadd.f32 %v4216, %v4288
        %v4290 = vpop.f32.mrb[0].mxu0
        %v4291 = vadd.f32 %v4218, %v4290
        %4292 = vmatprep.mubr.bf16.mxu0 %v1043
        %4293 = vmatmul.mubr.bf16.gmra.mrb[0].mxu0 %v1042
        %v4294 = vpop.f32.mrb[0].mxu0
        %v4295 = vadd.f32 %v4222, %v4294
        %v4296 = vpop.f32.mrb[0].mxu0
        %v4297 = vadd.f32 %v4224, %v4296
        %v4298 = vpop.f32.mrb[0].mxu0
        %v4299 = vadd.f32 %v4226, %v4298
        %v4300 = vpop.f32.mrb[0].mxu0
        %v4301 = vadd.f32 %v4228, %v4300
        %4302 = vdwg.mxu0
        %4303 = vmatprep.subr.bf16.mxu0 %v3774
        %4304 = vmatpush1.bf16.msra.mxu0 %v3773
        %4305 = vmatprep.subr.bf16.mxu0 %v3776
        %4306 = vmatpush1.bf16.msra.mxu0 %v3775
        %4307 = vmatprep.subr.bf16.mxu0 %v3778
        %4308 = vmatpush1.bf16.msra.mxu0 %v3777
        %4309 = vmatprep.subr.bf16.mxu0 %v3780
        %4310 = vmatpush1.bf16.msra.mxu0 %v3779
        %4311 = vmatprep.subr.bf16.mxu0 %v3782
        %4312 = vmatpush1.bf16.msra.mxu0 %v3781
        %4313 = vmatprep.subr.bf16.mxu0 %v3784
        %4314 = vmatpush1.bf16.msra.mxu0 %v3783
        %4315 = vmatprep.subr.bf16.mxu0 %v3786
        %4316 = vmatpush1.bf16.msra.mxu0 %v3785
        %4317 = vmatprep.subr.bf16.mxu0 %v3788
        %4318 = vmatpush1.bf16.msra.mxu0 %v3787
        %4319 = vmatprep.subr.bf16.mxu0 %v3790
        %4320 = vmatpush1.bf16.msra.mxu0 %v3789
        %4321 = vmatprep.subr.bf16.mxu0 %v3792
        %4322 = vmatpush1.bf16.msra.mxu0 %v3791
        %4323 = vmatprep.subr.bf16.mxu0 %v3794
        %4324 = vmatpush1.bf16.msra.mxu0 %v3793
        %4325 = vmatprep.subr.bf16.mxu0 %v3796
        %4326 = vmatpush1.bf16.msra.mxu0 %v3795
        %4327 = vmatprep.subr.bf16.mxu0 %v3798
        %4328 = vmatpush1.bf16.msra.mxu0 %v3797
        %4329 = vmatprep.subr.bf16.mxu0 %v3800
        %4330 = vmatpush1.bf16.msra.mxu0 %v3799
        %4331 = vmatprep.subr.bf16.mxu0 %v3802
        %4332 = vmatpush1.bf16.msra.mxu0 %v3801
        %4333 = vmatprep.subr.bf16.mxu0 %v3804
        %4334 = vmatpush1.bf16.msra.mxu0 %v3803
        %4335 = vmatprep.mubr.bf16.mxu0 %v1003
        %4336 = vmatmul.mubr.bf16.gmra.mrb[0].mxu0 %v1002
        %v4337 = vpop.f32.mrb[0].mxu0
        %v4338 = vadd.f32 %v4265, %v4337
        %v4339 = vpop.f32.mrb[0].mxu0
        %v4340 = vadd.f32 %v4267, %v4339
        %v4341 = vpop.f32.mrb[0].mxu0
        %v4342 = vadd.f32 %v4269, %v4341
        %v4343 = vpop.f32.mrb[0].mxu0
        %v4344 = vadd.f32 %v4271, %v4343
        %4345 = vmatprep.mubr.bf16.mxu0 %v1017
        %4346 = vmatmul.mubr.bf16.gmra.mrb[0].mxu0 %v1016
        %v4347 = vpop.f32.mrb[0].mxu0
        %v4348 = vadd.f32 %v4275, %v4347
        %v4349 = vpop.f32.mrb[0].mxu0
        %v4350 = vadd.f32 %v4277, %v4349
        %v4351 = vpop.f32.mrb[0].mxu0
        %v4352 = vadd.f32 %v4279, %v4351
        %v4353 = vpop.f32.mrb[0].mxu0
        %v4354 = vadd.f32 %v4281, %v4353
        %4355 = vmatprep.mubr.bf16.mxu0 %v1031
        %4356 = vmatmul.mubr.bf16.gmra.mrb[0].mxu0 %v1030
        %v4357 = vpop.f32.mrb[0].mxu0
        %v4358 = vadd.f32 %v4285, %v4357
        %v4359 = vpop.f32.mrb[0].mxu0
        %v4360 = vadd.f32 %v4287, %v4359
        %v4361 = vpop.f32.mrb[0].mxu0
        %v4362 = vadd.f32 %v4289, %v4361
        %v4363 = vpop.f32.mrb[0].mxu0
        %v4364 = vadd.f32 %v4291, %v4363
        %4365 = vmatprep.mubr.bf16.mxu0 %v1045
        %4366 = vmatmul.mubr.bf16.gmra.mrb[0].mxu0 %v1044
        %v4367 = vpop.f32.mrb[0].mxu0
        %v4368 = vadd.f32 %v4295, %v4367
        %v4369 = vpop.f32.mrb[0].mxu0
        %v4370 = vadd.f32 %v4297, %v4369
        %v4371 = vpop.f32.mrb[0].mxu0
        %v4372 = vadd.f32 %v4299, %v4371
        %v4373 = vpop.f32.mrb[0].mxu0
        %v4374 = vadd.f32 %v4301, %v4373
        %4375 = vdwg.mxu0
        %4376 = vmatprep.subr.bf16.mxu0 %v3806
        %4377 = vmatpush1.bf16.msra.mxu0 %v3805
        %4378 = vmatprep.subr.bf16.mxu0 %v3808
        %4379 = vmatpush1.bf16.msra.mxu0 %v3807
        %4380 = vmatprep.subr.bf16.mxu0 %v3810
        %4381 = vmatpush1.bf16.msra.mxu0 %v3809
        %4382 = vmatprep.subr.bf16.mxu0 %v3812
        %4383 = vmatpush1.bf16.msra.mxu0 %v3811
        %4384 = vmatprep.subr.bf16.mxu0 %v3814
        %4385 = vmatpush1.bf16.msra.mxu0 %v3813
        %4386 = vmatprep.subr.bf16.mxu0 %v3816
        %4387 = vmatpush1.bf16.msra.mxu0 %v3815
        %4388 = vmatprep.subr.bf16.mxu0 %v3818
        %4389 = vmatpush1.bf16.msra.mxu0 %v3817
        %4390 = vmatprep.subr.bf16.mxu0 %v3820
        %4391 = vmatpush1.bf16.msra.mxu0 %v3819
        %4392 = vmatprep.subr.bf16.mxu0 %v3822
        %4393 = vmatpush1.bf16.msra.mxu0 %v3821
        %4394 = vmatprep.subr.bf16.mxu0 %v3824
        %4395 = vmatpush1.bf16.msra.mxu0 %v3823
        %4396 = vmatprep.subr.bf16.mxu0 %v3826
        %4397 = vmatpush1.bf16.msra.mxu0 %v3825
        %4398 = vmatprep.subr.bf16.mxu0 %v3828
        %4399 = vmatpush1.bf16.msra.mxu0 %v3827
        %4400 = vmatprep.subr.bf16.mxu0 %v3830
        %4401 = vmatpush1.bf16.msra.mxu0 %v3829
        %4402 = vmatprep.subr.bf16.mxu0 %v3832
        %4403 = vmatpush1.bf16.msra.mxu0 %v3831
        %4404 = vmatprep.subr.bf16.mxu0 %v3834
        %4405 = vmatpush1.bf16.msra.mxu0 %v3833
        %4406 = vmatprep.subr.bf16.mxu0 %v3836
        %4407 = vmatpush1.bf16.msra.mxu0 %v3835
        %4408 = vmatprep.mubr.bf16.mxu0 %v1005
        %4409 = vmatmul.mubr.bf16.gmra.mrb[0].mxu0 %v1004
        %v4410 = vpop.f32.mrb[0].mxu0
        %v4411 = vadd.f32 %v4338, %v4410
        %v4412 = vpop.f32.mrb[0].mxu0
        %v4413 = vadd.f32 %v4340, %v4412
        %v4414 = vpop.f32.mrb[0].mxu0
        %v4415 = vadd.f32 %v4342, %v4414
        %v4416 = vpop.f32.mrb[0].mxu0
        %v4417 = vadd.f32 %v4344, %v4416
        %4418 = vmatprep.mubr.bf16.mxu0 %v1019
        %4419 = vmatmul.mubr.bf16.gmra.mrb[0].mxu0 %v1018
        %v4420 = vpop.f32.mrb[0].mxu0
        %v4421 = vadd.f32 %v4348, %v4420
        %v4422 = vpop.f32.mrb[0].mxu0
        %v4423 = vadd.f32 %v4350, %v4422
        %v4424 = vpop.f32.mrb[0].mxu0
        %v4425 = vadd.f32 %v4352, %v4424
        %v4426 = vpop.f32.mrb[0].mxu0
        %v4427 = vadd.f32 %v4354, %v4426
        %4428 = vmatprep.mubr.bf16.mxu0 %v1033
        %4429 = vmatmul.mubr.bf16.gmra.mrb[0].mxu0 %v1032
        %v4430 = vpop.f32.mrb[0].mxu0
        %v4431 = vadd.f32 %v4358, %v4430
        %v4432 = vpop.f32.mrb[0].mxu0
        %v4433 = vadd.f32 %v4360, %v4432
        %v4434 = vpop.f32.mrb[0].mxu0
        %v4435 = vadd.f32 %v4362, %v4434
        %v4436 = vpop.f32.mrb[0].mxu0
        %v4437 = vadd.f32 %v4364, %v4436
        %4438 = vmatprep.mubr.bf16.mxu0 %v1047
        %4439 = vmatmul.mubr.bf16.gmra.mrb[0].mxu0 %v1046
        %v4440 = vpop.f32.mrb[0].mxu0
        %v4441 = vadd.f32 %v4368, %v4440
        %v4442 = vpop.f32.mrb[0].mxu0
        %v4443 = vadd.f32 %v4370, %v4442
        %v4444 = vpop.f32.mrb[0].mxu0
        %v4445 = vadd.f32 %v4372, %v4444
        %v4446 = vpop.f32.mrb[0].mxu0
        %v4447 = vadd.f32 %v4374, %v4446
        %4448 = vdwg.mxu0
        %4449 = vmatprep.subr.bf16.mxu0 %v3838
        %4450 = vmatpush1.bf16.msra.mxu0 %v3837
        %4451 = vmatprep.subr.bf16.mxu0 %v3840
        %4452 = vmatpush1.bf16.msra.mxu0 %v3839
        %4453 = vmatprep.subr.bf16.mxu0 %v3842
        %4454 = vmatpush1.bf16.msra.mxu0 %v3841
        %4455 = vmatprep.subr.bf16.mxu0 %v3844
        %4456 = vmatpush1.bf16.msra.mxu0 %v3843
        %4457 = vmatprep.subr.bf16.mxu0 %v3846
        %4458 = vmatpush1.bf16.msra.mxu0 %v3845
        %4459 = vmatprep.subr.bf16.mxu0 %v3848
        %4460 = vmatpush1.bf16.msra.mxu0 %v3847
        %4461 = vmatprep.subr.bf16.mxu0 %v3850
        %4462 = vmatpush1.bf16.msra.mxu0 %v3849
        %4463 = vmatprep.subr.bf16.mxu0 %v3852
        %4464 = vmatpush1.bf16.msra.mxu0 %v3851
        %4465 = vmatprep.subr.bf16.mxu0 %v3854
        %4466 = vmatpush1.bf16.msra.mxu0 %v3853
        %4467 = vmatprep.subr.bf16.mxu0 %v3856
        %4468 = vmatpush1.bf16.msra.mxu0 %v3855
        %4469 = vmatprep.subr.bf16.mxu0 %v3858
        %4470 = vmatpush1.bf16.msra.mxu0 %v3857
        %4471 = vmatprep.subr.bf16.mxu0 %v3860
        %4472 = vmatpush1.bf16.msra.mxu0 %v3859
        %4473 = vmatprep.subr.bf16.mxu0 %v3862
        %4474 = vmatpush1.bf16.msra.mxu0 %v3861
        %4475 = vmatprep.subr.bf16.mxu0 %v3864
        %4476 = vmatpush1.bf16.msra.mxu0 %v3863
        %4477 = vmatprep.subr.bf16.mxu0 %v3866
        %4478 = vmatpush1.bf16.msra.mxu0 %v3865
        %4479 = vmatprep.subr.bf16.mxu0 %v3868
        %4480 = vmatpush1.bf16.msra.mxu0 %v3867
        %4481 = vmatprep.mubr.bf16.mxu0 %v1007
        %4482 = vmatmul.mubr.bf16.gmra.mrb[0].mxu0 %v1006
        %v4483 = vpop.f32.mrb[0].mxu0
        %v4484 = vadd.f32 %v4411, %v4483
        %v4485 = vpop.f32.mrb[0].mxu0
        %v4486 = vadd.f32 %v4413, %v4485
        %v4487 = vpop.f32.mrb[0].mxu0
        %v4488 = vadd.f32 %v4415, %v4487
        %v4489 = vpop.f32.mrb[0].mxu0
        %v4490 = vadd.f32 %v4417, %v4489
        %4491 = vmatprep.mubr.bf16.mxu0 %v1021
        %4492 = vmatmul.mubr.bf16.gmra.mrb[0].mxu0 %v1020
        %v4493 = vpop.f32.mrb[0].mxu0
        %v4494 = vadd.f32 %v4421, %v4493
        %v4495 = vpop.f32.mrb[0].mxu0
        %v4496 = vadd.f32 %v4423, %v4495
        %v4497 = vpop.f32.mrb[0].mxu0
        %v4498 = vadd.f32 %v4425, %v4497
        %v4499 = vpop.f32.mrb[0].mxu0
        %v4500 = vadd.f32 %v4427, %v4499
        %4501 = vmatprep.mubr.bf16.mxu0 %v1035
        %4502 = vmatmul.mubr.bf16.gmra.mrb[0].mxu0 %v1034
        %v4503 = vpop.f32.mrb[0].mxu0
        %v4504 = vadd.f32 %v4431, %v4503
        %v4505 = vpop.f32.mrb[0].mxu0
        %v4506 = vadd.f32 %v4433, %v4505
        %v4507 = vpop.f32.mrb[0].mxu0
        %v4508 = vadd.f32 %v4435, %v4507
        %v4509 = vpop.f32.mrb[0].mxu0
        %v4510 = vadd.f32 %v4437, %v4509
        %4511 = vmatprep.mubr.bf16.mxu0 %v1049
        %4512 = vmatmul.mubr.bf16.gmra.mrb[0].mxu0 %v1048
        %v4513 = vpop.f32.mrb[0].mxu0
        %v4514 = vadd.f32 %v4441, %v4513
        %v4515 = vpop.f32.mrb[0].mxu0
        %v4516 = vadd.f32 %v4443, %v4515
        %v4517 = vpop.f32.mrb[0].mxu0
        %v4518 = vadd.f32 %v4445, %v4517
        %v4519 = vpop.f32.mrb[0].mxu0
        %v4520 = vadd.f32 %v4447, %v4519
        %4521 = vdwg.mxu0
        %4522 = vmatprep.subr.bf16.mxu0 %v3870
        %4523 = vmatpush1.bf16.msra.mxu0 %v3869
        %4524 = vmatprep.subr.bf16.mxu0 %v3872
        %4525 = vmatpush1.bf16.msra.mxu0 %v3871
        %4526 = vmatprep.subr.bf16.mxu0 %v3874
        %4527 = vmatpush1.bf16.msra.mxu0 %v3873
        %4528 = vmatprep.subr.bf16.mxu0 %v3876
        %4529 = vmatpush1.bf16.msra.mxu0 %v3875
        %4530 = vmatprep.subr.bf16.mxu0 %v3878
        %4531 = vmatpush1.bf16.msra.mxu0 %v3877
        %4532 = vmatprep.subr.bf16.mxu0 %v3880
        %4533 = vmatpush1.bf16.msra.mxu0 %v3879
        %4534 = vmatprep.subr.bf16.mxu0 %v3882
        %4535 = vmatpush1.bf16.msra.mxu0 %v3881
        %4536 = vmatprep.subr.bf16.mxu0 %v3884
        %4537 = vmatpush1.bf16.msra.mxu0 %v3883
        %4538 = vmatprep.subr.bf16.mxu0 %v3886
        %4539 = vmatpush1.bf16.msra.mxu0 %v3885
        %4540 = vmatprep.subr.bf16.mxu0 %v3888
        %4541 = vmatpush1.bf16.msra.mxu0 %v3887
        %4542 = vmatprep.subr.bf16.mxu0 %v3890
        %4543 = vmatpush1.bf16.msra.mxu0 %v3889
        %4544 = vmatprep.subr.bf16.mxu0 %v3892
        %4545 = vmatpush1.bf16.msra.mxu0 %v3891
        %4546 = vmatprep.subr.bf16.mxu0 %v3894
        %4547 = vmatpush1.bf16.msra.mxu0 %v3893
        %4548 = vmatprep.subr.bf16.mxu0 %v3896
        %4549 = vmatpush1.bf16.msra.mxu0 %v3895
        %4550 = vmatprep.subr.bf16.mxu0 %v3898
        %4551 = vmatpush1.bf16.msra.mxu0 %v3897
        %4552 = vmatprep.subr.bf16.mxu0 %v3900
        %4553 = vmatpush1.bf16.msra.mxu0 %v3899
        %4554 = vmatprep.mubr.bf16.mxu0 %v1009
        %4555 = vmatmul.mubr.bf16.gmra.mrb[0].mxu0 %v1008
        %v4556 = vpop.f32.mrb[0].mxu0
        %v4557 = vadd.f32 %v4484, %v4556
        %v4558 = vpop.f32.mrb[0].mxu0
        %v4559 = vadd.f32 %v4486, %v4558
        %v4560 = vpop.f32.mrb[0].mxu0
        %v4561 = vadd.f32 %v4488, %v4560
        %v4562 = vpop.f32.mrb[0].mxu0
        %v4563 = vadd.f32 %v4490, %v4562
        %4564 = vmatprep.mubr.bf16.mxu0 %v1023
        %4565 = vmatmul.mubr.bf16.gmra.mrb[0].mxu0 %v1022
        %v4566 = vpop.f32.mrb[0].mxu0
        %v4567 = vadd.f32 %v4494, %v4566
        %v4568 = vpop.f32.mrb[0].mxu0
        %v4569 = vadd.f32 %v4496, %v4568
        %v4570 = vpop.f32.mrb[0].mxu0
        %v4571 = vadd.f32 %v4498, %v4570
        %v4572 = vpop.f32.mrb[0].mxu0
        %v4573 = vadd.f32 %v4500, %v4572
        %4574 = vmatprep.mubr.bf16.mxu0 %v1037
        %4575 = vmatmul.mubr.bf16.gmra.mrb[0].mxu0 %v1036
        %v4576 = vpop.f32.mrb[0].mxu0
        %v4577 = vadd.f32 %v4504, %v4576
        %v4578 = vpop.f32.mrb[0].mxu0
        %v4579 = vadd.f32 %v4506, %v4578
        %v4580 = vpop.f32.mrb[0].mxu0
        %v4581 = vadd.f32 %v4508, %v4580
        %v4582 = vpop.f32.mrb[0].mxu0
        %v4583 = vadd.f32 %v4510, %v4582
        %4584 = vmatprep.mubr.bf16.mxu0 %v1051
        %4585 = vmatmul.mubr.bf16.gmra.mrb[0].mxu0 %v1050
        %v4586 = vpop.f32.mrb[0].mxu0
        %v4587 = vadd.f32 %v4514, %v4586
        %v4588 = vpop.f32.mrb[0].mxu0
        %v4589 = vadd.f32 %v4516, %v4588
        %v4590 = vpop.f32.mrb[0].mxu0
        %v4591 = vadd.f32 %v4518, %v4590
        %v4592 = vpop.f32.mrb[0].mxu0
        %v4593 = vadd.f32 %v4520, %v4592
        %4594 = vdwg.mxu0
        %4595 = vmatprep.subr.bf16.mxu0 %v3902
        %4596 = vmatpush1.bf16.msra.mxu0 %v3901
        %4597 = vmatprep.subr.bf16.mxu0 %v3904
        %4598 = vmatpush1.bf16.msra.mxu0 %v3903
        %4599 = vmatprep.subr.bf16.mxu0 %v3906
        %4600 = vmatpush1.bf16.msra.mxu0 %v3905
        %4601 = vmatprep.subr.bf16.mxu0 %v3908
        %4602 = vmatpush1.bf16.msra.mxu0 %v3907
        %4603 = vmatprep.subr.bf16.mxu0 %v3910
        %4604 = vmatpush1.bf16.msra.mxu0 %v3909
        %4605 = vmatprep.subr.bf16.mxu0 %v3912
        %4606 = vmatpush1.bf16.msra.mxu0 %v3911
        %4607 = vmatprep.subr.bf16.mxu0 %v3914
        %4608 = vmatpush1.bf16.msra.mxu0 %v3913
        %4609 = vmatprep.subr.bf16.mxu0 %v3916
        %4610 = vmatpush1.bf16.msra.mxu0 %v3915
        %4611 = vmatprep.subr.bf16.mxu0 %v3918
        %4612 = vmatpush1.bf16.msra.mxu0 %v3917
        %4613 = vmatprep.subr.bf16.mxu0 %v3920
        %4614 = vmatpush1.bf16.msra.mxu0 %v3919
        %4615 = vmatprep.subr.bf16.mxu0 %v3922
        %4616 = vmatpush1.bf16.msra.mxu0 %v3921
        %4617 = vmatprep.subr.bf16.mxu0 %v3924
        %4618 = vmatpush1.bf16.msra.mxu0 %v3923
        %4619 = vmatprep.subr.bf16.mxu0 %v3926
        %4620 = vmatpush1.bf16.msra.mxu0 %v3925
        %4621 = vmatprep.subr.bf16.mxu0 %v3928
        %4622 = vmatpush1.bf16.msra.mxu0 %v3927
        %4623 = vmatprep.subr.bf16.mxu0 %v3930
        %4624 = vmatpush1.bf16.msra.mxu0 %v3929
        %4625 = vmatprep.subr.bf16.mxu0 %v3932
        %4626 = vmatpush1.bf16.msra.mxu0 %v3931
        %4627 = vmatprep.mubr.bf16.mxu0 %v1011
        %4628 = vmatmul.mubr.bf16.gmra.mrb[0].mxu0 %v1010
        %v4629 = vpop.f32.mrb[0].mxu0
        %v4630 = vadd.f32 %v4557, %v4629
        %v4631 = vpop.f32.mrb[0].mxu0
        %v4632 = vadd.f32 %v4559, %v4631
        %v4633 = vpop.f32.mrb[0].mxu0
        %v4634 = vadd.f32 %v4561, %v4633
        %v4635 = vpop.f32.mrb[0].mxu0
        %v4636 = vadd.f32 %v4563, %v4635
        %4637 = vmatprep.mubr.bf16.mxu0 %v1025
        %4638 = vmatmul.mubr.bf16.gmra.mrb[0].mxu0 %v1024
        %v4639 = vpop.f32.mrb[0].mxu0
        %v4640 = vadd.f32 %v4567, %v4639
        %v4641 = vpop.f32.mrb[0].mxu0
        %v4642 = vadd.f32 %v4569, %v4641
        %v4643 = vpop.f32.mrb[0].mxu0
        %v4644 = vadd.f32 %v4571, %v4643
        %v4645 = vpop.f32.mrb[0].mxu0
        %v4646 = vadd.f32 %v4573, %v4645
        %4647 = vmatprep.mubr.bf16.mxu0 %v1039
        %4648 = vmatmul.mubr.bf16.gmra.mrb[0].mxu0 %v1038
        %v4649 = vpop.f32.mrb[0].mxu0
        %v4650 = vadd.f32 %v4577, %v4649
        %v4651 = vpop.f32.mrb[0].mxu0
        %v4652 = vadd.f32 %v4579, %v4651
        %v4653 = vpop.f32.mrb[0].mxu0
        %v4654 = vadd.f32 %v4581, %v4653
        %v4655 = vpop.f32.mrb[0].mxu0
        %v4656 = vadd.f32 %v4583, %v4655
        %4657 = vmatprep.mubr.bf16.mxu0 %v1053
        %4658 = vmatmul.mubr.bf16.gmra.mrb[0].mxu0 %v1052
        %v4659 = vpop.f32.mrb[0].mxu0
        %v4660 = vadd.f32 %v4587, %v4659
        %v4661 = vpop.f32.mrb[0].mxu0
        %v4662 = vadd.f32 %v4589, %v4661
        %v4663 = vpop.f32.mrb[0].mxu0
        %v4664 = vadd.f32 %v4591, %v4663
        %v4665 = vpop.f32.mrb[0].mxu0
        %v4666 = vadd.f32 %v4593, %v4665
        %4667 = vdwg.mxu0
        %v4669 = vlaneseq
        %v4670 = vshrl.u32 %v4669, 7
        %v4671 = vsub.s32 0, %v4670
        %v4672 = vrot.slane %v3035, %v4671
        %v4673 = vlaneseq
        %v4674 = vshrl.u32 %v4673, 7
        %v4675 = vsub.s32 1, %v4674
        %v4676 = vrot.slane %v3035, %v4675
        %v4679 = vmul.f32 %v4630, %v4672
        %v4680 = vmul.f32 %v4632, %v4676
        %v4681 = vmul.f32 %v4634, %v4672
        %v4682 = vmul.f32 %v4636, %v4676
        %v4683 = vmul.f32 %v4640, %v4672
        %v4684 = vmul.f32 %v4642, %v4676
        %v4685 = vmul.f32 %v4644, %v4672
        %v4686 = vmul.f32 %v4646, %v4676
        %v4687 = vmul.f32 %v4650, %v4672
        %v4688 = vmul.f32 %v4652, %v4676
        %v4689 = vmul.f32 %v4654, %v4672
        %v4690 = vmul.f32 %v4656, %v4676
        %v4691 = vmul.f32 %v4660, %v4672
        %v4692 = vmul.f32 %v4662, %v4676
        %v4693 = vmul.f32 %v4664, %v4672
        %v4694 = vmul.f32 %v4666, %v4676
        %v4696 = vlaneseq
        %v4697 = vshrl.u32 %v4696, 7
        %v4698 = vsub.s32 0, %v4697
        %v4699 = vrot.slane %v3036, %v4698
        %v4700 = vlaneseq
        %v4701 = vshrl.u32 %v4700, 7
        %v4702 = vsub.s32 1, %v4701
        %v4703 = vrot.slane %v3036, %v4702
        %v4706 = vadd.f32 %v4679, %v4699
        %v4707 = vadd.f32 %v4680, %v4703
        %v4708 = vadd.f32 %v4681, %v4699
        %v4709 = vadd.f32 %v4682, %v4703
        %v4710 = vadd.f32 %v4683, %v4699
        %v4711 = vadd.f32 %v4684, %v4703
        %v4712 = vadd.f32 %v4685, %v4699
        %v4713 = vadd.f32 %v4686, %v4703
        %v4714 = vadd.f32 %v4687, %v4699
        %v4715 = vadd.f32 %v4688, %v4703
        %v4716 = vadd.f32 %v4689, %v4699
        %v4717 = vadd.f32 %v4690, %v4703
        %v4718 = vadd.f32 %v4691, %v4699
        %v4719 = vadd.f32 %v4692, %v4703
        %v4720 = vadd.f32 %v4693, %v4699
        %v4721 = vadd.f32 %v4694, %v4703
        %v4722 = vmax.f32 %v4706, 0.0
        %v4723 = vmax.f32 %v4707, 0.0
        %v4724 = vmax.f32 %v4708, 0.0
        %v4725 = vmax.f32 %v4709, 0.0
        %v4726 = vmax.f32 %v4710, 0.0
        %v4727 = vmax.f32 %v4711, 0.0
        %v4728 = vmax.f32 %v4712, 0.0
        %v4729 = vmax.f32 %v4713, 0.0
        %v4730 = vmax.f32 %v4714, 0.0
        %v4731 = vmax.f32 %v4715, 0.0
        %v4732 = vmax.f32 %v4716, 0.0
        %v4733 = vmax.f32 %v4717, 0.0
        %v4734 = vmax.f32 %v4718, 0.0
        %v4735 = vmax.f32 %v4719, 0.0
        %v4736 = vmax.f32 %v4720, 0.0
        %v4737 = vmax.f32 %v4721, 0.0
        %v4738 = vpack.c.bf16 %v4724, %v4722
        %v4739 = vpack.c.bf16 %v4725, %v4723
        %v4740 = vpack.c.bf16 %v4728, %v4726
        %v4741 = vpack.c.bf16 %v4729, %v4727
        %v4742 = vpack.c.bf16 %v4732, %v4730
        %v4743 = vpack.c.bf16 %v4733, %v4731
        %v4744 = vpack.c.bf16 %v4736, %v4734
        %v4745 = vpack.c.bf16 %v4737, %v4735
        %v4746 = vld [vmem:[%s1] sm:$0xf]
        %v4747 = vld [vmem:[%s1 + $0x4] sm:$0xf]
        %v4748 = vld [vmem:[%s1 + $0x8] sm:$0xf]
        %v4749 = vld [vmem:[%s1 + $0xc] sm:$0xf]
        %v4750 = vld [vmem:[%s1 + $0x10] sm:$0xf]
        %v4751 = vld [vmem:[%s1 + $0x14] sm:$0xf]
        %v4752 = vld [vmem:[%s1 + $0x18] sm:$0xf]
        %v4753 = vld [vmem:[%s1 + $0x1c] sm:$0xf]
        %v4762 = vunpack.c.l.b16 %v4746
        %v4763 = vunpack.c.l.b16 %v4747
        %v4764 = vunpack.c.l.b16 %v4748
        %v4765 = vunpack.c.l.b16 %v4749
        %v4766 = vunpack.c.l.b16 %v4750
        %v4767 = vunpack.c.l.b16 %v4751
        %v4768 = vunpack.c.l.b16 %v4752
        %v4769 = vunpack.c.l.b16 %v4753
        %v4770 = vpack.c.b16 %v4763, %v4762
        %v4771 = vpack.c.b16 %v4765, %v4764
        %v4772 = vpack.c.b16 %v4767, %v4766
        %v4773 = vpack.c.b16 %v4769, %v4768
        %vm4774 = vcmask 523264
        %v4776 = vsel %vm4774, %v4770, 0
        %v4779 = vsel %vm4774, %v4771, 0
        %v4782 = vsel %vm4774, %v4772, 0
        %v4785 = vsel %vm4774, %v4773, 0
        %4787 = vmatprep.subr.bf16.mxu0 %v4739
        %4788 = vmatpush1.bf16.msra.mxu0 %v4738
        %4789 = vmatprep.subr.bf16.mxu0 %v4741
        %4790 = vmatpush1.bf16.msra.mxu0 %v4740
        %4791 = vmatprep.subr.bf16.mxu0 %v4743
        %4792 = vmatpush1.bf16.msra.mxu0 %v4742
        %4793 = vmatprep.subr.bf16.mxu0 %v4745
        %4794 = vmatpush1.bf16.msra.mxu0 %v4744
        %4795 = vmatprep.subr.bf16.mxu0 0
        %4796 = vmatpush1.bf16.msra.mxu0 0
        %4797 = vmatprep.subr.bf16.mxu0 0
        %4798 = vmatpush1.bf16.msra.mxu0 0
        %4799 = vmatprep.subr.bf16.mxu0 0
        %4800 = vmatpush1.bf16.msra.mxu0 0
        %4801 = vmatprep.subr.bf16.mxu0 0
        %4802 = vmatpush1.bf16.msra.mxu0 0
        %4803 = vmatprep.subr.bf16.mxu0 0
        %4804 = vmatpush1.bf16.msra.mxu0 0
        %4805 = vmatprep.subr.bf16.mxu0 0
        %4806 = vmatpush1.bf16.msra.mxu0 0
        %4807 = vmatprep.subr.bf16.mxu0 0
        %4808 = vmatpush1.bf16.msra.mxu0 0
        %4809 = vmatprep.subr.bf16.mxu0 0
        %4810 = vmatpush1.bf16.msra.mxu0 0
        %4811 = vmatprep.subr.bf16.mxu0 0
        %4812 = vmatpush1.bf16.msra.mxu0 0
        %4813 = vmatprep.subr.bf16.mxu0 0
        %4814 = vmatpush1.bf16.msra.mxu0 0
        %4815 = vmatprep.subr.bf16.mxu0 0
        %4816 = vmatpush1.bf16.msra.mxu0 0
        %4817 = vmatprep.subr.bf16.mxu0 0
        %4818 = vmatpush1.bf16.msra.mxu0 0
        %4819 = vmatprep.mubr.bf16.mxu0 0
        %4820 = vmatmul.mubr.bf16.gmra.mrb[0].mxu0 %v4776
        %v4821 = vpop.f32.mrb[0].mxu0
        %v4822 = vadd.f32 0.0, %v4821
        %v4823 = vpop.f32.mrb[0].mxu0
        %v4824 = vadd.f32 0.0, %v4823
        %v4825 = vpop.f32.mrb[0].mxu0
        %v4826 = vadd.f32 0.0, %v4825
        %v4827 = vpop.f32.mrb[0].mxu0
        %v4828 = vadd.f32 0.0, %v4827
        %4829 = vmatprep.mubr.bf16.mxu0 0
        %4830 = vmatmul.mubr.bf16.gmra.mrb[0].mxu0 %v4779
        %v4831 = vpop.f32.mrb[0].mxu0
        %v4832 = vadd.f32 0.0, %v4831
        %v4833 = vpop.f32.mrb[0].mxu0
        %v4834 = vadd.f32 0.0, %v4833
        %v4835 = vpop.f32.mrb[0].mxu0
        %v4836 = vadd.f32 0.0, %v4835
        %v4837 = vpop.f32.mrb[0].mxu0
        %v4838 = vadd.f32 0.0, %v4837
        %4839 = vmatprep.mubr.bf16.mxu0 0
        %4840 = vmatmul.mubr.bf16.gmra.mrb[0].mxu0 %v4782
        %v4841 = vpop.f32.mrb[0].mxu0
        %v4842 = vadd.f32 0.0, %v4841
        %v4843 = vpop.f32.mrb[0].mxu0
        %v4844 = vadd.f32 0.0, %v4843
        %v4845 = vpop.f32.mrb[0].mxu0
        %v4846 = vadd.f32 0.0, %v4845
        %v4847 = vpop.f32.mrb[0].mxu0
        %v4848 = vadd.f32 0.0, %v4847
        %4849 = vmatprep.mubr.bf16.mxu0 0
        %4850 = vmatmul.mubr.bf16.gmra.mrb[0].mxu0 %v4785
        %v4851 = vpop.f32.mrb[0].mxu0
        %v4852 = vadd.f32 0.0, %v4851
        %v4853 = vpop.f32.mrb[0].mxu0
        %v4854 = vadd.f32 0.0, %v4853
        %v4855 = vpop.f32.mrb[0].mxu0
        %v4856 = vadd.f32 0.0, %v4855
        %v4857 = vpop.f32.mrb[0].mxu0
        %v4858 = vadd.f32 0.0, %v4857
        %4859 = vdwg.mxu0
        %v4860 = vpack.c.bf16 %v4826, %v4822
        %v4861 = vpack.c.bf16 %v4828, %v4824
        %v4862 = vpack.c.bf16 %v4836, %v4832
        %v4863 = vpack.c.bf16 %v4838, %v4834
        %v4864 = vpack.c.bf16 %v4846, %v4842
        %v4865 = vpack.c.bf16 %v4848, %v4844
        %v4866 = vpack.c.bf16 %v4856, %v4852
        %v4867 = vpack.c.bf16 %v4858, %v4854
        %v4868 = vld [vmem:[%s8] sm:$0xff]
        %v4869 = vld [vmem:[%s8 + $0x8] sm:$0xff]
        %v4870 = vld [vmem:[%s8 + $0x10] sm:$0xff]
        %v4871 = vld [vmem:[%s8 + $0x18] sm:$0xff]
        %v4872 = vld [vmem:[%s8 + $0x20] sm:$0xff]
        %v4873 = vld [vmem:[%s8 + $0x28] sm:$0xff]
        %v4874 = vld [vmem:[%s8 + $0x30] sm:$0xff]
        %v4875 = vld [vmem:[%s8 + $0x38] sm:$0xff]
        %v4876 = vld [vmem:[%s8 + $0x40] sm:$0xff]
        %v4877 = vld [vmem:[%s8 + $0x48] sm:$0xff]
        %v4878 = vld [vmem:[%s8 + $0x50] sm:$0xff]
        %v4879 = vld [vmem:[%s8 + $0x58] sm:$0xff]
        %v4880 = vld [vmem:[%s8 + $0x60] sm:$0xff]
        %v4881 = vld [vmem:[%s8 + $0x68] sm:$0xff]
        %v4882 = vld [vmem:[%s8 + $0x70] sm:$0xff]
        %v4883 = vld [vmem:[%s8 + $0x78] sm:$0xff]
        %v4884 = vld [vmem:[%s8 + $0x80] sm:$0xff]
        %v4885 = vld [vmem:[%s8 + $0x88] sm:$0xff]
        %v4886 = vld [vmem:[%s8 + $0x90] sm:$0xff]
        %v4887 = vld [vmem:[%s8 + $0x98] sm:$0xff]
        %v4888 = vld [vmem:[%s8 + $0xa0] sm:$0xff]
        %v4889 = vld [vmem:[%s8 + $0xa8] sm:$0xff]
        %v4890 = vld [vmem:[%s8 + $0xb0] sm:$0xff]
        %v4891 = vld [vmem:[%s8 + $0xb8] sm:$0xff]
        %s4892 = scalar_lea.vmem %s8, 192
        %v4893 = vld [vmem:[%s4892] sm:$0xff]
        %v4894 = vld [vmem:[%s4892 + $0x8] sm:$0xff]
        %v4895 = vld [vmem:[%s4892 + $0x10] sm:$0xff]
        %v4896 = vld [vmem:[%s4892 + $0x18] sm:$0xff]
        %v4897 = vld [vmem:[%s4892 + $0x20] sm:$0xff]
        %v4898 = vld [vmem:[%s4892 + $0x28] sm:$0xff]
        %v4899 = vld [vmem:[%s4892 + $0x30] sm:$0xff]
        %v4900 = vld [vmem:[%s4892 + $0x38] sm:$0xff]
        %v4901 = vld [vmem:[%s4892 + $0x40] sm:$0xff]
        %v4902 = vld [vmem:[%s4892 + $0x48] sm:$0xff]
        %v4903 = vld [vmem:[%s4892 + $0x50] sm:$0xff]
        %v4904 = vld [vmem:[%s4892 + $0x58] sm:$0xff]
        %v4905 = vld [vmem:[%s4892 + $0x60] sm:$0xff]
        %v4906 = vld [vmem:[%s4892 + $0x68] sm:$0xff]
        %v4907 = vld [vmem:[%s4892 + $0x70] sm:$0xff]
        %v4908 = vld [vmem:[%s4892 + $0x78] sm:$0xff]
        %v4909 = vld [vmem:[%s4892 + $0x80] sm:$0xff]
        %v4910 = vld [vmem:[%s4892 + $0x88] sm:$0xff]
        %v4911 = vld [vmem:[%s4892 + $0x90] sm:$0xff]
        %v4912 = vld [vmem:[%s4892 + $0x98] sm:$0xff]
        %v4913 = vld [vmem:[%s4892 + $0xa0] sm:$0xff]
        %v4914 = vld [vmem:[%s4892 + $0xa8] sm:$0xff]
        %v4915 = vld [vmem:[%s4892 + $0xb0] sm:$0xff]
        %v4916 = vld [vmem:[%s4892 + $0xb8] sm:$0xff]
        %v4941 = vunpack.c.l.b16 %v4893
        %v4942 = vunpack.c.h.b16 %v4893
        %v4943 = vunpack.c.l.b16 %v4894
        %v4944 = vunpack.c.h.b16 %v4894
        %v4945 = vunpack.c.l.b16 %v4895
        %v4946 = vunpack.c.h.b16 %v4895
        %v4947 = vunpack.c.l.b16 %v4896
        %v4948 = vunpack.c.h.b16 %v4896
        %v4949 = vunpack.c.l.b16 %v4897
        %v4950 = vunpack.c.h.b16 %v4897
        %v4951 = vunpack.c.l.b16 %v4898
        %v4952 = vunpack.c.h.b16 %v4898
        %v4953 = vunpack.c.l.b16 %v4899
        %v4954 = vunpack.c.h.b16 %v4899
        %v4955 = vunpack.c.l.b16 %v4900
        %v4956 = vunpack.c.h.b16 %v4900
        %v4957 = vunpack.c.l.b16 %v4901
        %v4958 = vunpack.c.h.b16 %v4901
        %v4959 = vunpack.c.l.b16 %v4902
        %v4960 = vunpack.c.h.b16 %v4902
        %v4961 = vunpack.c.l.b16 %v4903
        %v4962 = vunpack.c.h.b16 %v4903
        %v4963 = vunpack.c.l.b16 %v4904
        %v4964 = vunpack.c.h.b16 %v4904
        %v4965 = vunpack.c.l.b16 %v4905
        %v4966 = vunpack.c.h.b16 %v4905
        %v4967 = vunpack.c.l.b16 %v4906
        %v4968 = vunpack.c.h.b16 %v4906
        %v4969 = vunpack.c.l.b16 %v4907
        %v4970 = vunpack.c.h.b16 %v4907
        %v4971 = vunpack.c.l.b16 %v4908
        %v4972 = vunpack.c.h.b16 %v4908
        %v4973 = vunpack.c.l.b16 %v4909
        %v4974 = vunpack.c.h.b16 %v4909
        %v4975 = vunpack.c.l.b16 %v4910
        %v4976 = vunpack.c.h.b16 %v4910
        %v4977 = vunpack.c.l.b16 %v4911
        %v4978 = vunpack.c.h.b16 %v4911
        %v4979 = vunpack.c.l.b16 %v4912
        %v4980 = vunpack.c.h.b16 %v4912
        %v4981 = vunpack.c.l.b16 %v4913
        %v4982 = vunpack.c.h.b16 %v4913
        %v4983 = vunpack.c.l.b16 %v4914
        %v4984 = vunpack.c.h.b16 %v4914
        %v4985 = vunpack.c.l.b16 %v4915
        %v4986 = vunpack.c.h.b16 %v4915
        %v4987 = vunpack.c.l.b16 %v4916
        %v4988 = vunpack.c.h.b16 %v4916
        %v4989 = vpack.c.b16 %v4943, %v4941
        %v4990 = vpack.c.b16 %v4944, %v4942
        %v4991 = vpack.c.b16 %v4947, %v4945
        %v4992 = vpack.c.b16 %v4948, %v4946
        %v4993 = vpack.c.b16 %v4951, %v4949
        %v4994 = vpack.c.b16 %v4952, %v4950
        %v4995 = vpack.c.b16 %v4955, %v4953
        %v4996 = vpack.c.b16 %v4956, %v4954
        %v4997 = vpack.c.b16 %v4959, %v4957
        %v4998 = vpack.c.b16 %v4960, %v4958
        %v4999 = vpack.c.b16 %v4963, %v4961
        %v5000 = vpack.c.b16 %v4964, %v4962
        %v5001 = vpack.c.b16 %v4967, %v4965
        %v5002 = vpack.c.b16 %v4968, %v4966
        %v5003 = vpack.c.b16 %v4971, %v4969
        %v5004 = vpack.c.b16 %v4972, %v4970
        %v5005 = vpack.c.b16 %v4975, %v4973
        %v5006 = vpack.c.b16 %v4976, %v4974
        %v5007 = vpack.c.b16 %v4979, %v4977
        %v5008 = vpack.c.b16 %v4980, %v4978
        %v5009 = vpack.c.b16 %v4983, %v4981
        %v5010 = vpack.c.b16 %v4984, %v4982
        %v5011 = vpack.c.b16 %v4987, %v4985
        %v5012 = vpack.c.b16 %v4988, %v4986
        %v5038 = vsel %vm4774, %v4739, 0
        %v5041 = vsel %vm4774, %v4741, 0
        %v5044 = vsel %vm4774, %v4743, 0
        %v5047 = vsel %vm4774, %v4745, 0
        %5049 = vmatprep.subr.bf16.mxu0 %v4990
        %5050 = vmatpush1.bf16.msra.mxu0 %v4989
        %5051 = vmatprep.subr.bf16.mxu0 %v4992
        %5052 = vmatpush1.bf16.msra.mxu0 %v4991
        %5053 = vmatprep.subr.bf16.mxu0 %v4994
        %5054 = vmatpush1.bf16.msra.mxu0 %v4993
        %5055 = vmatprep.subr.bf16.mxu0 %v4996
        %5056 = vmatpush1.bf16.msra.mxu0 %v4995
        %5057 = vmatprep.subr.bf16.mxu0 %v4998
        %5058 = vmatpush1.bf16.msra.mxu0 %v4997
        %5059 = vmatprep.subr.bf16.mxu0 %v5000
        %5060 = vmatpush1.bf16.msra.mxu0 %v4999
        %5061 = vmatprep.subr.bf16.mxu0 %v5002
        %5062 = vmatpush1.bf16.msra.mxu0 %v5001
        %5063 = vmatprep.subr.bf16.mxu0 %v5004
        %5064 = vmatpush1.bf16.msra.mxu0 %v5003
        %5065 = vmatprep.subr.bf16.mxu0 %v5006
        %5066 = vmatpush1.bf16.msra.mxu0 %v5005
        %5067 = vmatprep.subr.bf16.mxu0 %v5008
        %5068 = vmatpush1.bf16.msra.mxu0 %v5007
        %5069 = vmatprep.subr.bf16.mxu0 %v5010
        %5070 = vmatpush1.bf16.msra.mxu0 %v5009
        %5071 = vmatprep.subr.bf16.mxu0 %v5012
        %5072 = vmatpush1.bf16.msra.mxu0 %v5011
        %5073 = vmatprep.subr.bf16.mxu0 0
        %5074 = vmatpush1.bf16.msra.mxu0 0
        %5075 = vmatprep.subr.bf16.mxu0 0
        %5076 = vmatpush1.bf16.msra.mxu0 0
        %5077 = vmatprep.subr.bf16.mxu0 0
        %5078 = vmatpush1.bf16.msra.mxu0 0
        %5079 = vmatprep.subr.bf16.mxu0 0
        %5080 = vmatpush1.bf16.msra.mxu0 0
        %5081 = vmatprep.mubr.bf16.mxu0 %v5038
        %5082 = vmatmul.mubr.bf16.gmra.mrb[0].mxu0 %v4738
        %v5083 = vpop.f32.mrb[0].mxu0
        %v5084 = vadd.f32 0.0, %v5083
        %v5085 = vpop.f32.mrb[0].mxu0
        %v5086 = vadd.f32 0.0, %v5085
        %v5087 = vpop.f32.mrb[0].mxu0
        %v5088 = vadd.f32 0.0, %v5087
        %v5089 = vpop.f32.mrb[0].mxu0
        %v5090 = vadd.f32 0.0, %v5089
        %5091 = vmatprep.mubr.bf16.mxu0 %v5041
        %5092 = vmatmul.mubr.bf16.gmra.mrb[0].mxu0 %v4740
        %v5093 = vpop.f32.mrb[0].mxu0
        %v5094 = vadd.f32 0.0, %v5093
        %v5095 = vpop.f32.mrb[0].mxu0
        %v5096 = vadd.f32 0.0, %v5095
        %v5097 = vpop.f32.mrb[0].mxu0
        %v5098 = vadd.f32 0.0, %v5097
        %v5099 = vpop.f32.mrb[0].mxu0
        %v5100 = vadd.f32 0.0, %v5099
        %5101 = vmatprep.mubr.bf16.mxu0 %v5044
        %5102 = vmatmul.mubr.bf16.gmra.mrb[0].mxu0 %v4742
        %v5103 = vpop.f32.mrb[0].mxu0
        %v5104 = vadd.f32 0.0, %v5103
        %v5105 = vpop.f32.mrb[0].mxu0
        %v5106 = vadd.f32 0.0, %v5105
        %v5107 = vpop.f32.mrb[0].mxu0
        %v5108 = vadd.f32 0.0, %v5107
        %v5109 = vpop.f32.mrb[0].mxu0
        %v5110 = vadd.f32 0.0, %v5109
        %5111 = vmatprep.mubr.bf16.mxu0 %v5047
        %5112 = vmatmul.mubr.bf16.gmra.mrb[0].mxu0 %v4744
        %v5113 = vpop.f32.mrb[0].mxu0
        %v5114 = vadd.f32 0.0, %v5113
        %v5115 = vpop.f32.mrb[0].mxu0
        %v5116 = vadd.f32 0.0, %v5115
        %v5117 = vpop.f32.mrb[0].mxu0
        %v5118 = vadd.f32 0.0, %v5117
        %v5119 = vpop.f32.mrb[0].mxu0
        %v5120 = vadd.f32 0.0, %v5119
        %5121 = vdwg.mxu0
        %v5146 = vunpack.c.l.b16 %v4868
        %v5147 = vunpack.c.h.b16 %v4868
        %v5148 = vunpack.c.l.b16 %v4869
        %v5149 = vunpack.c.h.b16 %v4869
        %v5150 = vunpack.c.l.b16 %v4870
        %v5151 = vunpack.c.h.b16 %v4870
        %v5152 = vunpack.c.l.b16 %v4871
        %v5153 = vunpack.c.h.b16 %v4871
        %v5154 = vunpack.c.l.b16 %v4872
        %v5155 = vunpack.c.h.b16 %v4872
        %v5156 = vunpack.c.l.b16 %v4873
        %v5157 = vunpack.c.h.b16 %v4873
        %v5158 = vunpack.c.l.b16 %v4874
        %v5159 = vunpack.c.h.b16 %v4874
        %v5160 = vunpack.c.l.b16 %v4875
        %v5161 = vunpack.c.h.b16 %v4875
        %v5162 = vunpack.c.l.b16 %v4876
        %v5163 = vunpack.c.h.b16 %v4876
        %v5164 = vunpack.c.l.b16 %v4877
        %v5165 = vunpack.c.h.b16 %v4877
        %v5166 = vunpack.c.l.b16 %v4878
        %v5167 = vunpack.c.h.b16 %v4878
        %v5168 = vunpack.c.l.b16 %v4879
        %v5169 = vunpack.c.h.b16 %v4879
        %v5170 = vunpack.c.l.b16 %v4880
        %v5171 = vunpack.c.h.b16 %v4880
        %v5172 = vunpack.c.l.b16 %v4881
        %v5173 = vunpack.c.h.b16 %v4881
        %v5174 = vunpack.c.l.b16 %v4882
        %v5175 = vunpack.c.h.b16 %v4882
        %v5176 = vunpack.c.l.b16 %v4883
        %v5177 = vunpack.c.h.b16 %v4883
        %v5178 = vunpack.c.l.b16 %v4884
        %v5179 = vunpack.c.h.b16 %v4884
        %v5180 = vunpack.c.l.b16 %v4885
        %v5181 = vunpack.c.h.b16 %v4885
        %v5182 = vunpack.c.l.b16 %v4886
        %v5183 = vunpack.c.h.b16 %v4886
        %v5184 = vunpack.c.l.b16 %v4887
        %v5185 = vunpack.c.h.b16 %v4887
        %v5186 = vunpack.c.l.b16 %v4888
        %v5187 = vunpack.c.h.b16 %v4888
        %v5188 = vunpack.c.l.b16 %v4889
        %v5189 = vunpack.c.h.b16 %v4889
        %v5190 = vunpack.c.l.b16 %v4890
        %v5191 = vunpack.c.h.b16 %v4890
        %v5192 = vunpack.c.l.b16 %v4891
        %v5193 = vunpack.c.h.b16 %v4891
        %v5194 = vpack.c.b16 %v5148, %v5146
        %v5195 = vpack.c.b16 %v5149, %v5147
        %v5196 = vpack.c.b16 %v5152, %v5150
        %v5197 = vpack.c.b16 %v5153, %v5151
        %v5198 = vpack.c.b16 %v5156, %v5154
        %v5199 = vpack.c.b16 %v5157, %v5155
        %v5200 = vpack.c.b16 %v5160, %v5158
        %v5201 = vpack.c.b16 %v5161, %v5159
        %v5202 = vpack.c.b16 %v5164, %v5162
        %v5203 = vpack.c.b16 %v5165, %v5163
        %v5204 = vpack.c.b16 %v5168, %v5166
        %v5205 = vpack.c.b16 %v5169, %v5167
        %v5206 = vpack.c.b16 %v5172, %v5170
        %v5207 = vpack.c.b16 %v5173, %v5171
        %v5208 = vpack.c.b16 %v5176, %v5174
        %v5209 = vpack.c.b16 %v5177, %v5175
        %v5210 = vpack.c.b16 %v5180, %v5178
        %v5211 = vpack.c.b16 %v5181, %v5179
        %v5212 = vpack.c.b16 %v5184, %v5182
        %v5213 = vpack.c.b16 %v5185, %v5183
        %v5214 = vpack.c.b16 %v5188, %v5186
        %v5215 = vpack.c.b16 %v5189, %v5187
        %v5216 = vpack.c.b16 %v5192, %v5190
        %v5217 = vpack.c.b16 %v5193, %v5191
        %v5243 = vsel %vm4774, %v4861, 0
        %v5246 = vsel %vm4774, %v4863, 0
        %v5249 = vsel %vm4774, %v4865, 0
        %v5252 = vsel %vm4774, %v4867, 0
        %5254 = vmatprep.subr.bf16.mxu0 %v5195
        %5255 = vmatpush1.bf16.msra.mxu0 %v5194
        %5256 = vmatprep.subr.bf16.mxu0 %v5197
        %5257 = vmatpush1.bf16.msra.mxu0 %v5196
        %5258 = vmatprep.subr.bf16.mxu0 %v5199
        %5259 = vmatpush1.bf16.msra.mxu0 %v5198
        %5260 = vmatprep.subr.bf16.mxu0 %v5201
        %5261 = vmatpush1.bf16.msra.mxu0 %v5200
        %5262 = vmatprep.subr.bf16.mxu0 %v5203
        %5263 = vmatpush1.bf16.msra.mxu0 %v5202
        %5264 = vmatprep.subr.bf16.mxu0 %v5205
        %5265 = vmatpush1.bf16.msra.mxu0 %v5204
        %5266 = vmatprep.subr.bf16.mxu0 %v5207
        %5267 = vmatpush1.bf16.msra.mxu0 %v5206
        %5268 = vmatprep.subr.bf16.mxu0 %v5209
        %5269 = vmatpush1.bf16.msra.mxu0 %v5208
        %5270 = vmatprep.subr.bf16.mxu0 %v5211
        %5271 = vmatpush1.bf16.msra.mxu0 %v5210
        %5272 = vmatprep.subr.bf16.mxu0 %v5213
        %5273 = vmatpush1.bf16.msra.mxu0 %v5212
        %5274 = vmatprep.subr.bf16.mxu0 %v5215
        %5275 = vmatpush1.bf16.msra.mxu0 %v5214
        %5276 = vmatprep.subr.bf16.mxu0 %v5217
        %5277 = vmatpush1.bf16.msra.mxu0 %v5216
        %5278 = vmatprep.subr.bf16.mxu0 0
        %5279 = vmatpush1.bf16.msra.mxu0 0
        %5280 = vmatprep.subr.bf16.mxu0 0
        %5281 = vmatpush1.bf16.msra.mxu0 0
        %5282 = vmatprep.subr.bf16.mxu0 0
        %5283 = vmatpush1.bf16.msra.mxu0 0
        %5284 = vmatprep.subr.bf16.mxu0 0
        %5285 = vmatpush1.bf16.msra.mxu0 0
        %5286 = vmatprep.mubr.bf16.mxu0 %v5243
        %5287 = vmatmul.mubr.bf16.gmra.mrb[0].mxu0 %v4860
        %v5288 = vpop.f32.mrb[0].mxu0
        %v5289 = vadd.f32 %v5084, %v5288
        %v5290 = vpop.f32.mrb[0].mxu0
        %v5291 = vadd.f32 %v5086, %v5290
        %v5292 = vpop.f32.mrb[0].mxu0
        %v5293 = vadd.f32 %v5088, %v5292
        %v5294 = vpop.f32.mrb[0].mxu0
        %v5295 = vadd.f32 %v5090, %v5294
        %5296 = vmatprep.mubr.bf16.mxu0 %v5246
        %5297 = vmatmul.mubr.bf16.gmra.mrb[0].mxu0 %v4862
        %v5298 = vpop.f32.mrb[0].mxu0
        %v5299 = vadd.f32 %v5094, %v5298
        %v5300 = vpop.f32.mrb[0].mxu0
        %v5301 = vadd.f32 %v5096, %v5300
        %v5302 = vpop.f32.mrb[0].mxu0
        %v5303 = vadd.f32 %v5098, %v5302
        %v5304 = vpop.f32.mrb[0].mxu0
        %v5305 = vadd.f32 %v5100, %v5304
        %5306 = vmatprep.mubr.bf16.mxu0 %v5249
        %5307 = vmatmul.mubr.bf16.gmra.mrb[0].mxu0 %v4864
        %v5308 = vpop.f32.mrb[0].mxu0
        %v5309 = vadd.f32 %v5104, %v5308
        %v5310 = vpop.f32.mrb[0].mxu0
        %v5311 = vadd.f32 %v5106, %v5310
        %v5312 = vpop.f32.mrb[0].mxu0
        %v5313 = vadd.f32 %v5108, %v5312
        %v5314 = vpop.f32.mrb[0].mxu0
        %v5315 = vadd.f32 %v5110, %v5314
        %5316 = vmatprep.mubr.bf16.mxu0 %v5252
        %5317 = vmatmul.mubr.bf16.gmra.mrb[0].mxu0 %v4866
        %v5318 = vpop.f32.mrb[0].mxu0
        %v5319 = vadd.f32 %v5114, %v5318
        %v5320 = vpop.f32.mrb[0].mxu0
        %v5321 = vadd.f32 %v5116, %v5320
        %v5322 = vpop.f32.mrb[0].mxu0
        %v5323 = vadd.f32 %v5118, %v5322
        %v5324 = vpop.f32.mrb[0].mxu0
        %v5325 = vadd.f32 %v5120, %v5324
        %5326 = vdwg.mxu0
        %s5327 = scalar_lea.vmem %s1, 32
        %v5328 = vld [vmem:[%s5327] sm:$0xf]
        %v5329 = vld [vmem:[%s5327 + $0x4] sm:$0xf]
        %v5330 = vld [vmem:[%s5327 + $0x8] sm:$0xf]
        %v5331 = vld [vmem:[%s5327 + $0xc] sm:$0xf]
        %v5332 = vld [vmem:[%s5327 + $0x10] sm:$0xf]
        %v5333 = vld [vmem:[%s5327 + $0x14] sm:$0xf]
        %v5334 = vld [vmem:[%s5327 + $0x18] sm:$0xf]
        %v5335 = vld [vmem:[%s5327 + $0x1c] sm:$0xf]
        %v5344 = vunpack.c.l.b16 %v5328
        %v5345 = vunpack.c.l.b16 %v5329
        %v5346 = vunpack.c.l.b16 %v5330
        %v5347 = vunpack.c.l.b16 %v5331
        %v5348 = vunpack.c.l.b16 %v5332
        %v5349 = vunpack.c.l.b16 %v5333
        %v5350 = vunpack.c.l.b16 %v5334
        %v5351 = vunpack.c.l.b16 %v5335
        %v5352 = vpack.c.b16 %v5345, %v5344
        %v5353 = vpack.c.b16 %v5347, %v5346
        %v5354 = vpack.c.b16 %v5349, %v5348
        %v5355 = vpack.c.b16 %v5351, %v5350
        %v5357 = vsel %vm4774, %v5352, 0
        %v5360 = vsel %vm4774, %v5353, 0
        %v5363 = vsel %vm4774, %v5354, 0
        %v5366 = vsel %vm4774, %v5355, 0
        %5368 = vmatprep.subr.bf16.mxu0 %v4739
        %5369 = vmatpush1.bf16.msra.mxu0 %v4738
        %5370 = vmatprep.subr.bf16.mxu0 %v4741
        %5371 = vmatpush1.bf16.msra.mxu0 %v4740
        %5372 = vmatprep.subr.bf16.mxu0 %v4743
        %5373 = vmatpush1.bf16.msra.mxu0 %v4742
        %5374 = vmatprep.subr.bf16.mxu0 %v4745
        %5375 = vmatpush1.bf16.msra.mxu0 %v4744
        %5376 = vmatprep.subr.bf16.mxu0 0
        %5377 = vmatpush1.bf16.msra.mxu0 0
        %5378 = vmatprep.subr.bf16.mxu0 0
        %5379 = vmatpush1.bf16.msra.mxu0 0
        %5380 = vmatprep.subr.bf16.mxu0 0
        %5381 = vmatpush1.bf16.msra.mxu0 0
        %5382 = vmatprep.subr.bf16.mxu0 0
        %5383 = vmatpush1.bf16.msra.mxu0 0
        %5384 = vmatprep.subr.bf16.mxu0 0
        %5385 = vmatpush1.bf16.msra.mxu0 0
        %5386 = vmatprep.subr.bf16.mxu0 0
        %5387 = vmatpush1.bf16.msra.mxu0 0
        %5388 = vmatprep.subr.bf16.mxu0 0
        %5389 = vmatpush1.bf16.msra.mxu0 0
        %5390 = vmatprep.subr.bf16.mxu0 0
        %5391 = vmatpush1.bf16.msra.mxu0 0
        %5392 = vmatprep.subr.bf16.mxu0 0
        %5393 = vmatpush1.bf16.msra.mxu0 0
        %5394 = vmatprep.subr.bf16.mxu0 0
        %5395 = vmatpush1.bf16.msra.mxu0 0
        %5396 = vmatprep.subr.bf16.mxu0 0
        %5397 = vmatpush1.bf16.msra.mxu0 0
        %5398 = vmatprep.subr.bf16.mxu0 0
        %5399 = vmatpush1.bf16.msra.mxu0 0
        %5400 = vmatprep.mubr.bf16.mxu0 0
        %5401 = vmatmul.mubr.bf16.gmra.mrb[0].mxu0 %v5357
        %v5402 = vpop.f32.mrb[0].mxu0
        %v5403 = vadd.f32 0.0, %v5402
        %v5404 = vpop.f32.mrb[0].mxu0
        %v5405 = vadd.f32 0.0, %v5404
        %v5406 = vpop.f32.mrb[0].mxu0
        %v5407 = vadd.f32 0.0, %v5406
        %v5408 = vpop.f32.mrb[0].mxu0
        %v5409 = vadd.f32 0.0, %v5408
        %5410 = vmatprep.mubr.bf16.mxu0 0
        %5411 = vmatmul.mubr.bf16.gmra.mrb[0].mxu0 %v5360
        %v5412 = vpop.f32.mrb[0].mxu0
        %v5413 = vadd.f32 0.0, %v5412
        %v5414 = vpop.f32.mrb[0].mxu0
        %v5415 = vadd.f32 0.0, %v5414
        %v5416 = vpop.f32.mrb[0].mxu0
        %v5417 = vadd.f32 0.0, %v5416
        %v5418 = vpop.f32.mrb[0].mxu0
        %v5419 = vadd.f32 0.0, %v5418
        %5420 = vmatprep.mubr.bf16.mxu0 0
        %5421 = vmatmul.mubr.bf16.gmra.mrb[0].mxu0 %v5363
        %v5422 = vpop.f32.mrb[0].mxu0
        %v5423 = vadd.f32 0.0, %v5422
        %v5424 = vpop.f32.mrb[0].mxu0
        %v5425 = vadd.f32 0.0, %v5424
        %v5426 = vpop.f32.mrb[0].mxu0
        %v5427 = vadd.f32 0.0, %v5426
        %v5428 = vpop.f32.mrb[0].mxu0
        %v5429 = vadd.f32 0.0, %v5428
        %5430 = vmatprep.mubr.bf16.mxu0 0
        %5431 = vmatmul.mubr.bf16.gmra.mrb[0].mxu0 %v5366
        %v5432 = vpop.f32.mrb[0].mxu0
        %v5433 = vadd.f32 0.0, %v5432
        %v5434 = vpop.f32.mrb[0].mxu0
        %v5435 = vadd.f32 0.0, %v5434
        %v5436 = vpop.f32.mrb[0].mxu0
        %v5437 = vadd.f32 0.0, %v5436
        %v5438 = vpop.f32.mrb[0].mxu0
        %v5439 = vadd.f32 0.0, %v5438
        %5440 = vdwg.mxu0
        %v5441 = vpack.c.bf16 %v5407, %v5403
        %v5442 = vpack.c.bf16 %v5409, %v5405
        %v5443 = vpack.c.bf16 %v5417, %v5413
        %v5444 = vpack.c.bf16 %v5419, %v5415
        %v5445 = vpack.c.bf16 %v5427, %v5423
        %v5446 = vpack.c.bf16 %v5429, %v5425
        %v5447 = vpack.c.bf16 %v5437, %v5433
        %v5448 = vpack.c.bf16 %v5439, %v5435
        %s5449 = scalar_lea.vmem %s8, 384
        %v5450 = vld [vmem:[%s5449] sm:$0xff]
        %v5451 = vld [vmem:[%s5449 + $0x8] sm:$0xff]
        %v5452 = vld [vmem:[%s5449 + $0x10] sm:$0xff]
        %v5453 = vld [vmem:[%s5449 + $0x18] sm:$0xff]
        %v5454 = vld [vmem:[%s5449 + $0x20] sm:$0xff]
        %v5455 = vld [vmem:[%s5449 + $0x28] sm:$0xff]
        %v5456 = vld [vmem:[%s5449 + $0x30] sm:$0xff]
        %v5457 = vld [vmem:[%s5449 + $0x38] sm:$0xff]
        %v5458 = vld [vmem:[%s5449 + $0x40] sm:$0xff]
        %v5459 = vld [vmem:[%s5449 + $0x48] sm:$0xff]
        %v5460 = vld [vmem:[%s5449 + $0x50] sm:$0xff]
        %v5461 = vld [vmem:[%s5449 + $0x58] sm:$0xff]
        %v5462 = vld [vmem:[%s5449 + $0x60] sm:$0xff]
        %v5463 = vld [vmem:[%s5449 + $0x68] sm:$0xff]
        %v5464 = vld [vmem:[%s5449 + $0x70] sm:$0xff]
        %v5465 = vld [vmem:[%s5449 + $0x78] sm:$0xff]
        %v5466 = vld [vmem:[%s5449 + $0x80] sm:$0xff]
        %v5467 = vld [vmem:[%s5449 + $0x88] sm:$0xff]
        %v5468 = vld [vmem:[%s5449 + $0x90] sm:$0xff]
        %v5469 = vld [vmem:[%s5449 + $0x98] sm:$0xff]
        %v5470 = vld [vmem:[%s5449 + $0xa0] sm:$0xff]
        %v5471 = vld [vmem:[%s5449 + $0xa8] sm:$0xff]
        %v5472 = vld [vmem:[%s5449 + $0xb0] sm:$0xff]
        %v5473 = vld [vmem:[%s5449 + $0xb8] sm:$0xff]
        %v5498 = vunpack.c.l.b16 %v5450
        %v5499 = vunpack.c.h.b16 %v5450
        %v5500 = vunpack.c.l.b16 %v5451
        %v5501 = vunpack.c.h.b16 %v5451
        %v5502 = vunpack.c.l.b16 %v5452
        %v5503 = vunpack.c.h.b16 %v5452
        %v5504 = vunpack.c.l.b16 %v5453
        %v5505 = vunpack.c.h.b16 %v5453
        %v5506 = vunpack.c.l.b16 %v5454
        %v5507 = vunpack.c.h.b16 %v5454
        %v5508 = vunpack.c.l.b16 %v5455
        %v5509 = vunpack.c.h.b16 %v5455
        %v5510 = vunpack.c.l.b16 %v5456
        %v5511 = vunpack.c.h.b16 %v5456
        %v5512 = vunpack.c.l.b16 %v5457
        %v5513 = vunpack.c.h.b16 %v5457
        %v5514 = vunpack.c.l.b16 %v5458
        %v5515 = vunpack.c.h.b16 %v5458
        %v5516 = vunpack.c.l.b16 %v5459
        %v5517 = vunpack.c.h.b16 %v5459
        %v5518 = vunpack.c.l.b16 %v5460
        %v5519 = vunpack.c.h.b16 %v5460
        %v5520 = vunpack.c.l.b16 %v5461
        %v5521 = vunpack.c.h.b16 %v5461
        %v5522 = vunpack.c.l.b16 %v5462
        %v5523 = vunpack.c.h.b16 %v5462
        %v5524 = vunpack.c.l.b16 %v5463
        %v5525 = vunpack.c.h.b16 %v5463
        %v5526 = vunpack.c.l.b16 %v5464
        %v5527 = vunpack.c.h.b16 %v5464
        %v5528 = vunpack.c.l.b16 %v5465
        %v5529 = vunpack.c.h.b16 %v5465
        %v5530 = vunpack.c.l.b16 %v5466
        %v5531 = vunpack.c.h.b16 %v5466
        %v5532 = vunpack.c.l.b16 %v5467
        %v5533 = vunpack.c.h.b16 %v5467
        %v5534 = vunpack.c.l.b16 %v5468
        %v5535 = vunpack.c.h.b16 %v5468
        %v5536 = vunpack.c.l.b16 %v5469
        %v5537 = vunpack.c.h.b16 %v5469
        %v5538 = vunpack.c.l.b16 %v5470
        %v5539 = vunpack.c.h.b16 %v5470
        %v5540 = vunpack.c.l.b16 %v5471
        %v5541 = vunpack.c.h.b16 %v5471
        %v5542 = vunpack.c.l.b16 %v5472
        %v5543 = vunpack.c.h.b16 %v5472
        %v5544 = vunpack.c.l.b16 %v5473
        %v5545 = vunpack.c.h.b16 %v5473
        %v5546 = vpack.c.b16 %v5500, %v5498
        %v5547 = vpack.c.b16 %v5501, %v5499
        %v5548 = vpack.c.b16 %v5504, %v5502
        %v5549 = vpack.c.b16 %v5505, %v5503
        %v5550 = vpack.c.b16 %v5508, %v5506
        %v5551 = vpack.c.b16 %v5509, %v5507
        %v5552 = vpack.c.b16 %v5512, %v5510
        %v5553 = vpack.c.b16 %v5513, %v5511
        %v5554 = vpack.c.b16 %v5516, %v5514
        %v5555 = vpack.c.b16 %v5517, %v5515
        %v5556 = vpack.c.b16 %v5520, %v5518
        %v5557 = vpack.c.b16 %v5521, %v5519
        %v5558 = vpack.c.b16 %v5524, %v5522
        %v5559 = vpack.c.b16 %v5525, %v5523
        %v5560 = vpack.c.b16 %v5528, %v5526
        %v5561 = vpack.c.b16 %v5529, %v5527
        %v5562 = vpack.c.b16 %v5532, %v5530
        %v5563 = vpack.c.b16 %v5533, %v5531
        %v5564 = vpack.c.b16 %v5536, %v5534
        %v5565 = vpack.c.b16 %v5537, %v5535
        %v5566 = vpack.c.b16 %v5540, %v5538
        %v5567 = vpack.c.b16 %v5541, %v5539
        %v5568 = vpack.c.b16 %v5544, %v5542
        %v5569 = vpack.c.b16 %v5545, %v5543
        %v5595 = vsel %vm4774, %v5442, 0
        %v5598 = vsel %vm4774, %v5444, 0
        %v5601 = vsel %vm4774, %v5446, 0
        %v5604 = vsel %vm4774, %v5448, 0
        %5606 = vmatprep.subr.bf16.mxu0 %v5547
        %5607 = vmatpush1.bf16.msra.mxu0 %v5546
        %5608 = vmatprep.subr.bf16.mxu0 %v5549
        %5609 = vmatpush1.bf16.msra.mxu0 %v5548
        %5610 = vmatprep.subr.bf16.mxu0 %v5551
        %5611 = vmatpush1.bf16.msra.mxu0 %v5550
        %5612 = vmatprep.subr.bf16.mxu0 %v5553
        %5613 = vmatpush1.bf16.msra.mxu0 %v5552
        %5614 = vmatprep.subr.bf16.mxu0 %v5555
        %5615 = vmatpush1.bf16.msra.mxu0 %v5554
        %5616 = vmatprep.subr.bf16.mxu0 %v5557
        %5617 = vmatpush1.bf16.msra.mxu0 %v5556
        %5618 = vmatprep.subr.bf16.mxu0 %v5559
        %5619 = vmatpush1.bf16.msra.mxu0 %v5558
        %5620 = vmatprep.subr.bf16.mxu0 %v5561
        %5621 = vmatpush1.bf16.msra.mxu0 %v5560
        %5622 = vmatprep.subr.bf16.mxu0 %v5563
        %5623 = vmatpush1.bf16.msra.mxu0 %v5562
        %5624 = vmatprep.subr.bf16.mxu0 %v5565
        %5625 = vmatpush1.bf16.msra.mxu0 %v5564
        %5626 = vmatprep.subr.bf16.mxu0 %v5567
        %5627 = vmatpush1.bf16.msra.mxu0 %v5566
        %5628 = vmatprep.subr.bf16.mxu0 %v5569
        %5629 = vmatpush1.bf16.msra.mxu0 %v5568
        %5630 = vmatprep.subr.bf16.mxu0 0
        %5631 = vmatpush1.bf16.msra.mxu0 0
        %5632 = vmatprep.subr.bf16.mxu0 0
        %5633 = vmatpush1.bf16.msra.mxu0 0
        %5634 = vmatprep.subr.bf16.mxu0 0
        %5635 = vmatpush1.bf16.msra.mxu0 0
        %5636 = vmatprep.subr.bf16.mxu0 0
        %5637 = vmatpush1.bf16.msra.mxu0 0
        %5638 = vmatprep.mubr.bf16.mxu0 %v5595
        %5639 = vmatmul.mubr.bf16.gmra.mrb[0].mxu0 %v5441
        %v5640 = vpop.f32.mrb[0].mxu0
        %v5641 = vadd.f32 0.0, %v5640
        %v5642 = vpop.f32.mrb[0].mxu0
        %v5643 = vadd.f32 0.0, %v5642
        %v5644 = vpop.f32.mrb[0].mxu0
        %v5645 = vadd.f32 0.0, %v5644
        %v5646 = vpop.f32.mrb[0].mxu0
        %v5647 = vadd.f32 0.0, %v5646
        %5648 = vmatprep.mubr.bf16.mxu0 %v5598
        %5649 = vmatmul.mubr.bf16.gmra.mrb[0].mxu0 %v5443
        %v5650 = vpop.f32.mrb[0].mxu0
        %v5651 = vadd.f32 0.0, %v5650
        %v5652 = vpop.f32.mrb[0].mxu0
        %v5653 = vadd.f32 0.0, %v5652
        %v5654 = vpop.f32.mrb[0].mxu0
        %v5655 = vadd.f32 0.0, %v5654
        %v5656 = vpop.f32.mrb[0].mxu0
        %v5657 = vadd.f32 0.0, %v5656
        %5658 = vmatprep.mubr.bf16.mxu0 %v5601
        %5659 = vmatmul.mubr.bf16.gmra.mrb[0].mxu0 %v5445
        %v5660 = vpop.f32.mrb[0].mxu0
        %v5661 = vadd.f32 0.0, %v5660
        %v5662 = vpop.f32.mrb[0].mxu0
        %v5663 = vadd.f32 0.0, %v5662
        %v5664 = vpop.f32.mrb[0].mxu0
        %v5665 = vadd.f32 0.0, %v5664
        %v5666 = vpop.f32.mrb[0].mxu0
        %v5667 = vadd.f32 0.0, %v5666
        %5668 = vmatprep.mubr.bf16.mxu0 %v5604
        %5669 = vmatmul.mubr.bf16.gmra.mrb[0].mxu0 %v5447
        %v5670 = vpop.f32.mrb[0].mxu0
        %v5671 = vadd.f32 0.0, %v5670
        %v5672 = vpop.f32.mrb[0].mxu0
        %v5673 = vadd.f32 0.0, %v5672
        %v5674 = vpop.f32.mrb[0].mxu0
        %v5675 = vadd.f32 0.0, %v5674
        %v5676 = vpop.f32.mrb[0].mxu0
        %v5677 = vadd.f32 0.0, %v5676
        %5678 = vdwg.mxu0
        %v5679 = vadd.f32 %v5289, %v5641
        %v5680 = vadd.f32 %v5291, %v5643
        %v5681 = vadd.f32 %v5293, %v5645
        %v5682 = vadd.f32 %v5295, %v5647
        %v5683 = vadd.f32 %v5299, %v5651
        %v5684 = vadd.f32 %v5301, %v5653
        %v5685 = vadd.f32 %v5303, %v5655
        %v5686 = vadd.f32 %v5305, %v5657
        %v5687 = vadd.f32 %v5309, %v5661
        %v5688 = vadd.f32 %v5311, %v5663
        %v5689 = vadd.f32 %v5313, %v5665
        %v5690 = vadd.f32 %v5315, %v5667
        %v5691 = vadd.f32 %v5319, %v5671
        %v5692 = vadd.f32 %v5321, %v5673
        %v5693 = vadd.f32 %v5323, %v5675
        %v5694 = vadd.f32 %v5325, %v5677
        %v5695 = vld [vmem:[%s9] sm:$0x3]
        %v5697 = vlaneseq
        %v5698 = vshrl.u32 %v5697, 7
        %v5699 = vsub.s32 0, %v5698
        %v5700 = vrot.slane %v5695, %v5699
        %v5701 = vlaneseq
        %v5702 = vshrl.u32 %v5701, 7
        %v5703 = vsub.s32 1, %v5702
        %v5704 = vrot.slane %v5695, %v5703
        %v5707 = vmul.f32 %v5679, %v5700
        %v5708 = vmul.f32 %v5680, %v5704
        %v5709 = vmul.f32 %v5681, %v5700
        %v5710 = vmul.f32 %v5682, %v5704
        %v5711 = vmul.f32 %v5683, %v5700
        %v5712 = vmul.f32 %v5684, %v5704
        %v5713 = vmul.f32 %v5685, %v5700
        %v5714 = vmul.f32 %v5686, %v5704
        %v5715 = vmul.f32 %v5687, %v5700
        %v5716 = vmul.f32 %v5688, %v5704
        %v5717 = vmul.f32 %v5689, %v5700
        %v5718 = vmul.f32 %v5690, %v5704
        %v5719 = vmul.f32 %v5691, %v5700
        %v5720 = vmul.f32 %v5692, %v5704
        %v5721 = vmul.f32 %v5693, %v5700
        %v5722 = vmul.f32 %v5694, %v5704
        %v5723 = vld [vmem:[%s10] sm:$0x3]
        %v5725 = vlaneseq
        %v5726 = vshrl.u32 %v5725, 7
        %v5727 = vsub.s32 0, %v5726
        %v5728 = vrot.slane %v5723, %v5727
        %v5729 = vlaneseq
        %v5730 = vshrl.u32 %v5729, 7
        %v5731 = vsub.s32 1, %v5730
        %v5732 = vrot.slane %v5723, %v5731
        %v5735 = vadd.f32 %v5707, %v5728
        %v5736 = vadd.f32 %v5708, %v5732
        %v5737 = vadd.f32 %v5709, %v5728
        %v5738 = vadd.f32 %v5710, %v5732
        %v5739 = vadd.f32 %v5711, %v5728
        %v5740 = vadd.f32 %v5712, %v5732
        %v5741 = vadd.f32 %v5713, %v5728
        %v5742 = vadd.f32 %v5714, %v5732
        %v5743 = vadd.f32 %v5715, %v5728
        %v5744 = vadd.f32 %v5716, %v5732
        %v5745 = vadd.f32 %v5717, %v5728
        %v5746 = vadd.f32 %v5718, %v5732
        %v5747 = vadd.f32 %v5719, %v5728
        %v5748 = vadd.f32 %v5720, %v5732
        %v5749 = vadd.f32 %v5721, %v5728
        %v5750 = vadd.f32 %v5722, %v5732
        %v5751 = vmax.f32 %v5735, 0.0
        %v5752 = vmax.f32 %v5736, 0.0
        %v5753 = vmax.f32 %v5737, 0.0
        %v5754 = vmax.f32 %v5738, 0.0
        %v5755 = vmax.f32 %v5739, 0.0
        %v5756 = vmax.f32 %v5740, 0.0
        %v5757 = vmax.f32 %v5741, 0.0
        %v5758 = vmax.f32 %v5742, 0.0
        %v5759 = vmax.f32 %v5743, 0.0
        %v5760 = vmax.f32 %v5744, 0.0
        %v5761 = vmax.f32 %v5745, 0.0
        %v5762 = vmax.f32 %v5746, 0.0
        %v5763 = vmax.f32 %v5747, 0.0
        %v5764 = vmax.f32 %v5748, 0.0
        %v5765 = vmax.f32 %v5749, 0.0
        %v5766 = vmax.f32 %v5750, 0.0
        %v5767 = vpack.c.bf16 %v5753, %v5751
        %v5768 = vpack.c.bf16 %v5754, %v5752
        %v5769 = vpack.c.bf16 %v5757, %v5755
        %v5770 = vpack.c.bf16 %v5758, %v5756
        %v5771 = vpack.c.bf16 %v5761, %v5759
        %v5772 = vpack.c.bf16 %v5762, %v5760
        %v5773 = vpack.c.bf16 %v5765, %v5763
        %v5774 = vpack.c.bf16 %v5766, %v5764
        %s5775 = scalar_lea.vmem %s1, 64
        %v5776 = vld [vmem:[%s5775] sm:$0xf]
        %v5777 = vld [vmem:[%s5775 + $0x4] sm:$0xf]
        %v5778 = vld [vmem:[%s5775 + $0x8] sm:$0xf]
        %v5779 = vld [vmem:[%s5775 + $0xc] sm:$0xf]
        %v5780 = vld [vmem:[%s5775 + $0x10] sm:$0xf]
        %v5781 = vld [vmem:[%s5775 + $0x14] sm:$0xf]
        %v5782 = vld [vmem:[%s5775 + $0x18] sm:$0xf]
        %v5783 = vld [vmem:[%s5775 + $0x1c] sm:$0xf]
        %v5792 = vunpack.c.l.b16 %v5776
        %v5793 = vunpack.c.l.b16 %v5777
        %v5794 = vunpack.c.l.b16 %v5778
        %v5795 = vunpack.c.l.b16 %v5779
        %v5796 = vunpack.c.l.b16 %v5780
        %v5797 = vunpack.c.l.b16 %v5781
        %v5798 = vunpack.c.l.b16 %v5782
        %v5799 = vunpack.c.l.b16 %v5783
        %v5800 = vpack.c.b16 %v5793, %v5792
        %v5801 = vpack.c.b16 %v5795, %v5794
        %v5802 = vpack.c.b16 %v5797, %v5796
        %v5803 = vpack.c.b16 %v5799, %v5798
        %v5805 = vsel %vm4774, %v5800, 0
        %v5808 = vsel %vm4774, %v5801, 0
        %v5811 = vsel %vm4774, %v5802, 0
        %v5814 = vsel %vm4774, %v5803, 0
        %5816 = vmatprep.subr.bf16.mxu0 %v5768
        %5817 = vmatpush1.bf16.msra.mxu0 %v5767
        %5818 = vmatprep.subr.bf16.mxu0 %v5770
        %5819 = vmatpush1.bf16.msra.mxu0 %v5769
        %5820 = vmatprep.subr.bf16.mxu0 %v5772
        %5821 = vmatpush1.bf16.msra.mxu0 %v5771
        %5822 = vmatprep.subr.bf16.mxu0 %v5774
        %5823 = vmatpush1.bf16.msra.mxu0 %v5773
        %5824 = vmatprep.subr.bf16.mxu0 0
        %5825 = vmatpush1.bf16.msra.mxu0 0
        %5826 = vmatprep.subr.bf16.mxu0 0
        %5827 = vmatpush1.bf16.msra.mxu0 0
        %5828 = vmatprep.subr.bf16.mxu0 0
        %5829 = vmatpush1.bf16.msra.mxu0 0
        %5830 = vmatprep.subr.bf16.mxu0 0
        %5831 = vmatpush1.bf16.msra.mxu0 0
        %5832 = vmatprep.subr.bf16.mxu0 0
        %5833 = vmatpush1.bf16.msra.mxu0 0
        %5834 = vmatprep.subr.bf16.mxu0 0
        %5835 = vmatpush1.bf16.msra.mxu0 0
        %5836 = vmatprep.subr.bf16.mxu0 0
        %5837 = vmatpush1.bf16.msra.mxu0 0
        %5838 = vmatprep.subr.bf16.mxu0 0
        %5839 = vmatpush1.bf16.msra.mxu0 0
        %5840 = vmatprep.subr.bf16.mxu0 0
        %5841 = vmatpush1.bf16.msra.mxu0 0
        %5842 = vmatprep.subr.bf16.mxu0 0
        %5843 = vmatpush1.bf16.msra.mxu0 0
        %5844 = vmatprep.subr.bf16.mxu0 0
        %5845 = vmatpush1.bf16.msra.mxu0 0
        %5846 = vmatprep.subr.bf16.mxu0 0
        %5847 = vmatpush1.bf16.msra.mxu0 0
        %5848 = vmatprep.mubr.bf16.mxu0 0
        %5849 = vmatmul.mubr.bf16.gmra.mrb[0].mxu0 %v5805
        %v5850 = vpop.f32.mrb[0].mxu0
        %v5851 = vadd.f32 0.0, %v5850
        %v5852 = vpop.f32.mrb[0].mxu0
        %v5853 = vadd.f32 0.0, %v5852
        %v5854 = vpop.f32.mrb[0].mxu0
        %v5855 = vadd.f32 0.0, %v5854
        %v5856 = vpop.f32.mrb[0].mxu0
        %v5857 = vadd.f32 0.0, %v5856
        %5858 = vmatprep.mubr.bf16.mxu0 0
        %5859 = vmatmul.mubr.bf16.gmra.mrb[0].mxu0 %v5808
        %v5860 = vpop.f32.mrb[0].mxu0
        %v5861 = vadd.f32 0.0, %v5860
        %v5862 = vpop.f32.mrb[0].mxu0
        %v5863 = vadd.f32 0.0, %v5862
        %v5864 = vpop.f32.mrb[0].mxu0
        %v5865 = vadd.f32 0.0, %v5864
        %v5866 = vpop.f32.mrb[0].mxu0
        %v5867 = vadd.f32 0.0, %v5866
        %5868 = vmatprep.mubr.bf16.mxu0 0
        %5869 = vmatmul.mubr.bf16.gmra.mrb[0].mxu0 %v5811
        %v5870 = vpop.f32.mrb[0].mxu0
        %v5871 = vadd.f32 0.0, %v5870
        %v5872 = vpop.f32.mrb[0].mxu0
        %v5873 = vadd.f32 0.0, %v5872
        %v5874 = vpop.f32.mrb[0].mxu0
        %v5875 = vadd.f32 0.0, %v5874
        %v5876 = vpop.f32.mrb[0].mxu0
        %v5877 = vadd.f32 0.0, %v5876
        %5878 = vmatprep.mubr.bf16.mxu0 0
        %5879 = vmatmul.mubr.bf16.gmra.mrb[0].mxu0 %v5814
        %v5880 = vpop.f32.mrb[0].mxu0
        %v5881 = vadd.f32 0.0, %v5880
        %v5882 = vpop.f32.mrb[0].mxu0
        %v5883 = vadd.f32 0.0, %v5882
        %v5884 = vpop.f32.mrb[0].mxu0
        %v5885 = vadd.f32 0.0, %v5884
        %v5886 = vpop.f32.mrb[0].mxu0
        %v5887 = vadd.f32 0.0, %v5886
        %5888 = vdwg.mxu0
        %v5889 = vpack.c.bf16 %v5855, %v5851
        %v5890 = vpack.c.bf16 %v5857, %v5853
        %v5891 = vpack.c.bf16 %v5865, %v5861
        %v5892 = vpack.c.bf16 %v5867, %v5863
        %v5893 = vpack.c.bf16 %v5875, %v5871
        %v5894 = vpack.c.bf16 %v5877, %v5873
        %v5895 = vpack.c.bf16 %v5885, %v5881
        %v5896 = vpack.c.bf16 %v5887, %v5883
        %v5897 = vld [vmem:[%s11] sm:$0xff]
        %v5898 = vld [vmem:[%s11 + $0x8] sm:$0xff]
        %v5899 = vld [vmem:[%s11 + $0x10] sm:$0xff]
        %v5900 = vld [vmem:[%s11 + $0x18] sm:$0xff]
        %v5901 = vld [vmem:[%s11 + $0x20] sm:$0xff]
        %v5902 = vld [vmem:[%s11 + $0x28] sm:$0xff]
        %v5903 = vld [vmem:[%s11 + $0x30] sm:$0xff]
        %v5904 = vld [vmem:[%s11 + $0x38] sm:$0xff]
        %v5905 = vld [vmem:[%s11 + $0x40] sm:$0xff]
        %v5906 = vld [vmem:[%s11 + $0x48] sm:$0xff]
        %v5907 = vld [vmem:[%s11 + $0x50] sm:$0xff]
        %v5908 = vld [vmem:[%s11 + $0x58] sm:$0xff]
        %v5909 = vld [vmem:[%s11 + $0x60] sm:$0xff]
        %v5910 = vld [vmem:[%s11 + $0x68] sm:$0xff]
        %v5911 = vld [vmem:[%s11 + $0x70] sm:$0xff]
        %v5912 = vld [vmem:[%s11 + $0x78] sm:$0xff]
        %v5913 = vld [vmem:[%s11 + $0x80] sm:$0xff]
        %v5914 = vld [vmem:[%s11 + $0x88] sm:$0xff]
        %v5915 = vld [vmem:[%s11 + $0x90] sm:$0xff]
        %v5916 = vld [vmem:[%s11 + $0x98] sm:$0xff]
        %v5917 = vld [vmem:[%s11 + $0xa0] sm:$0xff]
        %v5918 = vld [vmem:[%s11 + $0xa8] sm:$0xff]
        %v5919 = vld [vmem:[%s11 + $0xb0] sm:$0xff]
        %v5920 = vld [vmem:[%s11 + $0xb8] sm:$0xff]
        %s5921 = scalar_lea.vmem %s11, 192
        %v5922 = vld [vmem:[%s5921] sm:$0xff]
        %v5923 = vld [vmem:[%s5921 + $0x8] sm:$0xff]
        %v5924 = vld [vmem:[%s5921 + $0x10] sm:$0xff]
        %v5925 = vld [vmem:[%s5921 + $0x18] sm:$0xff]
        %v5926 = vld [vmem:[%s5921 + $0x20] sm:$0xff]
        %v5927 = vld [vmem:[%s5921 + $0x28] sm:$0xff]
        %v5928 = vld [vmem:[%s5921 + $0x30] sm:$0xff]
        %v5929 = vld [vmem:[%s5921 + $0x38] sm:$0xff]
        %v5930 = vld [vmem:[%s5921 + $0x40] sm:$0xff]
        %v5931 = vld [vmem:[%s5921 + $0x48] sm:$0xff]
        %v5932 = vld [vmem:[%s5921 + $0x50] sm:$0xff]
        %v5933 = vld [vmem:[%s5921 + $0x58] sm:$0xff]
        %v5934 = vld [vmem:[%s5921 + $0x60] sm:$0xff]
        %v5935 = vld [vmem:[%s5921 + $0x68] sm:$0xff]
        %v5936 = vld [vmem:[%s5921 + $0x70] sm:$0xff]
        %v5937 = vld [vmem:[%s5921 + $0x78] sm:$0xff]
        %v5938 = vld [vmem:[%s5921 + $0x80] sm:$0xff]
        %v5939 = vld [vmem:[%s5921 + $0x88] sm:$0xff]
        %v5940 = vld [vmem:[%s5921 + $0x90] sm:$0xff]
        %v5941 = vld [vmem:[%s5921 + $0x98] sm:$0xff]
        %v5942 = vld [vmem:[%s5921 + $0xa0] sm:$0xff]
        %v5943 = vld [vmem:[%s5921 + $0xa8] sm:$0xff]
        %v5944 = vld [vmem:[%s5921 + $0xb0] sm:$0xff]
        %v5945 = vld [vmem:[%s5921 + $0xb8] sm:$0xff]
        %v5970 = vunpack.c.l.b16 %v5922
        %v5971 = vunpack.c.h.b16 %v5922
        %v5972 = vunpack.c.l.b16 %v5923
        %v5973 = vunpack.c.h.b16 %v5923
        %v5974 = vunpack.c.l.b16 %v5924
        %v5975 = vunpack.c.h.b16 %v5924
        %v5976 = vunpack.c.l.b16 %v5925
        %v5977 = vunpack.c.h.b16 %v5925
        %v5978 = vunpack.c.l.b16 %v5926
        %v5979 = vunpack.c.h.b16 %v5926
        %v5980 = vunpack.c.l.b16 %v5927
        %v5981 = vunpack.c.h.b16 %v5927
        %v5982 = vunpack.c.l.b16 %v5928
        %v5983 = vunpack.c.h.b16 %v5928
        %v5984 = vunpack.c.l.b16 %v5929
        %v5985 = vunpack.c.h.b16 %v5929
        %v5986 = vunpack.c.l.b16 %v5930
        %v5987 = vunpack.c.h.b16 %v5930
        %v5988 = vunpack.c.l.b16 %v5931
        %v5989 = vunpack.c.h.b16 %v5931
        %v5990 = vunpack.c.l.b16 %v5932
        %v5991 = vunpack.c.h.b16 %v5932
        %v5992 = vunpack.c.l.b16 %v5933
        %v5993 = vunpack.c.h.b16 %v5933
        %v5994 = vunpack.c.l.b16 %v5934
        %v5995 = vunpack.c.h.b16 %v5934
        %v5996 = vunpack.c.l.b16 %v5935
        %v5997 = vunpack.c.h.b16 %v5935
        %v5998 = vunpack.c.l.b16 %v5936
        %v5999 = vunpack.c.h.b16 %v5936
        %v6000 = vunpack.c.l.b16 %v5937
        %v6001 = vunpack.c.h.b16 %v5937
        %v6002 = vunpack.c.l.b16 %v5938
        %v6003 = vunpack.c.h.b16 %v5938
        %v6004 = vunpack.c.l.b16 %v5939
        %v6005 = vunpack.c.h.b16 %v5939
        %v6006 = vunpack.c.l.b16 %v5940
        %v6007 = vunpack.c.h.b16 %v5940
        %v6008 = vunpack.c.l.b16 %v5941
        %v6009 = vunpack.c.h.b16 %v5941
        %v6010 = vunpack.c.l.b16 %v5942
        %v6011 = vunpack.c.h.b16 %v5942
        %v6012 = vunpack.c.l.b16 %v5943
        %v6013 = vunpack.c.h.b16 %v5943
        %v6014 = vunpack.c.l.b16 %v5944
        %v6015 = vunpack.c.h.b16 %v5944
        %v6016 = vunpack.c.l.b16 %v5945
        %v6017 = vunpack.c.h.b16 %v5945
        %v6018 = vpack.c.b16 %v5972, %v5970
        %v6019 = vpack.c.b16 %v5973, %v5971
        %v6020 = vpack.c.b16 %v5976, %v5974
        %v6021 = vpack.c.b16 %v5977, %v5975
        %v6022 = vpack.c.b16 %v5980, %v5978
        %v6023 = vpack.c.b16 %v5981, %v5979
        %v6024 = vpack.c.b16 %v5984, %v5982
        %v6025 = vpack.c.b16 %v5985, %v5983
        %v6026 = vpack.c.b16 %v5988, %v5986
        %v6027 = vpack.c.b16 %v5989, %v5987
        %v6028 = vpack.c.b16 %v5992, %v5990
        %v6029 = vpack.c.b16 %v5993, %v5991
        %v6030 = vpack.c.b16 %v5996, %v5994
        %v6031 = vpack.c.b16 %v5997, %v5995
        %v6032 = vpack.c.b16 %v6000, %v5998
        %v6033 = vpack.c.b16 %v6001, %v5999
        %v6034 = vpack.c.b16 %v6004, %v6002
        %v6035 = vpack.c.b16 %v6005, %v6003
        %v6036 = vpack.c.b16 %v6008, %v6006
        %v6037 = vpack.c.b16 %v6009, %v6007
        %v6038 = vpack.c.b16 %v6012, %v6010
        %v6039 = vpack.c.b16 %v6013, %v6011
        %v6040 = vpack.c.b16 %v6016, %v6014
        %v6041 = vpack.c.b16 %v6017, %v6015
        %v6067 = vsel %vm4774, %v5768, 0
        %v6070 = vsel %vm4774, %v5770, 0
        %v6073 = vsel %vm4774, %v5772, 0
        %v6076 = vsel %vm4774, %v5774, 0
        %6078 = vmatprep.subr.bf16.mxu0 %v6019
        %6079 = vmatpush1.bf16.msra.mxu0 %v6018
        %6080 = vmatprep.subr.bf16.mxu0 %v6021
        %6081 = vmatpush1.bf16.msra.mxu0 %v6020
        %6082 = vmatprep.subr.bf16.mxu0 %v6023
        %6083 = vmatpush1.bf16.msra.mxu0 %v6022
        %6084 = vmatprep.subr.bf16.mxu0 %v6025
        %6085 = vmatpush1.bf16.msra.mxu0 %v6024
        %6086 = vmatprep.subr.bf16.mxu0 %v6027
        %6087 = vmatpush1.bf16.msra.mxu0 %v6026
        %6088 = vmatprep.subr.bf16.mxu0 %v6029
        %6089 = vmatpush1.bf16.msra.mxu0 %v6028
        %6090 = vmatprep.subr.bf16.mxu0 %v6031
        %6091 = vmatpush1.bf16.msra.mxu0 %v6030
        %6092 = vmatprep.subr.bf16.mxu0 %v6033
        %6093 = vmatpush1.bf16.msra.mxu0 %v6032
        %6094 = vmatprep.subr.bf16.mxu0 %v6035
        %6095 = vmatpush1.bf16.msra.mxu0 %v6034
        %6096 = vmatprep.subr.bf16.mxu0 %v6037
        %6097 = vmatpush1.bf16.msra.mxu0 %v6036
        %6098 = vmatprep.subr.bf16.mxu0 %v6039
        %6099 = vmatpush1.bf16.msra.mxu0 %v6038
        %6100 = vmatprep.subr.bf16.mxu0 %v6041
        %6101 = vmatpush1.bf16.msra.mxu0 %v6040
        %6102 = vmatprep.subr.bf16.mxu0 0
        %6103 = vmatpush1.bf16.msra.mxu0 0
        %6104 = vmatprep.subr.bf16.mxu0 0
        %6105 = vmatpush1.bf16.msra.mxu0 0
        %6106 = vmatprep.subr.bf16.mxu0 0
        %6107 = vmatpush1.bf16.msra.mxu0 0
        %6108 = vmatprep.subr.bf16.mxu0 0
        %6109 = vmatpush1.bf16.msra.mxu0 0
        %6110 = vmatprep.mubr.bf16.mxu0 %v6067
        %6111 = vmatmul.mubr.bf16.gmra.mrb[0].mxu0 %v5767
        %v6112 = vpop.f32.mrb[0].mxu0
        %v6113 = vadd.f32 0.0, %v6112
        %v6114 = vpop.f32.mrb[0].mxu0
        %v6115 = vadd.f32 0.0, %v6114
        %v6116 = vpop.f32.mrb[0].mxu0
        %v6117 = vadd.f32 0.0, %v6116
        %v6118 = vpop.f32.mrb[0].mxu0
        %v6119 = vadd.f32 0.0, %v6118
        %6120 = vmatprep.mubr.bf16.mxu0 %v6070
        %6121 = vmatmul.mubr.bf16.gmra.mrb[0].mxu0 %v5769
        %v6122 = vpop.f32.mrb[0].mxu0
        %v6123 = vadd.f32 0.0, %v6122
        %v6124 = vpop.f32.mrb[0].mxu0
        %v6125 = vadd.f32 0.0, %v6124
        %v6126 = vpop.f32.mrb[0].mxu0
        %v6127 = vadd.f32 0.0, %v6126
        %v6128 = vpop.f32.mrb[0].mxu0
        %v6129 = vadd.f32 0.0, %v6128
        %6130 = vmatprep.mubr.bf16.mxu0 %v6073
        %6131 = vmatmul.mubr.bf16.gmra.mrb[0].mxu0 %v5771
        %v6132 = vpop.f32.mrb[0].mxu0
        %v6133 = vadd.f32 0.0, %v6132
        %v6134 = vpop.f32.mrb[0].mxu0
        %v6135 = vadd.f32 0.0, %v6134
        %v6136 = vpop.f32.mrb[0].mxu0
        %v6137 = vadd.f32 0.0, %v6136
        %v6138 = vpop.f32.mrb[0].mxu0
        %v6139 = vadd.f32 0.0, %v6138
        %6140 = vmatprep.mubr.bf16.mxu0 %v6076
        %6141 = vmatmul.mubr.bf16.gmra.mrb[0].mxu0 %v5773
        %v6142 = vpop.f32.mrb[0].mxu0
        %v6143 = vadd.f32 0.0, %v6142
        %v6144 = vpop.f32.mrb[0].mxu0
        %v6145 = vadd.f32 0.0, %v6144
        %v6146 = vpop.f32.mrb[0].mxu0
        %v6147 = vadd.f32 0.0, %v6146
        %v6148 = vpop.f32.mrb[0].mxu0
        %v6149 = vadd.f32 0.0, %v6148
        %6150 = vdwg.mxu0
        %v6175 = vunpack.c.l.b16 %v5897
        %v6176 = vunpack.c.h.b16 %v5897
        %v6177 = vunpack.c.l.b16 %v5898
        %v6178 = vunpack.c.h.b16 %v5898
        %v6179 = vunpack.c.l.b16 %v5899
        %v6180 = vunpack.c.h.b16 %v5899
        %v6181 = vunpack.c.l.b16 %v5900
        %v6182 = vunpack.c.h.b16 %v5900
        %v6183 = vunpack.c.l.b16 %v5901
        %v6184 = vunpack.c.h.b16 %v5901
        %v6185 = vunpack.c.l.b16 %v5902
        %v6186 = vunpack.c.h.b16 %v5902
        %v6187 = vunpack.c.l.b16 %v5903
        %v6188 = vunpack.c.h.b16 %v5903
        %v6189 = vunpack.c.l.b16 %v5904
        %v6190 = vunpack.c.h.b16 %v5904
        %v6191 = vunpack.c.l.b16 %v5905
        %v6192 = vunpack.c.h.b16 %v5905
        %v6193 = vunpack.c.l.b16 %v5906
        %v6194 = vunpack.c.h.b16 %v5906
        %v6195 = vunpack.c.l.b16 %v5907
        %v6196 = vunpack.c.h.b16 %v5907
        %v6197 = vunpack.c.l.b16 %v5908
        %v6198 = vunpack.c.h.b16 %v5908
        %v6199 = vunpack.c.l.b16 %v5909
        %v6200 = vunpack.c.h.b16 %v5909
        %v6201 = vunpack.c.l.b16 %v5910
        %v6202 = vunpack.c.h.b16 %v5910
        %v6203 = vunpack.c.l.b16 %v5911
        %v6204 = vunpack.c.h.b16 %v5911
        %v6205 = vunpack.c.l.b16 %v5912
        %v6206 = vunpack.c.h.b16 %v5912
        %v6207 = vunpack.c.l.b16 %v5913
        %v6208 = vunpack.c.h.b16 %v5913
        %v6209 = vunpack.c.l.b16 %v5914
        %v6210 = vunpack.c.h.b16 %v5914
        %v6211 = vunpack.c.l.b16 %v5915
        %v6212 = vunpack.c.h.b16 %v5915
        %v6213 = vunpack.c.l.b16 %v5916
        %v6214 = vunpack.c.h.b16 %v5916
        %v6215 = vunpack.c.l.b16 %v5917
        %v6216 = vunpack.c.h.b16 %v5917
        %v6217 = vunpack.c.l.b16 %v5918
        %v6218 = vunpack.c.h.b16 %v5918
        %v6219 = vunpack.c.l.b16 %v5919
        %v6220 = vunpack.c.h.b16 %v5919
        %v6221 = vunpack.c.l.b16 %v5920
        %v6222 = vunpack.c.h.b16 %v5920
        %v6223 = vpack.c.b16 %v6177, %v6175
        %v6224 = vpack.c.b16 %v6178, %v6176
        %v6225 = vpack.c.b16 %v6181, %v6179
        %v6226 = vpack.c.b16 %v6182, %v6180
        %v6227 = vpack.c.b16 %v6185, %v6183
        %v6228 = vpack.c.b16 %v6186, %v6184
        %v6229 = vpack.c.b16 %v6189, %v6187
        %v6230 = vpack.c.b16 %v6190, %v6188
        %v6231 = vpack.c.b16 %v6193, %v6191
        %v6232 = vpack.c.b16 %v6194, %v6192
        %v6233 = vpack.c.b16 %v6197, %v6195
        %v6234 = vpack.c.b16 %v6198, %v6196
        %v6235 = vpack.c.b16 %v6201, %v6199
        %v6236 = vpack.c.b16 %v6202, %v6200
        %v6237 = vpack.c.b16 %v6205, %v6203
        %v6238 = vpack.c.b16 %v6206, %v6204
        %v6239 = vpack.c.b16 %v6209, %v6207
        %v6240 = vpack.c.b16 %v6210, %v6208
        %v6241 = vpack.c.b16 %v6213, %v6211
        %v6242 = vpack.c.b16 %v6214, %v6212
        %v6243 = vpack.c.b16 %v6217, %v6215
        %v6244 = vpack.c.b16 %v6218, %v6216
        %v6245 = vpack.c.b16 %v6221, %v6219
        %v6246 = vpack.c.b16 %v6222, %v6220
        %v6272 = vsel %vm4774, %v5890, 0
        %v6275 = vsel %vm4774, %v5892, 0
        %v6278 = vsel %vm4774, %v5894, 0
        %v6281 = vsel %vm4774, %v5896, 0
        %6283 = vmatprep.subr.bf16.mxu0 %v6224
        %6284 = vmatpush1.bf16.msra.mxu0 %v6223
        %6285 = vmatprep.subr.bf16.mxu0 %v6226
        %6286 = vmatpush1.bf16.msra.mxu0 %v6225
        %6287 = vmatprep.subr.bf16.mxu0 %v6228
        %6288 = vmatpush1.bf16.msra.mxu0 %v6227
        %6289 = vmatprep.subr.bf16.mxu0 %v6230
        %6290 = vmatpush1.bf16.msra.mxu0 %v6229
        %6291 = vmatprep.subr.bf16.mxu0 %v6232
        %6292 = vmatpush1.bf16.msra.mxu0 %v6231
        %6293 = vmatprep.subr.bf16.mxu0 %v6234
        %6294 = vmatpush1.bf16.msra.mxu0 %v6233
        %6295 = vmatprep.subr.bf16.mxu0 %v6236
        %6296 = vmatpush1.bf16.msra.mxu0 %v6235
        %6297 = vmatprep.subr.bf16.mxu0 %v6238
        %6298 = vmatpush1.bf16.msra.mxu0 %v6237
        %6299 = vmatprep.subr.bf16.mxu0 %v6240
        %6300 = vmatpush1.bf16.msra.mxu0 %v6239
        %6301 = vmatprep.subr.bf16.mxu0 %v6242
        %6302 = vmatpush1.bf16.msra.mxu0 %v6241
        %6303 = vmatprep.subr.bf16.mxu0 %v6244
        %6304 = vmatpush1.bf16.msra.mxu0 %v6243
        %6305 = vmatprep.subr.bf16.mxu0 %v6246
        %6306 = vmatpush1.bf16.msra.mxu0 %v6245
        %6307 = vmatprep.subr.bf16.mxu0 0
        %6308 = vmatpush1.bf16.msra.mxu0 0
        %6309 = vmatprep.subr.bf16.mxu0 0
        %6310 = vmatpush1.bf16.msra.mxu0 0
        %6311 = vmatprep.subr.bf16.mxu0 0
        %6312 = vmatpush1.bf16.msra.mxu0 0
        %6313 = vmatprep.subr.bf16.mxu0 0
        %6314 = vmatpush1.bf16.msra.mxu0 0
        %6315 = vmatprep.mubr.bf16.mxu0 %v6272
        %6316 = vmatmul.mubr.bf16.gmra.mrb[0].mxu0 %v5889
        %v6317 = vpop.f32.mrb[0].mxu0
        %v6318 = vadd.f32 %v6113, %v6317
        %v6319 = vpop.f32.mrb[0].mxu0
        %v6320 = vadd.f32 %v6115, %v6319
        %v6321 = vpop.f32.mrb[0].mxu0
        %v6322 = vadd.f32 %v6117, %v6321
        %v6323 = vpop.f32.mrb[0].mxu0
        %v6324 = vadd.f32 %v6119, %v6323
        %6325 = vmatprep.mubr.bf16.mxu0 %v6275
        %6326 = vmatmul.mubr.bf16.gmra.mrb[0].mxu0 %v5891
        %v6327 = vpop.f32.mrb[0].mxu0
        %v6328 = vadd.f32 %v6123, %v6327
        %v6329 = vpop.f32.mrb[0].mxu0
        %v6330 = vadd.f32 %v6125, %v6329
        %v6331 = vpop.f32.mrb[0].mxu0
        %v6332 = vadd.f32 %v6127, %v6331
        %v6333 = vpop.f32.mrb[0].mxu0
        %v6334 = vadd.f32 %v6129, %v6333
        %6335 = vmatprep.mubr.bf16.mxu0 %v6278
        %6336 = vmatmul.mubr.bf16.gmra.mrb[0].mxu0 %v5893
        %v6337 = vpop.f32.mrb[0].mxu0
        %v6338 = vadd.f32 %v6133, %v6337
        %v6339 = vpop.f32.mrb[0].mxu0
        %v6340 = vadd.f32 %v6135, %v6339
        %v6341 = vpop.f32.mrb[0].mxu0
        %v6342 = vadd.f32 %v6137, %v6341
        %v6343 = vpop.f32.mrb[0].mxu0
        %v6344 = vadd.f32 %v6139, %v6343
        %6345 = vmatprep.mubr.bf16.mxu0 %v6281
        %6346 = vmatmul.mubr.bf16.gmra.mrb[0].mxu0 %v5895
        %v6347 = vpop.f32.mrb[0].mxu0
        %v6348 = vadd.f32 %v6143, %v6347
        %v6349 = vpop.f32.mrb[0].mxu0
        %v6350 = vadd.f32 %v6145, %v6349
        %v6351 = vpop.f32.mrb[0].mxu0
        %v6352 = vadd.f32 %v6147, %v6351
        %v6353 = vpop.f32.mrb[0].mxu0
        %v6354 = vadd.f32 %v6149, %v6353
        %6355 = vdwg.mxu0
        %s6356 = scalar_lea.vmem %s1, 96
        %v6357 = vld [vmem:[%s6356] sm:$0xf]
        %v6358 = vld [vmem:[%s6356 + $0x4] sm:$0xf]
        %v6359 = vld [vmem:[%s6356 + $0x8] sm:$0xf]
        %v6360 = vld [vmem:[%s6356 + $0xc] sm:$0xf]
        %v6361 = vld [vmem:[%s6356 + $0x10] sm:$0xf]
        %v6362 = vld [vmem:[%s6356 + $0x14] sm:$0xf]
        %v6363 = vld [vmem:[%s6356 + $0x18] sm:$0xf]
        %v6364 = vld [vmem:[%s6356 + $0x1c] sm:$0xf]
        %v6373 = vunpack.c.l.b16 %v6357
        %v6374 = vunpack.c.l.b16 %v6358
        %v6375 = vunpack.c.l.b16 %v6359
        %v6376 = vunpack.c.l.b16 %v6360
        %v6377 = vunpack.c.l.b16 %v6361
        %v6378 = vunpack.c.l.b16 %v6362
        %v6379 = vunpack.c.l.b16 %v6363
        %v6380 = vunpack.c.l.b16 %v6364
        %v6381 = vpack.c.b16 %v6374, %v6373
        %v6382 = vpack.c.b16 %v6376, %v6375
        %v6383 = vpack.c.b16 %v6378, %v6377
        %v6384 = vpack.c.b16 %v6380, %v6379
        %v6386 = vsel %vm4774, %v6381, 0
        %v6389 = vsel %vm4774, %v6382, 0
        %v6392 = vsel %vm4774, %v6383, 0
        %v6395 = vsel %vm4774, %v6384, 0
        %6397 = vmatprep.subr.bf16.mxu0 %v5768
        %6398 = vmatpush1.bf16.msra.mxu0 %v5767
        %6399 = vmatprep.subr.bf16.mxu0 %v5770
        %6400 = vmatpush1.bf16.msra.mxu0 %v5769
        %6401 = vmatprep.subr.bf16.mxu0 %v5772
        %6402 = vmatpush1.bf16.msra.mxu0 %v5771
        %6403 = vmatprep.subr.bf16.mxu0 %v5774
        %6404 = vmatpush1.bf16.msra.mxu0 %v5773
        %6405 = vmatprep.subr.bf16.mxu0 0
        %6406 = vmatpush1.bf16.msra.mxu0 0
        %6407 = vmatprep.subr.bf16.mxu0 0
        %6408 = vmatpush1.bf16.msra.mxu0 0
        %6409 = vmatprep.subr.bf16.mxu0 0
        %6410 = vmatpush1.bf16.msra.mxu0 0
        %6411 = vmatprep.subr.bf16.mxu0 0
        %6412 = vmatpush1.bf16.msra.mxu0 0
        %6413 = vmatprep.subr.bf16.mxu0 0
        %6414 = vmatpush1.bf16.msra.mxu0 0
        %6415 = vmatprep.subr.bf16.mxu0 0
        %6416 = vmatpush1.bf16.msra.mxu0 0
        %6417 = vmatprep.subr.bf16.mxu0 0
        %6418 = vmatpush1.bf16.msra.mxu0 0
        %6419 = vmatprep.subr.bf16.mxu0 0
        %6420 = vmatpush1.bf16.msra.mxu0 0
        %6421 = vmatprep.subr.bf16.mxu0 0
        %6422 = vmatpush1.bf16.msra.mxu0 0
        %6423 = vmatprep.subr.bf16.mxu0 0
        %6424 = vmatpush1.bf16.msra.mxu0 0
        %6425 = vmatprep.subr.bf16.mxu0 0
        %6426 = vmatpush1.bf16.msra.mxu0 0
        %6427 = vmatprep.subr.bf16.mxu0 0
        %6428 = vmatpush1.bf16.msra.mxu0 0
        %6429 = vmatprep.mubr.bf16.mxu0 0
        %6430 = vmatmul.mubr.bf16.gmra.mrb[0].mxu0 %v6386
        %v6431 = vpop.f32.mrb[0].mxu0
        %v6432 = vadd.f32 0.0, %v6431
        %v6433 = vpop.f32.mrb[0].mxu0
        %v6434 = vadd.f32 0.0, %v6433
        %v6435 = vpop.f32.mrb[0].mxu0
        %v6436 = vadd.f32 0.0, %v6435
        %v6437 = vpop.f32.mrb[0].mxu0
        %v6438 = vadd.f32 0.0, %v6437
        %6439 = vmatprep.mubr.bf16.mxu0 0
        %6440 = vmatmul.mubr.bf16.gmra.mrb[0].mxu0 %v6389
        %v6441 = vpop.f32.mrb[0].mxu0
        %v6442 = vadd.f32 0.0, %v6441
        %v6443 = vpop.f32.mrb[0].mxu0
        %v6444 = vadd.f32 0.0, %v6443
        %v6445 = vpop.f32.mrb[0].mxu0
        %v6446 = vadd.f32 0.0, %v6445
        %v6447 = vpop.f32.mrb[0].mxu0
        %v6448 = vadd.f32 0.0, %v6447
        %6449 = vmatprep.mubr.bf16.mxu0 0
        %6450 = vmatmul.mubr.bf16.gmra.mrb[0].mxu0 %v6392
        %v6451 = vpop.f32.mrb[0].mxu0
        %v6452 = vadd.f32 0.0, %v6451
        %v6453 = vpop.f32.mrb[0].mxu0
        %v6454 = vadd.f32 0.0, %v6453
        %v6455 = vpop.f32.mrb[0].mxu0
        %v6456 = vadd.f32 0.0, %v6455
        %v6457 = vpop.f32.mrb[0].mxu0
        %v6458 = vadd.f32 0.0, %v6457
        %6459 = vmatprep.mubr.bf16.mxu0 0
        %6460 = vmatmul.mubr.bf16.gmra.mrb[0].mxu0 %v6395
        %v6461 = vpop.f32.mrb[0].mxu0
        %v6462 = vadd.f32 0.0, %v6461
        %v6463 = vpop.f32.mrb[0].mxu0
        %v6464 = vadd.f32 0.0, %v6463
        %v6465 = vpop.f32.mrb[0].mxu0
        %v6466 = vadd.f32 0.0, %v6465
        %v6467 = vpop.f32.mrb[0].mxu0
        %v6468 = vadd.f32 0.0, %v6467
        %6469 = vdwg.mxu0
        %v6470 = vpack.c.bf16 %v6436, %v6432
        %v6471 = vpack.c.bf16 %v6438, %v6434
        %v6472 = vpack.c.bf16 %v6446, %v6442
        %v6473 = vpack.c.bf16 %v6448, %v6444
        %v6474 = vpack.c.bf16 %v6456, %v6452
        %v6475 = vpack.c.bf16 %v6458, %v6454
        %v6476 = vpack.c.bf16 %v6466, %v6462
        %v6477 = vpack.c.bf16 %v6468, %v6464
        %s6478 = scalar_lea.vmem %s11, 384
        %v6479 = vld [vmem:[%s6478] sm:$0xff]
        %v6480 = vld [vmem:[%s6478 + $0x8] sm:$0xff]
        %v6481 = vld [vmem:[%s6478 + $0x10] sm:$0xff]
        %v6482 = vld [vmem:[%s6478 + $0x18] sm:$0xff]
        %v6483 = vld [vmem:[%s6478 + $0x20] sm:$0xff]
        %v6484 = vld [vmem:[%s6478 + $0x28] sm:$0xff]
        %v6485 = vld [vmem:[%s6478 + $0x30] sm:$0xff]
        %v6486 = vld [vmem:[%s6478 + $0x38] sm:$0xff]
        %v6487 = vld [vmem:[%s6478 + $0x40] sm:$0xff]
        %v6488 = vld [vmem:[%s6478 + $0x48] sm:$0xff]
        %v6489 = vld [vmem:[%s6478 + $0x50] sm:$0xff]
        %v6490 = vld [vmem:[%s6478 + $0x58] sm:$0xff]
        %v6491 = vld [vmem:[%s6478 + $0x60] sm:$0xff]
        %v6492 = vld [vmem:[%s6478 + $0x68] sm:$0xff]
        %v6493 = vld [vmem:[%s6478 + $0x70] sm:$0xff]
        %v6494 = vld [vmem:[%s6478 + $0x78] sm:$0xff]
        %v6495 = vld [vmem:[%s6478 + $0x80] sm:$0xff]
        %v6496 = vld [vmem:[%s6478 + $0x88] sm:$0xff]
        %v6497 = vld [vmem:[%s6478 + $0x90] sm:$0xff]
        %v6498 = vld [vmem:[%s6478 + $0x98] sm:$0xff]
        %v6499 = vld [vmem:[%s6478 + $0xa0] sm:$0xff]
        %v6500 = vld [vmem:[%s6478 + $0xa8] sm:$0xff]
        %v6501 = vld [vmem:[%s6478 + $0xb0] sm:$0xff]
        %v6502 = vld [vmem:[%s6478 + $0xb8] sm:$0xff]
        %v6527 = vunpack.c.l.b16 %v6479
        %v6528 = vunpack.c.h.b16 %v6479
        %v6529 = vunpack.c.l.b16 %v6480
        %v6530 = vunpack.c.h.b16 %v6480
        %v6531 = vunpack.c.l.b16 %v6481
        %v6532 = vunpack.c.h.b16 %v6481
        %v6533 = vunpack.c.l.b16 %v6482
        %v6534 = vunpack.c.h.b16 %v6482
        %v6535 = vunpack.c.l.b16 %v6483
        %v6536 = vunpack.c.h.b16 %v6483
        %v6537 = vunpack.c.l.b16 %v6484
        %v6538 = vunpack.c.h.b16 %v6484
        %v6539 = vunpack.c.l.b16 %v6485
        %v6540 = vunpack.c.h.b16 %v6485
        %v6541 = vunpack.c.l.b16 %v6486
        %v6542 = vunpack.c.h.b16 %v6486
        %v6543 = vunpack.c.l.b16 %v6487
        %v6544 = vunpack.c.h.b16 %v6487
        %v6545 = vunpack.c.l.b16 %v6488
        %v6546 = vunpack.c.h.b16 %v6488
        %v6547 = vunpack.c.l.b16 %v6489
        %v6548 = vunpack.c.h.b16 %v6489
        %v6549 = vunpack.c.l.b16 %v6490
        %v6550 = vunpack.c.h.b16 %v6490
        %v6551 = vunpack.c.l.b16 %v6491
        %v6552 = vunpack.c.h.b16 %v6491
        %v6553 = vunpack.c.l.b16 %v6492
        %v6554 = vunpack.c.h.b16 %v6492
        %v6555 = vunpack.c.l.b16 %v6493
        %v6556 = vunpack.c.h.b16 %v6493
        %v6557 = vunpack.c.l.b16 %v6494
        %v6558 = vunpack.c.h.b16 %v6494
        %v6559 = vunpack.c.l.b16 %v6495
        %v6560 = vunpack.c.h.b16 %v6495
        %v6561 = vunpack.c.l.b16 %v6496
        %v6562 = vunpack.c.h.b16 %v6496
        %v6563 = vunpack.c.l.b16 %v6497
        %v6564 = vunpack.c.h.b16 %v6497
        %v6565 = vunpack.c.l.b16 %v6498
        %v6566 = vunpack.c.h.b16 %v6498
        %v6567 = vunpack.c.l.b16 %v6499
        %v6568 = vunpack.c.h.b16 %v6499
        %v6569 = vunpack.c.l.b16 %v6500
        %v6570 = vunpack.c.h.b16 %v6500
        %v6571 = vunpack.c.l.b16 %v6501
        %v6572 = vunpack.c.h.b16 %v6501
        %v6573 = vunpack.c.l.b16 %v6502
        %v6574 = vunpack.c.h.b16 %v6502
        %v6575 = vpack.c.b16 %v6529, %v6527
        %v6576 = vpack.c.b16 %v6530, %v6528
        %v6577 = vpack.c.b16 %v6533, %v6531
        %v6578 = vpack.c.b16 %v6534, %v6532
        %v6579 = vpack.c.b16 %v6537, %v6535
        %v6580 = vpack.c.b16 %v6538, %v6536
        %v6581 = vpack.c.b16 %v6541, %v6539
        %v6582 = vpack.c.b16 %v6542, %v6540
        %v6583 = vpack.c.b16 %v6545, %v6543
        %v6584 = vpack.c.b16 %v6546, %v6544
        %v6585 = vpack.c.b16 %v6549, %v6547
        %v6586 = vpack.c.b16 %v6550, %v6548
        %v6587 = vpack.c.b16 %v6553, %v6551
        %v6588 = vpack.c.b16 %v6554, %v6552
        %v6589 = vpack.c.b16 %v6557, %v6555
        %v6590 = vpack.c.b16 %v6558, %v6556
        %v6591 = vpack.c.b16 %v6561, %v6559
        %v6592 = vpack.c.b16 %v6562, %v6560
        %v6593 = vpack.c.b16 %v6565, %v6563
        %v6594 = vpack.c.b16 %v6566, %v6564
        %v6595 = vpack.c.b16 %v6569, %v6567
        %v6596 = vpack.c.b16 %v6570, %v6568
        %v6597 = vpack.c.b16 %v6573, %v6571
        %v6598 = vpack.c.b16 %v6574, %v6572
        %v6624 = vsel %vm4774, %v6471, 0
        %v6627 = vsel %vm4774, %v6473, 0
        %v6630 = vsel %vm4774, %v6475, 0
        %v6633 = vsel %vm4774, %v6477, 0
        %6635 = vmatprep.subr.bf16.mxu0 %v6576
        %6636 = vmatpush1.bf16.msra.mxu0 %v6575
        %6637 = vmatprep.subr.bf16.mxu0 %v6578
        %6638 = vmatpush1.bf16.msra.mxu0 %v6577
        %6639 = vmatprep.subr.bf16.mxu0 %v6580
        %6640 = vmatpush1.bf16.msra.mxu0 %v6579
        %6641 = vmatprep.subr.bf16.mxu0 %v6582
        %6642 = vmatpush1.bf16.msra.mxu0 %v6581
        %6643 = vmatprep.subr.bf16.mxu0 %v6584
        %6644 = vmatpush1.bf16.msra.mxu0 %v6583
        %6645 = vmatprep.subr.bf16.mxu0 %v6586
        %6646 = vmatpush1.bf16.msra.mxu0 %v6585
        %6647 = vmatprep.subr.bf16.mxu0 %v6588
        %6648 = vmatpush1.bf16.msra.mxu0 %v6587
        %6649 = vmatprep.subr.bf16.mxu0 %v6590
        %6650 = vmatpush1.bf16.msra.mxu0 %v6589
        %6651 = vmatprep.subr.bf16.mxu0 %v6592
        %6652 = vmatpush1.bf16.msra.mxu0 %v6591
        %6653 = vmatprep.subr.bf16.mxu0 %v6594
        %6654 = vmatpush1.bf16.msra.mxu0 %v6593
        %6655 = vmatprep.subr.bf16.mxu0 %v6596
        %6656 = vmatpush1.bf16.msra.mxu0 %v6595
        %6657 = vmatprep.subr.bf16.mxu0 %v6598
        %6658 = vmatpush1.bf16.msra.mxu0 %v6597
        %6659 = vmatprep.subr.bf16.mxu0 0
        %6660 = vmatpush1.bf16.msra.mxu0 0
        %6661 = vmatprep.subr.bf16.mxu0 0
        %6662 = vmatpush1.bf16.msra.mxu0 0
        %6663 = vmatprep.subr.bf16.mxu0 0
        %6664 = vmatpush1.bf16.msra.mxu0 0
        %6665 = vmatprep.subr.bf16.mxu0 0
        %6666 = vmatpush1.bf16.msra.mxu0 0
        %6667 = vmatprep.mubr.bf16.mxu0 %v6624
        %6668 = vmatmul.mubr.bf16.gmra.mrb[0].mxu0 %v6470
        %v6669 = vpop.f32.mrb[0].mxu0
        %v6670 = vadd.f32 0.0, %v6669
        %v6671 = vpop.f32.mrb[0].mxu0
        %v6672 = vadd.f32 0.0, %v6671
        %v6673 = vpop.f32.mrb[0].mxu0
        %v6674 = vadd.f32 0.0, %v6673
        %v6675 = vpop.f32.mrb[0].mxu0
        %v6676 = vadd.f32 0.0, %v6675
        %6677 = vmatprep.mubr.bf16.mxu0 %v6627
        %6678 = vmatmul.mubr.bf16.gmra.mrb[0].mxu0 %v6472
        %v6679 = vpop.f32.mrb[0].mxu0
        %v6680 = vadd.f32 0.0, %v6679
        %v6681 = vpop.f32.mrb[0].mxu0
        %v6682 = vadd.f32 0.0, %v6681
        %v6683 = vpop.f32.mrb[0].mxu0
        %v6684 = vadd.f32 0.0, %v6683
        %v6685 = vpop.f32.mrb[0].mxu0
        %v6686 = vadd.f32 0.0, %v6685
        %6687 = vmatprep.mubr.bf16.mxu0 %v6630
        %6688 = vmatmul.mubr.bf16.gmra.mrb[0].mxu0 %v6474
        %v6689 = vpop.f32.mrb[0].mxu0
        %v6690 = vadd.f32 0.0, %v6689
        %v6691 = vpop.f32.mrb[0].mxu0
        %v6692 = vadd.f32 0.0, %v6691
        %v6693 = vpop.f32.mrb[0].mxu0
        %v6694 = vadd.f32 0.0, %v6693
        %v6695 = vpop.f32.mrb[0].mxu0
        %v6696 = vadd.f32 0.0, %v6695
        %6697 = vmatprep.mubr.bf16.mxu0 %v6633
        %6698 = vmatmul.mubr.bf16.gmra.mrb[0].mxu0 %v6476
        %v6699 = vpop.f32.mrb[0].mxu0
        %v6700 = vadd.f32 0.0, %v6699
        %v6701 = vpop.f32.mrb[0].mxu0
        %v6702 = vadd.f32 0.0, %v6701
        %v6703 = vpop.f32.mrb[0].mxu0
        %v6704 = vadd.f32 0.0, %v6703
        %v6705 = vpop.f32.mrb[0].mxu0
        %v6706 = vadd.f32 0.0, %v6705
        %6707 = vdwg.mxu0
        %v6708 = vadd.f32 %v6318, %v6670
        %v6709 = vadd.f32 %v6320, %v6672
        %v6710 = vadd.f32 %v6322, %v6674
        %v6711 = vadd.f32 %v6324, %v6676
        %v6712 = vadd.f32 %v6328, %v6680
        %v6713 = vadd.f32 %v6330, %v6682
        %v6714 = vadd.f32 %v6332, %v6684
        %v6715 = vadd.f32 %v6334, %v6686
        %v6716 = vadd.f32 %v6338, %v6690
        %v6717 = vadd.f32 %v6340, %v6692
        %v6718 = vadd.f32 %v6342, %v6694
        %v6719 = vadd.f32 %v6344, %v6696
        %v6720 = vadd.f32 %v6348, %v6700
        %v6721 = vadd.f32 %v6350, %v6702
        %v6722 = vadd.f32 %v6352, %v6704
        %v6723 = vadd.f32 %v6354, %v6706
        %v6724 = vld [vmem:[%s12] sm:$0x3]
        %v6726 = vlaneseq
        %v6727 = vshrl.u32 %v6726, 7
        %v6728 = vsub.s32 0, %v6727
        %v6729 = vrot.slane %v6724, %v6728
        %v6730 = vlaneseq
        %v6731 = vshrl.u32 %v6730, 7
        %v6732 = vsub.s32 1, %v6731
        %v6733 = vrot.slane %v6724, %v6732
        %v6736 = vmul.f32 %v6708, %v6729
        %v6737 = vmul.f32 %v6709, %v6733
        %v6738 = vmul.f32 %v6710, %v6729
        %v6739 = vmul.f32 %v6711, %v6733
        %v6740 = vmul.f32 %v6712, %v6729
        %v6741 = vmul.f32 %v6713, %v6733
        %v6742 = vmul.f32 %v6714, %v6729
        %v6743 = vmul.f32 %v6715, %v6733
        %v6744 = vmul.f32 %v6716, %v6729
        %v6745 = vmul.f32 %v6717, %v6733
        %v6746 = vmul.f32 %v6718, %v6729
        %v6747 = vmul.f32 %v6719, %v6733
        %v6748 = vmul.f32 %v6720, %v6729
        %v6749 = vmul.f32 %v6721, %v6733
        %v6750 = vmul.f32 %v6722, %v6729
        %v6751 = vmul.f32 %v6723, %v6733
        %v6752 = vld [vmem:[%s13] sm:$0x3]
        %v6754 = vlaneseq
        %v6755 = vshrl.u32 %v6754, 7
        %v6756 = vsub.s32 0, %v6755
        %v6757 = vrot.slane %v6752, %v6756
        %v6758 = vlaneseq
        %v6759 = vshrl.u32 %v6758, 7
        %v6760 = vsub.s32 1, %v6759
        %v6761 = vrot.slane %v6752, %v6760
        %v6764 = vadd.f32 %v6736, %v6757
        %v6765 = vadd.f32 %v6737, %v6761
        %v6766 = vadd.f32 %v6738, %v6757
        %v6767 = vadd.f32 %v6739, %v6761
        %v6768 = vadd.f32 %v6740, %v6757
        %v6769 = vadd.f32 %v6741, %v6761
        %v6770 = vadd.f32 %v6742, %v6757
        %v6771 = vadd.f32 %v6743, %v6761
        %v6772 = vadd.f32 %v6744, %v6757
        %v6773 = vadd.f32 %v6745, %v6761
        %v6774 = vadd.f32 %v6746, %v6757
        %v6775 = vadd.f32 %v6747, %v6761
        %v6776 = vadd.f32 %v6748, %v6757
        %v6777 = vadd.f32 %v6749, %v6761
        %v6778 = vadd.f32 %v6750, %v6757
        %v6779 = vadd.f32 %v6751, %v6761
        %v6780 = vmax.f32 %v6764, 0.0
        %v6781 = vmax.f32 %v6765, 0.0
        %v6782 = vmax.f32 %v6766, 0.0
        %v6783 = vmax.f32 %v6767, 0.0
        %v6784 = vmax.f32 %v6768, 0.0
        %v6785 = vmax.f32 %v6769, 0.0
        %v6786 = vmax.f32 %v6770, 0.0
        %v6787 = vmax.f32 %v6771, 0.0
        %v6788 = vmax.f32 %v6772, 0.0
        %v6789 = vmax.f32 %v6773, 0.0
        %v6790 = vmax.f32 %v6774, 0.0
        %v6791 = vmax.f32 %v6775, 0.0
        %v6792 = vmax.f32 %v6776, 0.0
        %v6793 = vmax.f32 %v6777, 0.0
        %v6794 = vmax.f32 %v6778, 0.0
        %v6795 = vmax.f32 %v6779, 0.0
        %v6796 = vpack.c.bf16 %v2797, %v2795
        %v6797 = vpack.c.bf16 %v2798, %v2796
        %v6798 = vpack.c.bf16 %v2801, %v2799
        %v6799 = vpack.c.bf16 %v2802, %v2800
        %v6800 = vpack.c.bf16 %v2805, %v2803
        %v6801 = vpack.c.bf16 %v2806, %v2804
        %v6802 = vpack.c.bf16 %v2809, %v2807
        %v6803 = vpack.c.bf16 %v2810, %v2808
        %v6804 = vld [vmem:[%s14] sm:$0xff]
        %v6805 = vld [vmem:[%s14 + $0x8] sm:$0xff]
        %v6806 = vld [vmem:[%s14 + $0x10] sm:$0xff]
        %v6807 = vld [vmem:[%s14 + $0x18] sm:$0xff]
        %v6808 = vld [vmem:[%s14 + $0x20] sm:$0xff]
        %v6809 = vld [vmem:[%s14 + $0x28] sm:$0xff]
        %v6810 = vld [vmem:[%s14 + $0x30] sm:$0xff]
        %v6811 = vld [vmem:[%s14 + $0x38] sm:$0xff]
        %v6812 = vld [vmem:[%s14 + $0x40] sm:$0xff]
        %v6813 = vld [vmem:[%s14 + $0x48] sm:$0xff]
        %v6814 = vld [vmem:[%s14 + $0x50] sm:$0xff]
        %v6815 = vld [vmem:[%s14 + $0x58] sm:$0xff]
        %v6816 = vld [vmem:[%s14 + $0x60] sm:$0xff]
        %v6817 = vld [vmem:[%s14 + $0x68] sm:$0xff]
        %v6818 = vld [vmem:[%s14 + $0x70] sm:$0xff]
        %v6819 = vld [vmem:[%s14 + $0x78] sm:$0xff]
        %v6820 = vld [vmem:[%s14 + $0x80] sm:$0xff]
        %v6821 = vld [vmem:[%s14 + $0x88] sm:$0xff]
        %v6822 = vld [vmem:[%s14 + $0x90] sm:$0xff]
        %v6823 = vld [vmem:[%s14 + $0x98] sm:$0xff]
        %v6824 = vld [vmem:[%s14 + $0xa0] sm:$0xff]
        %v6825 = vld [vmem:[%s14 + $0xa8] sm:$0xff]
        %v6826 = vld [vmem:[%s14 + $0xb0] sm:$0xff]
        %v6827 = vld [vmem:[%s14 + $0xb8] sm:$0xff]
        %v6828 = vld [vmem:[%s14 + $0xc0] sm:$0xff]
        %v6829 = vld [vmem:[%s14 + $0xc8] sm:$0xff]
        %v6830 = vld [vmem:[%s14 + $0xd0] sm:$0xff]
        %v6831 = vld [vmem:[%s14 + $0xd8] sm:$0xff]
        %v6832 = vld [vmem:[%s14 + $0xe0] sm:$0xff]
        %v6833 = vld [vmem:[%s14 + $0xe8] sm:$0xff]
        %v6834 = vld [vmem:[%s14 + $0xf0] sm:$0xff]
        %v6835 = vld [vmem:[%s14 + $0xf8] sm:$0xff]
        %v6836 = vld [vmem:[%s14 + $0x100] sm:$0xff]
        %v6837 = vld [vmem:[%s14 + $0x108] sm:$0xff]
        %v6838 = vld [vmem:[%s14 + $0x110] sm:$0xff]
        %v6839 = vld [vmem:[%s14 + $0x118] sm:$0xff]
        %v6840 = vld [vmem:[%s14 + $0x120] sm:$0xff]
        %v6841 = vld [vmem:[%s14 + $0x128] sm:$0xff]
        %v6842 = vld [vmem:[%s14 + $0x130] sm:$0xff]
        %v6843 = vld [vmem:[%s14 + $0x138] sm:$0xff]
        %v6844 = vld [vmem:[%s14 + $0x140] sm:$0xff]
        %v6845 = vld [vmem:[%s14 + $0x148] sm:$0xff]
        %v6846 = vld [vmem:[%s14 + $0x150] sm:$0xff]
        %v6847 = vld [vmem:[%s14 + $0x158] sm:$0xff]
        %v6848 = vld [vmem:[%s14 + $0x160] sm:$0xff]
        %v6849 = vld [vmem:[%s14 + $0x168] sm:$0xff]
        %v6850 = vld [vmem:[%s14 + $0x170] sm:$0xff]
        %v6851 = vld [vmem:[%s14 + $0x178] sm:$0xff]
        %v6852 = vld [vmem:[%s14 + $0x180] sm:$0xff]
        %v6853 = vld [vmem:[%s14 + $0x188] sm:$0xff]
        %v6854 = vld [vmem:[%s14 + $0x190] sm:$0xff]
        %v6855 = vld [vmem:[%s14 + $0x198] sm:$0xff]
        %v6856 = vld [vmem:[%s14 + $0x1a0] sm:$0xff]
        %v6857 = vld [vmem:[%s14 + $0x1a8] sm:$0xff]
        %v6858 = vld [vmem:[%s14 + $0x1b0] sm:$0xff]
        %v6859 = vld [vmem:[%s14 + $0x1b8] sm:$0xff]
        %v6860 = vld [vmem:[%s14 + $0x1c0] sm:$0xff]
        %v6861 = vld [vmem:[%s14 + $0x1c8] sm:$0xff]
        %v6862 = vld [vmem:[%s14 + $0x1d0] sm:$0xff]
        %v6863 = vld [vmem:[%s14 + $0x1d8] sm:$0xff]
        %v6864 = vld [vmem:[%s14 + $0x1e0] sm:$0xff]
        %v6865 = vld [vmem:[%s14 + $0x1e8] sm:$0xff]
        %v6866 = vld [vmem:[%s14 + $0x1f0] sm:$0xff]
        %v6867 = vld [vmem:[%s14 + $0x1f8] sm:$0xff]
        %v6868 = vld [vmem:[%s14 + $0x200] sm:$0xff]
        %v6869 = vld [vmem:[%s14 + $0x208] sm:$0xff]
        %v6870 = vld [vmem:[%s14 + $0x210] sm:$0xff]
        %v6871 = vld [vmem:[%s14 + $0x218] sm:$0xff]
        %v6872 = vld [vmem:[%s14 + $0x220] sm:$0xff]
        %v6873 = vld [vmem:[%s14 + $0x228] sm:$0xff]
        %v6874 = vld [vmem:[%s14 + $0x230] sm:$0xff]
        %v6875 = vld [vmem:[%s14 + $0x238] sm:$0xff]
        %v6876 = vld [vmem:[%s14 + $0x240] sm:$0xff]
        %v6877 = vld [vmem:[%s14 + $0x248] sm:$0xff]
        %v6878 = vld [vmem:[%s14 + $0x250] sm:$0xff]
        %v6879 = vld [vmem:[%s14 + $0x258] sm:$0xff]
        %v6880 = vld [vmem:[%s14 + $0x260] sm:$0xff]
        %v6881 = vld [vmem:[%s14 + $0x268] sm:$0xff]
        %v6882 = vld [vmem:[%s14 + $0x270] sm:$0xff]
        %v6883 = vld [vmem:[%s14 + $0x278] sm:$0xff]
        %v6884 = vld [vmem:[%s14 + $0x280] sm:$0xff]
        %v6885 = vld [vmem:[%s14 + $0x288] sm:$0xff]
        %v6886 = vld [vmem:[%s14 + $0x290] sm:$0xff]
        %v6887 = vld [vmem:[%s14 + $0x298] sm:$0xff]
        %v6888 = vld [vmem:[%s14 + $0x2a0] sm:$0xff]
        %v6889 = vld [vmem:[%s14 + $0x2a8] sm:$0xff]
        %v6890 = vld [vmem:[%s14 + $0x2b0] sm:$0xff]
        %v6891 = vld [vmem:[%s14 + $0x2b8] sm:$0xff]
        %v6892 = vld [vmem:[%s14 + $0x2c0] sm:$0xff]
        %v6893 = vld [vmem:[%s14 + $0x2c8] sm:$0xff]
        %v6894 = vld [vmem:[%s14 + $0x2d0] sm:$0xff]
        %v6895 = vld [vmem:[%s14 + $0x2d8] sm:$0xff]
        %v6896 = vld [vmem:[%s14 + $0x2e0] sm:$0xff]
        %v6897 = vld [vmem:[%s14 + $0x2e8] sm:$0xff]
        %v6898 = vld [vmem:[%s14 + $0x2f0] sm:$0xff]
        %v6899 = vld [vmem:[%s14 + $0x2f8] sm:$0xff]
        %v6900 = vld [vmem:[%s14 + $0x300] sm:$0xff]
        %v6901 = vld [vmem:[%s14 + $0x308] sm:$0xff]
        %v6902 = vld [vmem:[%s14 + $0x310] sm:$0xff]
        %v6903 = vld [vmem:[%s14 + $0x318] sm:$0xff]
        %v6904 = vld [vmem:[%s14 + $0x320] sm:$0xff]
        %v6905 = vld [vmem:[%s14 + $0x328] sm:$0xff]
        %v6906 = vld [vmem:[%s14 + $0x330] sm:$0xff]
        %v6907 = vld [vmem:[%s14 + $0x338] sm:$0xff]
        %v6908 = vld [vmem:[%s14 + $0x340] sm:$0xff]
        %v6909 = vld [vmem:[%s14 + $0x348] sm:$0xff]
        %v6910 = vld [vmem:[%s14 + $0x350] sm:$0xff]
        %v6911 = vld [vmem:[%s14 + $0x358] sm:$0xff]
        %v6912 = vld [vmem:[%s14 + $0x360] sm:$0xff]
        %v6913 = vld [vmem:[%s14 + $0x368] sm:$0xff]
        %v6914 = vld [vmem:[%s14 + $0x370] sm:$0xff]
        %v6915 = vld [vmem:[%s14 + $0x378] sm:$0xff]
        %v6916 = vld [vmem:[%s14 + $0x380] sm:$0xff]
        %v6917 = vld [vmem:[%s14 + $0x388] sm:$0xff]
        %v6918 = vld [vmem:[%s14 + $0x390] sm:$0xff]
        %v6919 = vld [vmem:[%s14 + $0x398] sm:$0xff]
        %v6920 = vld [vmem:[%s14 + $0x3a0] sm:$0xff]
        %v6921 = vld [vmem:[%s14 + $0x3a8] sm:$0xff]
        %v6922 = vld [vmem:[%s14 + $0x3b0] sm:$0xff]
        %v6923 = vld [vmem:[%s14 + $0x3b8] sm:$0xff]
        %v6924 = vld [vmem:[%s14 + $0x3c0] sm:$0xff]
        %v6925 = vld [vmem:[%s14 + $0x3c8] sm:$0xff]
        %v6926 = vld [vmem:[%s14 + $0x3d0] sm:$0xff]
        %v6927 = vld [vmem:[%s14 + $0x3d8] sm:$0xff]
        %v6928 = vld [vmem:[%s14 + $0x3e0] sm:$0xff]
        %v6929 = vld [vmem:[%s14 + $0x3e8] sm:$0xff]
        %v6930 = vld [vmem:[%s14 + $0x3f0] sm:$0xff]
        %v6931 = vld [vmem:[%s14 + $0x3f8] sm:$0xff]
        %v6932 = vld [vmem:[%s14 + $0x400] sm:$0xff]
        %v6933 = vld [vmem:[%s14 + $0x408] sm:$0xff]
        %v6934 = vld [vmem:[%s14 + $0x410] sm:$0xff]
        %v6935 = vld [vmem:[%s14 + $0x418] sm:$0xff]
        %v6936 = vld [vmem:[%s14 + $0x420] sm:$0xff]
        %v6937 = vld [vmem:[%s14 + $0x428] sm:$0xff]
        %v6938 = vld [vmem:[%s14 + $0x430] sm:$0xff]
        %v6939 = vld [vmem:[%s14 + $0x438] sm:$0xff]
        %v6940 = vld [vmem:[%s14 + $0x440] sm:$0xff]
        %v6941 = vld [vmem:[%s14 + $0x448] sm:$0xff]
        %v6942 = vld [vmem:[%s14 + $0x450] sm:$0xff]
        %v6943 = vld [vmem:[%s14 + $0x458] sm:$0xff]
        %v6944 = vld [vmem:[%s14 + $0x460] sm:$0xff]
        %v6945 = vld [vmem:[%s14 + $0x468] sm:$0xff]
        %v6946 = vld [vmem:[%s14 + $0x470] sm:$0xff]
        %v6947 = vld [vmem:[%s14 + $0x478] sm:$0xff]
        %v6948 = vld [vmem:[%s14 + $0x480] sm:$0xff]
        %v6949 = vld [vmem:[%s14 + $0x488] sm:$0xff]
        %v6950 = vld [vmem:[%s14 + $0x490] sm:$0xff]
        %v6951 = vld [vmem:[%s14 + $0x498] sm:$0xff]
        %v6952 = vld [vmem:[%s14 + $0x4a0] sm:$0xff]
        %v6953 = vld [vmem:[%s14 + $0x4a8] sm:$0xff]
        %v6954 = vld [vmem:[%s14 + $0x4b0] sm:$0xff]
        %v6955 = vld [vmem:[%s14 + $0x4b8] sm:$0xff]
        %v6956 = vld [vmem:[%s14 + $0x4c0] sm:$0xff]
        %v6957 = vld [vmem:[%s14 + $0x4c8] sm:$0xff]
        %v6958 = vld [vmem:[%s14 + $0x4d0] sm:$0xff]
        %v6959 = vld [vmem:[%s14 + $0x4d8] sm:$0xff]
        %v6960 = vld [vmem:[%s14 + $0x4e0] sm:$0xff]
        %v6961 = vld [vmem:[%s14 + $0x4e8] sm:$0xff]
        %v6962 = vld [vmem:[%s14 + $0x4f0] sm:$0xff]
        %v6963 = vld [vmem:[%s14 + $0x4f8] sm:$0xff]
        %v6964 = vld [vmem:[%s14 + $0x500] sm:$0xff]
        %v6965 = vld [vmem:[%s14 + $0x508] sm:$0xff]
        %v6966 = vld [vmem:[%s14 + $0x510] sm:$0xff]
        %v6967 = vld [vmem:[%s14 + $0x518] sm:$0xff]
        %v6968 = vld [vmem:[%s14 + $0x520] sm:$0xff]
        %v6969 = vld [vmem:[%s14 + $0x528] sm:$0xff]
        %v6970 = vld [vmem:[%s14 + $0x530] sm:$0xff]
        %v6971 = vld [vmem:[%s14 + $0x538] sm:$0xff]
        %v6972 = vpack.c.bf16 %v6782, %v6780
        %v6973 = vpack.c.bf16 %v6783, %v6781
        %v6974 = vpack.c.bf16 %v6786, %v6784
        %v6975 = vpack.c.bf16 %v6787, %v6785
        %v6976 = vpack.c.bf16 %v6790, %v6788
        %v6977 = vpack.c.bf16 %v6791, %v6789
        %v6978 = vpack.c.bf16 %v6794, %v6792
        %v6979 = vpack.c.bf16 %v6795, %v6793
        %v6980 = vld [vmem:[%s15] sm:$0xff]
        %v6981 = vld [vmem:[%s15 + $0x8] sm:$0xff]
        %v6982 = vld [vmem:[%s15 + $0x10] sm:$0xff]
        %v6983 = vld [vmem:[%s15 + $0x18] sm:$0xff]
        %v6984 = vld [vmem:[%s15 + $0x20] sm:$0xff]
        %v6985 = vld [vmem:[%s15 + $0x28] sm:$0xff]
        %v6986 = vld [vmem:[%s15 + $0x30] sm:$0xff]
        %v6987 = vld [vmem:[%s15 + $0x38] sm:$0xff]
        %v6988 = vld [vmem:[%s15 + $0x40] sm:$0xff]
        %v6989 = vld [vmem:[%s15 + $0x48] sm:$0xff]
        %v6990 = vld [vmem:[%s15 + $0x50] sm:$0xff]
        %v6991 = vld [vmem:[%s15 + $0x58] sm:$0xff]
        %v6992 = vld [vmem:[%s15 + $0x60] sm:$0xff]
        %v6993 = vld [vmem:[%s15 + $0x68] sm:$0xff]
        %v6994 = vld [vmem:[%s15 + $0x70] sm:$0xff]
        %v6995 = vld [vmem:[%s15 + $0x78] sm:$0xff]
        %v6996 = vld [vmem:[%s15 + $0x80] sm:$0xff]
        %v6997 = vld [vmem:[%s15 + $0x88] sm:$0xff]
        %v6998 = vld [vmem:[%s15 + $0x90] sm:$0xff]
        %v6999 = vld [vmem:[%s15 + $0x98] sm:$0xff]
        %v7000 = vld [vmem:[%s15 + $0xa0] sm:$0xff]
        %v7001 = vld [vmem:[%s15 + $0xa8] sm:$0xff]
        %v7002 = vld [vmem:[%s15 + $0xb0] sm:$0xff]
        %v7003 = vld [vmem:[%s15 + $0xb8] sm:$0xff]
        %v7004 = vld [vmem:[%s15 + $0xc0] sm:$0xff]
        %v7005 = vld [vmem:[%s15 + $0xc8] sm:$0xff]
        %v7006 = vld [vmem:[%s15 + $0xd0] sm:$0xff]
        %v7007 = vld [vmem:[%s15 + $0xd8] sm:$0xff]
        %v7008 = vld [vmem:[%s15 + $0xe0] sm:$0xff]
        %v7009 = vld [vmem:[%s15 + $0xe8] sm:$0xff]
        %v7010 = vld [vmem:[%s15 + $0xf0] sm:$0xff]
        %v7011 = vld [vmem:[%s15 + $0xf8] sm:$0xff]
        %v7012 = vld [vmem:[%s15 + $0x100] sm:$0xff]
        %v7013 = vld [vmem:[%s15 + $0x108] sm:$0xff]
        %v7014 = vld [vmem:[%s15 + $0x110] sm:$0xff]
        %v7015 = vld [vmem:[%s15 + $0x118] sm:$0xff]
        %v7016 = vld [vmem:[%s15 + $0x120] sm:$0xff]
        %v7017 = vld [vmem:[%s15 + $0x128] sm:$0xff]
        %v7018 = vld [vmem:[%s15 + $0x130] sm:$0xff]
        %v7019 = vld [vmem:[%s15 + $0x138] sm:$0xff]
        %v7020 = vld [vmem:[%s15 + $0x140] sm:$0xff]
        %v7021 = vld [vmem:[%s15 + $0x148] sm:$0xff]
        %v7022 = vld [vmem:[%s15 + $0x150] sm:$0xff]
        %v7023 = vld [vmem:[%s15 + $0x158] sm:$0xff]
        %v7024 = vld [vmem:[%s15 + $0x160] sm:$0xff]
        %v7025 = vld [vmem:[%s15 + $0x168] sm:$0xff]
        %v7026 = vld [vmem:[%s15 + $0x170] sm:$0xff]
        %v7027 = vld [vmem:[%s15 + $0x178] sm:$0xff]
        %v7028 = vld [vmem:[%s15 + $0x180] sm:$0xff]
        %v7029 = vld [vmem:[%s15 + $0x188] sm:$0xff]
        %v7030 = vld [vmem:[%s15 + $0x190] sm:$0xff]
        %v7031 = vld [vmem:[%s15 + $0x198] sm:$0xff]
        %v7032 = vld [vmem:[%s15 + $0x1a0] sm:$0xff]
        %v7033 = vld [vmem:[%s15 + $0x1a8] sm:$0xff]
        %v7034 = vld [vmem:[%s15 + $0x1b0] sm:$0xff]
        %v7035 = vld [vmem:[%s15 + $0x1b8] sm:$0xff]
        %v7036 = vld [vmem:[%s15 + $0x1c0] sm:$0xff]
        %v7037 = vld [vmem:[%s15 + $0x1c8] sm:$0xff]
        %v7038 = vld [vmem:[%s15 + $0x1d0] sm:$0xff]
        %v7039 = vld [vmem:[%s15 + $0x1d8] sm:$0xff]
        %v7040 = vld [vmem:[%s15 + $0x1e0] sm:$0xff]
        %v7041 = vld [vmem:[%s15 + $0x1e8] sm:$0xff]
        %v7042 = vld [vmem:[%s15 + $0x1f0] sm:$0xff]
        %v7043 = vld [vmem:[%s15 + $0x1f8] sm:$0xff]
        %v7044 = vld [vmem:[%s15 + $0x200] sm:$0xff]
        %v7045 = vld [vmem:[%s15 + $0x208] sm:$0xff]
        %v7046 = vld [vmem:[%s15 + $0x210] sm:$0xff]
        %v7047 = vld [vmem:[%s15 + $0x218] sm:$0xff]
        %v7048 = vld [vmem:[%s15 + $0x220] sm:$0xff]
        %v7049 = vld [vmem:[%s15 + $0x228] sm:$0xff]
        %v7050 = vld [vmem:[%s15 + $0x230] sm:$0xff]
        %v7051 = vld [vmem:[%s15 + $0x238] sm:$0xff]
        %v7052 = vld [vmem:[%s15 + $0x240] sm:$0xff]
        %v7053 = vld [vmem:[%s15 + $0x248] sm:$0xff]
        %v7054 = vld [vmem:[%s15 + $0x250] sm:$0xff]
        %v7055 = vld [vmem:[%s15 + $0x258] sm:$0xff]
        %v7056 = vld [vmem:[%s15 + $0x260] sm:$0xff]
        %v7057 = vld [vmem:[%s15 + $0x268] sm:$0xff]
        %v7058 = vld [vmem:[%s15 + $0x270] sm:$0xff]
        %v7059 = vld [vmem:[%s15 + $0x278] sm:$0xff]
        %v7060 = vld [vmem:[%s15 + $0x280] sm:$0xff]
        %v7061 = vld [vmem:[%s15 + $0x288] sm:$0xff]
        %v7062 = vld [vmem:[%s15 + $0x290] sm:$0xff]
        %v7063 = vld [vmem:[%s15 + $0x298] sm:$0xff]
        %v7064 = vld [vmem:[%s15 + $0x2a0] sm:$0xff]
        %v7065 = vld [vmem:[%s15 + $0x2a8] sm:$0xff]
        %v7066 = vld [vmem:[%s15 + $0x2b0] sm:$0xff]
        %v7067 = vld [vmem:[%s15 + $0x2b8] sm:$0xff]
        %v7068 = vld [vmem:[%s15 + $0x2c0] sm:$0xff]
        %v7069 = vld [vmem:[%s15 + $0x2c8] sm:$0xff]
        %v7070 = vld [vmem:[%s15 + $0x2d0] sm:$0xff]
        %v7071 = vld [vmem:[%s15 + $0x2d8] sm:$0xff]
        %v7072 = vld [vmem:[%s15 + $0x2e0] sm:$0xff]
        %v7073 = vld [vmem:[%s15 + $0x2e8] sm:$0xff]
        %v7074 = vld [vmem:[%s15 + $0x2f0] sm:$0xff]
        %v7075 = vld [vmem:[%s15 + $0x2f8] sm:$0xff]
        %v7076 = vld [vmem:[%s15 + $0x300] sm:$0xff]
        %v7077 = vld [vmem:[%s15 + $0x308] sm:$0xff]
        %v7078 = vld [vmem:[%s15 + $0x310] sm:$0xff]
        %v7079 = vld [vmem:[%s15 + $0x318] sm:$0xff]
        %v7080 = vld [vmem:[%s15 + $0x320] sm:$0xff]
        %v7081 = vld [vmem:[%s15 + $0x328] sm:$0xff]
        %v7082 = vld [vmem:[%s15 + $0x330] sm:$0xff]
        %v7083 = vld [vmem:[%s15 + $0x338] sm:$0xff]
        %v7084 = vld [vmem:[%s15 + $0x340] sm:$0xff]
        %v7085 = vld [vmem:[%s15 + $0x348] sm:$0xff]
        %v7086 = vld [vmem:[%s15 + $0x350] sm:$0xff]
        %v7087 = vld [vmem:[%s15 + $0x358] sm:$0xff]
        %v7088 = vld [vmem:[%s15 + $0x360] sm:$0xff]
        %v7089 = vld [vmem:[%s15 + $0x368] sm:$0xff]
        %v7090 = vld [vmem:[%s15 + $0x370] sm:$0xff]
        %v7091 = vld [vmem:[%s15 + $0x378] sm:$0xff]
        %v7092 = vld [vmem:[%s15 + $0x380] sm:$0xff]
        %v7093 = vld [vmem:[%s15 + $0x388] sm:$0xff]
        %v7094 = vld [vmem:[%s15 + $0x390] sm:$0xff]
        %v7095 = vld [vmem:[%s15 + $0x398] sm:$0xff]
        %v7096 = vld [vmem:[%s15 + $0x3a0] sm:$0xff]
        %v7097 = vld [vmem:[%s15 + $0x3a8] sm:$0xff]
        %v7098 = vld [vmem:[%s15 + $0x3b0] sm:$0xff]
        %v7099 = vld [vmem:[%s15 + $0x3b8] sm:$0xff]
        %v7100 = vld [vmem:[%s15 + $0x3c0] sm:$0xff]
        %v7101 = vld [vmem:[%s15 + $0x3c8] sm:$0xff]
        %v7102 = vld [vmem:[%s15 + $0x3d0] sm:$0xff]
        %v7103 = vld [vmem:[%s15 + $0x3d8] sm:$0xff]
        %v7104 = vld [vmem:[%s15 + $0x3e0] sm:$0xff]
        %v7105 = vld [vmem:[%s15 + $0x3e8] sm:$0xff]
        %v7106 = vld [vmem:[%s15 + $0x3f0] sm:$0xff]
        %v7107 = vld [vmem:[%s15 + $0x3f8] sm:$0xff]
        %v7108 = vld [vmem:[%s15 + $0x400] sm:$0xff]
        %v7109 = vld [vmem:[%s15 + $0x408] sm:$0xff]
        %v7110 = vld [vmem:[%s15 + $0x410] sm:$0xff]
        %v7111 = vld [vmem:[%s15 + $0x418] sm:$0xff]
        %v7112 = vld [vmem:[%s15 + $0x420] sm:$0xff]
        %v7113 = vld [vmem:[%s15 + $0x428] sm:$0xff]
        %v7114 = vld [vmem:[%s15 + $0x430] sm:$0xff]
        %v7115 = vld [vmem:[%s15 + $0x438] sm:$0xff]
        %v7116 = vld [vmem:[%s15 + $0x440] sm:$0xff]
        %v7117 = vld [vmem:[%s15 + $0x448] sm:$0xff]
        %v7118 = vld [vmem:[%s15 + $0x450] sm:$0xff]
        %v7119 = vld [vmem:[%s15 + $0x458] sm:$0xff]
        %v7120 = vld [vmem:[%s15 + $0x460] sm:$0xff]
        %v7121 = vld [vmem:[%s15 + $0x468] sm:$0xff]
        %v7122 = vld [vmem:[%s15 + $0x470] sm:$0xff]
        %v7123 = vld [vmem:[%s15 + $0x478] sm:$0xff]
        %v7124 = vld [vmem:[%s15 + $0x480] sm:$0xff]
        %v7125 = vld [vmem:[%s15 + $0x488] sm:$0xff]
        %v7126 = vld [vmem:[%s15 + $0x490] sm:$0xff]
        %v7127 = vld [vmem:[%s15 + $0x498] sm:$0xff]
        %v7128 = vld [vmem:[%s15 + $0x4a0] sm:$0xff]
        %v7129 = vld [vmem:[%s15 + $0x4a8] sm:$0xff]
        %v7130 = vld [vmem:[%s15 + $0x4b0] sm:$0xff]
        %v7131 = vld [vmem:[%s15 + $0x4b8] sm:$0xff]
        %v7132 = vld [vmem:[%s15 + $0x4c0] sm:$0xff]
        %v7133 = vld [vmem:[%s15 + $0x4c8] sm:$0xff]
        %v7134 = vld [vmem:[%s15 + $0x4d0] sm:$0xff]
        %v7135 = vld [vmem:[%s15 + $0x4d8] sm:$0xff]
        %v7136 = vld [vmem:[%s15 + $0x4e0] sm:$0xff]
        %v7137 = vld [vmem:[%s15 + $0x4e8] sm:$0xff]
        %v7138 = vld [vmem:[%s15 + $0x4f0] sm:$0xff]
        %v7139 = vld [vmem:[%s15 + $0x4f8] sm:$0xff]
        %v7140 = vld [vmem:[%s15 + $0x500] sm:$0xff]
        %v7141 = vld [vmem:[%s15 + $0x508] sm:$0xff]
        %v7142 = vld [vmem:[%s15 + $0x510] sm:$0xff]
        %v7143 = vld [vmem:[%s15 + $0x518] sm:$0xff]
        %v7144 = vld [vmem:[%s15 + $0x520] sm:$0xff]
        %v7145 = vld [vmem:[%s15 + $0x528] sm:$0xff]
        %v7146 = vld [vmem:[%s15 + $0x530] sm:$0xff]
        %v7147 = vld [vmem:[%s15 + $0x538] sm:$0xff]
        %v7316 = vunpack.c.l.b16 %v6980
        %v7317 = vunpack.c.h.b16 %v6980
        %v7318 = vunpack.c.l.b16 %v6981
        %v7319 = vunpack.c.h.b16 %v6981
        %v7320 = vunpack.c.l.b16 %v6982
        %v7321 = vunpack.c.h.b16 %v6982
        %v7322 = vunpack.c.l.b16 %v6983
        %v7323 = vunpack.c.h.b16 %v6983
        %v7324 = vunpack.c.l.b16 %v6984
        %v7325 = vunpack.c.h.b16 %v6984
        %v7326 = vunpack.c.l.b16 %v6985
        %v7327 = vunpack.c.h.b16 %v6985
        %v7328 = vunpack.c.l.b16 %v6986
        %v7329 = vunpack.c.h.b16 %v6986
        %v7330 = vunpack.c.l.b16 %v6987
        %v7331 = vunpack.c.h.b16 %v6987
        %v7332 = vunpack.c.l.b16 %v6988
        %v7333 = vunpack.c.h.b16 %v6988
        %v7334 = vunpack.c.l.b16 %v6989
        %v7335 = vunpack.c.h.b16 %v6989
        %v7336 = vunpack.c.l.b16 %v6990
        %v7337 = vunpack.c.h.b16 %v6990
        %v7338 = vunpack.c.l.b16 %v6991
        %v7339 = vunpack.c.h.b16 %v6991
        %v7340 = vunpack.c.l.b16 %v6992
        %v7341 = vunpack.c.h.b16 %v6992
        %v7342 = vunpack.c.l.b16 %v6993
        %v7343 = vunpack.c.h.b16 %v6993
        %v7344 = vunpack.c.l.b16 %v6994
        %v7345 = vunpack.c.h.b16 %v6994
        %v7346 = vunpack.c.l.b16 %v6995
        %v7347 = vunpack.c.h.b16 %v6995
        %v7348 = vunpack.c.l.b16 %v6996
        %v7349 = vunpack.c.h.b16 %v6996
        %v7350 = vunpack.c.l.b16 %v6997
        %v7351 = vunpack.c.h.b16 %v6997
        %v7352 = vunpack.c.l.b16 %v6998
        %v7353 = vunpack.c.h.b16 %v6998
        %v7354 = vunpack.c.l.b16 %v6999
        %v7355 = vunpack.c.h.b16 %v6999
        %v7356 = vunpack.c.l.b16 %v7000
        %v7357 = vunpack.c.h.b16 %v7000
        %v7358 = vunpack.c.l.b16 %v7001
        %v7359 = vunpack.c.h.b16 %v7001
        %v7360 = vunpack.c.l.b16 %v7002
        %v7361 = vunpack.c.h.b16 %v7002
        %v7362 = vunpack.c.l.b16 %v7003
        %v7363 = vunpack.c.h.b16 %v7003
        %v7364 = vunpack.c.l.b16 %v7004
        %v7365 = vunpack.c.h.b16 %v7004
        %v7366 = vunpack.c.l.b16 %v7005
        %v7367 = vunpack.c.h.b16 %v7005
        %v7368 = vunpack.c.l.b16 %v7006
        %v7369 = vunpack.c.h.b16 %v7006
        %v7370 = vunpack.c.l.b16 %v7007
        %v7371 = vunpack.c.h.b16 %v7007
        %v7372 = vunpack.c.l.b16 %v7008
        %v7373 = vunpack.c.h.b16 %v7008
        %v7374 = vunpack.c.l.b16 %v7009
        %v7375 = vunpack.c.h.b16 %v7009
        %v7376 = vunpack.c.l.b16 %v7010
        %v7377 = vunpack.c.h.b16 %v7010
        %v7378 = vunpack.c.l.b16 %v7011
        %v7379 = vunpack.c.h.b16 %v7011
        %v7380 = vunpack.c.l.b16 %v7012
        %v7381 = vunpack.c.h.b16 %v7012
        %v7382 = vunpack.c.l.b16 %v7013
        %v7383 = vunpack.c.h.b16 %v7013
        %v7384 = vunpack.c.l.b16 %v7014
        %v7385 = vunpack.c.h.b16 %v7014
        %v7386 = vunpack.c.l.b16 %v7015
        %v7387 = vunpack.c.h.b16 %v7015
        %v7388 = vunpack.c.l.b16 %v7016
        %v7389 = vunpack.c.h.b16 %v7016
        %v7390 = vunpack.c.l.b16 %v7017
        %v7391 = vunpack.c.h.b16 %v7017
        %v7392 = vunpack.c.l.b16 %v7018
        %v7393 = vunpack.c.h.b16 %v7018
        %v7394 = vunpack.c.l.b16 %v7019
        %v7395 = vunpack.c.h.b16 %v7019
        %v7396 = vunpack.c.l.b16 %v7020
        %v7397 = vunpack.c.h.b16 %v7020
        %v7398 = vunpack.c.l.b16 %v7021
        %v7399 = vunpack.c.h.b16 %v7021
        %v7400 = vunpack.c.l.b16 %v7022
        %v7401 = vunpack.c.h.b16 %v7022
        %v7402 = vunpack.c.l.b16 %v7023
        %v7403 = vunpack.c.h.b16 %v7023
        %v7404 = vunpack.c.l.b16 %v7024
        %v7405 = vunpack.c.h.b16 %v7024
        %v7406 = vunpack.c.l.b16 %v7025
        %v7407 = vunpack.c.h.b16 %v7025
        %v7408 = vunpack.c.l.b16 %v7026
        %v7409 = vunpack.c.h.b16 %v7026
        %v7410 = vunpack.c.l.b16 %v7027
        %v7411 = vunpack.c.h.b16 %v7027
        %v7412 = vunpack.c.l.b16 %v7028
        %v7413 = vunpack.c.h.b16 %v7028
        %v7414 = vunpack.c.l.b16 %v7029
        %v7415 = vunpack.c.h.b16 %v7029
        %v7416 = vunpack.c.l.b16 %v7030
        %v7417 = vunpack.c.h.b16 %v7030
        %v7418 = vunpack.c.l.b16 %v7031
        %v7419 = vunpack.c.h.b16 %v7031
        %v7420 = vunpack.c.l.b16 %v7032
        %v7421 = vunpack.c.h.b16 %v7032
        %v7422 = vunpack.c.l.b16 %v7033
        %v7423 = vunpack.c.h.b16 %v7033
        %v7424 = vunpack.c.l.b16 %v7034
        %v7425 = vunpack.c.h.b16 %v7034
        %v7426 = vunpack.c.l.b16 %v7035
        %v7427 = vunpack.c.h.b16 %v7035
        %v7428 = vunpack.c.l.b16 %v7036
        %v7429 = vunpack.c.h.b16 %v7036
        %v7430 = vunpack.c.l.b16 %v7037
        %v7431 = vunpack.c.h.b16 %v7037
        %v7432 = vunpack.c.l.b16 %v7038
        %v7433 = vunpack.c.h.b16 %v7038
        %v7434 = vunpack.c.l.b16 %v7039
        %v7435 = vunpack.c.h.b16 %v7039
        %v7436 = vunpack.c.l.b16 %v7040
        %v7437 = vunpack.c.h.b16 %v7040
        %v7438 = vunpack.c.l.b16 %v7041
        %v7439 = vunpack.c.h.b16 %v7041
        %v7440 = vunpack.c.l.b16 %v7042
        %v7441 = vunpack.c.h.b16 %v7042
        %v7442 = vunpack.c.l.b16 %v7043
        %v7443 = vunpack.c.h.b16 %v7043
        %v7444 = vunpack.c.l.b16 %v7044
        %v7445 = vunpack.c.h.b16 %v7044
        %v7446 = vunpack.c.l.b16 %v7045
        %v7447 = vunpack.c.h.b16 %v7045
        %v7448 = vunpack.c.l.b16 %v7046
        %v7449 = vunpack.c.h.b16 %v7046
        %v7450 = vunpack.c.l.b16 %v7047
        %v7451 = vunpack.c.h.b16 %v7047
        %v7452 = vunpack.c.l.b16 %v7048
        %v7453 = vunpack.c.h.b16 %v7048
        %v7454 = vunpack.c.l.b16 %v7049
        %v7455 = vunpack.c.h.b16 %v7049
        %v7456 = vunpack.c.l.b16 %v7050
        %v7457 = vunpack.c.h.b16 %v7050
        %v7458 = vunpack.c.l.b16 %v7051
        %v7459 = vunpack.c.h.b16 %v7051
        %v7460 = vunpack.c.l.b16 %v7052
        %v7461 = vunpack.c.h.b16 %v7052
        %v7462 = vunpack.c.l.b16 %v7053
        %v7463 = vunpack.c.h.b16 %v7053
        %v7464 = vunpack.c.l.b16 %v7054
        %v7465 = vunpack.c.h.b16 %v7054
        %v7466 = vunpack.c.l.b16 %v7055
        %v7467 = vunpack.c.h.b16 %v7055
        %v7468 = vunpack.c.l.b16 %v7056
        %v7469 = vunpack.c.h.b16 %v7056
        %v7470 = vunpack.c.l.b16 %v7057
        %v7471 = vunpack.c.h.b16 %v7057
        %v7472 = vunpack.c.l.b16 %v7058
        %v7473 = vunpack.c.h.b16 %v7058
        %v7474 = vunpack.c.l.b16 %v7059
        %v7475 = vunpack.c.h.b16 %v7059
        %v7476 = vunpack.c.l.b16 %v7060
        %v7477 = vunpack.c.h.b16 %v7060
        %v7478 = vunpack.c.l.b16 %v7061
        %v7479 = vunpack.c.h.b16 %v7061
        %v7480 = vunpack.c.l.b16 %v7062
        %v7481 = vunpack.c.h.b16 %v7062
        %v7482 = vunpack.c.l.b16 %v7063
        %v7483 = vunpack.c.h.b16 %v7063
        %v7484 = vunpack.c.l.b16 %v7064
        %v7485 = vunpack.c.h.b16 %v7064
        %v7486 = vunpack.c.l.b16 %v7065
        %v7487 = vunpack.c.h.b16 %v7065
        %v7488 = vunpack.c.l.b16 %v7066
        %v7489 = vunpack.c.h.b16 %v7066
        %v7490 = vunpack.c.l.b16 %v7067
        %v7491 = vunpack.c.h.b16 %v7067
        %v7492 = vunpack.c.l.b16 %v7068
        %v7493 = vunpack.c.h.b16 %v7068
        %v7494 = vunpack.c.l.b16 %v7069
        %v7495 = vunpack.c.h.b16 %v7069
        %v7496 = vunpack.c.l.b16 %v7070
        %v7497 = vunpack.c.h.b16 %v7070
        %v7498 = vunpack.c.l.b16 %v7071
        %v7499 = vunpack.c.h.b16 %v7071
        %v7500 = vunpack.c.l.b16 %v7072
        %v7501 = vunpack.c.h.b16 %v7072
        %v7502 = vunpack.c.l.b16 %v7073
        %v7503 = vunpack.c.h.b16 %v7073
        %v7504 = vunpack.c.l.b16 %v7074
        %v7505 = vunpack.c.h.b16 %v7074
        %v7506 = vunpack.c.l.b16 %v7075
        %v7507 = vunpack.c.h.b16 %v7075
        %v7508 = vunpack.c.l.b16 %v7076
        %v7509 = vunpack.c.h.b16 %v7076
        %v7510 = vunpack.c.l.b16 %v7077
        %v7511 = vunpack.c.h.b16 %v7077
        %v7512 = vunpack.c.l.b16 %v7078
        %v7513 = vunpack.c.h.b16 %v7078
        %v7514 = vunpack.c.l.b16 %v7079
        %v7515 = vunpack.c.h.b16 %v7079
        %v7516 = vunpack.c.l.b16 %v7080
        %v7517 = vunpack.c.h.b16 %v7080
        %v7518 = vunpack.c.l.b16 %v7081
        %v7519 = vunpack.c.h.b16 %v7081
        %v7520 = vunpack.c.l.b16 %v7082
        %v7521 = vunpack.c.h.b16 %v7082
        %v7522 = vunpack.c.l.b16 %v7083
        %v7523 = vunpack.c.h.b16 %v7083
        %v7524 = vunpack.c.l.b16 %v7084
        %v7525 = vunpack.c.h.b16 %v7084
        %v7526 = vunpack.c.l.b16 %v7085
        %v7527 = vunpack.c.h.b16 %v7085
        %v7528 = vunpack.c.l.b16 %v7086
        %v7529 = vunpack.c.h.b16 %v7086
        %v7530 = vunpack.c.l.b16 %v7087
        %v7531 = vunpack.c.h.b16 %v7087
        %v7532 = vunpack.c.l.b16 %v7088
        %v7533 = vunpack.c.h.b16 %v7088
        %v7534 = vunpack.c.l.b16 %v7089
        %v7535 = vunpack.c.h.b16 %v7089
        %v7536 = vunpack.c.l.b16 %v7090
        %v7537 = vunpack.c.h.b16 %v7090
        %v7538 = vunpack.c.l.b16 %v7091
        %v7539 = vunpack.c.h.b16 %v7091
        %v7540 = vunpack.c.l.b16 %v7092
        %v7541 = vunpack.c.h.b16 %v7092
        %v7542 = vunpack.c.l.b16 %v7093
        %v7543 = vunpack.c.h.b16 %v7093
        %v7544 = vunpack.c.l.b16 %v7094
        %v7545 = vunpack.c.h.b16 %v7094
        %v7546 = vunpack.c.l.b16 %v7095
        %v7547 = vunpack.c.h.b16 %v7095
        %v7548 = vunpack.c.l.b16 %v7096
        %v7549 = vunpack.c.h.b16 %v7096
        %v7550 = vunpack.c.l.b16 %v7097
        %v7551 = vunpack.c.h.b16 %v7097
        %v7552 = vunpack.c.l.b16 %v7098
        %v7553 = vunpack.c.h.b16 %v7098
        %v7554 = vunpack.c.l.b16 %v7099
        %v7555 = vunpack.c.h.b16 %v7099
        %v7556 = vunpack.c.l.b16 %v7100
        %v7557 = vunpack.c.h.b16 %v7100
        %v7558 = vunpack.c.l.b16 %v7101
        %v7559 = vunpack.c.h.b16 %v7101
        %v7560 = vunpack.c.l.b16 %v7102
        %v7561 = vunpack.c.h.b16 %v7102
        %v7562 = vunpack.c.l.b16 %v7103
        %v7563 = vunpack.c.h.b16 %v7103
        %v7564 = vunpack.c.l.b16 %v7104
        %v7565 = vunpack.c.h.b16 %v7104
        %v7566 = vunpack.c.l.b16 %v7105
        %v7567 = vunpack.c.h.b16 %v7105
        %v7568 = vunpack.c.l.b16 %v7106
        %v7569 = vunpack.c.h.b16 %v7106
        %v7570 = vunpack.c.l.b16 %v7107
        %v7571 = vunpack.c.h.b16 %v7107
        %v7572 = vunpack.c.l.b16 %v7108
        %v7573 = vunpack.c.h.b16 %v7108
        %v7574 = vunpack.c.l.b16 %v7109
        %v7575 = vunpack.c.h.b16 %v7109
        %v7576 = vunpack.c.l.b16 %v7110
        %v7577 = vunpack.c.h.b16 %v7110
        %v7578 = vunpack.c.l.b16 %v7111
        %v7579 = vunpack.c.h.b16 %v7111
        %v7580 = vunpack.c.l.b16 %v7112
        %v7581 = vunpack.c.h.b16 %v7112
        %v7582 = vunpack.c.l.b16 %v7113
        %v7583 = vunpack.c.h.b16 %v7113
        %v7584 = vunpack.c.l.b16 %v7114
        %v7585 = vunpack.c.h.b16 %v7114
        %v7586 = vunpack.c.l.b16 %v7115
        %v7587 = vunpack.c.h.b16 %v7115
        %v7588 = vunpack.c.l.b16 %v7116
        %v7589 = vunpack.c.h.b16 %v7116
        %v7590 = vunpack.c.l.b16 %v7117
        %v7591 = vunpack.c.h.b16 %v7117
        %v7592 = vunpack.c.l.b16 %v7118
        %v7593 = vunpack.c.h.b16 %v7118
        %v7594 = vunpack.c.l.b16 %v7119
        %v7595 = vunpack.c.h.b16 %v7119
        %v7596 = vunpack.c.l.b16 %v7120
        %v7597 = vunpack.c.h.b16 %v7120
        %v7598 = vunpack.c.l.b16 %v7121
        %v7599 = vunpack.c.h.b16 %v7121
        %v7600 = vunpack.c.l.b16 %v7122
        %v7601 = vunpack.c.h.b16 %v7122
        %v7602 = vunpack.c.l.b16 %v7123
        %v7603 = vunpack.c.h.b16 %v7123
        %v7604 = vunpack.c.l.b16 %v7124
        %v7605 = vunpack.c.h.b16 %v7124
        %v7606 = vunpack.c.l.b16 %v7125
        %v7607 = vunpack.c.h.b16 %v7125
        %v7608 = vunpack.c.l.b16 %v7126
        %v7609 = vunpack.c.h.b16 %v7126
        %v7610 = vunpack.c.l.b16 %v7127
        %v7611 = vunpack.c.h.b16 %v7127
        %v7612 = vunpack.c.l.b16 %v7128
        %v7613 = vunpack.c.h.b16 %v7128
        %v7614 = vunpack.c.l.b16 %v7129
        %v7615 = vunpack.c.h.b16 %v7129
        %v7616 = vunpack.c.l.b16 %v7130
        %v7617 = vunpack.c.h.b16 %v7130
        %v7618 = vunpack.c.l.b16 %v7131
        %v7619 = vunpack.c.h.b16 %v7131
        %v7620 = vunpack.c.l.b16 %v7132
        %v7621 = vunpack.c.h.b16 %v7132
        %v7622 = vunpack.c.l.b16 %v7133
        %v7623 = vunpack.c.h.b16 %v7133
        %v7624 = vunpack.c.l.b16 %v7134
        %v7625 = vunpack.c.h.b16 %v7134
        %v7626 = vunpack.c.l.b16 %v7135
        %v7627 = vunpack.c.h.b16 %v7135
        %v7628 = vunpack.c.l.b16 %v7136
        %v7629 = vunpack.c.h.b16 %v7136
        %v7630 = vunpack.c.l.b16 %v7137
        %v7631 = vunpack.c.h.b16 %v7137
        %v7632 = vunpack.c.l.b16 %v7138
        %v7633 = vunpack.c.h.b16 %v7138
        %v7634 = vunpack.c.l.b16 %v7139
        %v7635 = vunpack.c.h.b16 %v7139
        %v7636 = vunpack.c.l.b16 %v7140
        %v7637 = vunpack.c.h.b16 %v7140
        %v7638 = vunpack.c.l.b16 %v7141
        %v7639 = vunpack.c.h.b16 %v7141
        %v7640 = vunpack.c.l.b16 %v7142
        %v7641 = vunpack.c.h.b16 %v7142
        %v7642 = vunpack.c.l.b16 %v7143
        %v7643 = vunpack.c.h.b16 %v7143
        %v7644 = vunpack.c.l.b16 %v7144
        %v7645 = vunpack.c.h.b16 %v7144
        %v7646 = vunpack.c.l.b16 %v7145
        %v7647 = vunpack.c.h.b16 %v7145
        %v7648 = vunpack.c.l.b16 %v7146
        %v7649 = vunpack.c.h.b16 %v7146
        %v7650 = vunpack.c.l.b16 %v7147
        %v7651 = vunpack.c.h.b16 %v7147
        %v7652 = vpack.c.b16 %v7330, %v7316
        %v7653 = vpack.c.b16 %v7331, %v7317
        %v7654 = vpack.c.b16 %v7332, %v7318
        %v7655 = vpack.c.b16 %v7333, %v7319
        %v7656 = vpack.c.b16 %v7334, %v7320
        %v7657 = vpack.c.b16 %v7335, %v7321
        %v7658 = vpack.c.b16 %v7336, %v7322
        %v7659 = vpack.c.b16 %v7337, %v7323
        %v7660 = vpack.c.b16 %v7338, %v7324
        %v7661 = vpack.c.b16 %v7339, %v7325
        %v7662 = vpack.c.b16 %v7340, %v7326
        %v7663 = vpack.c.b16 %v7341, %v7327
        %v7664 = vpack.c.b16 %v7342, %v7328
        %v7665 = vpack.c.b16 %v7343, %v7329
        %v7666 = vpack.c.b16 %v7358, %v7344
        %v7667 = vpack.c.b16 %v7359, %v7345
        %v7668 = vpack.c.b16 %v7360, %v7346
        %v7669 = vpack.c.b16 %v7361, %v7347
        %v7670 = vpack.c.b16 %v7362, %v7348
        %v7671 = vpack.c.b16 %v7363, %v7349
        %v7672 = vpack.c.b16 %v7364, %v7350
        %v7673 = vpack.c.b16 %v7365, %v7351
        %v7674 = vpack.c.b16 %v7366, %v7352
        %v7675 = vpack.c.b16 %v7367, %v7353
        %v7676 = vpack.c.b16 %v7368, %v7354
        %v7677 = vpack.c.b16 %v7369, %v7355
        %v7678 = vpack.c.b16 %v7370, %v7356
        %v7679 = vpack.c.b16 %v7371, %v7357
        %v7680 = vpack.c.b16 %v7386, %v7372
        %v7681 = vpack.c.b16 %v7387, %v7373
        %v7682 = vpack.c.b16 %v7388, %v7374
        %v7683 = vpack.c.b16 %v7389, %v7375
        %v7684 = vpack.c.b16 %v7390, %v7376
        %v7685 = vpack.c.b16 %v7391, %v7377
        %v7686 = vpack.c.b16 %v7392, %v7378
        %v7687 = vpack.c.b16 %v7393, %v7379
        %v7688 = vpack.c.b16 %v7394, %v7380
        %v7689 = vpack.c.b16 %v7395, %v7381
        %v7690 = vpack.c.b16 %v7396, %v7382
        %v7691 = vpack.c.b16 %v7397, %v7383
        %v7692 = vpack.c.b16 %v7398, %v7384
        %v7693 = vpack.c.b16 %v7399, %v7385
        %v7694 = vpack.c.b16 %v7414, %v7400
        %v7695 = vpack.c.b16 %v7415, %v7401
        %v7696 = vpack.c.b16 %v7416, %v7402
        %v7697 = vpack.c.b16 %v7417, %v7403
        %v7698 = vpack.c.b16 %v7418, %v7404
        %v7699 = vpack.c.b16 %v7419, %v7405
        %v7700 = vpack.c.b16 %v7420, %v7406
        %v7701 = vpack.c.b16 %v7421, %v7407
        %v7702 = vpack.c.b16 %v7422, %v7408
        %v7703 = vpack.c.b16 %v7423, %v7409
        %v7704 = vpack.c.b16 %v7424, %v7410
        %v7705 = vpack.c.b16 %v7425, %v7411
        %v7706 = vpack.c.b16 %v7426, %v7412
        %v7707 = vpack.c.b16 %v7427, %v7413
        %v7708 = vpack.c.b16 %v7442, %v7428
        %v7709 = vpack.c.b16 %v7443, %v7429
        %v7710 = vpack.c.b16 %v7444, %v7430
        %v7711 = vpack.c.b16 %v7445, %v7431
        %v7712 = vpack.c.b16 %v7446, %v7432
        %v7713 = vpack.c.b16 %v7447, %v7433
        %v7714 = vpack.c.b16 %v7448, %v7434
        %v7715 = vpack.c.b16 %v7449, %v7435
        %v7716 = vpack.c.b16 %v7450, %v7436
        %v7717 = vpack.c.b16 %v7451, %v7437
        %v7718 = vpack.c.b16 %v7452, %v7438
        %v7719 = vpack.c.b16 %v7453, %v7439
        %v7720 = vpack.c.b16 %v7454, %v7440
        %v7721 = vpack.c.b16 %v7455, %v7441
        %v7722 = vpack.c.b16 %v7470, %v7456
        %v7723 = vpack.c.b16 %v7471, %v7457
        %v7724 = vpack.c.b16 %v7472, %v7458
        %v7725 = vpack.c.b16 %v7473, %v7459
        %v7726 = vpack.c.b16 %v7474, %v7460
        %v7727 = vpack.c.b16 %v7475, %v7461
        %v7728 = vpack.c.b16 %v7476, %v7462
        %v7729 = vpack.c.b16 %v7477, %v7463
        %v7730 = vpack.c.b16 %v7478, %v7464
        %v7731 = vpack.c.b16 %v7479, %v7465
        %v7732 = vpack.c.b16 %v7480, %v7466
        %v7733 = vpack.c.b16 %v7481, %v7467
        %v7734 = vpack.c.b16 %v7482, %v7468
        %v7735 = vpack.c.b16 %v7483, %v7469
        %v7736 = vpack.c.b16 %v7498, %v7484
        %v7737 = vpack.c.b16 %v7499, %v7485
        %v7738 = vpack.c.b16 %v7500, %v7486
        %v7739 = vpack.c.b16 %v7501, %v7487
        %v7740 = vpack.c.b16 %v7502, %v7488
        %v7741 = vpack.c.b16 %v7503, %v7489
        %v7742 = vpack.c.b16 %v7504, %v7490
        %v7743 = vpack.c.b16 %v7505, %v7491
        %v7744 = vpack.c.b16 %v7506, %v7492
        %v7745 = vpack.c.b16 %v7507, %v7493
        %v7746 = vpack.c.b16 %v7508, %v7494
        %v7747 = vpack.c.b16 %v7509, %v7495
        %v7748 = vpack.c.b16 %v7510, %v7496
        %v7749 = vpack.c.b16 %v7511, %v7497
        %v7750 = vpack.c.b16 %v7526, %v7512
        %v7751 = vpack.c.b16 %v7527, %v7513
        %v7752 = vpack.c.b16 %v7528, %v7514
        %v7753 = vpack.c.b16 %v7529, %v7515
        %v7754 = vpack.c.b16 %v7530, %v7516
        %v7755 = vpack.c.b16 %v7531, %v7517
        %v7756 = vpack.c.b16 %v7532, %v7518
        %v7757 = vpack.c.b16 %v7533, %v7519
        %v7758 = vpack.c.b16 %v7534, %v7520
        %v7759 = vpack.c.b16 %v7535, %v7521
        %v7760 = vpack.c.b16 %v7536, %v7522
        %v7761 = vpack.c.b16 %v7537, %v7523
        %v7762 = vpack.c.b16 %v7538, %v7524
        %v7763 = vpack.c.b16 %v7539, %v7525
        %v7764 = vpack.c.b16 %v7554, %v7540
        %v7765 = vpack.c.b16 %v7555, %v7541
        %v7766 = vpack.c.b16 %v7556, %v7542
        %v7767 = vpack.c.b16 %v7557, %v7543
        %v7768 = vpack.c.b16 %v7558, %v7544
        %v7769 = vpack.c.b16 %v7559, %v7545
        %v7770 = vpack.c.b16 %v7560, %v7546
        %v7771 = vpack.c.b16 %v7561, %v7547
        %v7772 = vpack.c.b16 %v7562, %v7548
        %v7773 = vpack.c.b16 %v7563, %v7549
        %v7774 = vpack.c.b16 %v7564, %v7550
        %v7775 = vpack.c.b16 %v7565, %v7551
        %v7776 = vpack.c.b16 %v7566, %v7552
        %v7777 = vpack.c.b16 %v7567, %v7553
        %v7778 = vpack.c.b16 %v7582, %v7568
        %v7779 = vpack.c.b16 %v7583, %v7569
        %v7780 = vpack.c.b16 %v7584, %v7570
        %v7781 = vpack.c.b16 %v7585, %v7571
        %v7782 = vpack.c.b16 %v7586, %v7572
        %v7783 = vpack.c.b16 %v7587, %v7573
        %v7784 = vpack.c.b16 %v7588, %v7574
        %v7785 = vpack.c.b16 %v7589, %v7575
        %v7786 = vpack.c.b16 %v7590, %v7576
        %v7787 = vpack.c.b16 %v7591, %v7577
        %v7788 = vpack.c.b16 %v7592, %v7578
        %v7789 = vpack.c.b16 %v7593, %v7579
        %v7790 = vpack.c.b16 %v7594, %v7580
        %v7791 = vpack.c.b16 %v7595, %v7581
        %v7792 = vpack.c.b16 %v7610, %v7596
        %v7793 = vpack.c.b16 %v7611, %v7597
        %v7794 = vpack.c.b16 %v7612, %v7598
        %v7795 = vpack.c.b16 %v7613, %v7599
        %v7796 = vpack.c.b16 %v7614, %v7600
        %v7797 = vpack.c.b16 %v7615, %v7601
        %v7798 = vpack.c.b16 %v7616, %v7602
        %v7799 = vpack.c.b16 %v7617, %v7603
        %v7800 = vpack.c.b16 %v7618, %v7604
        %v7801 = vpack.c.b16 %v7619, %v7605
        %v7802 = vpack.c.b16 %v7620, %v7606
        %v7803 = vpack.c.b16 %v7621, %v7607
        %v7804 = vpack.c.b16 %v7622, %v7608
        %v7805 = vpack.c.b16 %v7623, %v7609
        %v7806 = vpack.c.b16 %v7638, %v7624
        %v7807 = vpack.c.b16 %v7639, %v7625
        %v7808 = vpack.c.b16 %v7640, %v7626
        %v7809 = vpack.c.b16 %v7641, %v7627
        %v7810 = vpack.c.b16 %v7642, %v7628
        %v7811 = vpack.c.b16 %v7643, %v7629
        %v7812 = vpack.c.b16 %v7644, %v7630
        %v7813 = vpack.c.b16 %v7645, %v7631
        %v7814 = vpack.c.b16 %v7646, %v7632
        %v7815 = vpack.c.b16 %v7647, %v7633
        %v7816 = vpack.c.b16 %v7648, %v7634
        %v7817 = vpack.c.b16 %v7649, %v7635
        %v7818 = vpack.c.b16 %v7650, %v7636
        %v7819 = vpack.c.b16 %v7651, %v7637
        %v7989 = vsel %vm4774, %v6973, 0
        %v7992 = vsel %vm4774, %v6975, 0
        %v7995 = vsel %vm4774, %v6977, 0
        %v7998 = vsel %vm4774, %v6979, 0
        %8000 = vmatprep.subr.bf16.mxu0 %v7653
        %8001 = vmatpush1.bf16.msra.mxu0 %v7652
        %8002 = vmatprep.subr.bf16.mxu0 %v7667
        %8003 = vmatpush1.bf16.msra.mxu0 %v7666
        %8004 = vmatprep.subr.bf16.mxu0 %v7681
        %8005 = vmatpush1.bf16.msra.mxu0 %v7680
        %8006 = vmatprep.subr.bf16.mxu0 %v7695
        %8007 = vmatpush1.bf16.msra.mxu0 %v7694
        %8008 = vmatprep.subr.bf16.mxu0 %v7709
        %8009 = vmatpush1.bf16.msra.mxu0 %v7708
        %8010 = vmatprep.subr.bf16.mxu0 %v7723
        %8011 = vmatpush1.bf16.msra.mxu0 %v7722
        %8012 = vmatprep.subr.bf16.mxu0 %v7737
        %8013 = vmatpush1.bf16.msra.mxu0 %v7736
        %8014 = vmatprep.subr.bf16.mxu0 %v7751
        %8015 = vmatpush1.bf16.msra.mxu0 %v7750
        %8016 = vmatprep.subr.bf16.mxu0 %v7765
        %8017 = vmatpush1.bf16.msra.mxu0 %v7764
        %8018 = vmatprep.subr.bf16.mxu0 %v7779
        %8019 = vmatpush1.bf16.msra.mxu0 %v7778
        %8020 = vmatprep.subr.bf16.mxu0 %v7793
        %8021 = vmatpush1.bf16.msra.mxu0 %v7792
        %8022 = vmatprep.subr.bf16.mxu0 %v7807
        %8023 = vmatpush1.bf16.msra.mxu0 %v7806
        %8024 = vmatprep.subr.bf16.mxu0 0
        %8025 = vmatpush1.bf16.msra.mxu0 0
        %8026 = vmatprep.subr.bf16.mxu0 0
        %8027 = vmatpush1.bf16.msra.mxu0 0
        %8028 = vmatprep.subr.bf16.mxu0 0
        %8029 = vmatpush1.bf16.msra.mxu0 0
        %8030 = vmatprep.subr.bf16.mxu0 0
        %8031 = vmatpush1.bf16.msra.mxu0 0
        %8032 = vmatprep.mubr.bf16.mxu0 %v7989
        %8033 = vmatmul.mubr.bf16.gmra.mrb[0].mxu0 %v6972
        %v8034 = vpop.f32.mrb[0].mxu0
        %v8035 = vadd.f32 0.0, %v8034
        %v8036 = vpop.f32.mrb[0].mxu0
        %v8037 = vadd.f32 0.0, %v8036
        %v8038 = vpop.f32.mrb[0].mxu0
        %v8039 = vadd.f32 0.0, %v8038
        %v8040 = vpop.f32.mrb[0].mxu0
        %v8041 = vadd.f32 0.0, %v8040
        %8042 = vmatprep.mubr.bf16.mxu0 %v7992
        %8043 = vmatmul.mubr.bf16.gmra.mrb[0].mxu0 %v6974
        %v8044 = vpop.f32.mrb[0].mxu0
        %v8045 = vadd.f32 0.0, %v8044
        %v8046 = vpop.f32.mrb[0].mxu0
        %v8047 = vadd.f32 0.0, %v8046
        %v8048 = vpop.f32.mrb[0].mxu0
        %v8049 = vadd.f32 0.0, %v8048
        %v8050 = vpop.f32.mrb[0].mxu0
        %v8051 = vadd.f32 0.0, %v8050
        %8052 = vmatprep.mubr.bf16.mxu0 %v7995
        %8053 = vmatmul.mubr.bf16.gmra.mrb[0].mxu0 %v6976
        %v8054 = vpop.f32.mrb[0].mxu0
        %v8055 = vadd.f32 0.0, %v8054
        %v8056 = vpop.f32.mrb[0].mxu0
        %v8057 = vadd.f32 0.0, %v8056
        %v8058 = vpop.f32.mrb[0].mxu0
        %v8059 = vadd.f32 0.0, %v8058
        %v8060 = vpop.f32.mrb[0].mxu0
        %v8061 = vadd.f32 0.0, %v8060
        %8062 = vmatprep.mubr.bf16.mxu0 %v7998
        %8063 = vmatmul.mubr.bf16.gmra.mrb[0].mxu0 %v6978
        %v8064 = vpop.f32.mrb[0].mxu0
        %v8065 = vadd.f32 0.0, %v8064
        %v8066 = vpop.f32.mrb[0].mxu0
        %v8067 = vadd.f32 0.0, %v8066
        %v8068 = vpop.f32.mrb[0].mxu0
        %v8069 = vadd.f32 0.0, %v8068
        %v8070 = vpop.f32.mrb[0].mxu0
        %v8071 = vadd.f32 0.0, %v8070
        %8072 = vdwg.mxu0
        %8073 = vmatprep.subr.bf16.mxu0 %v7655
        %8074 = vmatpush1.bf16.msra.mxu0 %v7654
        %8075 = vmatprep.subr.bf16.mxu0 %v7669
        %8076 = vmatpush1.bf16.msra.mxu0 %v7668
        %8077 = vmatprep.subr.bf16.mxu0 %v7683
        %8078 = vmatpush1.bf16.msra.mxu0 %v7682
        %8079 = vmatprep.subr.bf16.mxu0 %v7697
        %8080 = vmatpush1.bf16.msra.mxu0 %v7696
        %8081 = vmatprep.subr.bf16.mxu0 %v7711
        %8082 = vmatpush1.bf16.msra.mxu0 %v7710
        %8083 = vmatprep.subr.bf16.mxu0 %v7725
        %8084 = vmatpush1.bf16.msra.mxu0 %v7724
        %8085 = vmatprep.subr.bf16.mxu0 %v7739
        %8086 = vmatpush1.bf16.msra.mxu0 %v7738
        %8087 = vmatprep.subr.bf16.mxu0 %v7753
        %8088 = vmatpush1.bf16.msra.mxu0 %v7752
        %8089 = vmatprep.subr.bf16.mxu0 %v7767
        %8090 = vmatpush1.bf16.msra.mxu0 %v7766
        %8091 = vmatprep.subr.bf16.mxu0 %v7781
        %8092 = vmatpush1.bf16.msra.mxu0 %v7780
        %8093 = vmatprep.subr.bf16.mxu0 %v7795
        %8094 = vmatpush1.bf16.msra.mxu0 %v7794
        %8095 = vmatprep.subr.bf16.mxu0 %v7809
        %8096 = vmatpush1.bf16.msra.mxu0 %v7808
        %8097 = vmatprep.subr.bf16.mxu0 0
        %8098 = vmatpush1.bf16.msra.mxu0 0
        %8099 = vmatprep.subr.bf16.mxu0 0
        %8100 = vmatpush1.bf16.msra.mxu0 0
        %8101 = vmatprep.subr.bf16.mxu0 0
        %8102 = vmatpush1.bf16.msra.mxu0 0
        %8103 = vmatprep.subr.bf16.mxu0 0
        %8104 = vmatpush1.bf16.msra.mxu0 0
        %8105 = vmatprep.mubr.bf16.mxu0 %v7989
        %8106 = vmatmul.mubr.bf16.gmra.mrb[0].mxu0 %v6972
        %v8107 = vpop.f32.mrb[0].mxu0
        %v8108 = vadd.f32 0.0, %v8107
        %v8109 = vpop.f32.mrb[0].mxu0
        %v8110 = vadd.f32 0.0, %v8109
        %v8111 = vpop.f32.mrb[0].mxu0
        %v8112 = vadd.f32 0.0, %v8111
        %v8113 = vpop.f32.mrb[0].mxu0
        %v8114 = vadd.f32 0.0, %v8113
        %8115 = vmatprep.mubr.bf16.mxu0 %v7992
        %8116 = vmatmul.mubr.bf16.gmra.mrb[0].mxu0 %v6974
        %v8117 = vpop.f32.mrb[0].mxu0
        %v8118 = vadd.f32 0.0, %v8117
        %v8119 = vpop.f32.mrb[0].mxu0
        %v8120 = vadd.f32 0.0, %v8119
        %v8121 = vpop.f32.mrb[0].mxu0
        %v8122 = vadd.f32 0.0, %v8121
        %v8123 = vpop.f32.mrb[0].mxu0
        %v8124 = vadd.f32 0.0, %v8123
        %8125 = vmatprep.mubr.bf16.mxu0 %v7995
        %8126 = vmatmul.mubr.bf16.gmra.mrb[0].mxu0 %v6976
        %v8127 = vpop.f32.mrb[0].mxu0
        %v8128 = vadd.f32 0.0, %v8127
        %v8129 = vpop.f32.mrb[0].mxu0
        %v8130 = vadd.f32 0.0, %v8129
        %v8131 = vpop.f32.mrb[0].mxu0
        %v8132 = vadd.f32 0.0, %v8131
        %v8133 = vpop.f32.mrb[0].mxu0
        %v8134 = vadd.f32 0.0, %v8133
        %8135 = vmatprep.mubr.bf16.mxu0 %v7998
        %8136 = vmatmul.mubr.bf16.gmra.mrb[0].mxu0 %v6978
        %v8137 = vpop.f32.mrb[0].mxu0
        %v8138 = vadd.f32 0.0, %v8137
        %v8139 = vpop.f32.mrb[0].mxu0
        %v8140 = vadd.f32 0.0, %v8139
        %v8141 = vpop.f32.mrb[0].mxu0
        %v8142 = vadd.f32 0.0, %v8141
        %v8143 = vpop.f32.mrb[0].mxu0
        %v8144 = vadd.f32 0.0, %v8143
        %8145 = vdwg.mxu0
        %8146 = vmatprep.subr.bf16.mxu0 %v7657
        %8147 = vmatpush1.bf16.msra.mxu0 %v7656
        %8148 = vmatprep.subr.bf16.mxu0 %v7671
        %8149 = vmatpush1.bf16.msra.mxu0 %v7670
        %8150 = vmatprep.subr.bf16.mxu0 %v7685
        %8151 = vmatpush1.bf16.msra.mxu0 %v7684
        %8152 = vmatprep.subr.bf16.mxu0 %v7699
        %8153 = vmatpush1.bf16.msra.mxu0 %v7698
        %8154 = vmatprep.subr.bf16.mxu0 %v7713
        %8155 = vmatpush1.bf16.msra.mxu0 %v7712
        %8156 = vmatprep.subr.bf16.mxu0 %v7727
        %8157 = vmatpush1.bf16.msra.mxu0 %v7726
        %8158 = vmatprep.subr.bf16.mxu0 %v7741
        %8159 = vmatpush1.bf16.msra.mxu0 %v7740
        %8160 = vmatprep.subr.bf16.mxu0 %v7755
        %8161 = vmatpush1.bf16.msra.mxu0 %v7754
        %8162 = vmatprep.subr.bf16.mxu0 %v7769
        %8163 = vmatpush1.bf16.msra.mxu0 %v7768
        %8164 = vmatprep.subr.bf16.mxu0 %v7783
        %8165 = vmatpush1.bf16.msra.mxu0 %v7782
        %8166 = vmatprep.subr.bf16.mxu0 %v7797
        %8167 = vmatpush1.bf16.msra.mxu0 %v7796
        %8168 = vmatprep.subr.bf16.mxu0 %v7811
        %8169 = vmatpush1.bf16.msra.mxu0 %v7810
        %8170 = vmatprep.subr.bf16.mxu0 0
        %8171 = vmatpush1.bf16.msra.mxu0 0
        %8172 = vmatprep.subr.bf16.mxu0 0
        %8173 = vmatpush1.bf16.msra.mxu0 0
        %8174 = vmatprep.subr.bf16.mxu0 0
        %8175 = vmatpush1.bf16.msra.mxu0 0
        %8176 = vmatprep.subr.bf16.mxu0 0
        %8177 = vmatpush1.bf16.msra.mxu0 0
        %8178 = vmatprep.mubr.bf16.mxu0 %v7989
        %8179 = vmatmul.mubr.bf16.gmra.mrb[0].mxu0 %v6972
        %v8180 = vpop.f32.mrb[0].mxu0
        %v8181 = vadd.f32 0.0, %v8180
        %v8182 = vpop.f32.mrb[0].mxu0
        %v8183 = vadd.f32 0.0, %v8182
        %v8184 = vpop.f32.mrb[0].mxu0
        %v8185 = vadd.f32 0.0, %v8184
        %v8186 = vpop.f32.mrb[0].mxu0
        %v8187 = vadd.f32 0.0, %v8186
        %8188 = vmatprep.mubr.bf16.mxu0 %v7992
        %8189 = vmatmul.mubr.bf16.gmra.mrb[0].mxu0 %v6974
        %v8190 = vpop.f32.mrb[0].mxu0
        %v8191 = vadd.f32 0.0, %v8190
        %v8192 = vpop.f32.mrb[0].mxu0
        %v8193 = vadd.f32 0.0, %v8192
        %v8194 = vpop.f32.mrb[0].mxu0
        %v8195 = vadd.f32 0.0, %v8194
        %v8196 = vpop.f32.mrb[0].mxu0
        %v8197 = vadd.f32 0.0, %v8196
        %8198 = vmatprep.mubr.bf16.mxu0 %v7995
        %8199 = vmatmul.mubr.bf16.gmra.mrb[0].mxu0 %v6976
        %v8200 = vpop.f32.mrb[0].mxu0
        %v8201 = vadd.f32 0.0, %v8200
        %v8202 = vpop.f32.mrb[0].mxu0
        %v8203 = vadd.f32 0.0, %v8202
        %v8204 = vpop.f32.mrb[0].mxu0
        %v8205 = vadd.f32 0.0, %v8204
        %v8206 = vpop.f32.mrb[0].mxu0
        %v8207 = vadd.f32 0.0, %v8206
        %8208 = vmatprep.mubr.bf16.mxu0 %v7998
        %8209 = vmatmul.mubr.bf16.gmra.mrb[0].mxu0 %v6978
        %v8210 = vpop.f32.mrb[0].mxu0
        %v8211 = vadd.f32 0.0, %v8210
        %v8212 = vpop.f32.mrb[0].mxu0
        %v8213 = vadd.f32 0.0, %v8212
        %v8214 = vpop.f32.mrb[0].mxu0
        %v8215 = vadd.f32 0.0, %v8214
        %v8216 = vpop.f32.mrb[0].mxu0
        %v8217 = vadd.f32 0.0, %v8216
        %8218 = vdwg.mxu0
        %8219 = vmatprep.subr.bf16.mxu0 %v7659
        %8220 = vmatpush1.bf16.msra.mxu0 %v7658
        %8221 = vmatprep.subr.bf16.mxu0 %v7673
        %8222 = vmatpush1.bf16.msra.mxu0 %v7672
        %8223 = vmatprep.subr.bf16.mxu0 %v7687
        %8224 = vmatpush1.bf16.msra.mxu0 %v7686
        %8225 = vmatprep.subr.bf16.mxu0 %v7701
        %8226 = vmatpush1.bf16.msra.mxu0 %v7700
        %8227 = vmatprep.subr.bf16.mxu0 %v7715
        %8228 = vmatpush1.bf16.msra.mxu0 %v7714
        %8229 = vmatprep.subr.bf16.mxu0 %v7729
        %8230 = vmatpush1.bf16.msra.mxu0 %v7728
        %8231 = vmatprep.subr.bf16.mxu0 %v7743
        %8232 = vmatpush1.bf16.msra.mxu0 %v7742
        %8233 = vmatprep.subr.bf16.mxu0 %v7757
        %8234 = vmatpush1.bf16.msra.mxu0 %v7756
        %8235 = vmatprep.subr.bf16.mxu0 %v7771
        %8236 = vmatpush1.bf16.msra.mxu0 %v7770
        %8237 = vmatprep.subr.bf16.mxu0 %v7785
        %8238 = vmatpush1.bf16.msra.mxu0 %v7784
        %8239 = vmatprep.subr.bf16.mxu0 %v7799
        %8240 = vmatpush1.bf16.msra.mxu0 %v7798
        %8241 = vmatprep.subr.bf16.mxu0 %v7813
        %8242 = vmatpush1.bf16.msra.mxu0 %v7812
        %8243 = vmatprep.subr.bf16.mxu0 0
        %8244 = vmatpush1.bf16.msra.mxu0 0
        %8245 = vmatprep.subr.bf16.mxu0 0
        %8246 = vmatpush1.bf16.msra.mxu0 0
        %8247 = vmatprep.subr.bf16.mxu0 0
        %8248 = vmatpush1.bf16.msra.mxu0 0
        %8249 = vmatprep.subr.bf16.mxu0 0
        %8250 = vmatpush1.bf16.msra.mxu0 0
        %8251 = vmatprep.mubr.bf16.mxu0 %v7989
        %8252 = vmatmul.mubr.bf16.gmra.mrb[0].mxu0 %v6972
        %v8253 = vpop.f32.mrb[0].mxu0
        %v8254 = vadd.f32 0.0, %v8253
        %v8255 = vpop.f32.mrb[0].mxu0
        %v8256 = vadd.f32 0.0, %v8255
        %v8257 = vpop.f32.mrb[0].mxu0
        %v8258 = vadd.f32 0.0, %v8257
        %v8259 = vpop.f32.mrb[0].mxu0
        %v8260 = vadd.f32 0.0, %v8259
        %8261 = vmatprep.mubr.bf16.mxu0 %v7992
        %8262 = vmatmul.mubr.bf16.gmra.mrb[0].mxu0 %v6974
        %v8263 = vpop.f32.mrb[0].mxu0
        %v8264 = vadd.f32 0.0, %v8263
        %v8265 = vpop.f32.mrb[0].mxu0
        %v8266 = vadd.f32 0.0, %v8265
        %v8267 = vpop.f32.mrb[0].mxu0
        %v8268 = vadd.f32 0.0, %v8267
        %v8269 = vpop.f32.mrb[0].mxu0
        %v8270 = vadd.f32 0.0, %v8269
        %8271 = vmatprep.mubr.bf16.mxu0 %v7995
        %8272 = vmatmul.mubr.bf16.gmra.mrb[0].mxu0 %v6976
        %v8273 = vpop.f32.mrb[0].mxu0
        %v8274 = vadd.f32 0.0, %v8273
        %v8275 = vpop.f32.mrb[0].mxu0
        %v8276 = vadd.f32 0.0, %v8275
        %v8277 = vpop.f32.mrb[0].mxu0
        %v8278 = vadd.f32 0.0, %v8277
        %v8279 = vpop.f32.mrb[0].mxu0
        %v8280 = vadd.f32 0.0, %v8279
        %8281 = vmatprep.mubr.bf16.mxu0 %v7998
        %8282 = vmatmul.mubr.bf16.gmra.mrb[0].mxu0 %v6978
        %v8283 = vpop.f32.mrb[0].mxu0
        %v8284 = vadd.f32 0.0, %v8283
        %v8285 = vpop.f32.mrb[0].mxu0
        %v8286 = vadd.f32 0.0, %v8285
        %v8287 = vpop.f32.mrb[0].mxu0
        %v8288 = vadd.f32 0.0, %v8287
        %v8289 = vpop.f32.mrb[0].mxu0
        %v8290 = vadd.f32 0.0, %v8289
        %8291 = vdwg.mxu0
        %8292 = vmatprep.subr.bf16.mxu0 %v7661
        %8293 = vmatpush1.bf16.msra.mxu0 %v7660
        %8294 = vmatprep.subr.bf16.mxu0 %v7675
        %8295 = vmatpush1.bf16.msra.mxu0 %v7674
        %8296 = vmatprep.subr.bf16.mxu0 %v7689
        %8297 = vmatpush1.bf16.msra.mxu0 %v7688
        %8298 = vmatprep.subr.bf16.mxu0 %v7703
        %8299 = vmatpush1.bf16.msra.mxu0 %v7702
        %8300 = vmatprep.subr.bf16.mxu0 %v7717
        %8301 = vmatpush1.bf16.msra.mxu0 %v7716
        %8302 = vmatprep.subr.bf16.mxu0 %v7731
        %8303 = vmatpush1.bf16.msra.mxu0 %v7730
        %8304 = vmatprep.subr.bf16.mxu0 %v7745
        %8305 = vmatpush1.bf16.msra.mxu0 %v7744
        %8306 = vmatprep.subr.bf16.mxu0 %v7759
        %8307 = vmatpush1.bf16.msra.mxu0 %v7758
        %8308 = vmatprep.subr.bf16.mxu0 %v7773
        %8309 = vmatpush1.bf16.msra.mxu0 %v7772
        %8310 = vmatprep.subr.bf16.mxu0 %v7787
        %8311 = vmatpush1.bf16.msra.mxu0 %v7786
        %8312 = vmatprep.subr.bf16.mxu0 %v7801
        %8313 = vmatpush1.bf16.msra.mxu0 %v7800
        %8314 = vmatprep.subr.bf16.mxu0 %v7815
        %8315 = vmatpush1.bf16.msra.mxu0 %v7814
        %8316 = vmatprep.subr.bf16.mxu0 0
        %8317 = vmatpush1.bf16.msra.mxu0 0
        %8318 = vmatprep.subr.bf16.mxu0 0
        %8319 = vmatpush1.bf16.msra.mxu0 0
        %8320 = vmatprep.subr.bf16.mxu0 0
        %8321 = vmatpush1.bf16.msra.mxu0 0
        %8322 = vmatprep.subr.bf16.mxu0 0
        %8323 = vmatpush1.bf16.msra.mxu0 0
        %8324 = vmatprep.mubr.bf16.mxu0 %v7989
        %8325 = vmatmul.mubr.bf16.gmra.mrb[0].mxu0 %v6972
        %v8326 = vpop.f32.mrb[0].mxu0
        %v8327 = vadd.f32 0.0, %v8326
        %v8328 = vpop.f32.mrb[0].mxu0
        %v8329 = vadd.f32 0.0, %v8328
        %v8330 = vpop.f32.mrb[0].mxu0
        %v8331 = vadd.f32 0.0, %v8330
        %v8332 = vpop.f32.mrb[0].mxu0
        %v8333 = vadd.f32 0.0, %v8332
        %8334 = vmatprep.mubr.bf16.mxu0 %v7992
        %8335 = vmatmul.mubr.bf16.gmra.mrb[0].mxu0 %v6974
        %v8336 = vpop.f32.mrb[0].mxu0
        %v8337 = vadd.f32 0.0, %v8336
        %v8338 = vpop.f32.mrb[0].mxu0
        %v8339 = vadd.f32 0.0, %v8338
        %v8340 = vpop.f32.mrb[0].mxu0
        %v8341 = vadd.f32 0.0, %v8340
        %v8342 = vpop.f32.mrb[0].mxu0
        %v8343 = vadd.f32 0.0, %v8342
        %8344 = vmatprep.mubr.bf16.mxu0 %v7995
        %8345 = vmatmul.mubr.bf16.gmra.mrb[0].mxu0 %v6976
        %v8346 = vpop.f32.mrb[0].mxu0
        %v8347 = vadd.f32 0.0, %v8346
        %v8348 = vpop.f32.mrb[0].mxu0
        %v8349 = vadd.f32 0.0, %v8348
        %v8350 = vpop.f32.mrb[0].mxu0
        %v8351 = vadd.f32 0.0, %v8350
        %v8352 = vpop.f32.mrb[0].mxu0
        %v8353 = vadd.f32 0.0, %v8352
        %8354 = vmatprep.mubr.bf16.mxu0 %v7998
        %8355 = vmatmul.mubr.bf16.gmra.mrb[0].mxu0 %v6978
        %v8356 = vpop.f32.mrb[0].mxu0
        %v8357 = vadd.f32 0.0, %v8356
        %v8358 = vpop.f32.mrb[0].mxu0
        %v8359 = vadd.f32 0.0, %v8358
        %v8360 = vpop.f32.mrb[0].mxu0
        %v8361 = vadd.f32 0.0, %v8360
        %v8362 = vpop.f32.mrb[0].mxu0
        %v8363 = vadd.f32 0.0, %v8362
        %8364 = vdwg.mxu0
        %8365 = vmatprep.subr.bf16.mxu0 %v7663
        %8366 = vmatpush1.bf16.msra.mxu0 %v7662
        %8367 = vmatprep.subr.bf16.mxu0 %v7677
        %8368 = vmatpush1.bf16.msra.mxu0 %v7676
        %8369 = vmatprep.subr.bf16.mxu0 %v7691
        %8370 = vmatpush1.bf16.msra.mxu0 %v7690
        %8371 = vmatprep.subr.bf16.mxu0 %v7705
        %8372 = vmatpush1.bf16.msra.mxu0 %v7704
        %8373 = vmatprep.subr.bf16.mxu0 %v7719
        %8374 = vmatpush1.bf16.msra.mxu0 %v7718
        %8375 = vmatprep.subr.bf16.mxu0 %v7733
        %8376 = vmatpush1.bf16.msra.mxu0 %v7732
        %8377 = vmatprep.subr.bf16.mxu0 %v7747
        %8378 = vmatpush1.bf16.msra.mxu0 %v7746
        %8379 = vmatprep.subr.bf16.mxu0 %v7761
        %8380 = vmatpush1.bf16.msra.mxu0 %v7760
        %8381 = vmatprep.subr.bf16.mxu0 %v7775
        %8382 = vmatpush1.bf16.msra.mxu0 %v7774
        %8383 = vmatprep.subr.bf16.mxu0 %v7789
        %8384 = vmatpush1.bf16.msra.mxu0 %v7788
        %8385 = vmatprep.subr.bf16.mxu0 %v7803
        %8386 = vmatpush1.bf16.msra.mxu0 %v7802
        %8387 = vmatprep.subr.bf16.mxu0 %v7817
        %8388 = vmatpush1.bf16.msra.mxu0 %v7816
        %8389 = vmatprep.subr.bf16.mxu0 0
        %8390 = vmatpush1.bf16.msra.mxu0 0
        %8391 = vmatprep.subr.bf16.mxu0 0
        %8392 = vmatpush1.bf16.msra.mxu0 0
        %8393 = vmatprep.subr.bf16.mxu0 0
        %8394 = vmatpush1.bf16.msra.mxu0 0
        %8395 = vmatprep.subr.bf16.mxu0 0
        %8396 = vmatpush1.bf16.msra.mxu0 0
        %8397 = vmatprep.mubr.bf16.mxu0 %v7989
        %8398 = vmatmul.mubr.bf16.gmra.mrb[0].mxu0 %v6972
        %v8399 = vpop.f32.mrb[0].mxu0
        %v8400 = vadd.f32 0.0, %v8399
        %v8401 = vpop.f32.mrb[0].mxu0
        %v8402 = vadd.f32 0.0, %v8401
        %v8403 = vpop.f32.mrb[0].mxu0
        %v8404 = vadd.f32 0.0, %v8403
        %v8405 = vpop.f32.mrb[0].mxu0
        %v8406 = vadd.f32 0.0, %v8405
        %8407 = vmatprep.mubr.bf16.mxu0 %v7992
        %8408 = vmatmul.mubr.bf16.gmra.mrb[0].mxu0 %v6974
        %v8409 = vpop.f32.mrb[0].mxu0
        %v8410 = vadd.f32 0.0, %v8409
        %v8411 = vpop.f32.mrb[0].mxu0
        %v8412 = vadd.f32 0.0, %v8411
        %v8413 = vpop.f32.mrb[0].mxu0
        %v8414 = vadd.f32 0.0, %v8413
        %v8415 = vpop.f32.mrb[0].mxu0
        %v8416 = vadd.f32 0.0, %v8415
        %8417 = vmatprep.mubr.bf16.mxu0 %v7995
        %8418 = vmatmul.mubr.bf16.gmra.mrb[0].mxu0 %v6976
        %v8419 = vpop.f32.mrb[0].mxu0
        %v8420 = vadd.f32 0.0, %v8419
        %v8421 = vpop.f32.mrb[0].mxu0
        %v8422 = vadd.f32 0.0, %v8421
        %v8423 = vpop.f32.mrb[0].mxu0
        %v8424 = vadd.f32 0.0, %v8423
        %v8425 = vpop.f32.mrb[0].mxu0
        %v8426 = vadd.f32 0.0, %v8425
        %8427 = vmatprep.mubr.bf16.mxu0 %v7998
        %8428 = vmatmul.mubr.bf16.gmra.mrb[0].mxu0 %v6978
        %v8429 = vpop.f32.mrb[0].mxu0
        %v8430 = vadd.f32 0.0, %v8429
        %v8431 = vpop.f32.mrb[0].mxu0
        %v8432 = vadd.f32 0.0, %v8431
        %v8433 = vpop.f32.mrb[0].mxu0
        %v8434 = vadd.f32 0.0, %v8433
        %v8435 = vpop.f32.mrb[0].mxu0
        %v8436 = vadd.f32 0.0, %v8435
        %8437 = vdwg.mxu0
        %8438 = vmatprep.subr.bf16.mxu0 %v7665
        %8439 = vmatpush1.bf16.msra.mxu0 %v7664
        %8440 = vmatprep.subr.bf16.mxu0 %v7679
        %8441 = vmatpush1.bf16.msra.mxu0 %v7678
        %8442 = vmatprep.subr.bf16.mxu0 %v7693
        %8443 = vmatpush1.bf16.msra.mxu0 %v7692
        %8444 = vmatprep.subr.bf16.mxu0 %v7707
        %8445 = vmatpush1.bf16.msra.mxu0 %v7706
        %8446 = vmatprep.subr.bf16.mxu0 %v7721
        %8447 = vmatpush1.bf16.msra.mxu0 %v7720
        %8448 = vmatprep.subr.bf16.mxu0 %v7735
        %8449 = vmatpush1.bf16.msra.mxu0 %v7734
        %8450 = vmatprep.subr.bf16.mxu0 %v7749
        %8451 = vmatpush1.bf16.msra.mxu0 %v7748
        %8452 = vmatprep.subr.bf16.mxu0 %v7763
        %8453 = vmatpush1.bf16.msra.mxu0 %v7762
        %8454 = vmatprep.subr.bf16.mxu0 %v7777
        %8455 = vmatpush1.bf16.msra.mxu0 %v7776
        %8456 = vmatprep.subr.bf16.mxu0 %v7791
        %8457 = vmatpush1.bf16.msra.mxu0 %v7790
        %8458 = vmatprep.subr.bf16.mxu0 %v7805
        %8459 = vmatpush1.bf16.msra.mxu0 %v7804
        %8460 = vmatprep.subr.bf16.mxu0 %v7819
        %8461 = vmatpush1.bf16.msra.mxu0 %v7818
        %8462 = vmatprep.subr.bf16.mxu0 0
        %8463 = vmatpush1.bf16.msra.mxu0 0
        %8464 = vmatprep.subr.bf16.mxu0 0
        %8465 = vmatpush1.bf16.msra.mxu0 0
        %8466 = vmatprep.subr.bf16.mxu0 0
        %8467 = vmatpush1.bf16.msra.mxu0 0
        %8468 = vmatprep.subr.bf16.mxu0 0
        %8469 = vmatpush1.bf16.msra.mxu0 0
        %8470 = vmatprep.mubr.bf16.mxu0 %v7989
        %8471 = vmatmul.mubr.bf16.gmra.mrb[0].mxu0 %v6972
        %v8472 = vpop.f32.mrb[0].mxu0
        %v8473 = vadd.f32 0.0, %v8472
        %v8474 = vpop.f32.mrb[0].mxu0
        %v8475 = vadd.f32 0.0, %v8474
        %v8476 = vpop.f32.mrb[0].mxu0
        %v8477 = vadd.f32 0.0, %v8476
        %v8478 = vpop.f32.mrb[0].mxu0
        %v8479 = vadd.f32 0.0, %v8478
        %8480 = vmatprep.mubr.bf16.mxu0 %v7992
        %8481 = vmatmul.mubr.bf16.gmra.mrb[0].mxu0 %v6974
        %v8482 = vpop.f32.mrb[0].mxu0
        %v8483 = vadd.f32 0.0, %v8482
        %v8484 = vpop.f32.mrb[0].mxu0
        %v8485 = vadd.f32 0.0, %v8484
        %v8486 = vpop.f32.mrb[0].mxu0
        %v8487 = vadd.f32 0.0, %v8486
        %v8488 = vpop.f32.mrb[0].mxu0
        %v8489 = vadd.f32 0.0, %v8488
        %8490 = vmatprep.mubr.bf16.mxu0 %v7995
        %8491 = vmatmul.mubr.bf16.gmra.mrb[0].mxu0 %v6976
        %v8492 = vpop.f32.mrb[0].mxu0
        %v8493 = vadd.f32 0.0, %v8492
        %v8494 = vpop.f32.mrb[0].mxu0
        %v8495 = vadd.f32 0.0, %v8494
        %v8496 = vpop.f32.mrb[0].mxu0
        %v8497 = vadd.f32 0.0, %v8496
        %v8498 = vpop.f32.mrb[0].mxu0
        %v8499 = vadd.f32 0.0, %v8498
        %8500 = vmatprep.mubr.bf16.mxu0 %v7998
        %8501 = vmatmul.mubr.bf16.gmra.mrb[0].mxu0 %v6978
        %v8502 = vpop.f32.mrb[0].mxu0
        %v8503 = vadd.f32 0.0, %v8502
        %v8504 = vpop.f32.mrb[0].mxu0
        %v8505 = vadd.f32 0.0, %v8504
        %v8506 = vpop.f32.mrb[0].mxu0
        %v8507 = vadd.f32 0.0, %v8506
        %v8508 = vpop.f32.mrb[0].mxu0
        %v8509 = vadd.f32 0.0, %v8508
        %8510 = vdwg.mxu0
        %v8679 = vunpack.c.l.b16 %v6804
        %v8680 = vunpack.c.h.b16 %v6804
        %v8681 = vunpack.c.l.b16 %v6805
        %v8682 = vunpack.c.h.b16 %v6805
        %v8683 = vunpack.c.l.b16 %v6806
        %v8684 = vunpack.c.h.b16 %v6806
        %v8685 = vunpack.c.l.b16 %v6807
        %v8686 = vunpack.c.h.b16 %v6807
        %v8687 = vunpack.c.l.b16 %v6808
        %v8688 = vunpack.c.h.b16 %v6808
        %v8689 = vunpack.c.l.b16 %v6809
        %v8690 = vunpack.c.h.b16 %v6809
        %v8691 = vunpack.c.l.b16 %v6810
        %v8692 = vunpack.c.h.b16 %v6810
        %v8693 = vunpack.c.l.b16 %v6811
        %v8694 = vunpack.c.h.b16 %v6811
        %v8695 = vunpack.c.l.b16 %v6812
        %v8696 = vunpack.c.h.b16 %v6812
        %v8697 = vunpack.c.l.b16 %v6813
        %v8698 = vunpack.c.h.b16 %v6813
        %v8699 = vunpack.c.l.b16 %v6814
        %v8700 = vunpack.c.h.b16 %v6814
        %v8701 = vunpack.c.l.b16 %v6815
        %v8702 = vunpack.c.h.b16 %v6815
        %v8703 = vunpack.c.l.b16 %v6816
        %v8704 = vunpack.c.h.b16 %v6816
        %v8705 = vunpack.c.l.b16 %v6817
        %v8706 = vunpack.c.h.b16 %v6817
        %v8707 = vunpack.c.l.b16 %v6818
        %v8708 = vunpack.c.h.b16 %v6818
        %v8709 = vunpack.c.l.b16 %v6819
        %v8710 = vunpack.c.h.b16 %v6819
        %v8711 = vunpack.c.l.b16 %v6820
        %v8712 = vunpack.c.h.b16 %v6820
        %v8713 = vunpack.c.l.b16 %v6821
        %v8714 = vunpack.c.h.b16 %v6821
        %v8715 = vunpack.c.l.b16 %v6822
        %v8716 = vunpack.c.h.b16 %v6822
        %v8717 = vunpack.c.l.b16 %v6823
        %v8718 = vunpack.c.h.b16 %v6823
        %v8719 = vunpack.c.l.b16 %v6824
        %v8720 = vunpack.c.h.b16 %v6824
        %v8721 = vunpack.c.l.b16 %v6825
        %v8722 = vunpack.c.h.b16 %v6825
        %v8723 = vunpack.c.l.b16 %v6826
        %v8724 = vunpack.c.h.b16 %v6826
        %v8725 = vunpack.c.l.b16 %v6827
        %v8726 = vunpack.c.h.b16 %v6827
        %v8727 = vunpack.c.l.b16 %v6828
        %v8728 = vunpack.c.h.b16 %v6828
        %v8729 = vunpack.c.l.b16 %v6829
        %v8730 = vunpack.c.h.b16 %v6829
        %v8731 = vunpack.c.l.b16 %v6830
        %v8732 = vunpack.c.h.b16 %v6830
        %v8733 = vunpack.c.l.b16 %v6831
        %v8734 = vunpack.c.h.b16 %v6831
        %v8735 = vunpack.c.l.b16 %v6832
        %v8736 = vunpack.c.h.b16 %v6832
        %v8737 = vunpack.c.l.b16 %v6833
        %v8738 = vunpack.c.h.b16 %v6833
        %v8739 = vunpack.c.l.b16 %v6834
        %v8740 = vunpack.c.h.b16 %v6834
        %v8741 = vunpack.c.l.b16 %v6835
        %v8742 = vunpack.c.h.b16 %v6835
        %v8743 = vunpack.c.l.b16 %v6836
        %v8744 = vunpack.c.h.b16 %v6836
        %v8745 = vunpack.c.l.b16 %v6837
        %v8746 = vunpack.c.h.b16 %v6837
        %v8747 = vunpack.c.l.b16 %v6838
        %v8748 = vunpack.c.h.b16 %v6838
        %v8749 = vunpack.c.l.b16 %v6839
        %v8750 = vunpack.c.h.b16 %v6839
        %v8751 = vunpack.c.l.b16 %v6840
        %v8752 = vunpack.c.h.b16 %v6840
        %v8753 = vunpack.c.l.b16 %v6841
        %v8754 = vunpack.c.h.b16 %v6841
        %v8755 = vunpack.c.l.b16 %v6842
        %v8756 = vunpack.c.h.b16 %v6842
        %v8757 = vunpack.c.l.b16 %v6843
        %v8758 = vunpack.c.h.b16 %v6843
        %v8759 = vunpack.c.l.b16 %v6844
        %v8760 = vunpack.c.h.b16 %v6844
        %v8761 = vunpack.c.l.b16 %v6845
        %v8762 = vunpack.c.h.b16 %v6845
        %v8763 = vunpack.c.l.b16 %v6846
        %v8764 = vunpack.c.h.b16 %v6846
        %v8765 = vunpack.c.l.b16 %v6847
        %v8766 = vunpack.c.h.b16 %v6847
        %v8767 = vunpack.c.l.b16 %v6848
        %v8768 = vunpack.c.h.b16 %v6848
        %v8769 = vunpack.c.l.b16 %v6849
        %v8770 = vunpack.c.h.b16 %v6849
        %v8771 = vunpack.c.l.b16 %v6850
        %v8772 = vunpack.c.h.b16 %v6850
        %v8773 = vunpack.c.l.b16 %v6851
        %v8774 = vunpack.c.h.b16 %v6851
        %v8775 = vunpack.c.l.b16 %v6852
        %v8776 = vunpack.c.h.b16 %v6852
        %v8777 = vunpack.c.l.b16 %v6853
        %v8778 = vunpack.c.h.b16 %v6853
        %v8779 = vunpack.c.l.b16 %v6854
        %v8780 = vunpack.c.h.b16 %v6854
        %v8781 = vunpack.c.l.b16 %v6855
        %v8782 = vunpack.c.h.b16 %v6855
        %v8783 = vunpack.c.l.b16 %v6856
        %v8784 = vunpack.c.h.b16 %v6856
        %v8785 = vunpack.c.l.b16 %v6857
        %v8786 = vunpack.c.h.b16 %v6857
        %v8787 = vunpack.c.l.b16 %v6858
        %v8788 = vunpack.c.h.b16 %v6858
        %v8789 = vunpack.c.l.b16 %v6859
        %v8790 = vunpack.c.h.b16 %v6859
        %v8791 = vunpack.c.l.b16 %v6860
        %v8792 = vunpack.c.h.b16 %v6860
        %v8793 = vunpack.c.l.b16 %v6861
        %v8794 = vunpack.c.h.b16 %v6861
        %v8795 = vunpack.c.l.b16 %v6862
        %v8796 = vunpack.c.h.b16 %v6862
        %v8797 = vunpack.c.l.b16 %v6863
        %v8798 = vunpack.c.h.b16 %v6863
        %v8799 = vunpack.c.l.b16 %v6864
        %v8800 = vunpack.c.h.b16 %v6864
        %v8801 = vunpack.c.l.b16 %v6865
        %v8802 = vunpack.c.h.b16 %v6865
        %v8803 = vunpack.c.l.b16 %v6866
        %v8804 = vunpack.c.h.b16 %v6866
        %v8805 = vunpack.c.l.b16 %v6867
        %v8806 = vunpack.c.h.b16 %v6867
        %v8807 = vunpack.c.l.b16 %v6868
        %v8808 = vunpack.c.h.b16 %v6868
        %v8809 = vunpack.c.l.b16 %v6869
        %v8810 = vunpack.c.h.b16 %v6869
        %v8811 = vunpack.c.l.b16 %v6870
        %v8812 = vunpack.c.h.b16 %v6870
        %v8813 = vunpack.c.l.b16 %v6871
        %v8814 = vunpack.c.h.b16 %v6871
        %v8815 = vunpack.c.l.b16 %v6872
        %v8816 = vunpack.c.h.b16 %v6872
        %v8817 = vunpack.c.l.b16 %v6873
        %v8818 = vunpack.c.h.b16 %v6873
        %v8819 = vunpack.c.l.b16 %v6874
        %v8820 = vunpack.c.h.b16 %v6874
        %v8821 = vunpack.c.l.b16 %v6875
        %v8822 = vunpack.c.h.b16 %v6875
        %v8823 = vunpack.c.l.b16 %v6876
        %v8824 = vunpack.c.h.b16 %v6876
        %v8825 = vunpack.c.l.b16 %v6877
        %v8826 = vunpack.c.h.b16 %v6877
        %v8827 = vunpack.c.l.b16 %v6878
        %v8828 = vunpack.c.h.b16 %v6878
        %v8829 = vunpack.c.l.b16 %v6879
        %v8830 = vunpack.c.h.b16 %v6879
        %v8831 = vunpack.c.l.b16 %v6880
        %v8832 = vunpack.c.h.b16 %v6880
        %v8833 = vunpack.c.l.b16 %v6881
        %v8834 = vunpack.c.h.b16 %v6881
        %v8835 = vunpack.c.l.b16 %v6882
        %v8836 = vunpack.c.h.b16 %v6882
        %v8837 = vunpack.c.l.b16 %v6883
        %v8838 = vunpack.c.h.b16 %v6883
        %v8839 = vunpack.c.l.b16 %v6884
        %v8840 = vunpack.c.h.b16 %v6884
        %v8841 = vunpack.c.l.b16 %v6885
        %v8842 = vunpack.c.h.b16 %v6885
        %v8843 = vunpack.c.l.b16 %v6886
        %v8844 = vunpack.c.h.b16 %v6886
        %v8845 = vunpack.c.l.b16 %v6887
        %v8846 = vunpack.c.h.b16 %v6887
        %v8847 = vunpack.c.l.b16 %v6888
        %v8848 = vunpack.c.h.b16 %v6888
        %v8849 = vunpack.c.l.b16 %v6889
        %v8850 = vunpack.c.h.b16 %v6889
        %v8851 = vunpack.c.l.b16 %v6890
        %v8852 = vunpack.c.h.b16 %v6890
        %v8853 = vunpack.c.l.b16 %v6891
        %v8854 = vunpack.c.h.b16 %v6891
        %v8855 = vunpack.c.l.b16 %v6892
        %v8856 = vunpack.c.h.b16 %v6892
        %v8857 = vunpack.c.l.b16 %v6893
        %v8858 = vunpack.c.h.b16 %v6893
        %v8859 = vunpack.c.l.b16 %v6894
        %v8860 = vunpack.c.h.b16 %v6894
        %v8861 = vunpack.c.l.b16 %v6895
        %v8862 = vunpack.c.h.b16 %v6895
        %v8863 = vunpack.c.l.b16 %v6896
        %v8864 = vunpack.c.h.b16 %v6896
        %v8865 = vunpack.c.l.b16 %v6897
        %v8866 = vunpack.c.h.b16 %v6897
        %v8867 = vunpack.c.l.b16 %v6898
        %v8868 = vunpack.c.h.b16 %v6898
        %v8869 = vunpack.c.l.b16 %v6899
        %v8870 = vunpack.c.h.b16 %v6899
        %v8871 = vunpack.c.l.b16 %v6900
        %v8872 = vunpack.c.h.b16 %v6900
        %v8873 = vunpack.c.l.b16 %v6901
        %v8874 = vunpack.c.h.b16 %v6901
        %v8875 = vunpack.c.l.b16 %v6902
        %v8876 = vunpack.c.h.b16 %v6902
        %v8877 = vunpack.c.l.b16 %v6903
        %v8878 = vunpack.c.h.b16 %v6903
        %v8879 = vunpack.c.l.b16 %v6904
        %v8880 = vunpack.c.h.b16 %v6904
        %v8881 = vunpack.c.l.b16 %v6905
        %v8882 = vunpack.c.h.b16 %v6905
        %v8883 = vunpack.c.l.b16 %v6906
        %v8884 = vunpack.c.h.b16 %v6906
        %v8885 = vunpack.c.l.b16 %v6907
        %v8886 = vunpack.c.h.b16 %v6907
        %v8887 = vunpack.c.l.b16 %v6908
        %v8888 = vunpack.c.h.b16 %v6908
        %v8889 = vunpack.c.l.b16 %v6909
        %v8890 = vunpack.c.h.b16 %v6909
        %v8891 = vunpack.c.l.b16 %v6910
        %v8892 = vunpack.c.h.b16 %v6910
        %v8893 = vunpack.c.l.b16 %v6911
        %v8894 = vunpack.c.h.b16 %v6911
        %v8895 = vunpack.c.l.b16 %v6912
        %v8896 = vunpack.c.h.b16 %v6912
        %v8897 = vunpack.c.l.b16 %v6913
        %v8898 = vunpack.c.h.b16 %v6913
        %v8899 = vunpack.c.l.b16 %v6914
        %v8900 = vunpack.c.h.b16 %v6914
        %v8901 = vunpack.c.l.b16 %v6915
        %v8902 = vunpack.c.h.b16 %v6915
        %v8903 = vunpack.c.l.b16 %v6916
        %v8904 = vunpack.c.h.b16 %v6916
        %v8905 = vunpack.c.l.b16 %v6917
        %v8906 = vunpack.c.h.b16 %v6917
        %v8907 = vunpack.c.l.b16 %v6918
        %v8908 = vunpack.c.h.b16 %v6918
        %v8909 = vunpack.c.l.b16 %v6919
        %v8910 = vunpack.c.h.b16 %v6919
        %v8911 = vunpack.c.l.b16 %v6920
        %v8912 = vunpack.c.h.b16 %v6920
        %v8913 = vunpack.c.l.b16 %v6921
        %v8914 = vunpack.c.h.b16 %v6921
        %v8915 = vunpack.c.l.b16 %v6922
        %v8916 = vunpack.c.h.b16 %v6922
        %v8917 = vunpack.c.l.b16 %v6923
        %v8918 = vunpack.c.h.b16 %v6923
        %v8919 = vunpack.c.l.b16 %v6924
        %v8920 = vunpack.c.h.b16 %v6924
        %v8921 = vunpack.c.l.b16 %v6925
        %v8922 = vunpack.c.h.b16 %v6925
        %v8923 = vunpack.c.l.b16 %v6926
        %v8924 = vunpack.c.h.b16 %v6926
        %v8925 = vunpack.c.l.b16 %v6927
        %v8926 = vunpack.c.h.b16 %v6927
        %v8927 = vunpack.c.l.b16 %v6928
        %v8928 = vunpack.c.h.b16 %v6928
        %v8929 = vunpack.c.l.b16 %v6929
        %v8930 = vunpack.c.h.b16 %v6929
        %v8931 = vunpack.c.l.b16 %v6930
        %v8932 = vunpack.c.h.b16 %v6930
        %v8933 = vunpack.c.l.b16 %v6931
        %v8934 = vunpack.c.h.b16 %v6931
        %v8935 = vunpack.c.l.b16 %v6932
        %v8936 = vunpack.c.h.b16 %v6932
        %v8937 = vunpack.c.l.b16 %v6933
        %v8938 = vunpack.c.h.b16 %v6933
        %v8939 = vunpack.c.l.b16 %v6934
        %v8940 = vunpack.c.h.b16 %v6934
        %v8941 = vunpack.c.l.b16 %v6935
        %v8942 = vunpack.c.h.b16 %v6935
        %v8943 = vunpack.c.l.b16 %v6936
        %v8944 = vunpack.c.h.b16 %v6936
        %v8945 = vunpack.c.l.b16 %v6937
        %v8946 = vunpack.c.h.b16 %v6937
        %v8947 = vunpack.c.l.b16 %v6938
        %v8948 = vunpack.c.h.b16 %v6938
        %v8949 = vunpack.c.l.b16 %v6939
        %v8950 = vunpack.c.h.b16 %v6939
        %v8951 = vunpack.c.l.b16 %v6940
        %v8952 = vunpack.c.h.b16 %v6940
        %v8953 = vunpack.c.l.b16 %v6941
        %v8954 = vunpack.c.h.b16 %v6941
        %v8955 = vunpack.c.l.b16 %v6942
        %v8956 = vunpack.c.h.b16 %v6942
        %v8957 = vunpack.c.l.b16 %v6943
        %v8958 = vunpack.c.h.b16 %v6943
        %v8959 = vunpack.c.l.b16 %v6944
        %v8960 = vunpack.c.h.b16 %v6944
        %v8961 = vunpack.c.l.b16 %v6945
        %v8962 = vunpack.c.h.b16 %v6945
        %v8963 = vunpack.c.l.b16 %v6946
        %v8964 = vunpack.c.h.b16 %v6946
        %v8965 = vunpack.c.l.b16 %v6947
        %v8966 = vunpack.c.h.b16 %v6947
        %v8967 = vunpack.c.l.b16 %v6948
        %v8968 = vunpack.c.h.b16 %v6948
        %v8969 = vunpack.c.l.b16 %v6949
        %v8970 = vunpack.c.h.b16 %v6949
        %v8971 = vunpack.c.l.b16 %v6950
        %v8972 = vunpack.c.h.b16 %v6950
        %v8973 = vunpack.c.l.b16 %v6951
        %v8974 = vunpack.c.h.b16 %v6951
        %v8975 = vunpack.c.l.b16 %v6952
        %v8976 = vunpack.c.h.b16 %v6952
        %v8977 = vunpack.c.l.b16 %v6953
        %v8978 = vunpack.c.h.b16 %v6953
        %v8979 = vunpack.c.l.b16 %v6954
        %v8980 = vunpack.c.h.b16 %v6954
        %v8981 = vunpack.c.l.b16 %v6955
        %v8982 = vunpack.c.h.b16 %v6955
        %v8983 = vunpack.c.l.b16 %v6956
        %v8984 = vunpack.c.h.b16 %v6956
        %v8985 = vunpack.c.l.b16 %v6957
        %v8986 = vunpack.c.h.b16 %v6957
        %v8987 = vunpack.c.l.b16 %v6958
        %v8988 = vunpack.c.h.b16 %v6958
        %v8989 = vunpack.c.l.b16 %v6959
        %v8990 = vunpack.c.h.b16 %v6959
        %v8991 = vunpack.c.l.b16 %v6960
        %v8992 = vunpack.c.h.b16 %v6960
        %v8993 = vunpack.c.l.b16 %v6961
        %v8994 = vunpack.c.h.b16 %v6961
        %v8995 = vunpack.c.l.b16 %v6962
        %v8996 = vunpack.c.h.b16 %v6962
        %v8997 = vunpack.c.l.b16 %v6963
        %v8998 = vunpack.c.h.b16 %v6963
        %v8999 = vunpack.c.l.b16 %v6964
        %v9000 = vunpack.c.h.b16 %v6964
        %v9001 = vunpack.c.l.b16 %v6965
        %v9002 = vunpack.c.h.b16 %v6965
        %v9003 = vunpack.c.l.b16 %v6966
        %v9004 = vunpack.c.h.b16 %v6966
        %v9005 = vunpack.c.l.b16 %v6967
        %v9006 = vunpack.c.h.b16 %v6967
        %v9007 = vunpack.c.l.b16 %v6968
        %v9008 = vunpack.c.h.b16 %v6968
        %v9009 = vunpack.c.l.b16 %v6969
        %v9010 = vunpack.c.h.b16 %v6969
        %v9011 = vunpack.c.l.b16 %v6970
        %v9012 = vunpack.c.h.b16 %v6970
        %v9013 = vunpack.c.l.b16 %v6971
        %v9014 = vunpack.c.h.b16 %v6971
        %v9015 = vpack.c.b16 %v8693, %v8679
        %v9016 = vpack.c.b16 %v8694, %v8680
        %v9017 = vpack.c.b16 %v8695, %v8681
        %v9018 = vpack.c.b16 %v8696, %v8682
        %v9019 = vpack.c.b16 %v8697, %v8683
        %v9020 = vpack.c.b16 %v8698, %v8684
        %v9021 = vpack.c.b16 %v8699, %v8685
        %v9022 = vpack.c.b16 %v8700, %v8686
        %v9023 = vpack.c.b16 %v8701, %v8687
        %v9024 = vpack.c.b16 %v8702, %v8688
        %v9025 = vpack.c.b16 %v8703, %v8689
        %v9026 = vpack.c.b16 %v8704, %v8690
        %v9027 = vpack.c.b16 %v8705, %v8691
        %v9028 = vpack.c.b16 %v8706, %v8692
        %v9029 = vpack.c.b16 %v8721, %v8707
        %v9030 = vpack.c.b16 %v8722, %v8708
        %v9031 = vpack.c.b16 %v8723, %v8709
        %v9032 = vpack.c.b16 %v8724, %v8710
        %v9033 = vpack.c.b16 %v8725, %v8711
        %v9034 = vpack.c.b16 %v8726, %v8712
        %v9035 = vpack.c.b16 %v8727, %v8713
        %v9036 = vpack.c.b16 %v8728, %v8714
        %v9037 = vpack.c.b16 %v8729, %v8715
        %v9038 = vpack.c.b16 %v8730, %v8716
        %v9039 = vpack.c.b16 %v8731, %v8717
        %v9040 = vpack.c.b16 %v8732, %v8718
        %v9041 = vpack.c.b16 %v8733, %v8719
        %v9042 = vpack.c.b16 %v8734, %v8720
        %v9043 = vpack.c.b16 %v8749, %v8735
        %v9044 = vpack.c.b16 %v8750, %v8736
        %v9045 = vpack.c.b16 %v8751, %v8737
        %v9046 = vpack.c.b16 %v8752, %v8738
        %v9047 = vpack.c.b16 %v8753, %v8739
        %v9048 = vpack.c.b16 %v8754, %v8740
        %v9049 = vpack.c.b16 %v8755, %v8741
        %v9050 = vpack.c.b16 %v8756, %v8742
        %v9051 = vpack.c.b16 %v8757, %v8743
        %v9052 = vpack.c.b16 %v8758, %v8744
        %v9053 = vpack.c.b16 %v8759, %v8745
        %v9054 = vpack.c.b16 %v8760, %v8746
        %v9055 = vpack.c.b16 %v8761, %v8747
        %v9056 = vpack.c.b16 %v8762, %v8748
        %v9057 = vpack.c.b16 %v8777, %v8763
        %v9058 = vpack.c.b16 %v8778, %v8764
        %v9059 = vpack.c.b16 %v8779, %v8765
        %v9060 = vpack.c.b16 %v8780, %v8766
        %v9061 = vpack.c.b16 %v8781, %v8767
        %v9062 = vpack.c.b16 %v8782, %v8768
        %v9063 = vpack.c.b16 %v8783, %v8769
        %v9064 = vpack.c.b16 %v8784, %v8770
        %v9065 = vpack.c.b16 %v8785, %v8771
        %v9066 = vpack.c.b16 %v8786, %v8772
        %v9067 = vpack.c.b16 %v8787, %v8773
        %v9068 = vpack.c.b16 %v8788, %v8774
        %v9069 = vpack.c.b16 %v8789, %v8775
        %v9070 = vpack.c.b16 %v8790, %v8776
        %v9071 = vpack.c.b16 %v8805, %v8791
        %v9072 = vpack.c.b16 %v8806, %v8792
        %v9073 = vpack.c.b16 %v8807, %v8793
        %v9074 = vpack.c.b16 %v8808, %v8794
        %v9075 = vpack.c.b16 %v8809, %v8795
        %v9076 = vpack.c.b16 %v8810, %v8796
        %v9077 = vpack.c.b16 %v8811, %v8797
        %v9078 = vpack.c.b16 %v8812, %v8798
        %v9079 = vpack.c.b16 %v8813, %v8799
        %v9080 = vpack.c.b16 %v8814, %v8800
        %v9081 = vpack.c.b16 %v8815, %v8801
        %v9082 = vpack.c.b16 %v8816, %v8802
        %v9083 = vpack.c.b16 %v8817, %v8803
        %v9084 = vpack.c.b16 %v8818, %v8804
        %v9085 = vpack.c.b16 %v8833, %v8819
        %v9086 = vpack.c.b16 %v8834, %v8820
        %v9087 = vpack.c.b16 %v8835, %v8821
        %v9088 = vpack.c.b16 %v8836, %v8822
        %v9089 = vpack.c.b16 %v8837, %v8823
        %v9090 = vpack.c.b16 %v8838, %v8824
        %v9091 = vpack.c.b16 %v8839, %v8825
        %v9092 = vpack.c.b16 %v8840, %v8826
        %v9093 = vpack.c.b16 %v8841, %v8827
        %v9094 = vpack.c.b16 %v8842, %v8828
        %v9095 = vpack.c.b16 %v8843, %v8829
        %v9096 = vpack.c.b16 %v8844, %v8830
        %v9097 = vpack.c.b16 %v8845, %v8831
        %v9098 = vpack.c.b16 %v8846, %v8832
        %v9099 = vpack.c.b16 %v8861, %v8847
        %v9100 = vpack.c.b16 %v8862, %v8848
        %v9101 = vpack.c.b16 %v8863, %v8849
        %v9102 = vpack.c.b16 %v8864, %v8850
        %v9103 = vpack.c.b16 %v8865, %v8851
        %v9104 = vpack.c.b16 %v8866, %v8852
        %v9105 = vpack.c.b16 %v8867, %v8853
        %v9106 = vpack.c.b16 %v8868, %v8854
        %v9107 = vpack.c.b16 %v8869, %v8855
        %v9108 = vpack.c.b16 %v8870, %v8856
        %v9109 = vpack.c.b16 %v8871, %v8857
        %v9110 = vpack.c.b16 %v8872, %v8858
        %v9111 = vpack.c.b16 %v8873, %v8859
        %v9112 = vpack.c.b16 %v8874, %v8860
        %v9113 = vpack.c.b16 %v8889, %v8875
        %v9114 = vpack.c.b16 %v8890, %v8876
        %v9115 = vpack.c.b16 %v8891, %v8877
        %v9116 = vpack.c.b16 %v8892, %v8878
        %v9117 = vpack.c.b16 %v8893, %v8879
        %v9118 = vpack.c.b16 %v8894, %v8880
        %v9119 = vpack.c.b16 %v8895, %v8881
        %v9120 = vpack.c.b16 %v8896, %v8882
        %v9121 = vpack.c.b16 %v8897, %v8883
        %v9122 = vpack.c.b16 %v8898, %v8884
        %v9123 = vpack.c.b16 %v8899, %v8885
        %v9124 = vpack.c.b16 %v8900, %v8886
        %v9125 = vpack.c.b16 %v8901, %v8887
        %v9126 = vpack.c.b16 %v8902, %v8888
        %v9127 = vpack.c.b16 %v8917, %v8903
        %v9128 = vpack.c.b16 %v8918, %v8904
        %v9129 = vpack.c.b16 %v8919, %v8905
        %v9130 = vpack.c.b16 %v8920, %v8906
        %v9131 = vpack.c.b16 %v8921, %v8907
        %v9132 = vpack.c.b16 %v8922, %v8908
        %v9133 = vpack.c.b16 %v8923, %v8909
        %v9134 = vpack.c.b16 %v8924, %v8910
        %v9135 = vpack.c.b16 %v8925, %v8911
        %v9136 = vpack.c.b16 %v8926, %v8912
        %v9137 = vpack.c.b16 %v8927, %v8913
        %v9138 = vpack.c.b16 %v8928, %v8914
        %v9139 = vpack.c.b16 %v8929, %v8915
        %v9140 = vpack.c.b16 %v8930, %v8916
        %v9141 = vpack.c.b16 %v8945, %v8931
        %v9142 = vpack.c.b16 %v8946, %v8932
        %v9143 = vpack.c.b16 %v8947, %v8933
        %v9144 = vpack.c.b16 %v8948, %v8934
        %v9145 = vpack.c.b16 %v8949, %v8935
        %v9146 = vpack.c.b16 %v8950, %v8936
        %v9147 = vpack.c.b16 %v8951, %v8937
        %v9148 = vpack.c.b16 %v8952, %v8938
        %v9149 = vpack.c.b16 %v8953, %v8939
        %v9150 = vpack.c.b16 %v8954, %v8940
        %v9151 = vpack.c.b16 %v8955, %v8941
        %v9152 = vpack.c.b16 %v8956, %v8942
        %v9153 = vpack.c.b16 %v8957, %v8943
        %v9154 = vpack.c.b16 %v8958, %v8944
        %v9155 = vpack.c.b16 %v8973, %v8959
        %v9156 = vpack.c.b16 %v8974, %v8960
        %v9157 = vpack.c.b16 %v8975, %v8961
        %v9158 = vpack.c.b16 %v8976, %v8962
        %v9159 = vpack.c.b16 %v8977, %v8963
        %v9160 = vpack.c.b16 %v8978, %v8964
        %v9161 = vpack.c.b16 %v8979, %v8965
        %v9162 = vpack.c.b16 %v8980, %v8966
        %v9163 = vpack.c.b16 %v8981, %v8967
        %v9164 = vpack.c.b16 %v8982, %v8968
        %v9165 = vpack.c.b16 %v8983, %v8969
        %v9166 = vpack.c.b16 %v8984, %v8970
        %v9167 = vpack.c.b16 %v8985, %v8971
        %v9168 = vpack.c.b16 %v8986, %v8972
        %v9169 = vpack.c.b16 %v9001, %v8987
        %v9170 = vpack.c.b16 %v9002, %v8988
        %v9171 = vpack.c.b16 %v9003, %v8989
        %v9172 = vpack.c.b16 %v9004, %v8990
        %v9173 = vpack.c.b16 %v9005, %v8991
        %v9174 = vpack.c.b16 %v9006, %v8992
        %v9175 = vpack.c.b16 %v9007, %v8993
        %v9176 = vpack.c.b16 %v9008, %v8994
        %v9177 = vpack.c.b16 %v9009, %v8995
        %v9178 = vpack.c.b16 %v9010, %v8996
        %v9179 = vpack.c.b16 %v9011, %v8997
        %v9180 = vpack.c.b16 %v9012, %v8998
        %v9181 = vpack.c.b16 %v9013, %v8999
        %v9182 = vpack.c.b16 %v9014, %v9000
        %v9352 = vsel %vm4774, %v6797, 0
        %v9355 = vsel %vm4774, %v6799, 0
        %v9358 = vsel %vm4774, %v6801, 0
        %v9361 = vsel %vm4774, %v6803, 0
        %9363 = vmatprep.subr.bf16.mxu0 %v9016
        %9364 = vmatpush1.bf16.msra.mxu0 %v9015
        %9365 = vmatprep.subr.bf16.mxu0 %v9030
        %9366 = vmatpush1.bf16.msra.mxu0 %v9029
        %9367 = vmatprep.subr.bf16.mxu0 %v9044
        %9368 = vmatpush1.bf16.msra.mxu0 %v9043
        %9369 = vmatprep.subr.bf16.mxu0 %v9058
        %9370 = vmatpush1.bf16.msra.mxu0 %v9057
        %9371 = vmatprep.subr.bf16.mxu0 %v9072
        %9372 = vmatpush1.bf16.msra.mxu0 %v9071
        %9373 = vmatprep.subr.bf16.mxu0 %v9086
        %9374 = vmatpush1.bf16.msra.mxu0 %v9085
        %9375 = vmatprep.subr.bf16.mxu0 %v9100
        %9376 = vmatpush1.bf16.msra.mxu0 %v9099
        %9377 = vmatprep.subr.bf16.mxu0 %v9114
        %9378 = vmatpush1.bf16.msra.mxu0 %v9113
        %9379 = vmatprep.subr.bf16.mxu0 %v9128
        %9380 = vmatpush1.bf16.msra.mxu0 %v9127
        %9381 = vmatprep.subr.bf16.mxu0 %v9142
        %9382 = vmatpush1.bf16.msra.mxu0 %v9141
        %9383 = vmatprep.subr.bf16.mxu0 %v9156
        %9384 = vmatpush1.bf16.msra.mxu0 %v9155
        %9385 = vmatprep.subr.bf16.mxu0 %v9170
        %9386 = vmatpush1.bf16.msra.mxu0 %v9169
        %9387 = vmatprep.subr.bf16.mxu0 0
        %9388 = vmatpush1.bf16.msra.mxu0 0
        %9389 = vmatprep.subr.bf16.mxu0 0
        %9390 = vmatpush1.bf16.msra.mxu0 0
        %9391 = vmatprep.subr.bf16.mxu0 0
        %9392 = vmatpush1.bf16.msra.mxu0 0
        %9393 = vmatprep.subr.bf16.mxu0 0
        %9394 = vmatpush1.bf16.msra.mxu0 0
        %9395 = vmatprep.mubr.bf16.mxu0 %v9352
        %9396 = vmatmul.mubr.bf16.gmra.mrb[0].mxu0 %v6796
        %v9397 = vpop.f32.mrb[0].mxu0
        %v9398 = vadd.f32 %v8035, %v9397
        %v9399 = vpop.f32.mrb[0].mxu0
        %v9400 = vadd.f32 %v8037, %v9399
        %v9401 = vpop.f32.mrb[0].mxu0
        %v9402 = vadd.f32 %v8039, %v9401
        %v9403 = vpop.f32.mrb[0].mxu0
        %v9404 = vadd.f32 %v8041, %v9403
        %9405 = vmatprep.mubr.bf16.mxu0 %v9355
        %9406 = vmatmul.mubr.bf16.gmra.mrb[0].mxu0 %v6798
        %v9407 = vpop.f32.mrb[0].mxu0
        %v9408 = vadd.f32 %v8045, %v9407
        %v9409 = vpop.f32.mrb[0].mxu0
        %v9410 = vadd.f32 %v8047, %v9409
        %v9411 = vpop.f32.mrb[0].mxu0
        %v9412 = vadd.f32 %v8049, %v9411
        %v9413 = vpop.f32.mrb[0].mxu0
        %v9414 = vadd.f32 %v8051, %v9413
        %9415 = vmatprep.mubr.bf16.mxu0 %v9358
        %9416 = vmatmul.mubr.bf16.gmra.mrb[0].mxu0 %v6800
        %v9417 = vpop.f32.mrb[0].mxu0
        %v9418 = vadd.f32 %v8055, %v9417
        %v9419 = vpop.f32.mrb[0].mxu0
        %v9420 = vadd.f32 %v8057, %v9419
        %v9421 = vpop.f32.mrb[0].mxu0
        %v9422 = vadd.f32 %v8059, %v9421
        %v9423 = vpop.f32.mrb[0].mxu0
        %v9424 = vadd.f32 %v8061, %v9423
        %9425 = vmatprep.mubr.bf16.mxu0 %v9361
        %9426 = vmatmul.mubr.bf16.gmra.mrb[0].mxu0 %v6802
        %v9427 = vpop.f32.mrb[0].mxu0
        %v9428 = vadd.f32 %v8065, %v9427
        %v9429 = vpop.f32.mrb[0].mxu0
        %v9430 = vadd.f32 %v8067, %v9429
        %v9431 = vpop.f32.mrb[0].mxu0
        %v9432 = vadd.f32 %v8069, %v9431
        %v9433 = vpop.f32.mrb[0].mxu0
        %v9434 = vadd.f32 %v8071, %v9433
        %9435 = vdwg.mxu0
        %9436 = vmatprep.subr.bf16.mxu0 %v9018
        %9437 = vmatpush1.bf16.msra.mxu0 %v9017
        %9438 = vmatprep.subr.bf16.mxu0 %v9032
        %9439 = vmatpush1.bf16.msra.mxu0 %v9031
        %9440 = vmatprep.subr.bf16.mxu0 %v9046
        %9441 = vmatpush1.bf16.msra.mxu0 %v9045
        %9442 = vmatprep.subr.bf16.mxu0 %v9060
        %9443 = vmatpush1.bf16.msra.mxu0 %v9059
        %9444 = vmatprep.subr.bf16.mxu0 %v9074
        %9445 = vmatpush1.bf16.msra.mxu0 %v9073
        %9446 = vmatprep.subr.bf16.mxu0 %v9088
        %9447 = vmatpush1.bf16.msra.mxu0 %v9087
        %9448 = vmatprep.subr.bf16.mxu0 %v9102
        %9449 = vmatpush1.bf16.msra.mxu0 %v9101
        %9450 = vmatprep.subr.bf16.mxu0 %v9116
        %9451 = vmatpush1.bf16.msra.mxu0 %v9115
        %9452 = vmatprep.subr.bf16.mxu0 %v9130
        %9453 = vmatpush1.bf16.msra.mxu0 %v9129
        %9454 = vmatprep.subr.bf16.mxu0 %v9144
        %9455 = vmatpush1.bf16.msra.mxu0 %v9143
        %9456 = vmatprep.subr.bf16.mxu0 %v9158
        %9457 = vmatpush1.bf16.msra.mxu0 %v9157
        %9458 = vmatprep.subr.bf16.mxu0 %v9172
        %9459 = vmatpush1.bf16.msra.mxu0 %v9171
        %9460 = vmatprep.subr.bf16.mxu0 0
        %9461 = vmatpush1.bf16.msra.mxu0 0
        %9462 = vmatprep.subr.bf16.mxu0 0
        %9463 = vmatpush1.bf16.msra.mxu0 0
        %9464 = vmatprep.subr.bf16.mxu0 0
        %9465 = vmatpush1.bf16.msra.mxu0 0
        %9466 = vmatprep.subr.bf16.mxu0 0
        %9467 = vmatpush1.bf16.msra.mxu0 0
        %9468 = vmatprep.mubr.bf16.mxu0 %v9352
        %9469 = vmatmul.mubr.bf16.gmra.mrb[0].mxu0 %v6796
        %v9470 = vpop.f32.mrb[0].mxu0
        %v9471 = vadd.f32 %v8108, %v9470
        %v9472 = vpop.f32.mrb[0].mxu0
        %v9473 = vadd.f32 %v8110, %v9472
        %v9474 = vpop.f32.mrb[0].mxu0
        %v9475 = vadd.f32 %v8112, %v9474
        %v9476 = vpop.f32.mrb[0].mxu0
        %v9477 = vadd.f32 %v8114, %v9476
        %9478 = vmatprep.mubr.bf16.mxu0 %v9355
        %9479 = vmatmul.mubr.bf16.gmra.mrb[0].mxu0 %v6798
        %v9480 = vpop.f32.mrb[0].mxu0
        %v9481 = vadd.f32 %v8118, %v9480
        %v9482 = vpop.f32.mrb[0].mxu0
        %v9483 = vadd.f32 %v8120, %v9482
        %v9484 = vpop.f32.mrb[0].mxu0
        %v9485 = vadd.f32 %v8122, %v9484
        %v9486 = vpop.f32.mrb[0].mxu0
        %v9487 = vadd.f32 %v8124, %v9486
        %9488 = vmatprep.mubr.bf16.mxu0 %v9358
        %9489 = vmatmul.mubr.bf16.gmra.mrb[0].mxu0 %v6800
        %v9490 = vpop.f32.mrb[0].mxu0
        %v9491 = vadd.f32 %v8128, %v9490
        %v9492 = vpop.f32.mrb[0].mxu0
        %v9493 = vadd.f32 %v8130, %v9492
        %v9494 = vpop.f32.mrb[0].mxu0
        %v9495 = vadd.f32 %v8132, %v9494
        %v9496 = vpop.f32.mrb[0].mxu0
        %v9497 = vadd.f32 %v8134, %v9496
        %9498 = vmatprep.mubr.bf16.mxu0 %v9361
        %9499 = vmatmul.mubr.bf16.gmra.mrb[0].mxu0 %v6802
        %v9500 = vpop.f32.mrb[0].mxu0
        %v9501 = vadd.f32 %v8138, %v9500
        %v9502 = vpop.f32.mrb[0].mxu0
        %v9503 = vadd.f32 %v8140, %v9502
        %v9504 = vpop.f32.mrb[0].mxu0
        %v9505 = vadd.f32 %v8142, %v9504
        %v9506 = vpop.f32.mrb[0].mxu0
        %v9507 = vadd.f32 %v8144, %v9506
        %9508 = vdwg.mxu0
        %9509 = vmatprep.subr.bf16.mxu0 %v9020
        %9510 = vmatpush1.bf16.msra.mxu0 %v9019
        %9511 = vmatprep.subr.bf16.mxu0 %v9034
        %9512 = vmatpush1.bf16.msra.mxu0 %v9033
        %9513 = vmatprep.subr.bf16.mxu0 %v9048
        %9514 = vmatpush1.bf16.msra.mxu0 %v9047
        %9515 = vmatprep.subr.bf16.mxu0 %v9062
        %9516 = vmatpush1.bf16.msra.mxu0 %v9061
        %9517 = vmatprep.subr.bf16.mxu0 %v9076
        %9518 = vmatpush1.bf16.msra.mxu0 %v9075
        %9519 = vmatprep.subr.bf16.mxu0 %v9090
        %9520 = vmatpush1.bf16.msra.mxu0 %v9089
        %9521 = vmatprep.subr.bf16.mxu0 %v9104
        %9522 = vmatpush1.bf16.msra.mxu0 %v9103
        %9523 = vmatprep.subr.bf16.mxu0 %v9118
        %9524 = vmatpush1.bf16.msra.mxu0 %v9117
        %9525 = vmatprep.subr.bf16.mxu0 %v9132
        %9526 = vmatpush1.bf16.msra.mxu0 %v9131
        %9527 = vmatprep.subr.bf16.mxu0 %v9146
        %9528 = vmatpush1.bf16.msra.mxu0 %v9145
        %9529 = vmatprep.subr.bf16.mxu0 %v9160
        %9530 = vmatpush1.bf16.msra.mxu0 %v9159
        %9531 = vmatprep.subr.bf16.mxu0 %v9174
        %9532 = vmatpush1.bf16.msra.mxu0 %v9173
        %9533 = vmatprep.subr.bf16.mxu0 0
        %9534 = vmatpush1.bf16.msra.mxu0 0
        %9535 = vmatprep.subr.bf16.mxu0 0
        %9536 = vmatpush1.bf16.msra.mxu0 0
        %9537 = vmatprep.subr.bf16.mxu0 0
        %9538 = vmatpush1.bf16.msra.mxu0 0
        %9539 = vmatprep.subr.bf16.mxu0 0
        %9540 = vmatpush1.bf16.msra.mxu0 0
        %9541 = vmatprep.mubr.bf16.mxu0 %v9352
        %9542 = vmatmul.mubr.bf16.gmra.mrb[0].mxu0 %v6796
        %v9543 = vpop.f32.mrb[0].mxu0
        %v9544 = vadd.f32 %v8181, %v9543
        %v9545 = vpop.f32.mrb[0].mxu0
        %v9546 = vadd.f32 %v8183, %v9545
        %v9547 = vpop.f32.mrb[0].mxu0
        %v9548 = vadd.f32 %v8185, %v9547
        %v9549 = vpop.f32.mrb[0].mxu0
        %v9550 = vadd.f32 %v8187, %v9549
        %9551 = vmatprep.mubr.bf16.mxu0 %v9355
        %9552 = vmatmul.mubr.bf16.gmra.mrb[0].mxu0 %v6798
        %v9553 = vpop.f32.mrb[0].mxu0
        %v9554 = vadd.f32 %v8191, %v9553
        %v9555 = vpop.f32.mrb[0].mxu0
        %v9556 = vadd.f32 %v8193, %v9555
        %v9557 = vpop.f32.mrb[0].mxu0
        %v9558 = vadd.f32 %v8195, %v9557
        %v9559 = vpop.f32.mrb[0].mxu0
        %v9560 = vadd.f32 %v8197, %v9559
        %9561 = vmatprep.mubr.bf16.mxu0 %v9358
        %9562 = vmatmul.mubr.bf16.gmra.mrb[0].mxu0 %v6800
        %v9563 = vpop.f32.mrb[0].mxu0
        %v9564 = vadd.f32 %v8201, %v9563
        %v9565 = vpop.f32.mrb[0].mxu0
        %v9566 = vadd.f32 %v8203, %v9565
        %v9567 = vpop.f32.mrb[0].mxu0
        %v9568 = vadd.f32 %v8205, %v9567
        %v9569 = vpop.f32.mrb[0].mxu0
        %v9570 = vadd.f32 %v8207, %v9569
        %9571 = vmatprep.mubr.bf16.mxu0 %v9361
        %9572 = vmatmul.mubr.bf16.gmra.mrb[0].mxu0 %v6802
        %v9573 = vpop.f32.mrb[0].mxu0
        %v9574 = vadd.f32 %v8211, %v9573
        %v9575 = vpop.f32.mrb[0].mxu0
        %v9576 = vadd.f32 %v8213, %v9575
        %v9577 = vpop.f32.mrb[0].mxu0
        %v9578 = vadd.f32 %v8215, %v9577
        %v9579 = vpop.f32.mrb[0].mxu0
        %v9580 = vadd.f32 %v8217, %v9579
        %9581 = vdwg.mxu0
        %9582 = vmatprep.subr.bf16.mxu0 %v9022
        %9583 = vmatpush1.bf16.msra.mxu0 %v9021
        %9584 = vmatprep.subr.bf16.mxu0 %v9036
        %9585 = vmatpush1.bf16.msra.mxu0 %v9035
        %9586 = vmatprep.subr.bf16.mxu0 %v9050
        %9587 = vmatpush1.bf16.msra.mxu0 %v9049
        %9588 = vmatprep.subr.bf16.mxu0 %v9064
        %9589 = vmatpush1.bf16.msra.mxu0 %v9063
        %9590 = vmatprep.subr.bf16.mxu0 %v9078
        %9591 = vmatpush1.bf16.msra.mxu0 %v9077
        %9592 = vmatprep.subr.bf16.mxu0 %v9092
        %9593 = vmatpush1.bf16.msra.mxu0 %v9091
        %9594 = vmatprep.subr.bf16.mxu0 %v9106
        %9595 = vmatpush1.bf16.msra.mxu0 %v9105
        %9596 = vmatprep.subr.bf16.mxu0 %v9120
        %9597 = vmatpush1.bf16.msra.mxu0 %v9119
        %9598 = vmatprep.subr.bf16.mxu0 %v9134
        %9599 = vmatpush1.bf16.msra.mxu0 %v9133
        %9600 = vmatprep.subr.bf16.mxu0 %v9148
        %9601 = vmatpush1.bf16.msra.mxu0 %v9147
        %9602 = vmatprep.subr.bf16.mxu0 %v9162
        %9603 = vmatpush1.bf16.msra.mxu0 %v9161
        %9604 = vmatprep.subr.bf16.mxu0 %v9176
        %9605 = vmatpush1.bf16.msra.mxu0 %v9175
        %9606 = vmatprep.subr.bf16.mxu0 0
        %9607 = vmatpush1.bf16.msra.mxu0 0
        %9608 = vmatprep.subr.bf16.mxu0 0
        %9609 = vmatpush1.bf16.msra.mxu0 0
        %9610 = vmatprep.subr.bf16.mxu0 0
        %9611 = vmatpush1.bf16.msra.mxu0 0
        %9612 = vmatprep.subr.bf16.mxu0 0
        %9613 = vmatpush1.bf16.msra.mxu0 0
        %9614 = vmatprep.mubr.bf16.mxu0 %v9352
        %9615 = vmatmul.mubr.bf16.gmra.mrb[0].mxu0 %v6796
        %v9616 = vpop.f32.mrb[0].mxu0
        %v9617 = vadd.f32 %v8254, %v9616
        %v9618 = vpop.f32.mrb[0].mxu0
        %v9619 = vadd.f32 %v8256, %v9618
        %v9620 = vpop.f32.mrb[0].mxu0
        %v9621 = vadd.f32 %v8258, %v9620
        %v9622 = vpop.f32.mrb[0].mxu0
        %v9623 = vadd.f32 %v8260, %v9622
        %9624 = vmatprep.mubr.bf16.mxu0 %v9355
        %9625 = vmatmul.mubr.bf16.gmra.mrb[0].mxu0 %v6798
        %v9626 = vpop.f32.mrb[0].mxu0
        %v9627 = vadd.f32 %v8264, %v9626
        %v9628 = vpop.f32.mrb[0].mxu0
        %v9629 = vadd.f32 %v8266, %v9628
        %v9630 = vpop.f32.mrb[0].mxu0
        %v9631 = vadd.f32 %v8268, %v9630
        %v9632 = vpop.f32.mrb[0].mxu0
        %v9633 = vadd.f32 %v8270, %v9632
        %9634 = vmatprep.mubr.bf16.mxu0 %v9358
        %9635 = vmatmul.mubr.bf16.gmra.mrb[0].mxu0 %v6800
        %v9636 = vpop.f32.mrb[0].mxu0
        %v9637 = vadd.f32 %v8274, %v9636
        %v9638 = vpop.f32.mrb[0].mxu0
        %v9639 = vadd.f32 %v8276, %v9638
        %v9640 = vpop.f32.mrb[0].mxu0
        %v9641 = vadd.f32 %v8278, %v9640
        %v9642 = vpop.f32.mrb[0].mxu0
        %v9643 = vadd.f32 %v8280, %v9642
        %9644 = vmatprep.mubr.bf16.mxu0 %v9361
        %9645 = vmatmul.mubr.bf16.gmra.mrb[0].mxu0 %v6802
        %v9646 = vpop.f32.mrb[0].mxu0
        %v9647 = vadd.f32 %v8284, %v9646
        %v9648 = vpop.f32.mrb[0].mxu0
        %v9649 = vadd.f32 %v8286, %v9648
        %v9650 = vpop.f32.mrb[0].mxu0
        %v9651 = vadd.f32 %v8288, %v9650
        %v9652 = vpop.f32.mrb[0].mxu0
        %v9653 = vadd.f32 %v8290, %v9652
        %9654 = vdwg.mxu0
        %9655 = vmatprep.subr.bf16.mxu0 %v9024
        %9656 = vmatpush1.bf16.msra.mxu0 %v9023
        %9657 = vmatprep.subr.bf16.mxu0 %v9038
        %9658 = vmatpush1.bf16.msra.mxu0 %v9037
        %9659 = vmatprep.subr.bf16.mxu0 %v9052
        %9660 = vmatpush1.bf16.msra.mxu0 %v9051
        %9661 = vmatprep.subr.bf16.mxu0 %v9066
        %9662 = vmatpush1.bf16.msra.mxu0 %v9065
        %9663 = vmatprep.subr.bf16.mxu0 %v9080
        %9664 = vmatpush1.bf16.msra.mxu0 %v9079
        %9665 = vmatprep.subr.bf16.mxu0 %v9094
        %9666 = vmatpush1.bf16.msra.mxu0 %v9093
        %9667 = vmatprep.subr.bf16.mxu0 %v9108
        %9668 = vmatpush1.bf16.msra.mxu0 %v9107
        %9669 = vmatprep.subr.bf16.mxu0 %v9122
        %9670 = vmatpush1.bf16.msra.mxu0 %v9121
        %9671 = vmatprep.subr.bf16.mxu0 %v9136
        %9672 = vmatpush1.bf16.msra.mxu0 %v9135
        %9673 = vmatprep.subr.bf16.mxu0 %v9150
        %9674 = vmatpush1.bf16.msra.mxu0 %v9149
        %9675 = vmatprep.subr.bf16.mxu0 %v9164
        %9676 = vmatpush1.bf16.msra.mxu0 %v9163
        %9677 = vmatprep.subr.bf16.mxu0 %v9178
        %9678 = vmatpush1.bf16.msra.mxu0 %v9177
        %9679 = vmatprep.subr.bf16.mxu0 0
        %9680 = vmatpush1.bf16.msra.mxu0 0
        %9681 = vmatprep.subr.bf16.mxu0 0
        %9682 = vmatpush1.bf16.msra.mxu0 0
        %9683 = vmatprep.subr.bf16.mxu0 0
        %9684 = vmatpush1.bf16.msra.mxu0 0
        %9685 = vmatprep.subr.bf16.mxu0 0
        %9686 = vmatpush1.bf16.msra.mxu0 0
        %9687 = vmatprep.mubr.bf16.mxu0 %v9352
        %9688 = vmatmul.mubr.bf16.gmra.mrb[0].mxu0 %v6796
        %v9689 = vpop.f32.mrb[0].mxu0
        %v9690 = vadd.f32 %v8327, %v9689
        %v9691 = vpop.f32.mrb[0].mxu0
        %v9692 = vadd.f32 %v8329, %v9691
        %v9693 = vpop.f32.mrb[0].mxu0
        %v9694 = vadd.f32 %v8331, %v9693
        %v9695 = vpop.f32.mrb[0].mxu0
        %v9696 = vadd.f32 %v8333, %v9695
        %9697 = vmatprep.mubr.bf16.mxu0 %v9355
        %9698 = vmatmul.mubr.bf16.gmra.mrb[0].mxu0 %v6798
        %v9699 = vpop.f32.mrb[0].mxu0
        %v9700 = vadd.f32 %v8337, %v9699
        %v9701 = vpop.f32.mrb[0].mxu0
        %v9702 = vadd.f32 %v8339, %v9701
        %v9703 = vpop.f32.mrb[0].mxu0
        %v9704 = vadd.f32 %v8341, %v9703
        %v9705 = vpop.f32.mrb[0].mxu0
        %v9706 = vadd.f32 %v8343, %v9705
        %9707 = vmatprep.mubr.bf16.mxu0 %v9358
        %9708 = vmatmul.mubr.bf16.gmra.mrb[0].mxu0 %v6800
        %v9709 = vpop.f32.mrb[0].mxu0
        %v9710 = vadd.f32 %v8347, %v9709
        %v9711 = vpop.f32.mrb[0].mxu0
        %v9712 = vadd.f32 %v8349, %v9711
        %v9713 = vpop.f32.mrb[0].mxu0
        %v9714 = vadd.f32 %v8351, %v9713
        %v9715 = vpop.f32.mrb[0].mxu0
        %v9716 = vadd.f32 %v8353, %v9715
        %9717 = vmatprep.mubr.bf16.mxu0 %v9361
        %9718 = vmatmul.mubr.bf16.gmra.mrb[0].mxu0 %v6802
        %v9719 = vpop.f32.mrb[0].mxu0
        %v9720 = vadd.f32 %v8357, %v9719
        %v9721 = vpop.f32.mrb[0].mxu0
        %v9722 = vadd.f32 %v8359, %v9721
        %v9723 = vpop.f32.mrb[0].mxu0
        %v9724 = vadd.f32 %v8361, %v9723
        %v9725 = vpop.f32.mrb[0].mxu0
        %v9726 = vadd.f32 %v8363, %v9725
        %9727 = vdwg.mxu0
        %9728 = vmatprep.subr.bf16.mxu0 %v9026
        %9729 = vmatpush1.bf16.msra.mxu0 %v9025
        %9730 = vmatprep.subr.bf16.mxu0 %v9040
        %9731 = vmatpush1.bf16.msra.mxu0 %v9039
        %9732 = vmatprep.subr.bf16.mxu0 %v9054
        %9733 = vmatpush1.bf16.msra.mxu0 %v9053
        %9734 = vmatprep.subr.bf16.mxu0 %v9068
        %9735 = vmatpush1.bf16.msra.mxu0 %v9067
        %9736 = vmatprep.subr.bf16.mxu0 %v9082
        %9737 = vmatpush1.bf16.msra.mxu0 %v9081
        %9738 = vmatprep.subr.bf16.mxu0 %v9096
        %9739 = vmatpush1.bf16.msra.mxu0 %v9095
        %9740 = vmatprep.subr.bf16.mxu0 %v9110
        %9741 = vmatpush1.bf16.msra.mxu0 %v9109
        %9742 = vmatprep.subr.bf16.mxu0 %v9124
        %9743 = vmatpush1.bf16.msra.mxu0 %v9123
        %9744 = vmatprep.subr.bf16.mxu0 %v9138
        %9745 = vmatpush1.bf16.msra.mxu0 %v9137
        %9746 = vmatprep.subr.bf16.mxu0 %v9152
        %9747 = vmatpush1.bf16.msra.mxu0 %v9151
        %9748 = vmatprep.subr.bf16.mxu0 %v9166
        %9749 = vmatpush1.bf16.msra.mxu0 %v9165
        %9750 = vmatprep.subr.bf16.mxu0 %v9180
        %9751 = vmatpush1.bf16.msra.mxu0 %v9179
        %9752 = vmatprep.subr.bf16.mxu0 0
        %9753 = vmatpush1.bf16.msra.mxu0 0
        %9754 = vmatprep.subr.bf16.mxu0 0
        %9755 = vmatpush1.bf16.msra.mxu0 0
        %9756 = vmatprep.subr.bf16.mxu0 0
        %9757 = vmatpush1.bf16.msra.mxu0 0
        %9758 = vmatprep.subr.bf16.mxu0 0
        %9759 = vmatpush1.bf16.msra.mxu0 0
        %9760 = vmatprep.mubr.bf16.mxu0 %v9352
        %9761 = vmatmul.mubr.bf16.gmra.mrb[0].mxu0 %v6796
        %v9762 = vpop.f32.mrb[0].mxu0
        %v9763 = vadd.f32 %v8400, %v9762
        %v9764 = vpop.f32.mrb[0].mxu0
        %v9765 = vadd.f32 %v8402, %v9764
        %v9766 = vpop.f32.mrb[0].mxu0
        %v9767 = vadd.f32 %v8404, %v9766
        %v9768 = vpop.f32.mrb[0].mxu0
        %v9769 = vadd.f32 %v8406, %v9768
        %9770 = vmatprep.mubr.bf16.mxu0 %v9355
        %9771 = vmatmul.mubr.bf16.gmra.mrb[0].mxu0 %v6798
        %v9772 = vpop.f32.mrb[0].mxu0
        %v9773 = vadd.f32 %v8410, %v9772
        %v9774 = vpop.f32.mrb[0].mxu0
        %v9775 = vadd.f32 %v8412, %v9774
        %v9776 = vpop.f32.mrb[0].mxu0
        %v9777 = vadd.f32 %v8414, %v9776
        %v9778 = vpop.f32.mrb[0].mxu0
        %v9779 = vadd.f32 %v8416, %v9778
        %9780 = vmatprep.mubr.bf16.mxu0 %v9358
        %9781 = vmatmul.mubr.bf16.gmra.mrb[0].mxu0 %v6800
        %v9782 = vpop.f32.mrb[0].mxu0
        %v9783 = vadd.f32 %v8420, %v9782
        %v9784 = vpop.f32.mrb[0].mxu0
        %v9785 = vadd.f32 %v8422, %v9784
        %v9786 = vpop.f32.mrb[0].mxu0
        %v9787 = vadd.f32 %v8424, %v9786
        %v9788 = vpop.f32.mrb[0].mxu0
        %v9789 = vadd.f32 %v8426, %v9788
        %9790 = vmatprep.mubr.bf16.mxu0 %v9361
        %9791 = vmatmul.mubr.bf16.gmra.mrb[0].mxu0 %v6802
        %v9792 = vpop.f32.mrb[0].mxu0
        %v9793 = vadd.f32 %v8430, %v9792
        %v9794 = vpop.f32.mrb[0].mxu0
        %v9795 = vadd.f32 %v8432, %v9794
        %v9796 = vpop.f32.mrb[0].mxu0
        %v9797 = vadd.f32 %v8434, %v9796
        %v9798 = vpop.f32.mrb[0].mxu0
        %v9799 = vadd.f32 %v8436, %v9798
        %9800 = vdwg.mxu0
        %9801 = vmatprep.subr.bf16.mxu0 %v9028
        %9802 = vmatpush1.bf16.msra.mxu0 %v9027
        %9803 = vmatprep.subr.bf16.mxu0 %v9042
        %9804 = vmatpush1.bf16.msra.mxu0 %v9041
        %9805 = vmatprep.subr.bf16.mxu0 %v9056
        %9806 = vmatpush1.bf16.msra.mxu0 %v9055
        %9807 = vmatprep.subr.bf16.mxu0 %v9070
        %9808 = vmatpush1.bf16.msra.mxu0 %v9069
        %9809 = vmatprep.subr.bf16.mxu0 %v9084
        %9810 = vmatpush1.bf16.msra.mxu0 %v9083
        %9811 = vmatprep.subr.bf16.mxu0 %v9098
        %9812 = vmatpush1.bf16.msra.mxu0 %v9097
        %9813 = vmatprep.subr.bf16.mxu0 %v9112
        %9814 = vmatpush1.bf16.msra.mxu0 %v9111
        %9815 = vmatprep.subr.bf16.mxu0 %v9126
        %9816 = vmatpush1.bf16.msra.mxu0 %v9125
        %9817 = vmatprep.subr.bf16.mxu0 %v9140
        %9818 = vmatpush1.bf16.msra.mxu0 %v9139
        %9819 = vmatprep.subr.bf16.mxu0 %v9154
        %9820 = vmatpush1.bf16.msra.mxu0 %v9153
        %9821 = vmatprep.subr.bf16.mxu0 %v9168
        %9822 = vmatpush1.bf16.msra.mxu0 %v9167
        %9823 = vmatprep.subr.bf16.mxu0 %v9182
        %9824 = vmatpush1.bf16.msra.mxu0 %v9181
        %9825 = vmatprep.subr.bf16.mxu0 0
        %9826 = vmatpush1.bf16.msra.mxu0 0
        %9827 = vmatprep.subr.bf16.mxu0 0
        %9828 = vmatpush1.bf16.msra.mxu0 0
        %9829 = vmatprep.subr.bf16.mxu0 0
        %9830 = vmatpush1.bf16.msra.mxu0 0
        %9831 = vmatprep.subr.bf16.mxu0 0
        %9832 = vmatpush1.bf16.msra.mxu0 0
        %9833 = vmatprep.mubr.bf16.mxu0 %v9352
        %9834 = vmatmul.mubr.bf16.gmra.mrb[0].mxu0 %v6796
        %v9835 = vpop.f32.mrb[0].mxu0
        %v9836 = vadd.f32 %v8473, %v9835
        %v9837 = vpop.f32.mrb[0].mxu0
        %v9838 = vadd.f32 %v8475, %v9837
        %v9839 = vpop.f32.mrb[0].mxu0
        %v9840 = vadd.f32 %v8477, %v9839
        %v9841 = vpop.f32.mrb[0].mxu0
        %v9842 = vadd.f32 %v8479, %v9841
        %9843 = vmatprep.mubr.bf16.mxu0 %v9355
        %9844 = vmatmul.mubr.bf16.gmra.mrb[0].mxu0 %v6798
        %v9845 = vpop.f32.mrb[0].mxu0
        %v9846 = vadd.f32 %v8483, %v9845
        %v9847 = vpop.f32.mrb[0].mxu0
        %v9848 = vadd.f32 %v8485, %v9847
        %v9849 = vpop.f32.mrb[0].mxu0
        %v9850 = vadd.f32 %v8487, %v9849
        %v9851 = vpop.f32.mrb[0].mxu0
        %v9852 = vadd.f32 %v8489, %v9851
        %9853 = vmatprep.mubr.bf16.mxu0 %v9358
        %9854 = vmatmul.mubr.bf16.gmra.mrb[0].mxu0 %v6800
        %v9855 = vpop.f32.mrb[0].mxu0
        %v9856 = vadd.f32 %v8493, %v9855
        %v9857 = vpop.f32.mrb[0].mxu0
        %v9858 = vadd.f32 %v8495, %v9857
        %v9859 = vpop.f32.mrb[0].mxu0
        %v9860 = vadd.f32 %v8497, %v9859
        %v9861 = vpop.f32.mrb[0].mxu0
        %v9862 = vadd.f32 %v8499, %v9861
        %9863 = vmatprep.mubr.bf16.mxu0 %v9361
        %9864 = vmatmul.mubr.bf16.gmra.mrb[0].mxu0 %v6802
        %v9865 = vpop.f32.mrb[0].mxu0
        %v9866 = vadd.f32 %v8503, %v9865
        %v9867 = vpop.f32.mrb[0].mxu0
        %v9868 = vadd.f32 %v8505, %v9867
        %v9869 = vpop.f32.mrb[0].mxu0
        %v9870 = vadd.f32 %v8507, %v9869
        %v9871 = vpop.f32.mrb[0].mxu0
        %v9872 = vadd.f32 %v8509, %v9871
        %9873 = vdwg.mxu0
        %v9874 = vmul.f32 %v9398, 0.2
        %v9875 = vmul.f32 %v9400, 0.2
        %v9876 = vmul.f32 %v9471, 0.2
        %v9877 = vmul.f32 %v9473, 0.2
        %v9878 = vmul.f32 %v9544, 0.2
        %v9879 = vmul.f32 %v9546, 0.2
        %v9880 = vmul.f32 %v9617, 0.2
        %v9881 = vmul.f32 %v9619, 0.2
        %v9882 = vmul.f32 %v9690, 0.2
        %v9883 = vmul.f32 %v9692, 0.2
        %v9884 = vmul.f32 %v9763, 0.2
        %v9885 = vmul.f32 %v9765, 0.2
        %v9886 = vmul.f32 %v9836, 0.2
        %v9887 = vmul.f32 %v9838, 0.2
        %v9888 = vmul.f32 %v9402, 0.2
        %v9889 = vmul.f32 %v9404, 0.2
        %v9890 = vmul.f32 %v9475, 0.2
        %v9891 = vmul.f32 %v9477, 0.2
        %v9892 = vmul.f32 %v9548, 0.2
        %v9893 = vmul.f32 %v9550, 0.2
        %v9894 = vmul.f32 %v9621, 0.2
        %v9895 = vmul.f32 %v9623, 0.2
        %v9896 = vmul.f32 %v9694, 0.2
        %v9897 = vmul.f32 %v9696, 0.2
        %v9898 = vmul.f32 %v9767, 0.2
        %v9899 = vmul.f32 %v9769, 0.2
        %v9900 = vmul.f32 %v9840, 0.2
        %v9901 = vmul.f32 %v9842, 0.2
        %v9902 = vmul.f32 %v9408, 0.2
        %v9903 = vmul.f32 %v9410, 0.2
        %v9904 = vmul.f32 %v9481, 0.2
        %v9905 = vmul.f32 %v9483, 0.2
        %v9906 = vmul.f32 %v9554, 0.2
        %v9907 = vmul.f32 %v9556, 0.2
        %v9908 = vmul.f32 %v9627, 0.2
        %v9909 = vmul.f32 %v9629, 0.2
        %v9910 = vmul.f32 %v9700, 0.2
        %v9911 = vmul.f32 %v9702, 0.2
        %v9912 = vmul.f32 %v9773, 0.2
        %v9913 = vmul.f32 %v9775, 0.2
        %v9914 = vmul.f32 %v9846, 0.2
        %v9915 = vmul.f32 %v9848, 0.2
        %v9916 = vmul.f32 %v9412, 0.2
        %v9917 = vmul.f32 %v9414, 0.2
        %v9918 = vmul.f32 %v9485, 0.2
        %v9919 = vmul.f32 %v9487, 0.2
        %v9920 = vmul.f32 %v9558, 0.2
        %v9921 = vmul.f32 %v9560, 0.2
        %v9922 = vmul.f32 %v9631, 0.2
        %v9923 = vmul.f32 %v9633, 0.2
        %v9924 = vmul.f32 %v9704, 0.2
        %v9925 = vmul.f32 %v9706, 0.2
        %v9926 = vmul.f32 %v9777, 0.2
        %v9927 = vmul.f32 %v9779, 0.2
        %v9928 = vmul.f32 %v9850, 0.2
        %v9929 = vmul.f32 %v9852, 0.2
        %v9930 = vmul.f32 %v9418, 0.2
        %v9931 = vmul.f32 %v9420, 0.2
        %v9932 = vmul.f32 %v9491, 0.2
        %v9933 = vmul.f32 %v9493, 0.2
        %v9934 = vmul.f32 %v9564, 0.2
        %v9935 = vmul.f32 %v9566, 0.2
        %v9936 = vmul.f32 %v9637, 0.2
        %v9937 = vmul.f32 %v9639, 0.2
        %v9938 = vmul.f32 %v9710, 0.2
        %v9939 = vmul.f32 %v9712, 0.2
        %v9940 = vmul.f32 %v9783, 0.2
        %v9941 = vmul.f32 %v9785, 0.2
        %v9942 = vmul.f32 %v9856, 0.2
        %v9943 = vmul.f32 %v9858, 0.2
        %v9944 = vmul.f32 %v9422, 0.2
        %v9945 = vmul.f32 %v9424, 0.2
        %v9946 = vmul.f32 %v9495, 0.2
        %v9947 = vmul.f32 %v9497, 0.2
        %v9948 = vmul.f32 %v9568, 0.2
        %v9949 = vmul.f32 %v9570, 0.2
        %v9950 = vmul.f32 %v9641, 0.2
        %v9951 = vmul.f32 %v9643, 0.2
        %v9952 = vmul.f32 %v9714, 0.2
        %v9953 = vmul.f32 %v9716, 0.2
        %v9954 = vmul.f32 %v9787, 0.2
        %v9955 = vmul.f32 %v9789, 0.2
        %v9956 = vmul.f32 %v9860, 0.2
        %v9957 = vmul.f32 %v9862, 0.2
        %v9958 = vmul.f32 %v9428, 0.2
        %v9959 = vmul.f32 %v9430, 0.2
        %v9960 = vmul.f32 %v9501, 0.2
        %v9961 = vmul.f32 %v9503, 0.2
        %v9962 = vmul.f32 %v9574, 0.2
        %v9963 = vmul.f32 %v9576, 0.2
        %v9964 = vmul.f32 %v9647, 0.2
        %v9965 = vmul.f32 %v9649, 0.2
        %v9966 = vmul.f32 %v9720, 0.2
        %v9967 = vmul.f32 %v9722, 0.2
        %v9968 = vmul.f32 %v9793, 0.2
        %v9969 = vmul.f32 %v9795, 0.2
        %v9970 = vmul.f32 %v9866, 0.2
        %v9971 = vmul.f32 %v9868, 0.2
        %v9972 = vmul.f32 %v9432, 0.2
        %v9973 = vmul.f32 %v9434, 0.2
        %v9974 = vmul.f32 %v9505, 0.2
        %v9975 = vmul.f32 %v9507, 0.2
        %v9976 = vmul.f32 %v9578, 0.2
        %v9977 = vmul.f32 %v9580, 0.2
        %v9978 = vmul.f32 %v9651, 0.2
        %v9979 = vmul.f32 %v9653, 0.2
        %v9980 = vmul.f32 %v9724, 0.2
        %v9981 = vmul.f32 %v9726, 0.2
        %v9982 = vmul.f32 %v9797, 0.2
        %v9983 = vmul.f32 %v9799, 0.2
        %v9984 = vmul.f32 %v9870, 0.2
        %v9985 = vmul.f32 %v9872, 0.2
        %v9986 = vld [vmem:[%s16] sm:$0xff]
        %v9987 = vld [vmem:[%s16 + $0x8] sm:$0x3f]
        %v9990 = vlaneseq
        %v9991 = vshrl.u32 %v9990, 7
        %v9992 = vsub.s32 0, %v9991
        %v9993 = vrot.slane %v9986, %v9992
        %v9994 = vlaneseq
        %v9995 = vshrl.u32 %v9994, 7
        %v9996 = vsub.s32 1, %v9995
        %v9997 = vrot.slane %v9986, %v9996
        %v9998 = vlaneseq
        %v9999 = vshrl.u32 %v9998, 7
        %v10000 = vsub.s32 2, %v9999
        %v10001 = vrot.slane %v9986, %v10000
        %v10002 = vlaneseq
        %v10003 = vshrl.u32 %v10002, 7
        %v10004 = vsub.s32 3, %v10003
        %v10005 = vrot.slane %v9986, %v10004
        %v10006 = vlaneseq
        %v10007 = vshrl.u32 %v10006, 7
        %v10008 = vsub.s32 4, %v10007
        %v10009 = vrot.slane %v9986, %v10008
        %v10010 = vlaneseq
        %v10011 = vshrl.u32 %v10010, 7
        %v10012 = vsub.s32 5, %v10011
        %v10013 = vrot.slane %v9986, %v10012
        %v10014 = vlaneseq
        %v10015 = vshrl.u32 %v10014, 7
        %v10016 = vsub.s32 6, %v10015
        %v10017 = vrot.slane %v9986, %v10016
        %v10018 = vlaneseq
        %v10019 = vshrl.u32 %v10018, 7
        %v10020 = vsub.s32 7, %v10019
        %v10021 = vrot.slane %v9986, %v10020
        %v10022 = vlaneseq
        %v10023 = vshrl.u32 %v10022, 7
        %v10024 = vsub.s32 0, %v10023
        %v10025 = vrot.slane %v9987, %v10024
        %v10026 = vlaneseq
        %v10027 = vshrl.u32 %v10026, 7
        %v10028 = vsub.s32 1, %v10027
        %v10029 = vrot.slane %v9987, %v10028
        %v10030 = vlaneseq
        %v10031 = vshrl.u32 %v10030, 7
        %v10032 = vsub.s32 2, %v10031
        %v10033 = vrot.slane %v9987, %v10032
        %v10034 = vlaneseq
        %v10035 = vshrl.u32 %v10034, 7
        %v10036 = vsub.s32 3, %v10035
        %v10037 = vrot.slane %v9987, %v10036
        %v10038 = vlaneseq
        %v10039 = vshrl.u32 %v10038, 7
        %v10040 = vsub.s32 4, %v10039
        %v10041 = vrot.slane %v9987, %v10040
        %v10042 = vlaneseq
        %v10043 = vshrl.u32 %v10042, 7
        %v10044 = vsub.s32 5, %v10043
        %v10045 = vrot.slane %v9987, %v10044
        %v10060 = vadd.f32 %v9874, %v9993
        %v10061 = vadd.f32 %v9875, %v9997
        %v10062 = vadd.f32 %v9876, %v10001
        %v10063 = vadd.f32 %v9877, %v10005
        %v10064 = vadd.f32 %v9878, %v10009
        %v10065 = vadd.f32 %v9879, %v10013
        %v10066 = vadd.f32 %v9880, %v10017
        %v10067 = vadd.f32 %v9881, %v10021
        %v10068 = vadd.f32 %v9882, %v10025
        %v10069 = vadd.f32 %v9883, %v10029
        %v10070 = vadd.f32 %v9884, %v10033
        %v10071 = vadd.f32 %v9885, %v10037
        %v10072 = vadd.f32 %v9886, %v10041
        %v10073 = vadd.f32 %v9887, %v10045
        %v10074 = vadd.f32 %v9888, %v9993
        %v10075 = vadd.f32 %v9889, %v9997
        %v10076 = vadd.f32 %v9890, %v10001
        %v10077 = vadd.f32 %v9891, %v10005
        %v10078 = vadd.f32 %v9892, %v10009
        %v10079 = vadd.f32 %v9893, %v10013
        %v10080 = vadd.f32 %v9894, %v10017
        %v10081 = vadd.f32 %v9895, %v10021
        %v10082 = vadd.f32 %v9896, %v10025
        %v10083 = vadd.f32 %v9897, %v10029
        %v10084 = vadd.f32 %v9898, %v10033
        %v10085 = vadd.f32 %v9899, %v10037
        %v10086 = vadd.f32 %v9900, %v10041
        %v10087 = vadd.f32 %v9901, %v10045
        %v10088 = vadd.f32 %v9902, %v9993
        %v10089 = vadd.f32 %v9903, %v9997
        %v10090 = vadd.f32 %v9904, %v10001
        %v10091 = vadd.f32 %v9905, %v10005
        %v10092 = vadd.f32 %v9906, %v10009
        %v10093 = vadd.f32 %v9907, %v10013
        %v10094 = vadd.f32 %v9908, %v10017
        %v10095 = vadd.f32 %v9909, %v10021
        %v10096 = vadd.f32 %v9910, %v10025
        %v10097 = vadd.f32 %v9911, %v10029
        %v10098 = vadd.f32 %v9912, %v10033
        %v10099 = vadd.f32 %v9913, %v10037
        %v10100 = vadd.f32 %v9914, %v10041
        %v10101 = vadd.f32 %v9915, %v10045
        %v10102 = vadd.f32 %v9916, %v9993
        %v10103 = vadd.f32 %v9917, %v9997
        %v10104 = vadd.f32 %v9918, %v10001
        %v10105 = vadd.f32 %v9919, %v10005
        %v10106 = vadd.f32 %v9920, %v10009
        %v10107 = vadd.f32 %v9921, %v10013
        %v10108 = vadd.f32 %v9922, %v10017
        %v10109 = vadd.f32 %v9923, %v10021
        %v10110 = vadd.f32 %v9924, %v10025
        %v10111 = vadd.f32 %v9925, %v10029
        %v10112 = vadd.f32 %v9926, %v10033
        %v10113 = vadd.f32 %v9927, %v10037
        %v10114 = vadd.f32 %v9928, %v10041
        %v10115 = vadd.f32 %v9929, %v10045
        %v10116 = vadd.f32 %v9930, %v9993
        %v10117 = vadd.f32 %v9931, %v9997
        %v10118 = vadd.f32 %v9932, %v10001
        %v10119 = vadd.f32 %v9933, %v10005
        %v10120 = vadd.f32 %v9934, %v10009
        %v10121 = vadd.f32 %v9935, %v10013
        %v10122 = vadd.f32 %v9936, %v10017
        %v10123 = vadd.f32 %v9937, %v10021
        %v10124 = vadd.f32 %v9938, %v10025
        %v10125 = vadd.f32 %v9939, %v10029
        %v10126 = vadd.f32 %v9940, %v10033
        %v10127 = vadd.f32 %v9941, %v10037
        %v10128 = vadd.f32 %v9942, %v10041
        %v10129 = vadd.f32 %v9943, %v10045
        %v10130 = vadd.f32 %v9944, %v9993
        %v10131 = vadd.f32 %v9945, %v9997
        %v10132 = vadd.f32 %v9946, %v10001
        %v10133 = vadd.f32 %v9947, %v10005
        %v10134 = vadd.f32 %v9948, %v10009
        %v10135 = vadd.f32 %v9949, %v10013
        %v10136 = vadd.f32 %v9950, %v10017
        %v10137 = vadd.f32 %v9951, %v10021
        %v10138 = vadd.f32 %v9952, %v10025
        %v10139 = vadd.f32 %v9953, %v10029
        %v10140 = vadd.f32 %v9954, %v10033
        %v10141 = vadd.f32 %v9955, %v10037
        %v10142 = vadd.f32 %v9956, %v10041
        %v10143 = vadd.f32 %v9957, %v10045
        %v10144 = vadd.f32 %v9958, %v9993
        %v10145 = vadd.f32 %v9959, %v9997
        %v10146 = vadd.f32 %v9960, %v10001
        %v10147 = vadd.f32 %v9961, %v10005
        %v10148 = vadd.f32 %v9962, %v10009
        %v10149 = vadd.f32 %v9963, %v10013
        %v10150 = vadd.f32 %v9964, %v10017
        %v10151 = vadd.f32 %v9965, %v10021
        %v10152 = vadd.f32 %v9966, %v10025
        %v10153 = vadd.f32 %v9967, %v10029
        %v10154 = vadd.f32 %v9968, %v10033
        %v10155 = vadd.f32 %v9969, %v10037
        %v10156 = vadd.f32 %v9970, %v10041
        %v10157 = vadd.f32 %v9971, %v10045
        %v10158 = vadd.f32 %v9972, %v9993
        %v10159 = vadd.f32 %v9973, %v9997
        %v10160 = vadd.f32 %v9974, %v10001
        %v10161 = vadd.f32 %v9975, %v10005
        %v10162 = vadd.f32 %v9976, %v10009
        %v10163 = vadd.f32 %v9977, %v10013
        %v10164 = vadd.f32 %v9978, %v10017
        %v10165 = vadd.f32 %v9979, %v10021
        %v10166 = vadd.f32 %v9980, %v10025
        %v10167 = vadd.f32 %v9981, %v10029
        %v10168 = vadd.f32 %v9982, %v10033
        %v10169 = vadd.f32 %v9983, %v10037
        %v10170 = vadd.f32 %v9984, %v10041
        %v10171 = vadd.f32 %v9985, %v10045
        %v10172 = vunpack.c.l.bf16 %v548
        %v10173 = vunpack.c.h.bf16 %v548
        %v10174 = vunpack.c.l.bf16 %v549
        %v10175 = vunpack.c.h.bf16 %v549
        %v10176 = vunpack.c.l.bf16 %v550
        %v10177 = vunpack.c.h.bf16 %v550
        %v10178 = vunpack.c.l.bf16 %v551
        %v10179 = vunpack.c.h.bf16 %v551
        %v10180 = vunpack.c.l.bf16 %v552
        %v10181 = vunpack.c.h.bf16 %v552
        %v10182 = vunpack.c.l.bf16 %v553
        %v10183 = vunpack.c.h.bf16 %v553
        %v10184 = vunpack.c.l.bf16 %v554
        %v10185 = vunpack.c.h.bf16 %v554
        %v10186 = vunpack.c.l.bf16 %v555
        %v10187 = vunpack.c.h.bf16 %v555
        %v10188 = vunpack.c.l.bf16 %v556
        %v10189 = vunpack.c.h.bf16 %v556
        %v10190 = vunpack.c.l.bf16 %v557
        %v10191 = vunpack.c.h.bf16 %v557
        %v10192 = vunpack.c.l.bf16 %v558
        %v10193 = vunpack.c.h.bf16 %v558
        %v10194 = vunpack.c.l.bf16 %v559
        %v10195 = vunpack.c.h.bf16 %v559
        %v10196 = vunpack.c.l.bf16 %v560
        %v10197 = vunpack.c.h.bf16 %v560
        %v10198 = vunpack.c.l.bf16 %v561
        %v10199 = vunpack.c.h.bf16 %v561
        %v10200 = vunpack.c.l.bf16 %v562
        %v10201 = vunpack.c.h.bf16 %v562
        %v10202 = vunpack.c.l.bf16 %v563
        %v10203 = vunpack.c.h.bf16 %v563
        %v10204 = vunpack.c.l.bf16 %v564
        %v10205 = vunpack.c.h.bf16 %v564
        %v10206 = vunpack.c.l.bf16 %v565
        %v10207 = vunpack.c.h.bf16 %v565
        %v10208 = vunpack.c.l.bf16 %v566
        %v10209 = vunpack.c.h.bf16 %v566
        %v10210 = vunpack.c.l.bf16 %v567
        %v10211 = vunpack.c.h.bf16 %v567
        %v10212 = vunpack.c.l.bf16 %v568
        %v10213 = vunpack.c.h.bf16 %v568
        %v10214 = vunpack.c.l.bf16 %v569
        %v10215 = vunpack.c.h.bf16 %v569
        %v10216 = vunpack.c.l.bf16 %v570
        %v10217 = vunpack.c.h.bf16 %v570
        %v10218 = vunpack.c.l.bf16 %v571
        %v10219 = vunpack.c.h.bf16 %v571
        %v10220 = vunpack.c.l.bf16 %v572
        %v10221 = vunpack.c.h.bf16 %v572
        %v10222 = vunpack.c.l.bf16 %v573
        %v10223 = vunpack.c.h.bf16 %v573
        %v10224 = vunpack.c.l.bf16 %v574
        %v10225 = vunpack.c.h.bf16 %v574
        %v10226 = vunpack.c.l.bf16 %v575
        %v10227 = vunpack.c.h.bf16 %v575
        %v10228 = vunpack.c.l.bf16 %v576
        %v10229 = vunpack.c.h.bf16 %v576
        %v10230 = vunpack.c.l.bf16 %v577
        %v10231 = vunpack.c.h.bf16 %v577
        %v10232 = vunpack.c.l.bf16 %v578
        %v10233 = vunpack.c.h.bf16 %v578
        %v10234 = vunpack.c.l.bf16 %v579
        %v10235 = vunpack.c.h.bf16 %v579
        %v10236 = vunpack.c.l.bf16 %v580
        %v10237 = vunpack.c.h.bf16 %v580
        %v10238 = vunpack.c.l.bf16 %v581
        %v10239 = vunpack.c.h.bf16 %v581
        %v10240 = vunpack.c.l.bf16 %v582
        %v10241 = vunpack.c.h.bf16 %v582
        %v10242 = vunpack.c.l.bf16 %v583
        %v10243 = vunpack.c.h.bf16 %v583
        %v10244 = vunpack.c.l.bf16 %v584
        %v10245 = vunpack.c.h.bf16 %v584
        %v10246 = vunpack.c.l.bf16 %v585
        %v10247 = vunpack.c.h.bf16 %v585
        %v10248 = vunpack.c.l.bf16 %v586
        %v10249 = vunpack.c.h.bf16 %v586
        %v10250 = vunpack.c.l.bf16 %v587
        %v10251 = vunpack.c.h.bf16 %v587
        %v10252 = vunpack.c.l.bf16 %v588
        %v10253 = vunpack.c.h.bf16 %v588
        %v10254 = vunpack.c.l.bf16 %v589
        %v10255 = vunpack.c.h.bf16 %v589
        %v10256 = vunpack.c.l.bf16 %v590
        %v10257 = vunpack.c.h.bf16 %v590
        %v10258 = vunpack.c.l.bf16 %v591
        %v10259 = vunpack.c.h.bf16 %v591
        %v10260 = vunpack.c.l.bf16 %v592
        %v10261 = vunpack.c.h.bf16 %v592
        %v10262 = vunpack.c.l.bf16 %v593
        %v10263 = vunpack.c.h.bf16 %v593
        %v10264 = vunpack.c.l.bf16 %v594
        %v10265 = vunpack.c.h.bf16 %v594
        %v10266 = vunpack.c.l.bf16 %v595
        %v10267 = vunpack.c.h.bf16 %v595
        %v10268 = vunpack.c.l.bf16 %v596
        %v10269 = vunpack.c.h.bf16 %v596
        %v10270 = vunpack.c.l.bf16 %v597
        %v10271 = vunpack.c.h.bf16 %v597
        %v10272 = vunpack.c.l.bf16 %v598
        %v10273 = vunpack.c.h.bf16 %v598
        %v10274 = vunpack.c.l.bf16 %v599
        %v10275 = vunpack.c.h.bf16 %v599
        %v10276 = vunpack.c.l.bf16 %v600
        %v10277 = vunpack.c.h.bf16 %v600
        %v10278 = vunpack.c.l.bf16 %v601
        %v10279 = vunpack.c.h.bf16 %v601
        %v10280 = vunpack.c.l.bf16 %v602
        %v10281 = vunpack.c.h.bf16 %v602
        %v10282 = vunpack.c.l.bf16 %v603
        %v10283 = vunpack.c.h.bf16 %v603
        %v10284 = vadd.f32 %v10060, %v10172
        %v10285 = vadd.f32 %v10061, %v10173
        %v10286 = vadd.f32 %v10062, %v10174
        %v10287 = vadd.f32 %v10063, %v10175
        %v10288 = vadd.f32 %v10064, %v10176
        %v10289 = vadd.f32 %v10065, %v10177
        %v10290 = vadd.f32 %v10066, %v10178
        %v10291 = vadd.f32 %v10067, %v10179
        %v10292 = vadd.f32 %v10068, %v10180
        %v10293 = vadd.f32 %v10069, %v10181
        %v10294 = vadd.f32 %v10070, %v10182
        %v10295 = vadd.f32 %v10071, %v10183
        %v10296 = vadd.f32 %v10072, %v10184
        %v10297 = vadd.f32 %v10073, %v10185
        %v10298 = vadd.f32 %v10074, %v10186
        %v10299 = vadd.f32 %v10075, %v10187
        %v10300 = vadd.f32 %v10076, %v10188
        %v10301 = vadd.f32 %v10077, %v10189
        %v10302 = vadd.f32 %v10078, %v10190
        %v10303 = vadd.f32 %v10079, %v10191
        %v10304 = vadd.f32 %v10080, %v10192
        %v10305 = vadd.f32 %v10081, %v10193
        %v10306 = vadd.f32 %v10082, %v10194
        %v10307 = vadd.f32 %v10083, %v10195
        %v10308 = vadd.f32 %v10084, %v10196
        %v10309 = vadd.f32 %v10085, %v10197
        %v10310 = vadd.f32 %v10086, %v10198
        %v10311 = vadd.f32 %v10087, %v10199
        %v10312 = vadd.f32 %v10088, %v10200
        %v10313 = vadd.f32 %v10089, %v10201
        %v10314 = vadd.f32 %v10090, %v10202
        %v10315 = vadd.f32 %v10091, %v10203
        %v10316 = vadd.f32 %v10092, %v10204
        %v10317 = vadd.f32 %v10093, %v10205
        %v10318 = vadd.f32 %v10094, %v10206
        %v10319 = vadd.f32 %v10095, %v10207
        %v10320 = vadd.f32 %v10096, %v10208
        %v10321 = vadd.f32 %v10097, %v10209
        %v10322 = vadd.f32 %v10098, %v10210
        %v10323 = vadd.f32 %v10099, %v10211
        %v10324 = vadd.f32 %v10100, %v10212
        %v10325 = vadd.f32 %v10101, %v10213
        %v10326 = vadd.f32 %v10102, %v10214
        %v10327 = vadd.f32 %v10103, %v10215
        %v10328 = vadd.f32 %v10104, %v10216
        %v10329 = vadd.f32 %v10105, %v10217
        %v10330 = vadd.f32 %v10106, %v10218
        %v10331 = vadd.f32 %v10107, %v10219
        %v10332 = vadd.f32 %v10108, %v10220
        %v10333 = vadd.f32 %v10109, %v10221
        %v10334 = vadd.f32 %v10110, %v10222
        %v10335 = vadd.f32 %v10111, %v10223
        %v10336 = vadd.f32 %v10112, %v10224
        %v10337 = vadd.f32 %v10113, %v10225
        %v10338 = vadd.f32 %v10114, %v10226
        %v10339 = vadd.f32 %v10115, %v10227
        %v10340 = vadd.f32 %v10116, %v10228
        %v10341 = vadd.f32 %v10117, %v10229
        %v10342 = vadd.f32 %v10118, %v10230
        %v10343 = vadd.f32 %v10119, %v10231
        %v10344 = vadd.f32 %v10120, %v10232
        %v10345 = vadd.f32 %v10121, %v10233
        %v10346 = vadd.f32 %v10122, %v10234
        %v10347 = vadd.f32 %v10123, %v10235
        %v10348 = vadd.f32 %v10124, %v10236
        %v10349 = vadd.f32 %v10125, %v10237
        %v10350 = vadd.f32 %v10126, %v10238
        %v10351 = vadd.f32 %v10127, %v10239
        %v10352 = vadd.f32 %v10128, %v10240
        %v10353 = vadd.f32 %v10129, %v10241
        %v10354 = vadd.f32 %v10130, %v10242
        %v10355 = vadd.f32 %v10131, %v10243
        %v10356 = vadd.f32 %v10132, %v10244
        %v10357 = vadd.f32 %v10133, %v10245
        %v10358 = vadd.f32 %v10134, %v10246
        %v10359 = vadd.f32 %v10135, %v10247
        %v10360 = vadd.f32 %v10136, %v10248
        %v10361 = vadd.f32 %v10137, %v10249
        %v10362 = vadd.f32 %v10138, %v10250
        %v10363 = vadd.f32 %v10139, %v10251
        %v10364 = vadd.f32 %v10140, %v10252
        %v10365 = vadd.f32 %v10141, %v10253
        %v10366 = vadd.f32 %v10142, %v10254
        %v10367 = vadd.f32 %v10143, %v10255
        %v10368 = vadd.f32 %v10144, %v10256
        %v10369 = vadd.f32 %v10145, %v10257
        %v10370 = vadd.f32 %v10146, %v10258
        %v10371 = vadd.f32 %v10147, %v10259
        %v10372 = vadd.f32 %v10148, %v10260
        %v10373 = vadd.f32 %v10149, %v10261
        %v10374 = vadd.f32 %v10150, %v10262
        %v10375 = vadd.f32 %v10151, %v10263
        %v10376 = vadd.f32 %v10152, %v10264
        %v10377 = vadd.f32 %v10153, %v10265
        %v10378 = vadd.f32 %v10154, %v10266
        %v10379 = vadd.f32 %v10155, %v10267
        %v10380 = vadd.f32 %v10156, %v10268
        %v10381 = vadd.f32 %v10157, %v10269
        %v10382 = vadd.f32 %v10158, %v10270
        %v10383 = vadd.f32 %v10159, %v10271
        %v10384 = vadd.f32 %v10160, %v10272
        %v10385 = vadd.f32 %v10161, %v10273
        %v10386 = vadd.f32 %v10162, %v10274
        %v10387 = vadd.f32 %v10163, %v10275
        %v10388 = vadd.f32 %v10164, %v10276
        %v10389 = vadd.f32 %v10165, %v10277
        %v10390 = vadd.f32 %v10166, %v10278
        %v10391 = vadd.f32 %v10167, %v10279
        %v10392 = vadd.f32 %v10168, %v10280
        %v10393 = vadd.f32 %v10169, %v10281
        %v10394 = vadd.f32 %v10170, %v10282
        %v10395 = vadd.f32 %v10171, %v10283
        %v10396 = vmax.f32 %v10284, 0.0
        %v10397 = vmax.f32 %v10285, 0.0
        %v10398 = vmax.f32 %v10286, 0.0
        %v10399 = vmax.f32 %v10287, 0.0
        %v10400 = vmax.f32 %v10288, 0.0
        %v10401 = vmax.f32 %v10289, 0.0
        %v10402 = vmax.f32 %v10290, 0.0
        %v10403 = vmax.f32 %v10291, 0.0
        %v10404 = vmax.f32 %v10292, 0.0
        %v10405 = vmax.f32 %v10293, 0.0
        %v10406 = vmax.f32 %v10294, 0.0
        %v10407 = vmax.f32 %v10295, 0.0
        %v10408 = vmax.f32 %v10296, 0.0
        %v10409 = vmax.f32 %v10297, 0.0
        %v10410 = vmax.f32 %v10298, 0.0
        %v10411 = vmax.f32 %v10299, 0.0
        %v10412 = vmax.f32 %v10300, 0.0
        %v10413 = vmax.f32 %v10301, 0.0
        %v10414 = vmax.f32 %v10302, 0.0
        %v10415 = vmax.f32 %v10303, 0.0
        %v10416 = vmax.f32 %v10304, 0.0
        %v10417 = vmax.f32 %v10305, 0.0
        %v10418 = vmax.f32 %v10306, 0.0
        %v10419 = vmax.f32 %v10307, 0.0
        %v10420 = vmax.f32 %v10308, 0.0
        %v10421 = vmax.f32 %v10309, 0.0
        %v10422 = vmax.f32 %v10310, 0.0
        %v10423 = vmax.f32 %v10311, 0.0
        %v10424 = vmax.f32 %v10312, 0.0
        %v10425 = vmax.f32 %v10313, 0.0
        %v10426 = vmax.f32 %v10314, 0.0
        %v10427 = vmax.f32 %v10315, 0.0
        %v10428 = vmax.f32 %v10316, 0.0
        %v10429 = vmax.f32 %v10317, 0.0
        %v10430 = vmax.f32 %v10318, 0.0
        %v10431 = vmax.f32 %v10319, 0.0
        %v10432 = vmax.f32 %v10320, 0.0
        %v10433 = vmax.f32 %v10321, 0.0
        %v10434 = vmax.f32 %v10322, 0.0
        %v10435 = vmax.f32 %v10323, 0.0
        %v10436 = vmax.f32 %v10324, 0.0
        %v10437 = vmax.f32 %v10325, 0.0
        %v10438 = vmax.f32 %v10326, 0.0
        %v10439 = vmax.f32 %v10327, 0.0
        %v10440 = vmax.f32 %v10328, 0.0
        %v10441 = vmax.f32 %v10329, 0.0
        %v10442 = vmax.f32 %v10330, 0.0
        %v10443 = vmax.f32 %v10331, 0.0
        %v10444 = vmax.f32 %v10332, 0.0
        %v10445 = vmax.f32 %v10333, 0.0
        %v10446 = vmax.f32 %v10334, 0.0
        %v10447 = vmax.f32 %v10335, 0.0
        %v10448 = vmax.f32 %v10336, 0.0
        %v10449 = vmax.f32 %v10337, 0.0
        %v10450 = vmax.f32 %v10338, 0.0
        %v10451 = vmax.f32 %v10339, 0.0
        %v10452 = vmax.f32 %v10340, 0.0
        %v10453 = vmax.f32 %v10341, 0.0
        %v10454 = vmax.f32 %v10342, 0.0
        %v10455 = vmax.f32 %v10343, 0.0
        %v10456 = vmax.f32 %v10344, 0.0
        %v10457 = vmax.f32 %v10345, 0.0
        %v10458 = vmax.f32 %v10346, 0.0
        %v10459 = vmax.f32 %v10347, 0.0
        %v10460 = vmax.f32 %v10348, 0.0
        %v10461 = vmax.f32 %v10349, 0.0
        %v10462 = vmax.f32 %v10350, 0.0
        %v10463 = vmax.f32 %v10351, 0.0
        %v10464 = vmax.f32 %v10352, 0.0
        %v10465 = vmax.f32 %v10353, 0.0
        %v10466 = vmax.f32 %v10354, 0.0
        %v10467 = vmax.f32 %v10355, 0.0
        %v10468 = vmax.f32 %v10356, 0.0
        %v10469 = vmax.f32 %v10357, 0.0
        %v10470 = vmax.f32 %v10358, 0.0
        %v10471 = vmax.f32 %v10359, 0.0
        %v10472 = vmax.f32 %v10360, 0.0
        %v10473 = vmax.f32 %v10361, 0.0
        %v10474 = vmax.f32 %v10362, 0.0
        %v10475 = vmax.f32 %v10363, 0.0
        %v10476 = vmax.f32 %v10364, 0.0
        %v10477 = vmax.f32 %v10365, 0.0
        %v10478 = vmax.f32 %v10366, 0.0
        %v10479 = vmax.f32 %v10367, 0.0
        %v10480 = vmax.f32 %v10368, 0.0
        %v10481 = vmax.f32 %v10369, 0.0
        %v10482 = vmax.f32 %v10370, 0.0
        %v10483 = vmax.f32 %v10371, 0.0
        %v10484 = vmax.f32 %v10372, 0.0
        %v10485 = vmax.f32 %v10373, 0.0
        %v10486 = vmax.f32 %v10374, 0.0
        %v10487 = vmax.f32 %v10375, 0.0
        %v10488 = vmax.f32 %v10376, 0.0
        %v10489 = vmax.f32 %v10377, 0.0
        %v10490 = vmax.f32 %v10378, 0.0
        %v10491 = vmax.f32 %v10379, 0.0
        %v10492 = vmax.f32 %v10380, 0.0
        %v10493 = vmax.f32 %v10381, 0.0
        %v10494 = vmax.f32 %v10382, 0.0
        %v10495 = vmax.f32 %v10383, 0.0
        %v10496 = vmax.f32 %v10384, 0.0
        %v10497 = vmax.f32 %v10385, 0.0
        %v10498 = vmax.f32 %v10386, 0.0
        %v10499 = vmax.f32 %v10387, 0.0
        %v10500 = vmax.f32 %v10388, 0.0
        %v10501 = vmax.f32 %v10389, 0.0
        %v10502 = vmax.f32 %v10390, 0.0
        %v10503 = vmax.f32 %v10391, 0.0
        %v10504 = vmax.f32 %v10392, 0.0
        %v10505 = vmax.f32 %v10393, 0.0
        %v10506 = vmax.f32 %v10394, 0.0
        %v10507 = vmax.f32 %v10395, 0.0
        %10508 = vst [vmem:[%s541] sm:$0xff] %v10396
        %10509 = vst [vmem:[%s541 + $0x8] sm:$0xff] %v10397
        %10510 = vst [vmem:[%s541 + $0x10] sm:$0xff] %v10398
        %10511 = vst [vmem:[%s541 + $0x18] sm:$0xff] %v10399
        %10512 = vst [vmem:[%s541 + $0x20] sm:$0xff] %v10400
        %10513 = vst [vmem:[%s541 + $0x28] sm:$0xff] %v10401
        %10514 = vst [vmem:[%s541 + $0x30] sm:$0xff] %v10402
        %10515 = vst [vmem:[%s541 + $0x38] sm:$0xff] %v10403
        %10516 = vst [vmem:[%s541 + $0x40] sm:$0xff] %v10404
        %10517 = vst [vmem:[%s541 + $0x48] sm:$0xff] %v10405
        %10518 = vst [vmem:[%s541 + $0x50] sm:$0xff] %v10406
        %10519 = vst [vmem:[%s541 + $0x58] sm:$0xff] %v10407
        %10520 = vst [vmem:[%s541 + $0x60] sm:$0xff] %v10408
        %10521 = vst [vmem:[%s541 + $0x68] sm:$0xff] %v10409
        %10522 = vst [vmem:[%s541 + $0x70] sm:$0xff] %v10410
        %10523 = vst [vmem:[%s541 + $0x78] sm:$0xff] %v10411
        %10524 = vst [vmem:[%s541 + $0x80] sm:$0xff] %v10412
        %10525 = vst [vmem:[%s541 + $0x88] sm:$0xff] %v10413
        %10526 = vst [vmem:[%s541 + $0x90] sm:$0xff] %v10414
        %10527 = vst [vmem:[%s541 + $0x98] sm:$0xff] %v10415
        %10528 = vst [vmem:[%s541 + $0xa0] sm:$0xff] %v10416
        %10529 = vst [vmem:[%s541 + $0xa8] sm:$0xff] %v10417
        %10530 = vst [vmem:[%s541 + $0xb0] sm:$0xff] %v10418
        %10531 = vst [vmem:[%s541 + $0xb8] sm:$0xff] %v10419
        %10532 = vst [vmem:[%s541 + $0xc0] sm:$0xff] %v10420
        %10533 = vst [vmem:[%s541 + $0xc8] sm:$0xff] %v10421
        %10534 = vst [vmem:[%s541 + $0xd0] sm:$0xff] %v10422
        %10535 = vst [vmem:[%s541 + $0xd8] sm:$0xff] %v10423
        %10536 = vst [vmem:[%s541 + $0xe0] sm:$0xff] %v10424
        %10537 = vst [vmem:[%s541 + $0xe8] sm:$0xff] %v10425
        %10538 = vst [vmem:[%s541 + $0xf0] sm:$0xff] %v10426
        %10539 = vst [vmem:[%s541 + $0xf8] sm:$0xff] %v10427
        %10540 = vst [vmem:[%s541 + $0x100] sm:$0xff] %v10428
        %10541 = vst [vmem:[%s541 + $0x108] sm:$0xff] %v10429
        %10542 = vst [vmem:[%s541 + $0x110] sm:$0xff] %v10430
        %10543 = vst [vmem:[%s541 + $0x118] sm:$0xff] %v10431
        %10544 = vst [vmem:[%s541 + $0x120] sm:$0xff] %v10432
        %10545 = vst [vmem:[%s541 + $0x128] sm:$0xff] %v10433
        %10546 = vst [vmem:[%s541 + $0x130] sm:$0xff] %v10434
        %10547 = vst [vmem:[%s541 + $0x138] sm:$0xff] %v10435
        %10548 = vst [vmem:[%s541 + $0x140] sm:$0xff] %v10436
        %10549 = vst [vmem:[%s541 + $0x148] sm:$0xff] %v10437
        %10550 = vst [vmem:[%s541 + $0x150] sm:$0xff] %v10438
        %10551 = vst [vmem:[%s541 + $0x158] sm:$0xff] %v10439
        %10552 = vst [vmem:[%s541 + $0x160] sm:$0xff] %v10440
        %10553 = vst [vmem:[%s541 + $0x168] sm:$0xff] %v10441
        %10554 = vst [vmem:[%s541 + $0x170] sm:$0xff] %v10442
        %10555 = vst [vmem:[%s541 + $0x178] sm:$0xff] %v10443
        %10556 = vst [vmem:[%s541 + $0x180] sm:$0xff] %v10444
        %10557 = vst [vmem:[%s541 + $0x188] sm:$0xff] %v10445
        %10558 = vst [vmem:[%s541 + $0x190] sm:$0xff] %v10446
        %10559 = vst [vmem:[%s541 + $0x198] sm:$0xff] %v10447
        %10560 = vst [vmem:[%s541 + $0x1a0] sm:$0xff] %v10448
        %10561 = vst [vmem:[%s541 + $0x1a8] sm:$0xff] %v10449
        %10562 = vst [vmem:[%s541 + $0x1b0] sm:$0xff] %v10450
        %10563 = vst [vmem:[%s541 + $0x1b8] sm:$0xff] %v10451
        %10564 = vst [vmem:[%s541 + $0x1c0] sm:$0xff] %v10452
        %10565 = vst [vmem:[%s541 + $0x1c8] sm:$0xff] %v10453
        %10566 = vst [vmem:[%s541 + $0x1d0] sm:$0xff] %v10454
        %10567 = vst [vmem:[%s541 + $0x1d8] sm:$0xff] %v10455
        %10568 = vst [vmem:[%s541 + $0x1e0] sm:$0xff] %v10456
        %10569 = vst [vmem:[%s541 + $0x1e8] sm:$0xff] %v10457
        %10570 = vst [vmem:[%s541 + $0x1f0] sm:$0xff] %v10458
        %10571 = vst [vmem:[%s541 + $0x1f8] sm:$0xff] %v10459
        %10572 = vst [vmem:[%s541 + $0x200] sm:$0xff] %v10460
        %10573 = vst [vmem:[%s541 + $0x208] sm:$0xff] %v10461
        %10574 = vst [vmem:[%s541 + $0x210] sm:$0xff] %v10462
        %10575 = vst [vmem:[%s541 + $0x218] sm:$0xff] %v10463
        %10576 = vst [vmem:[%s541 + $0x220] sm:$0xff] %v10464
        %10577 = vst [vmem:[%s541 + $0x228] sm:$0xff] %v10465
        %10578 = vst [vmem:[%s541 + $0x230] sm:$0xff] %v10466
        %10579 = vst [vmem:[%s541 + $0x238] sm:$0xff] %v10467
        %10580 = vst [vmem:[%s541 + $0x240] sm:$0xff] %v10468
        %10581 = vst [vmem:[%s541 + $0x248] sm:$0xff] %v10469
        %10582 = vst [vmem:[%s541 + $0x250] sm:$0xff] %v10470
        %10583 = vst [vmem:[%s541 + $0x258] sm:$0xff] %v10471
        %10584 = vst [vmem:[%s541 + $0x260] sm:$0xff] %v10472
        %10585 = vst [vmem:[%s541 + $0x268] sm:$0xff] %v10473
        %10586 = vst [vmem:[%s541 + $0x270] sm:$0xff] %v10474
        %10587 = vst [vmem:[%s541 + $0x278] sm:$0xff] %v10475
        %10588 = vst [vmem:[%s541 + $0x280] sm:$0xff] %v10476
        %10589 = vst [vmem:[%s541 + $0x288] sm:$0xff] %v10477
        %10590 = vst [vmem:[%s541 + $0x290] sm:$0xff] %v10478
        %10591 = vst [vmem:[%s541 + $0x298] sm:$0xff] %v10479
        %10592 = vst [vmem:[%s541 + $0x2a0] sm:$0xff] %v10480
        %10593 = vst [vmem:[%s541 + $0x2a8] sm:$0xff] %v10481
        %10594 = vst [vmem:[%s541 + $0x2b0] sm:$0xff] %v10482
        %10595 = vst [vmem:[%s541 + $0x2b8] sm:$0xff] %v10483
        %10596 = vst [vmem:[%s541 + $0x2c0] sm:$0xff] %v10484
        %10597 = vst [vmem:[%s541 + $0x2c8] sm:$0xff] %v10485
        %10598 = vst [vmem:[%s541 + $0x2d0] sm:$0xff] %v10486
        %10599 = vst [vmem:[%s541 + $0x2d8] sm:$0xff] %v10487
        %10600 = vst [vmem:[%s541 + $0x2e0] sm:$0xff] %v10488
        %10601 = vst [vmem:[%s541 + $0x2e8] sm:$0xff] %v10489
        %10602 = vst [vmem:[%s541 + $0x2f0] sm:$0xff] %v10490
        %10603 = vst [vmem:[%s541 + $0x2f8] sm:$0xff] %v10491
        %10604 = vst [vmem:[%s541 + $0x300] sm:$0xff] %v10492
        %10605 = vst [vmem:[%s541 + $0x308] sm:$0xff] %v10493
        %10606 = vst [vmem:[%s541 + $0x310] sm:$0xff] %v10494
        %10607 = vst [vmem:[%s541 + $0x318] sm:$0xff] %v10495
        %10608 = vst [vmem:[%s541 + $0x320] sm:$0xff] %v10496
        %10609 = vst [vmem:[%s541 + $0x328] sm:$0xff] %v10497
        %10610 = vst [vmem:[%s541 + $0x330] sm:$0xff] %v10498
        %10611 = vst [vmem:[%s541 + $0x338] sm:$0xff] %v10499
        %10612 = vst [vmem:[%s541 + $0x340] sm:$0xff] %v10500
        %10613 = vst [vmem:[%s541 + $0x348] sm:$0xff] %v10501
        %10614 = vst [vmem:[%s541 + $0x350] sm:$0xff] %v10502
        %10615 = vst [vmem:[%s541 + $0x358] sm:$0xff] %v10503
        %10616 = vst [vmem:[%s541 + $0x360] sm:$0xff] %v10504
        %10617 = vst [vmem:[%s541 + $0x368] sm:$0xff] %v10505
        %10618 = vst [vmem:[%s541 + $0x370] sm:$0xff] %v10506
        %10619 = vst [vmem:[%s541 + $0x378] sm:$0xff] %v10507
        %s10620 = sand.u32 %s401, 1
        %s10621 = scalar_lea.sflag [#allocation3], %s10620
        %s10622 = sand.u32 %s401, 1
        %s10623 = smul.addr %s10622, 896
        %s10624 = scalar_lea.vmem [#allocation2], %s10623
        // Predicated region
        $region89: #{_lambda_.1} parent=87 // pred_check
          %p10625 = pneg %p411
        $region90: #{_lambda_.1} parent=87 // pred_check_branch
          %10627 = sbr.rel (%p10625) target = $region92
        $region91: #{_lambda_.1} parent=87 // pred_region
          %s10629 = ssub.s32 14336, 14336
          %10630 = vsyncadd %s10621, %s10629
          %s10631 = smul.addr %s31, 112
          %s10632 = smul.addr %s10631, 128
          %s10633 = scalar_lea.hbm %s17, %s10632
          %s10634 = sshll.u32 %s10624, 4
          %s10635 = int_to_ptr.vmem [resolvable:$true] %s10634
          %10640 = dma.vmem_to_hbm [thread:$0]  %s10635, 14336, %s10633, %s10621, 1792, 1792, 112
        $region92: #{_lambda_.1} parent=87 // pred_fallthru
          _
      $region88: #{_lambda_.1} parent=5 // pred_fallthru
        _
      %p10641 = scmp.le.s32.totalorder 2, %s26
      // Predicated region
      $region93: #{_lambda_.1} parent=5 // pred_check
        %p10642 = pneg %p10641
      $region94: #{_lambda_.1} parent=5 // pred_check_branch
        %10644 = sbr.rel (%p10642) target = $region96
      $region95: #{_lambda_.1} parent=5 // pred_region
        %s10645 = ssub.s32 %s26, 2
        // Predicated region
        $region97: #{_lambda_.1} parent=95 // pred_check
          %p10646 = pneg %p417
        $region98: #{_lambda_.1} parent=95 // pred_check_branch
          %10648 = sbr.rel (%p10646) target = $region100
        $region99: #{_lambda_.1} parent=95 // pred_region
          %s10649 = sand.u32 %s402, 1
          %s10650 = scalar_lea.sflag [#allocation3], %s10649
          %s10651 = sand.u32 %s402, 1
          %s10652 = smul.addr %s10651, 896
          %s10653 = scalar_lea.vmem [#allocation2], %s10652
          %10654 = dma.done %s10650, 14336
        $region100: #{_lambda_.1} parent=95 // pred_fallthru
          _
      $region96: #{_lambda_.1} parent=5 // pred_fallthru
        _
    $region6: #{_lambda_.1} parent=1 // loop_footer
      %s30 = sadd.s32 1, %s26
    $region7: #{_lambda_.1} parent=1 // loop_footer_branch
      %25 = sbr.rel target = $region3
    $region8: #{_lambda_.1} parent=1 // loop_exit
      _
    %10655 = vsyncpa [#allocation3], 1
    %s10656 = scalar_lea.sflag [#allocation3], 1
    %10657 = vsyncpa %s10656, 1

</llo_original>
